<compile_context>
chip_gen: v7x
topology: tpu7x:2x2x1
jax: 0.10.0
libtpu: 0.0.40
codegen_flags: <defaults>
</compile_context>

<pallas_src>
import functools
import math

import numpy as np
import jax
import jax.numpy as jnp
from jax.experimental import pallas as pl
from jax.experimental.pallas import tpu as pltpu

PRELU_SLOPE = 0.2                       # nn.PReLU(num_parameters=1, init=0.2)
RGB_MEAN = jnp.array([0.4488, 0.4371, 0.404], jnp.float32)   # MeanShift, std=1

ROW_TILE_CAP = 512      # max rows per block (multiple of 8 when tiled)
LANE_TILE_CAP = 2048    # max lanes per block (multiple of 128/256 when tiled)
MAX_SINGLE_K = 1024     # above this, fall back to a K-tiled accumulator kernel
VMEM_LIMIT_BYTES = 32 * 1024 * 1024   # safe on v5e/v6e/v7x


def _round_up(x, m):
    return ((x + m - 1) // m) * m


def _pick_tile(dim, cap, align):
    """Pick a block size for `dim`: full dim if small, else largest aligned divisor.
    Returns (tile, padded_dim); padding is a rare fallback only."""
    if dim <= cap:
        return dim, dim
    t = (cap // align) * align
    while t >= align:
        if dim % t == 0:
            return t, dim
        t -= align
    t = (cap // align) * align
    return t, _round_up(dim, t)


# ----------------------------- Pallas kernels ------------------------------ #
def _mm_kernel(a_ref, b_ref, bias_ref, o_ref, *, act, slope):
    """Single-pass fused matmul: full K in one block (no accumulator)."""
    y = jnp.dot(a_ref[...], b_ref[...], preferred_element_type=jnp.float32)
    y = y + bias_ref[...]
    if act == "prelu":
        y = jnp.where(y >= 0, y, slope * y)
    elif act == "relu":
        y = jnp.maximum(y, 0.0)
    o_ref[...] = y.astype(o_ref.dtype)


def _mm_kernel_acc(a_ref, b_ref, bias_ref, o_ref, acc_ref, *, act, slope):
    """K-tiled accumulator variant (only used when K > MAX_SINGLE_K)."""
    @pl.when(pl.program_id(2) == 0)
    def _():
        acc_ref[...] = jnp.zeros_like(acc_ref)

    acc_ref[...] += jnp.dot(a_ref[...], b_ref[...],
                            preferred_element_type=jnp.float32)

    @pl.when(pl.program_id(2) == pl.num_programs(2) - 1)
    def _():
        y = acc_ref[...] + bias_ref[...]
        if act == "prelu":
            y = jnp.where(y >= 0, y, slope * y)
        elif act == "relu":
            y = jnp.maximum(y, 0.0)
        o_ref[...] = y.astype(o_ref.dtype)


def matmul_bias_act(a, b, bias=None, act=None, slope=PRELU_SLOPE,
                    out_dtype=jnp.float32):
    """out = act(a @ b + bias).  a:(M,K)  b:(K,N)  bias:(M,) broadcast per row.
    Operands are fed to the MXU as bf16; accumulation is fp32."""
    M, K = a.shape
    K2, N = b.shape
    assert K == K2
    a = a.astype(jnp.bfloat16)
    b = b.astype(jnp.bfloat16)
    if bias is None:
        bias = jnp.zeros((M,), jnp.float32)
    bias = bias.astype(jnp.float32).reshape(M, 1)

    # Rows: keep at least one sublane group; otherwise only exact divisors.
    Mp = max(M, 8)
    tm, Mp = _pick_tile(Mp, ROW_TILE_CAP, 8)
    tn, Np = _pick_tile(N, LANE_TILE_CAP, 128)
    if Mp != M:
        a = jnp.pad(a, ((0, Mp - M), (0, 0)))
        bias = jnp.pad(bias, ((0, Mp - M), (0, 0)))
    if Np != N:
        b = jnp.pad(b, ((0, 0), (0, Np - N)))

    if K <= MAX_SINGLE_K:
        grid = (Mp // tm, Np // tn)
        kernel = functools.partial(_mm_kernel, act=act, slope=slope)
        in_specs = [
            pl.BlockSpec((tm, K), lambda i, j: (i, 0)),
            pl.BlockSpec((K, tn), lambda i, j: (0, j)),
            pl.BlockSpec((tm, 1), lambda i, j: (i, 0)),
        ]
        out_specs = pl.BlockSpec((tm, tn), lambda i, j: (i, j))
        scratch = []
        dims = ("parallel", "parallel")
    else:
        tk = 512
        Kp = _round_up(K, tk)
        if Kp != K:
            a = jnp.pad(a, ((0, 0), (0, Kp - K)))
            b = jnp.pad(b, ((0, Kp - K), (0, 0)))
        grid = (Mp // tm, Np // tn, Kp // tk)
        kernel = functools.partial(_mm_kernel_acc, act=act, slope=slope)
        in_specs = [
            pl.BlockSpec((tm, tk), lambda i, j, k: (i, k)),
            pl.BlockSpec((tk, tn), lambda i, j, k: (k, j)),
            pl.BlockSpec((tm, 1), lambda i, j, k: (i, 0)),
        ]
        out_specs = pl.BlockSpec((tm, tn), lambda i, j, k: (i, j))
        scratch = [pltpu.VMEM((tm, tn), jnp.float32)]
        dims = ("parallel", "parallel", "arbitrary")

    out = pl.pallas_call(
        kernel,
        out_shape=jax.ShapeDtypeStruct((Mp, Np), out_dtype),
        grid_spec=pltpu.PrefetchScalarGridSpec(
            num_scalar_prefetch=0,
            grid=grid,
            in_specs=in_specs,
            out_specs=out_specs,
            scratch_shapes=scratch,
        ),
        compiler_params=pltpu.CompilerParams(
            dimension_semantics=dims,
            vmem_limit_bytes=VMEM_LIMIT_BYTES),
    )(a, b, bias)

    if Mp != M or Np != N:
        out = out[:M, :N]
    return out


# ------------------------------ glue layers -------------------------------- #
def conv2d_cf(x, wp, *, k, stride=1, padding=0, act=None,
              out_dtype=jnp.bfloat16):
    """Conv2d in channel-first flattened form.
    x: (Cin, B, H, W); wp["w"]: (Cout, Cin*k*k) bf16; wp["b"]: (Cout,)."""
    Cin, B, H, W = x.shape
    wmat, bias = wp["w"], wp["b"]
    Cout = wmat.shape[0]
    if k == 1:
        assert stride == 1 and padding == 0
        patches = x.reshape(Cin, B * H * W)          # pure reshape, no copy
        OH, OW = H, W
    else:
        # TODO(synk): patch gather could move in-kernel (scalar-prefetched
        # offsets) to avoid the k*k-slice im2col copy; kept host-side here.
        xb = x.astype(jnp.bfloat16)
        xp = jnp.pad(xb, ((0, 0), (0, 0),
                          (padding, padding), (padding, padding)))
        OH = (H + 2 * padding - k) // stride + 1
        OW = (W + 2 * padding - k) // stride + 1
        slices = [xp[:, :, i:i + stride * OH:stride, j:j + stride * OW:stride]
                  for i in range(k) for j in range(k)]
        patches = jnp.stack(slices, axis=1).reshape(Cin * k * k, B * OH * OW)
    out = matmul_bias_act(wmat, patches, bias, act=act, out_dtype=out_dtype)
    return out.reshape(Cout, B, OH, OW)


def conv_transpose_k8s4p2_cf(x, wp, *, act="prelu", out_dtype=jnp.bfloat16):
    """ConvTranspose2d(k=8, stride=4, pad=2) computed directly:
    one outer-product matmul + 4 shifted pixel-shuffle adds (col2im).
    x: (Cin, B, H, W); wp["w"]: (Cout*64, Cin) bf16; wp["b"]: (Cout,)."""
    Cin, B, H, W = x.shape
    wmat, bias = wp["w"], wp["b"]
    Cout = wmat.shape[0] // 64
    OH, OW = 4 * H, 4 * W

    cols = matmul_bias_act(wmat, x.reshape(Cin, B * H * W),
                           bias=None, act=None, out_dtype=jnp.float32)
    # rows ordered (co, kh, kw); split kh=4a+r, kw=4c+s (stride 4).
    cols = cols.reshape(Cout, 2, 4, 2, 4, B, H, W)
    canvas = jnp.zeros((Cout, B, OH, OW), jnp.float32)
    for a in (0, 1):
        for c in (0, 1):
            blk = cols[:, a, :, c]                       # (Cout, 4, 4, B, H, W)
            img = blk.transpose(0, 3, 4, 1, 5, 2).reshape(Cout, B, OH, OW)
            dy, dx = 4 * a - 2, 4 * c - 2
            ys, ye = max(0, dy), min(OH, OH + dy)
            xs, xe = max(0, dx), min(OW, OW + dx)
            canvas = canvas.at[:, :, ys:ye, xs:xe].add(
                img[:, :, ys - dy:ye - dy, xs - dx:xe - dx])
    y = canvas + bias.reshape(Cout, 1, 1, 1)
    if act == "prelu":
        y = jnp.where(y >= 0, y, PRELU_SLOPE * y)
    elif act == "relu":
        y = jnp.maximum(y, 0.0)
    return y.astype(out_dtype)


def _interp_matrix(in_size, scale):
    """PyTorch bilinear, align_corners=False, as a (out,in) matrix."""
    out_size = in_size * scale
    A = np.zeros((out_size, in_size), dtype=np.float32)
    for o in range(out_size):
        src = (o + 0.5) / scale - 0.5
        if src < 0.0:
            src = 0.0
        x0 = int(math.floor(src))
        x1 = min(x0 + 1, in_size - 1)
        frac = src - x0
        A[o, x0] += 1.0 - frac
        A[o, x1] += frac
    return jnp.asarray(A)


def bilinear_upsample_cf(x, scale):
    """x: (C, B, H, W) -> (C, B, H*scale, W*scale), separable bilinear."""
    C, B, H, W = x.shape
    OH, OW = H * scale, W * scale
    A_h, A_w = _interp_matrix(H, scale), _interp_matrix(W, scale)
    y = matmul_bias_act(x.reshape(C * B * H, W), A_w.T, None,
                        act=None, out_dtype=jnp.float32)
    y = y.reshape(C, B, H, OW).transpose(0, 1, 3, 2).reshape(C * B * OW, H)
    y = matmul_bias_act(y, A_h.T, None, act=None, out_dtype=jnp.float32)
    return y.reshape(C, B, OW, OH).transpose(0, 1, 3, 2)


# ----------------------------- FeedbackBlock ------------------------------- #
def feedback_block(x, last_hidden, bp, nf, ng):
    _, B, H, W = x.shape
    t = jnp.concatenate([x, last_hidden], axis=0)
    t = conv2d_cf(t, bp["compress_in"], k=1, act="prelu")
    lr_features = [t]
    hr_features = []
    for idx in range(ng):
        # torch.empty -> zeros; the reference fill loop overwrites the same
        # channel slice for every i, so only lr_features[idx-1] survives.
        LD_L = jnp.zeros((nf * (idx + 1), B, H, W), jnp.bfloat16)
        if idx > 0:
            LD_L = LD_L.at[nf * idx:nf * (idx + 1)].set(lr_features[idx - 1])
            LD_L = conv2d_cf(LD_L, bp["uptran"][idx - 1], k=1, act="prelu")
        LD_H = conv_transpose_k8s4p2_cf(LD_L, bp["up"][idx], act="prelu")
        hr_features.append(LD_H)
        HRh, HRw = hr_features[0].shape[2], hr_features[0].shape[3]
        LD_H2 = jnp.zeros((nf * (idx + 1), B, HRh, HRw), jnp.bfloat16)
        if idx > 0:
            LD_H2 = LD_H2.at[nf * idx:nf * (idx + 1)].set(hr_features[idx - 1])
            LD_H2 = conv2d_cf(LD_H2, bp["downtran"][idx - 1], k=1, act="prelu")
        LD_L2 = conv2d_cf(LD_H2, bp["down"][idx], k=8, stride=4, padding=2,
                          act="prelu")
        lr_features.append(LD_L2)
    out = jnp.concatenate(lr_features[1:], axis=0)
    out = conv2d_cf(out, bp["compress_out"], k=1, act="prelu")
    return out


# ---------------------------- weight packing -------------------------------- #
def pack_params(p):
    """Pre-pack PyTorch-layout weights into bf16 matmul matrices (hoisted
    out of the num_steps / num_groups loops)."""
    def pc(q):                       # conv weight (Cout, Cin, k, k)
        co = q["w"].shape[0]
        return {"w": q["w"].reshape(co, -1).astype(jnp.bfloat16),
                "b": q["b"].astype(jnp.float32)}

    def pd(q):                       # deconv weight (Cin, Cout, 8, 8)
        ci, co, kh, kw = q["w"].shape
        wm = q["w"].transpose(1, 2, 3, 0).reshape(co * kh * kw, ci)
        return {"w": wm.astype(jnp.bfloat16), "b": q["b"].astype(jnp.float32)}

    blk = p["block"]
    return {
        "conv_in": pc(p["conv_in"]),
        "feat_in": pc(p["feat_in"]),
        "block": {
            "compress_in": pc(blk["compress_in"]),
            "up": [pd(q) for q in blk["up"]],
            "down": [pc(q) for q in blk["down"]],
            "uptran": [pc(q) for q in blk["uptran"]],
            "downtran": [pc(q) for q in blk["downtran"]],
            "compress_out": pc(blk["compress_out"]),
        },
        "out": pd(p["out"]),
        "conv_out": pc(p["conv_out"]),
        "fc1": {"w": p["fc1"]["w"].astype(jnp.bfloat16),
                "b": p["fc1"]["b"].astype(jnp.float32)},
        "fc2": {"w": p["fc2"]["w"].astype(jnp.bfloat16),
                "b": p["fc2"]["b"].astype(jnp.float32)},
    }


# ------------------------------ full forward ------------------------------- #
def sr_projection_forward(params, x, *, nf, ng, num_steps, upscale):
    pk = pack_params(params)
    B = x.shape[0]
    mean = RGB_MEAN.reshape(3, 1, 1, 1)

    xc = jnp.transpose(x, (1, 0, 2, 3)).astype(jnp.float32)   # (C, B, H, W)
    xc = xc - mean                                            # sub_mean (std=1)
    inter_res = bilinear_upsample_cf(xc, upscale)             # (3, B, 4H, 4W)

    a = conv2d_cf(xc, pk["conv_in"], k=3, padding=1, act="prelu")
    a = conv2d_cf(a, pk["feat_in"], k=1, act="prelu")

    last_hidden = a                                           # should_reset copy
    out_img = None
    for _ in range(num_steps):
        h = feedback_block(a, last_hidden, pk["block"], nf, ng)
        last_hidden = h
        y = conv_transpose_k8s4p2_cf(h, pk["out"], act="prelu")
        y = conv2d_cf(y, pk["conv_out"], k=3, padding=1, act=None,
                      out_dtype=jnp.float32)
        y = inter_res + y
        y = y + mean                                          # add_mean
        out_img = y

    # outs = outs[-1:]; fc head:  transpose030112 -> Linear(8,32) -> ReLU ->
    # Linear(32,1) -> ReLU -> transpose031323 -> squeeze -> stack.
    C, _, OH, OW = out_img.shape
    xt = jnp.transpose(out_img, (1, 0, 2, 3)).reshape(B, C * OH * OW)
    h1 = matmul_bias_act(pk["fc1"]["w"], xt, pk["fc1"]["b"], act="relu",
                         out_dtype=jnp.float32)               # (32, C*H*W)
    h2 = matmul_bias_act(pk["fc2"]["w"], h1, pk["fc2"]["b"], act="relu",
                         out_dtype=jnp.float32)               # (1,  C*H*W)
    t = h2.reshape(C, OH, OW)
    return jnp.stack([t], axis=0)                             # (1, C, H*up, W*up)


# ----------------------------- parameter init ------------------------------ #
def init_params(key, in_ch, out_ch, nf, ng):
    it = iter(jax.random.split(key, 64))

    def conv_p(cin, cout, k):
        return {"w": jax.random.normal(next(it), (cout, cin, k, k), jnp.float32) * 0.05,
                "b": jax.random.normal(next(it), (cout,), jnp.float32) * 0.05}

    def deconv_p(cin, cout, k):   # PyTorch ConvTranspose2d layout (Cin, Cout, k, k)
        return {"w": jax.random.normal(next(it), (cin, cout, k, k), jnp.float32) * 0.05,
                "b": jax.random.normal(next(it), (cout,), jnp.float32) * 0.05}

    return {
        "conv_in": conv_p(in_ch, 4 * nf, 3),
        "feat_in": conv_p(4 * nf, nf, 1),
        "block": {
            "compress_in": conv_p(2 * nf, nf, 1),
            "up": [deconv_p(nf, nf, 8) for _ in range(ng)],
            "down": [conv_p(nf, nf, 8) for _ in range(ng)],
            "uptran": [conv_p(nf * (i + 2), nf, 1) for i in range(ng - 1)],
            "downtran": [conv_p(nf * (i + 2), nf, 1) for i in range(ng - 1)],
            "compress_out": conv_p(ng * nf, nf, 1),
        },
        "out": deconv_p(nf, nf, 8),
        "conv_out": conv_p(nf, out_ch, 3),
        "fc1": {"w": jax.random.normal(next(it), (32, 8), jnp.float32) * 0.05,
                "b": jax.random.normal(next(it), (32,), jnp.float32) * 0.05},
        "fc2": {"w": jax.random.normal(next(it), (1, 32), jnp.float32) * 0.05,
                "b": jax.random.normal(next(it), (1,), jnp.float32) * 0.05},
    }


if __name__ == "__main__":
    # Linear(8, 32) in self.fc acts on the batch axis after transpose030112,
    # so the batch size must be 8.
    BATCH, IN_CH, OUT_CH = 8, 3, 3
    NF, NG, NUM_STEPS, UPSCALE = 8, 2, 2, 4
    H = W = 8

    root = jax.random.PRNGKey(0)
    k_in, k_par = jax.random.split(root)
    x = jax.random.normal(k_in, (BATCH, IN_CH, H, W), jnp.float32)
    params = init_params(k_par, IN_CH, OUT_CH, NF, NG)

    fwd = jax.jit(functools.partial(sr_projection_forward, nf=NF, ng=NG,
                                    num_steps=NUM_STEPS, upscale=UPSCALE))
    out = jax.block_until_ready(fwd(params, x))
    assert out.shape == (1, OUT_CH, H * UPSCALE, W * UPSCALE), out.shape
    assert bool(jnp.all(jnp.isfinite(out)))
    print("KERNEL_OK")
</pallas_src>

<mosaic_0001>
module attributes {stable_mosaic.version = 11 : i64} {
  func.func @_mm_kernel(%arg0: i32, %arg1: i32, %arg2: memref<512x8xbf16, #tpu.memory_space<vmem>>, %arg3: memref<8x512xbf16, #tpu.memory_space<vmem>>, %arg4: memref<512x1xf32, #tpu.memory_space<vmem>>, %arg5: memref<512x512xf32, #tpu.memory_space<vmem>>) attributes {dimension_semantics = [#tpu.dimension_semantics<parallel>, #tpu.dimension_semantics<parallel>], iteration_bounds = array<i64: 1, 1>, scalar_prefetch = 0 : i64, scratch_operands = 0 : i64, tpu.core_type = #tpu.core_type<tc>, window_params = [{transform_indices = @transform_0, window_bounds = array<i64: 512, 8>}, {transform_indices = @transform_1, window_bounds = array<i64: 8, 512>}, {transform_indices = @transform_2, window_bounds = array<i64: 512, 1>}, {transform_indices = @transform_3, window_bounds = array<i64: 512, 512>}]} {
    %c0 = arith.constant 0 : index
    %c0_0 = arith.constant 0 : index
    %0 = vector.load %arg2[%c0, %c0_0] : memref<512x8xbf16, #tpu.memory_space<vmem>>, vector<512x8xbf16>
    %c0_1 = arith.constant 0 : index
    %c0_2 = arith.constant 0 : index
    %1 = vector.load %arg3[%c0_1, %c0_2] : memref<8x512xbf16, #tpu.memory_space<vmem>>, vector<8x512xbf16>
    %cst = arith.constant dense<0.000000e+00> : vector<512x512xf32>
    %2 = tpu.matmul %0, %1, %cst {dimension_numbers = #tpu.dot_dimension_numbers<[1], [0], [0], [1], [0, 0, 1, 1], [], []>} : vector<512x8xbf16>, vector<8x512xbf16>, vector<512x512xf32> -> vector<512x512xf32>
    %c0_3 = arith.constant 0 : index
    %c0_4 = arith.constant 0 : index
    %3 = vector.load %arg4[%c0_3, %c0_4] : memref<512x1xf32, #tpu.memory_space<vmem>>, vector<512x1xf32>
    %4 = vector.broadcast %3 : vector<512x1xf32> to vector<512x512xf32>
    %5 = arith.addf %2, %4 : vector<512x512xf32>
    %c0_5 = arith.constant 0 : index
    %c0_6 = arith.constant 0 : index
    %6 = vector.load %arg5[%c0_5, %c0_6] : memref<512x512xf32, #tpu.memory_space<vmem>>, vector<512x512xf32>
    tpu.vector_store %arg5[%c0_5, %c0_6], %5 {strides = array<i32>} : memref<512x512xf32, #tpu.memory_space<vmem>>, vector<512x512xf32>,
    return
  }
  func.func @transform_0(%arg0: i32, %arg1: i32) -> (i32, i32) {
    %c0_i32 = arith.constant 0 : i32
    %c0_i32_0 = arith.constant 0 : i32
    return %arg0, %c0_i32 : i32, i32
  }
  func.func @transform_1(%arg0: i32, %arg1: i32) -> (i32, i32) {
    %c0_i32 = arith.constant 0 : i32
    %c0_i32_0 = arith.constant 0 : i32
    return %c0_i32, %arg1 : i32, i32
  }
  func.func @transform_2(%arg0: i32, %arg1: i32) -> (i32, i32) {
    %c0_i32 = arith.constant 0 : i32
    %c0_i32_0 = arith.constant 0 : i32
    return %arg0, %c0_i32 : i32, i32
  }
  func.func @transform_3(%arg0: i32, %arg1: i32) -> (i32, i32) {
    %c0_i32 = arith.constant 0 : i32
    return %arg0, %arg1 : i32, i32
  }
}

module attributes {stable_mosaic.version = 11 : i64} {
  func.func @_mm_kernel(%arg0: i32, %arg1: i32, %arg2: memref<8x16xbf16, #tpu.memory_space<vmem>>, %arg3: memref<16x2048xbf16, #tpu.memory_space<vmem>>, %arg4: memref<8x1xf32, #tpu.memory_space<vmem>>, %arg5: memref<8x2048xbf16, #tpu.memory_space<vmem>>) attributes {dimension_semantics = [#tpu.dimension_semantics<parallel>, #tpu.dimension_semantics<parallel>], iteration_bounds = array<i64: 1, 4>, scalar_prefetch = 0 : i64, scratch_operands = 0 : i64, tpu.core_type = #tpu.core_type<tc>, window_params = [{transform_indices = @transform_0, window_bounds = array<i64: 8, 16>}, {transform_indices = @transform_1, window_bounds = array<i64: 16, 2048>}, {transform_indices = @transform_2, window_bounds = array<i64: 8, 1>}, {transform_indices = @transform_3, window_bounds = array<i64: 8, 2048>}]} {
    %c0 = arith.constant 0 : index
    %c0_0 = arith.constant 0 : index
    %0 = vector.load %arg2[%c0, %c0_0] : memref<8x16xbf16, #tpu.memory_space<vmem>>, vector<8x16xbf16>
    %c0_1 = arith.constant 0 : index
    %c0_2 = arith.constant 0 : index
    %1 = vector.load %arg3[%c0_1, %c0_2] : memref<16x2048xbf16, #tpu.memory_space<vmem>>, vector<16x2048xbf16>
    %cst = arith.constant dense<0.000000e+00> : vector<8x2048xf32>
    %2 = tpu.matmul %0, %1, %cst {dimension_numbers = #tpu.dot_dimension_numbers<[1], [0], [0], [1], [0, 0, 1, 1], [], []>} : vector<8x16xbf16>, vector<16x2048xbf16>, vector<8x2048xf32> -> vector<8x2048xf32>
    %c0_3 = arith.constant 0 : index
    %c0_4 = arith.constant 0 : index
    %3 = vector.load %arg4[%c0_3, %c0_4] : memref<8x1xf32, #tpu.memory_space<vmem>>, vector<8x1xf32>
    %4 = vector.broadcast %3 : vector<8x1xf32> to vector<8x2048xf32>
    %5 = arith.addf %2, %4 : vector<8x2048xf32>
    %cst_5 = arith.constant 0.000000e+00 : f32
    %6 = vector.broadcast %cst_5 : f32 to vector<8x2048xf32>
    %7 = arith.cmpf oge, %5, %6 : vector<8x2048xf32>
    %cst_6 = arith.constant 2.000000e-01 : f32
    %8 = vector.broadcast %cst_6 : f32 to vector<8x2048xf32>
    %9 = arith.mulf %8, %5 : vector<8x2048xf32>
    %10 = arith.select %7, %5, %9 : vector<8x2048xi1>, vector<8x2048xf32>
    %11 = arith.truncf %10 : vector<8x2048xf32> to vector<8x2048xbf16>
    %c0_7 = arith.constant 0 : index
    %c0_8 = arith.constant 0 : index
    %12 = vector.load %arg5[%c0_7, %c0_8] : memref<8x2048xbf16, #tpu.memory_space<vmem>>, vector<8x2048xbf16>
    tpu.vector_store %arg5[%c0_7, %c0_8], %11 {strides = array<i32>} : memref<8x2048xbf16, #tpu.memory_space<vmem>>, vector<8x2048xbf16>,
    return
  }
  func.func @transform_0(%arg0: i32, %arg1: i32) -> (i32, i32) {
    %c0_i32 = arith.constant 0 : i32
    %c0_i32_0 = arith.constant 0 : i32
    return %arg0, %c0_i32 : i32, i32
  }
  func.func @transform_1(%arg0: i32, %arg1: i32) -> (i32, i32) {
    %c0_i32 = arith.constant 0 : i32
    %c0_i32_0 = arith.constant 0 : i32
    return %c0_i32, %arg1 : i32, i32
  }
  func.func @transform_2(%arg0: i32, %arg1: i32) -> (i32, i32) {
    %c0_i32 = arith.constant 0 : i32
    %c0_i32_0 = arith.constant 0 : i32
    return %arg0, %c0_i32 : i32, i32
  }
  func.func @transform_3(%arg0: i32, %arg1: i32) -> (i32, i32) {
    %c0_i32 = arith.constant 0 : i32
    return %arg0, %arg1 : i32, i32
  }
}

module attributes {stable_mosaic.version = 11 : i64} {
  func.func @_mm_kernel(%arg0: i32, %arg1: i32, %arg2: memref<8x512xbf16, #tpu.memory_space<vmem>>, %arg3: memref<512x512xbf16, #tpu.memory_space<vmem>>, %arg4: memref<8x1xf32, #tpu.memory_space<vmem>>, %arg5: memref<8x512xbf16, #tpu.memory_space<vmem>>) attributes {dimension_semantics = [#tpu.dimension_semantics<parallel>, #tpu.dimension_semantics<parallel>], iteration_bounds = array<i64: 1, 1>, scalar_prefetch = 0 : i64, scratch_operands = 0 : i64, tpu.core_type = #tpu.core_type<tc>, window_params = [{transform_indices = @transform_0, window_bounds = array<i64: 8, 512>}, {transform_indices = @transform_1, window_bounds = array<i64: 512, 512>}, {transform_indices = @transform_2, window_bounds = array<i64: 8, 1>}, {transform_indices = @transform_3, window_bounds = array<i64: 8, 512>}]} {
    %c0 = arith.constant 0 : index
    %c0_0 = arith.constant 0 : index
    %0 = vector.load %arg2[%c0, %c0_0] : memref<8x512xbf16, #tpu.memory_space<vmem>>, vector<8x512xbf16>
    %c0_1 = arith.constant 0 : index
    %c0_2 = arith.constant 0 : index
    %1 = vector.load %arg3[%c0_1, %c0_2] : memref<512x512xbf16, #tpu.memory_space<vmem>>, vector<512x512xbf16>
    %cst = arith.constant dense<0.000000e+00> : vector<8x512xf32>
    %2 = tpu.matmul %0, %1, %cst {dimension_numbers = #tpu.dot_dimension_numbers<[1], [0], [0], [1], [0, 0, 1, 1], [], []>} : vector<8x512xbf16>, vector<512x512xbf16>, vector<8x512xf32> -> vector<8x512xf32>
    %c0_3 = arith.constant 0 : index
    %c0_4 = arith.constant 0 : index
    %3 = vector.load %arg4[%c0_3, %c0_4] : memref<8x1xf32, #tpu.memory_space<vmem>>, vector<8x1xf32>
    %4 = vector.broadcast %3 : vector<8x1xf32> to vector<8x512xf32>
    %5 = arith.addf %2, %4 : vector<8x512xf32>
    %cst_5 = arith.constant 0.000000e+00 : f32
    %6 = vector.broadcast %cst_5 : f32 to vector<8x512xf32>
    %7 = arith.cmpf oge, %5, %6 : vector<8x512xf32>
    %cst_6 = arith.constant 2.000000e-01 : f32
    %8 = vector.broadcast %cst_6 : f32 to vector<8x512xf32>
    %9 = arith.mulf %8, %5 : vector<8x512xf32>
    %10 = arith.select %7, %5, %9 : vector<8x512xi1>, vector<8x512xf32>
    %11 = arith.truncf %10 : vector<8x512xf32> to vector<8x512xbf16>
    %c0_7 = arith.constant 0 : index
    %c0_8 = arith.constant 0 : index
    %12 = vector.load %arg5[%c0_7, %c0_8] : memref<8x512xbf16, #tpu.memory_space<vmem>>, vector<8x512xbf16>
    tpu.vector_store %arg5[%c0_7, %c0_8], %11 {strides = array<i32>} : memref<8x512xbf16, #tpu.memory_space<vmem>>, vector<8x512xbf16>,
    return
  }
  func.func @transform_0(%arg0: i32, %arg1: i32) -> (i32, i32) {
    %c0_i32 = arith.constant 0 : i32
    %c0_i32_0 = arith.constant 0 : i32
    return %arg0, %c0_i32 : i32, i32
  }
  func.func @transform_1(%arg0: i32, %arg1: i32) -> (i32, i32) {
    %c0_i32 = arith.constant 0 : i32
    %c0_i32_0 = arith.constant 0 : i32
    return %c0_i32, %arg1 : i32, i32
  }
  func.func @transform_2(%arg0: i32, %arg1: i32) -> (i32, i32) {
    %c0_i32 = arith.constant 0 : i32
    %c0_i32_0 = arith.constant 0 : i32
    return %arg0, %c0_i32 : i32, i32
  }
  func.func @transform_3(%arg0: i32, %arg1: i32) -> (i32, i32) {
    %c0_i32 = arith.constant 0 : i32
    return %arg0, %arg1 : i32, i32
  }
}

module attributes {stable_mosaic.version = 11 : i64} {
  func.func @_mm_kernel(%arg0: i32, %arg1: i32, %arg2: memref<8x512xbf16, #tpu.memory_space<vmem>>, %arg3: memref<512x512xbf16, #tpu.memory_space<vmem>>, %arg4: memref<8x1xf32, #tpu.memory_space<vmem>>, %arg5: memref<8x512xbf16, #tpu.memory_space<vmem>>) attributes {dimension_semantics = [#tpu.dimension_semantics<parallel>, #tpu.dimension_semantics<parallel>], iteration_bounds = array<i64: 1, 1>, scalar_prefetch = 0 : i64, scratch_operands = 0 : i64, tpu.core_type = #tpu.core_type<tc>, window_params = [{transform_indices = @transform_0, window_bounds = array<i64: 8, 512>}, {transform_indices = @transform_1, window_bounds = array<i64: 512, 512>}, {transform_indices = @transform_2, window_bounds = array<i64: 8, 1>}, {transform_indices = @transform_3, window_bounds = array<i64: 8, 512>}]} {
    %c0 = arith.constant 0 : index
    %c0_0 = arith.constant 0 : index
    %0 = vector.load %arg2[%c0, %c0_0] : memref<8x512xbf16, #tpu.memory_space<vmem>>, vector<8x512xbf16>
    %c0_1 = arith.constant 0 : index
    %c0_2 = arith.constant 0 : index
    %1 = vector.load %arg3[%c0_1, %c0_2] : memref<512x512xbf16, #tpu.memory_space<vmem>>, vector<512x512xbf16>
    %cst = arith.constant dense<0.000000e+00> : vector<8x512xf32>
    %2 = tpu.matmul %0, %1, %cst {dimension_numbers = #tpu.dot_dimension_numbers<[1], [0], [0], [1], [0, 0, 1, 1], [], []>} : vector<8x512xbf16>, vector<512x512xbf16>, vector<8x512xf32> -> vector<8x512xf32>
    %c0_3 = arith.constant 0 : index
    %c0_4 = arith.constant 0 : index
    %3 = vector.load %arg4[%c0_3, %c0_4] : memref<8x1xf32, #tpu.memory_space<vmem>>, vector<8x1xf32>
    %4 = vector.broadcast %3 : vector<8x1xf32> to vector<8x512xf32>
    %5 = arith.addf %2, %4 : vector<8x512xf32>
    %cst_5 = arith.constant 0.000000e+00 : f32
    %6 = vector.broadcast %cst_5 : f32 to vector<8x512xf32>
    %7 = arith.cmpf oge, %5, %6 : vector<8x512xf32>
    %cst_6 = arith.constant 2.000000e-01 : f32
    %8 = vector.broadcast %cst_6 : f32 to vector<8x512xf32>
    %9 = arith.mulf %8, %5 : vector<8x512xf32>
    %10 = arith.select %7, %5, %9 : vector<8x512xi1>, vector<8x512xf32>
    %11 = arith.truncf %10 : vector<8x512xf32> to vector<8x512xbf16>
    %c0_7 = arith.constant 0 : index
    %c0_8 = arith.constant 0 : index
    %12 = vector.load %arg5[%c0_7, %c0_8] : memref<8x512xbf16, #tpu.memory_space<vmem>>, vector<8x512xbf16>
    tpu.vector_store %arg5[%c0_7, %c0_8], %11 {strides = array<i32>} : memref<8x512xbf16, #tpu.memory_space<vmem>>, vector<8x512xbf16>,
    return
  }
  func.func @transform_0(%arg0: i32, %arg1: i32) -> (i32, i32) {
    %c0_i32 = arith.constant 0 : i32
    %c0_i32_0 = arith.constant 0 : i32
    return %arg0, %c0_i32 : i32, i32
  }
  func.func @transform_1(%arg0: i32, %arg1: i32) -> (i32, i32) {
    %c0_i32 = arith.constant 0 : i32
    %c0_i32_0 = arith.constant 0 : i32
    return %c0_i32, %arg1 : i32, i32
  }
  func.func @transform_2(%arg0: i32, %arg1: i32) -> (i32, i32) {
    %c0_i32 = arith.constant 0 : i32
    %c0_i32_0 = arith.constant 0 : i32
    return %arg0, %c0_i32 : i32, i32
  }
  func.func @transform_3(%arg0: i32, %arg1: i32) -> (i32, i32) {
    %c0_i32 = arith.constant 0 : i32
    return %arg0, %arg1 : i32, i32
  }
}

module attributes {stable_mosaic.version = 11 : i64} {
  func.func @_mm_kernel(%arg0: i32, %arg1: i32, %arg2: memref<8x16xbf16, #tpu.memory_space<vmem>>, %arg3: memref<16x512xbf16, #tpu.memory_space<vmem>>, %arg4: memref<8x1xf32, #tpu.memory_space<vmem>>, %arg5: memref<8x512xbf16, #tpu.memory_space<vmem>>) attributes {dimension_semantics = [#tpu.dimension_semantics<parallel>, #tpu.dimension_semantics<parallel>], iteration_bounds = array<i64: 1, 1>, scalar_prefetch = 0 : i64, scratch_operands = 0 : i64, tpu.core_type = #tpu.core_type<tc>, window_params = [{transform_indices = @transform_0, window_bounds = array<i64: 8, 16>}, {transform_indices = @transform_1, window_bounds = array<i64: 16, 512>}, {transform_indices = @transform_2, window_bounds = array<i64: 8, 1>}, {transform_indices = @transform_3, window_bounds = array<i64: 8, 512>}]} {
    %c0 = arith.constant 0 : index
    %c0_0 = arith.constant 0 : index
    %0 = vector.load %arg2[%c0, %c0_0] : memref<8x16xbf16, #tpu.memory_space<vmem>>, vector<8x16xbf16>
    %c0_1 = arith.constant 0 : index
    %c0_2 = arith.constant 0 : index
    %1 = vector.load %arg3[%c0_1, %c0_2] : memref<16x512xbf16, #tpu.memory_space<vmem>>, vector<16x512xbf16>
    %cst = arith.constant dense<0.000000e+00> : vector<8x512xf32>
    %2 = tpu.matmul %0, %1, %cst {dimension_numbers = #tpu.dot_dimension_numbers<[1], [0], [0], [1], [0, 0, 1, 1], [], []>} : vector<8x16xbf16>, vector<16x512xbf16>, vector<8x512xf32> -> vector<8x512xf32>
    %c0_3 = arith.constant 0 : index
    %c0_4 = arith.constant 0 : index
    %3 = vector.load %arg4[%c0_3, %c0_4] : memref<8x1xf32, #tpu.memory_space<vmem>>, vector<8x1xf32>
    %4 = vector.broadcast %3 : vector<8x1xf32> to vector<8x512xf32>
    %5 = arith.addf %2, %4 : vector<8x512xf32>
    %cst_5 = arith.constant 0.000000e+00 : f32
    %6 = vector.broadcast %cst_5 : f32 to vector<8x512xf32>
    %7 = arith.cmpf oge, %5, %6 : vector<8x512xf32>
    %cst_6 = arith.constant 2.000000e-01 : f32
    %8 = vector.broadcast %cst_6 : f32 to vector<8x512xf32>
    %9 = arith.mulf %8, %5 : vector<8x512xf32>
    %10 = arith.select %7, %5, %9 : vector<8x512xi1>, vector<8x512xf32>
    %11 = arith.truncf %10 : vector<8x512xf32> to vector<8x512xbf16>
    %c0_7 = arith.constant 0 : index
    %c0_8 = arith.constant 0 : index
    %12 = vector.load %arg5[%c0_7, %c0_8] : memref<8x512xbf16, #tpu.memory_space<vmem>>, vector<8x512xbf16>
    tpu.vector_store %arg5[%c0_7, %c0_8], %11 {strides = array<i32>} : memref<8x512xbf16, #tpu.memory_space<vmem>>, vector<8x512xbf16>,
    return
  }
  func.func @transform_0(%arg0: i32, %arg1: i32) -> (i32, i32) {
    %c0_i32 = arith.constant 0 : i32
    %c0_i32_0 = arith.constant 0 : i32
    return %arg0, %c0_i32 : i32, i32
  }
  func.func @transform_1(%arg0: i32, %arg1: i32) -> (i32, i32) {
    %c0_i32 = arith.constant 0 : i32
    %c0_i32_0 = arith.constant 0 : i32
    return %c0_i32, %arg1 : i32, i32
  }
  func.func @transform_2(%arg0: i32, %arg1: i32) -> (i32, i32) {
    %c0_i32 = arith.constant 0 : i32
    %c0_i32_0 = arith.constant 0 : i32
    return %arg0, %c0_i32 : i32, i32
  }
  func.func @transform_3(%arg0: i32, %arg1: i32) -> (i32, i32) {
    %c0_i32 = arith.constant 0 : i32
    return %arg0, %arg1 : i32, i32
  }
}

module attributes {stable_mosaic.version = 11 : i64} {
  func.func @_mm_kernel(%arg0: i32, %arg1: i32, %arg2: memref<512x8xbf16, #tpu.memory_space<vmem>>, %arg3: memref<8x512xbf16, #tpu.memory_space<vmem>>, %arg4: memref<512x1xf32, #tpu.memory_space<vmem>>, %arg5: memref<512x512xf32, #tpu.memory_space<vmem>>) attributes {dimension_semantics = [#tpu.dimension_semantics<parallel>, #tpu.dimension_semantics<parallel>], iteration_bounds = array<i64: 1, 1>, scalar_prefetch = 0 : i64, scratch_operands = 0 : i64, tpu.core_type = #tpu.core_type<tc>, window_params = [{transform_indices = @transform_0, window_bounds = array<i64: 512, 8>}, {transform_indices = @transform_1, window_bounds = array<i64: 8, 512>}, {transform_indices = @transform_2, window_bounds = array<i64: 512, 1>}, {transform_indices = @transform_3, window_bounds = array<i64: 512, 512>}]} {
    %c0 = arith.constant 0 : index
    %c0_0 = arith.constant 0 : index
    %0 = vector.load %arg2[%c0, %c0_0] : memref<512x8xbf16, #tpu.memory_space<vmem>>, vector<512x8xbf16>
    %c0_1 = arith.constant 0 : index
    %c0_2 = arith.constant 0 : index
    %1 = vector.load %arg3[%c0_1, %c0_2] : memref<8x512xbf16, #tpu.memory_space<vmem>>, vector<8x512xbf16>
    %cst = arith.constant dense<0.000000e+00> : vector<512x512xf32>
    %2 = tpu.matmul %0, %1, %cst {dimension_numbers = #tpu.dot_dimension_numbers<[1], [0], [0], [1], [0, 0, 1, 1], [], []>} : vector<512x8xbf16>, vector<8x512xbf16>, vector<512x512xf32> -> vector<512x512xf32>
    %c0_3 = arith.constant 0 : index
    %c0_4 = arith.constant 0 : index
    %3 = vector.load %arg4[%c0_3, %c0_4] : memref<512x1xf32, #tpu.memory_space<vmem>>, vector<512x1xf32>
    %4 = vector.broadcast %3 : vector<512x1xf32> to vector<512x512xf32>
    %5 = arith.addf %2, %4 : vector<512x512xf32>
    %c0_5 = arith.constant 0 : index
    %c0_6 = arith.constant 0 : index
    %6 = vector.load %arg5[%c0_5, %c0_6] : memref<512x512xf32, #tpu.memory_space<vmem>>, vector<512x512xf32>
    tpu.vector_store %arg5[%c0_5, %c0_6], %5 {strides = array<i32>} : memref<512x512xf32, #tpu.memory_space<vmem>>, vector<512x512xf32>,
    return
  }
  func.func @transform_0(%arg0: i32, %arg1: i32) -> (i32, i32) {
    %c0_i32 = arith.constant 0 : i32
    %c0_i32_0 = arith.constant 0 : i32
    return %arg0, %c0_i32 : i32, i32
  }
  func.func @transform_1(%arg0: i32, %arg1: i32) -> (i32, i32) {
    %c0_i32 = arith.constant 0 : i32
    %c0_i32_0 = arith.constant 0 : i32
    return %c0_i32, %arg1 : i32, i32
  }
  func.func @transform_2(%arg0: i32, %arg1: i32) -> (i32, i32) {
    %c0_i32 = arith.constant 0 : i32
    %c0_i32_0 = arith.constant 0 : i32
    return %arg0, %c0_i32 : i32, i32
  }
  func.func @transform_3(%arg0: i32, %arg1: i32) -> (i32, i32) {
    %c0_i32 = arith.constant 0 : i32
    return %arg0, %arg1 : i32, i32
  }
}

module attributes {stable_mosaic.version = 11 : i64} {
  func.func @_mm_kernel(%arg0: i32, %arg1: i32, %arg2: memref<8x72xbf16, #tpu.memory_space<vmem>>, %arg3: memref<72x2048xbf16, #tpu.memory_space<vmem>>, %arg4: memref<8x1xf32, #tpu.memory_space<vmem>>, %arg5: memref<8x2048xf32, #tpu.memory_space<vmem>>) attributes {dimension_semantics = [#tpu.dimension_semantics<parallel>, #tpu.dimension_semantics<parallel>], iteration_bounds = array<i64: 1, 4>, scalar_prefetch = 0 : i64, scratch_operands = 0 : i64, tpu.core_type = #tpu.core_type<tc>, window_params = [{transform_indices = @transform_0, window_bounds = array<i64: 8, 72>}, {transform_indices = @transform_1, window_bounds = array<i64: 72, 2048>}, {transform_indices = @transform_2, window_bounds = array<i64: 8, 1>}, {transform_indices = @transform_3, window_bounds = array<i64: 8, 2048>}]} {
    %c0 = arith.constant 0 : index
    %c0_0 = arith.constant 0 : index
    %0 = vector.load %arg2[%c0, %c0_0] : memref<8x72xbf16, #tpu.memory_space<vmem>>, vector<8x72xbf16>
    %c0_1 = arith.constant 0 : index
    %c0_2 = arith.constant 0 : index
    %1 = vector.load %arg3[%c0_1, %c0_2] : memref<72x2048xbf16, #tpu.memory_space<vmem>>, vector<72x2048xbf16>
    %cst = arith.constant dense<0.000000e+00> : vector<8x2048xf32>
    %2 = tpu.matmul %0, %1, %cst {dimension_numbers = #tpu.dot_dimension_numbers<[1], [0], [0], [1], [0, 0, 1, 1], [], []>} : vector<8x72xbf16>, vector<72x2048xbf16>, vector<8x2048xf32> -> vector<8x2048xf32>
    %c0_3 = arith.constant 0 : index
    %c0_4 = arith.constant 0 : index
    %3 = vector.load %arg4[%c0_3, %c0_4] : memref<8x1xf32, #tpu.memory_space<vmem>>, vector<8x1xf32>
    %4 = vector.broadcast %3 : vector<8x1xf32> to vector<8x2048xf32>
    %5 = arith.addf %2, %4 : vector<8x2048xf32>
    %c0_5 = arith.constant 0 : index
    %c0_6 = arith.constant 0 : index
    %6 = vector.load %arg5[%c0_5, %c0_6] : memref<8x2048xf32, #tpu.memory_space<vmem>>, vector<8x2048xf32>
    tpu.vector_store %arg5[%c0_5, %c0_6], %5 {strides = array<i32>} : memref<8x2048xf32, #tpu.memory_space<vmem>>, vector<8x2048xf32>,
    return
  }
  func.func @transform_0(%arg0: i32, %arg1: i32) -> (i32, i32) {
    %c0_i32 = arith.constant 0 : i32
    %c0_i32_0 = arith.constant 0 : i32
    return %arg0, %c0_i32 : i32, i32
  }
  func.func @transform_1(%arg0: i32, %arg1: i32) -> (i32, i32) {
    %c0_i32 = arith.constant 0 : i32
    %c0_i32_0 = arith.constant 0 : i32
    return %c0_i32, %arg1 : i32, i32
  }
  func.func @transform_2(%arg0: i32, %arg1: i32) -> (i32, i32) {
    %c0_i32 = arith.constant 0 : i32
    %c0_i32_0 = arith.constant 0 : i32
    return %arg0, %c0_i32 : i32, i32
  }
  func.func @transform_3(%arg0: i32, %arg1: i32) -> (i32, i32) {
    %c0_i32 = arith.constant 0 : i32
    return %arg0, %arg1 : i32, i32
  }
}

module attributes {stable_mosaic.version = 11 : i64} {
  func.func @_mm_kernel(%arg0: i32, %arg1: i32, %arg2: memref<192x8xbf16, #tpu.memory_space<vmem>>, %arg3: memref<8x32xbf16, #tpu.memory_space<vmem>>, %arg4: memref<192x1xf32, #tpu.memory_space<vmem>>, %arg5: memref<192x32xf32, #tpu.memory_space<vmem>>) attributes {dimension_semantics = [#tpu.dimension_semantics<parallel>, #tpu.dimension_semantics<parallel>], iteration_bounds = array<i64: 1, 1>, scalar_prefetch = 0 : i64, scratch_operands = 0 : i64, tpu.core_type = #tpu.core_type<tc>, window_params = [{transform_indices = @transform_0, window_bounds = array<i64: 192, 8>}, {transform_indices = @transform_1, window_bounds = array<i64: 8, 32>}, {transform_indices = @transform_2, window_bounds = array<i64: 192, 1>}, {transform_indices = @transform_3, window_bounds = array<i64: 192, 32>}]} {
    %c0 = arith.constant 0 : index
    %c0_0 = arith.constant 0 : index
    %0 = vector.load %arg2[%c0, %c0_0] : memref<192x8xbf16, #tpu.memory_space<vmem>>, vector<192x8xbf16>
    %c0_1 = arith.constant 0 : index
    %c0_2 = arith.constant 0 : index
    %1 = vector.load %arg3[%c0_1, %c0_2] : memref<8x32xbf16, #tpu.memory_space<vmem>>, vector<8x32xbf16>
    %cst = arith.constant dense<0.000000e+00> : vector<192x32xf32>
    %2 = tpu.matmul %0, %1, %cst {dimension_numbers = #tpu.dot_dimension_numbers<[1], [0], [0], [1], [0, 0, 1, 1], [], []>} : vector<192x8xbf16>, vector<8x32xbf16>, vector<192x32xf32> -> vector<192x32xf32>
    %c0_3 = arith.constant 0 : index
    %c0_4 = arith.constant 0 : index
    %3 = vector.load %arg4[%c0_3, %c0_4] : memref<192x1xf32, #tpu.memory_space<vmem>>, vector<192x1xf32>
    %4 = vector.broadcast %3 : vector<192x1xf32> to vector<192x32xf32>
    %5 = arith.addf %2, %4 : vector<192x32xf32>
    %c0_5 = arith.constant 0 : index
    %c0_6 = arith.constant 0 : index
    %6 = vector.load %arg5[%c0_5, %c0_6] : memref<192x32xf32, #tpu.memory_space<vmem>>, vector<192x32xf32>
    tpu.vector_store %arg5[%c0_5, %c0_6], %5 {strides = array<i32>} : memref<192x32xf32, #tpu.memory_space<vmem>>, vector<192x32xf32>,
    return
  }
  func.func @transform_0(%arg0: i32, %arg1: i32) -> (i32, i32) {
    %c0_i32 = arith.constant 0 : i32
    %c0_i32_0 = arith.constant 0 : i32
    return %arg0, %c0_i32 : i32, i32
  }
  func.func @transform_1(%arg0: i32, %arg1: i32) -> (i32, i32) {
    %c0_i32 = arith.constant 0 : i32
    %c0_i32_0 = arith.constant 0 : i32
    return %c0_i32, %arg1 : i32, i32
  }
  func.func @transform_2(%arg0: i32, %arg1: i32) -> (i32, i32) {
    %c0_i32 = arith.constant 0 : i32
    %c0_i32_0 = arith.constant 0 : i32
    return %arg0, %c0_i32 : i32, i32
  }
  func.func @transform_3(%arg0: i32, %arg1: i32) -> (i32, i32) {
    %c0_i32 = arith.constant 0 : i32
    return %arg0, %arg1 : i32, i32
  }
}

module attributes {stable_mosaic.version = 11 : i64} {
  func.func @_mm_kernel(%arg0: i32, %arg1: i32, %arg2: memref<384x8xbf16, #tpu.memory_space<vmem>>, %arg3: memref<8x32xbf16, #tpu.memory_space<vmem>>, %arg4: memref<384x1xf32, #tpu.memory_space<vmem>>, %arg5: memref<384x32xf32, #tpu.memory_space<vmem>>) attributes {dimension_semantics = [#tpu.dimension_semantics<parallel>, #tpu.dimension_semantics<parallel>], iteration_bounds = array<i64: 2, 1>, scalar_prefetch = 0 : i64, scratch_operands = 0 : i64, tpu.core_type = #tpu.core_type<tc>, window_params = [{transform_indices = @transform_0, window_bounds = array<i64: 384, 8>}, {transform_indices = @transform_1, window_bounds = array<i64: 8, 32>}, {transform_indices = @transform_2, window_bounds = array<i64: 384, 1>}, {transform_indices = @transform_3, window_bounds = array<i64: 384, 32>}]} {
    %c0 = arith.constant 0 : index
    %c0_0 = arith.constant 0 : index
    %0 = vector.load %arg2[%c0, %c0_0] : memref<384x8xbf16, #tpu.memory_space<vmem>>, vector<384x8xbf16>
    %c0_1 = arith.constant 0 : index
    %c0_2 = arith.constant 0 : index
    %1 = vector.load %arg3[%c0_1, %c0_2] : memref<8x32xbf16, #tpu.memory_space<vmem>>, vector<8x32xbf16>
    %cst = arith.constant dense<0.000000e+00> : vector<384x32xf32>
    %2 = tpu.matmul %0, %1, %cst {dimension_numbers = #tpu.dot_dimension_numbers<[1], [0], [0], [1], [0, 0, 1, 1], [], []>} : vector<384x8xbf16>, vector<8x32xbf16>, vector<384x32xf32> -> vector<384x32xf32>
    %c0_3 = arith.constant 0 : index
    %c0_4 = arith.constant 0 : index
    %3 = vector.load %arg4[%c0_3, %c0_4] : memref<384x1xf32, #tpu.memory_space<vmem>>, vector<384x1xf32>
    %4 = vector.broadcast %3 : vector<384x1xf32> to vector<384x32xf32>
    %5 = arith.addf %2, %4 : vector<384x32xf32>
    %c0_5 = arith.constant 0 : index
    %c0_6 = arith.constant 0 : index
    %6 = vector.load %arg5[%c0_5, %c0_6] : memref<384x32xf32, #tpu.memory_space<vmem>>, vector<384x32xf32>
    tpu.vector_store %arg5[%c0_5, %c0_6], %5 {strides = array<i32>} : memref<384x32xf32, #tpu.memory_space<vmem>>, vector<384x32xf32>,
    return
  }
  func.func @transform_0(%arg0: i32, %arg1: i32) -> (i32, i32) {
    %c0_i32 = arith.constant 0 : i32
    %c0_i32_0 = arith.constant 0 : i32
    return %arg0, %c0_i32 : i32, i32
  }
  func.func @transform_1(%arg0: i32, %arg1: i32) -> (i32, i32) {
    %c0_i32 = arith.constant 0 : i32
    %c0_i32_0 = arith.constant 0 : i32
    return %c0_i32, %arg1 : i32, i32
  }
  func.func @transform_2(%arg0: i32, %arg1: i32) -> (i32, i32) {
    %c0_i32 = arith.constant 0 : i32
    %c0_i32_0 = arith.constant 0 : i32
    return %arg0, %c0_i32 : i32, i32
  }
  func.func @transform_3(%arg0: i32, %arg1: i32) -> (i32, i32) {
    %c0_i32 = arith.constant 0 : i32
    return %arg0, %arg1 : i32, i32
  }
}

module attributes {stable_mosaic.version = 11 : i64} {
  func.func @_mm_kernel(%arg0: i32, %arg1: i32, %arg2: memref<32x8xbf16, #tpu.memory_space<vmem>>, %arg3: memref<8x1536xbf16, #tpu.memory_space<vmem>>, %arg4: memref<32x1xf32, #tpu.memory_space<vmem>>, %arg5: memref<32x1536xf32, #tpu.memory_space<vmem>>) attributes {dimension_semantics = [#tpu.dimension_semantics<parallel>, #tpu.dimension_semantics<parallel>], iteration_bounds = array<i64: 1, 2>, scalar_prefetch = 0 : i64, scratch_operands = 0 : i64, tpu.core_type = #tpu.core_type<tc>, window_params = [{transform_indices = @transform_0, window_bounds = array<i64: 32, 8>}, {transform_indices = @transform_1, window_bounds = array<i64: 8, 1536>}, {transform_indices = @transform_2, window_bounds = array<i64: 32, 1>}, {transform_indices = @transform_3, window_bounds = array<i64: 32, 1536>}]} {
    %c0 = arith.constant 0 : index
    %c0_0 = arith.constant 0 : index
    %0 = vector.load %arg2[%c0, %c0_0] : memref<32x8xbf16, #tpu.memory_space<vmem>>, vector<32x8xbf16>
    %c0_1 = arith.constant 0 : index
    %c0_2 = arith.constant 0 : index
    %1 = vector.load %arg3[%c0_1, %c0_2] : memref<8x1536xbf16, #tpu.memory_space<vmem>>, vector<8x1536xbf16>
    %cst = arith.constant dense<0.000000e+00> : vector<32x1536xf32>
    %2 = tpu.matmul %0, %1, %cst {dimension_numbers = #tpu.dot_dimension_numbers<[1], [0], [0], [1], [0, 0, 1, 1], [], []>} : vector<32x8xbf16>, vector<8x1536xbf16>, vector<32x1536xf32> -> vector<32x1536xf32>
    %c0_3 = arith.constant 0 : index
    %c0_4 = arith.constant 0 : index
    %3 = vector.load %arg4[%c0_3, %c0_4] : memref<32x1xf32, #tpu.memory_space<vmem>>, vector<32x1xf32>
    %4 = vector.broadcast %3 : vector<32x1xf32> to vector<32x1536xf32>
    %5 = arith.addf %2, %4 : vector<32x1536xf32>
    %cst_5 = arith.constant 0.000000e+00 : f32
    %6 = vector.broadcast %cst_5 : f32 to vector<32x1536xf32>
    %7 = arith.maximumf %5, %6 : vector<32x1536xf32>
    %c0_6 = arith.constant 0 : index
    %c0_7 = arith.constant 0 : index
    %8 = vector.load %arg5[%c0_6, %c0_7] : memref<32x1536xf32, #tpu.memory_space<vmem>>, vector<32x1536xf32>
    tpu.vector_store %arg5[%c0_6, %c0_7], %7 {strides = array<i32>} : memref<32x1536xf32, #tpu.memory_space<vmem>>, vector<32x1536xf32>,
    return
  }
  func.func @transform_0(%arg0: i32, %arg1: i32) -> (i32, i32) {
    %c0_i32 = arith.constant 0 : i32
    %c0_i32_0 = arith.constant 0 : i32
    return %arg0, %c0_i32 : i32, i32
  }
  func.func @transform_1(%arg0: i32, %arg1: i32) -> (i32, i32) {
    %c0_i32 = arith.constant 0 : i32
    %c0_i32_0 = arith.constant 0 : i32
    return %c0_i32, %arg1 : i32, i32
  }
  func.func @transform_2(%arg0: i32, %arg1: i32) -> (i32, i32) {
    %c0_i32 = arith.constant 0 : i32
    %c0_i32_0 = arith.constant 0 : i32
    return %arg0, %c0_i32 : i32, i32
  }
  func.func @transform_3(%arg0: i32, %arg1: i32) -> (i32, i32) {
    %c0_i32 = arith.constant 0 : i32
    return %arg0, %arg1 : i32, i32
  }
}

module attributes {stable_mosaic.version = 11 : i64} {
  func.func @_mm_kernel(%arg0: i32, %arg1: i32, %arg2: memref<8x32xbf16, #tpu.memory_space<vmem>>, %arg3: memref<32x1536xbf16, #tpu.memory_space<vmem>>, %arg4: memref<8x1xf32, #tpu.memory_space<vmem>>, %arg5: memref<8x1536xf32, #tpu.memory_space<vmem>>) attributes {dimension_semantics = [#tpu.dimension_semantics<parallel>, #tpu.dimension_semantics<parallel>], iteration_bounds = array<i64: 1, 2>, scalar_prefetch = 0 : i64, scratch_operands = 0 : i64, tpu.core_type = #tpu.core_type<tc>, window_params = [{transform_indices = @transform_0, window_bounds = array<i64: 8, 32>}, {transform_indices = @transform_1, window_bounds = array<i64: 32, 1536>}, {transform_indices = @transform_2, window_bounds = array<i64: 8, 1>}, {transform_indices = @transform_3, window_bounds = array<i64: 8, 1536>}]} {
    %c0 = arith.constant 0 : index
    %c0_0 = arith.constant 0 : index
    %0 = vector.load %arg2[%c0, %c0_0] : memref<8x32xbf16, #tpu.memory_space<vmem>>, vector<8x32xbf16>
    %c0_1 = arith.constant 0 : index
    %c0_2 = arith.constant 0 : index
    %1 = vector.load %arg3[%c0_1, %c0_2] : memref<32x1536xbf16, #tpu.memory_space<vmem>>, vector<32x1536xbf16>
    %cst = arith.constant dense<0.000000e+00> : vector<8x1536xf32>
    %2 = tpu.matmul %0, %1, %cst {dimension_numbers = #tpu.dot_dimension_numbers<[1], [0], [0], [1], [0, 0, 1, 1], [], []>} : vector<8x32xbf16>, vector<32x1536xbf16>, vector<8x1536xf32> -> vector<8x1536xf32>
    %c0_3 = arith.constant 0 : index
    %c0_4 = arith.constant 0 : index
    %3 = vector.load %arg4[%c0_3, %c0_4] : memref<8x1xf32, #tpu.memory_space<vmem>>, vector<8x1xf32>
    %4 = vector.broadcast %3 : vector<8x1xf32> to vector<8x1536xf32>
    %5 = arith.addf %2, %4 : vector<8x1536xf32>
    %cst_5 = arith.constant 0.000000e+00 : f32
    %6 = vector.broadcast %cst_5 : f32 to vector<8x1536xf32>
    %7 = arith.maximumf %5, %6 : vector<8x1536xf32>
    %c0_6 = arith.constant 0 : index
    %c0_7 = arith.constant 0 : index
    %8 = vector.load %arg5[%c0_6, %c0_7] : memref<8x1536xf32, #tpu.memory_space<vmem>>, vector<8x1536xf32>
    tpu.vector_store %arg5[%c0_6, %c0_7], %7 {strides = array<i32>} : memref<8x1536xf32, #tpu.memory_space<vmem>>, vector<8x1536xf32>,
    return
  }
  func.func @transform_0(%arg0: i32, %arg1: i32) -> (i32, i32) {
    %c0_i32 = arith.constant 0 : i32
    %c0_i32_0 = arith.constant 0 : i32
    return %arg0, %c0_i32 : i32, i32
  }
  func.func @transform_1(%arg0: i32, %arg1: i32) -> (i32, i32) {
    %c0_i32 = arith.constant 0 : i32
    %c0_i32_0 = arith.constant 0 : i32
    return %c0_i32, %arg1 : i32, i32
  }
  func.func @transform_2(%arg0: i32, %arg1: i32) -> (i32, i32) {
    %c0_i32 = arith.constant 0 : i32
    %c0_i32_0 = arith.constant 0 : i32
    return %arg0, %c0_i32 : i32, i32
  }
  func.func @transform_3(%arg0: i32, %arg1: i32) -> (i32, i32) {
    %c0_i32 = arith.constant 0 : i32
    return %arg0, %arg1 : i32, i32
  }
}

</mosaic_0001>

<llo_original>
// kernel: sr_projection_forward.13
$region0: #{sr_projection_forward.13}
  #allocation0 [shape = 'u32[]', space=smem, size = 0x4, offset = 0x4, fixed_abs, tag = 'smem constant byte address 0x4 - core index']
  #allocation1 [shape = 'u32[144,128]{1,0:T(1,128)}', space=vmem, size = 0x12000, scoped, tag = 'internal scratch']
  %s0 = inlined_call_operand.vmem [shape: bf16[512,8], index: 0, kind: input, shape index: {}]
  %s1 = inlined_call_operand.vmem [shape: bf16[8,512], index: 1, kind: input, shape index: {}]
  %s2 = inlined_call_operand.vmem [shape: f32[512,1], index: 2, kind: input, shape index: {}]
  %s3 = inlined_call_operand.vmem [shape: f32[512,512], index: 3, kind: output, shape index: {}]
  %s4 = sld [smem:[#allocation0]]
  $region22: #{sr_projection_forward.13} parent=0
    _
  %s6 = ssub.s32 1, %s4
  %s7 = scalar_select 0, %s6, %s4
  // Predicated region
  $region2: #{sr_projection_forward.13} parent=0 // pred_check
    _
  $region3: #{sr_projection_forward.13} parent=0 // pred_check_branch
    %9 = sbr.rel (0) target = $region5
  $region4: #{sr_projection_forward.13} parent=0 // pred_region
    _
  $region5: #{sr_projection_forward.13} parent=0 // pred_fallthru
    _
  // Predicated region
  $region6: #{sr_projection_forward.13} parent=0 // pred_check
    _
  $region7: #{sr_projection_forward.13} parent=0 // pred_check_branch
    %11 = sbr.rel (0) target = $region9
  $region8: #{sr_projection_forward.13} parent=0 // pred_region
    _
  $region9: #{sr_projection_forward.13} parent=0 // pred_fallthru
    _
  // Predicated region
  $region10: #{sr_projection_forward.13} parent=0 // pred_check
    _
  $region11: #{sr_projection_forward.13} parent=0 // pred_check_branch
    %13 = sbr.rel (0) target = $region13
  $region12: #{sr_projection_forward.13} parent=0 // pred_region
    _
  $region13: #{sr_projection_forward.13} parent=0 // pred_fallthru
    _
  %v15 = vld [vmem:[%s0] sm:$0xf]
  %v16 = vld [vmem:[%s0 + $0x4] sm:$0xf]
  %v17 = vld [vmem:[%s0 + $0x8] sm:$0xf]
  %v18 = vld [vmem:[%s0 + $0xc] sm:$0xf]
  %v19 = vld [vmem:[%s0 + $0x10] sm:$0xf]
  %v20 = vld [vmem:[%s0 + $0x14] sm:$0xf]
  %v21 = vld [vmem:[%s0 + $0x18] sm:$0xf]
  %v22 = vld [vmem:[%s0 + $0x1c] sm:$0xf]
  %v23 = vld [vmem:[%s0 + $0x20] sm:$0xf]
  %v24 = vld [vmem:[%s0 + $0x24] sm:$0xf]
  %v25 = vld [vmem:[%s0 + $0x28] sm:$0xf]
  %v26 = vld [vmem:[%s0 + $0x2c] sm:$0xf]
  %v27 = vld [vmem:[%s0 + $0x30] sm:$0xf]
  %v28 = vld [vmem:[%s0 + $0x34] sm:$0xf]
  %v29 = vld [vmem:[%s0 + $0x38] sm:$0xf]
  %v30 = vld [vmem:[%s0 + $0x3c] sm:$0xf]
  %v31 = vld [vmem:[%s0 + $0x40] sm:$0xf]
  %v32 = vld [vmem:[%s0 + $0x44] sm:$0xf]
  %v33 = vld [vmem:[%s0 + $0x48] sm:$0xf]
  %v34 = vld [vmem:[%s0 + $0x4c] sm:$0xf]
  %v35 = vld [vmem:[%s0 + $0x50] sm:$0xf]
  %v36 = vld [vmem:[%s0 + $0x54] sm:$0xf]
  %v37 = vld [vmem:[%s0 + $0x58] sm:$0xf]
  %v38 = vld [vmem:[%s0 + $0x5c] sm:$0xf]
  %v39 = vld [vmem:[%s0 + $0x60] sm:$0xf]
  %v40 = vld [vmem:[%s0 + $0x64] sm:$0xf]
  %v41 = vld [vmem:[%s0 + $0x68] sm:$0xf]
  %v42 = vld [vmem:[%s0 + $0x6c] sm:$0xf]
  %v43 = vld [vmem:[%s0 + $0x70] sm:$0xf]
  %v44 = vld [vmem:[%s0 + $0x74] sm:$0xf]
  %v45 = vld [vmem:[%s0 + $0x78] sm:$0xf]
  %v46 = vld [vmem:[%s0 + $0x7c] sm:$0xf]
  %v47 = vld [vmem:[%s0 + $0x80] sm:$0xf]
  %v48 = vld [vmem:[%s0 + $0x84] sm:$0xf]
  %v49 = vld [vmem:[%s0 + $0x88] sm:$0xf]
  %v50 = vld [vmem:[%s0 + $0x8c] sm:$0xf]
  %v51 = vld [vmem:[%s0 + $0x90] sm:$0xf]
  %v52 = vld [vmem:[%s0 + $0x94] sm:$0xf]
  %v53 = vld [vmem:[%s0 + $0x98] sm:$0xf]
  %v54 = vld [vmem:[%s0 + $0x9c] sm:$0xf]
  %v55 = vld [vmem:[%s0 + $0xa0] sm:$0xf]
  %v56 = vld [vmem:[%s0 + $0xa4] sm:$0xf]
  %v57 = vld [vmem:[%s0 + $0xa8] sm:$0xf]
  %v58 = vld [vmem:[%s0 + $0xac] sm:$0xf]
  %v59 = vld [vmem:[%s0 + $0xb0] sm:$0xf]
  %v60 = vld [vmem:[%s0 + $0xb4] sm:$0xf]
  %v61 = vld [vmem:[%s0 + $0xb8] sm:$0xf]
  %v62 = vld [vmem:[%s0 + $0xbc] sm:$0xf]
  %v63 = vld [vmem:[%s0 + $0xc0] sm:$0xf]
  %v64 = vld [vmem:[%s0 + $0xc4] sm:$0xf]
  %v65 = vld [vmem:[%s0 + $0xc8] sm:$0xf]
  %v66 = vld [vmem:[%s0 + $0xcc] sm:$0xf]
  %v67 = vld [vmem:[%s0 + $0xd0] sm:$0xf]
  %v68 = vld [vmem:[%s0 + $0xd4] sm:$0xf]
  %v69 = vld [vmem:[%s0 + $0xd8] sm:$0xf]
  %v70 = vld [vmem:[%s0 + $0xdc] sm:$0xf]
  %v71 = vld [vmem:[%s0 + $0xe0] sm:$0xf]
  %v72 = vld [vmem:[%s0 + $0xe4] sm:$0xf]
  %v73 = vld [vmem:[%s0 + $0xe8] sm:$0xf]
  %v74 = vld [vmem:[%s0 + $0xec] sm:$0xf]
  %v75 = vld [vmem:[%s0 + $0xf0] sm:$0xf]
  %v76 = vld [vmem:[%s0 + $0xf4] sm:$0xf]
  %v77 = vld [vmem:[%s0 + $0xf8] sm:$0xf]
  %v78 = vld [vmem:[%s0 + $0xfc] sm:$0xf]
  %v79 = vld [vmem:[%s1] sm:$0xff]
  %v80 = vld [vmem:[%s1 + $0x8] sm:$0xff]
  %v81 = vld [vmem:[%s2] sm:$0xff]
  %v82 = vld [vmem:[%s2 + $0x8] sm:$0xff]
  %v83 = vld [vmem:[%s2 + $0x10] sm:$0xff]
  %v84 = vld [vmem:[%s2 + $0x18] sm:$0xff]
  %v85 = vld [vmem:[%s2 + $0x20] sm:$0xff]
  %v86 = vld [vmem:[%s2 + $0x28] sm:$0xff]
  %v87 = vld [vmem:[%s2 + $0x30] sm:$0xff]
  %v88 = vld [vmem:[%s2 + $0x38] sm:$0xff]
  %v89 = vld [vmem:[%s2 + $0x40] sm:$0xff]
  %v90 = vld [vmem:[%s2 + $0x48] sm:$0xff]
  %v91 = vld [vmem:[%s2 + $0x50] sm:$0xff]
  %v92 = vld [vmem:[%s2 + $0x58] sm:$0xff]
  %v93 = vld [vmem:[%s2 + $0x60] sm:$0xff]
  %v94 = vld [vmem:[%s2 + $0x68] sm:$0xff]
  %v95 = vld [vmem:[%s2 + $0x70] sm:$0xff]
  %v96 = vld [vmem:[%s2 + $0x78] sm:$0xff]
  %v97 = vld [vmem:[%s2 + $0x80] sm:$0xff]
  %v98 = vld [vmem:[%s2 + $0x88] sm:$0xff]
  %v99 = vld [vmem:[%s2 + $0x90] sm:$0xff]
  %v100 = vld [vmem:[%s2 + $0x98] sm:$0xff]
  %v101 = vld [vmem:[%s2 + $0xa0] sm:$0xff]
  %v102 = vld [vmem:[%s2 + $0xa8] sm:$0xff]
  %v103 = vld [vmem:[%s2 + $0xb0] sm:$0xff]
  %v104 = vld [vmem:[%s2 + $0xb8] sm:$0xff]
  %v105 = vld [vmem:[%s2 + $0xc0] sm:$0xff]
  %v106 = vld [vmem:[%s2 + $0xc8] sm:$0xff]
  %v107 = vld [vmem:[%s2 + $0xd0] sm:$0xff]
  %v108 = vld [vmem:[%s2 + $0xd8] sm:$0xff]
  %v109 = vld [vmem:[%s2 + $0xe0] sm:$0xff]
  %v110 = vld [vmem:[%s2 + $0xe8] sm:$0xff]
  %v111 = vld [vmem:[%s2 + $0xf0] sm:$0xff]
  %v112 = vld [vmem:[%s2 + $0xf8] sm:$0xff]
  %v113 = vld [vmem:[%s2 + $0x100] sm:$0xff]
  %v114 = vld [vmem:[%s2 + $0x108] sm:$0xff]
  %v115 = vld [vmem:[%s2 + $0x110] sm:$0xff]
  %v116 = vld [vmem:[%s2 + $0x118] sm:$0xff]
  %v117 = vld [vmem:[%s2 + $0x120] sm:$0xff]
  %v118 = vld [vmem:[%s2 + $0x128] sm:$0xff]
  %v119 = vld [vmem:[%s2 + $0x130] sm:$0xff]
  %v120 = vld [vmem:[%s2 + $0x138] sm:$0xff]
  %v121 = vld [vmem:[%s2 + $0x140] sm:$0xff]
  %v122 = vld [vmem:[%s2 + $0x148] sm:$0xff]
  %v123 = vld [vmem:[%s2 + $0x150] sm:$0xff]
  %v124 = vld [vmem:[%s2 + $0x158] sm:$0xff]
  %v125 = vld [vmem:[%s2 + $0x160] sm:$0xff]
  %v126 = vld [vmem:[%s2 + $0x168] sm:$0xff]
  %v127 = vld [vmem:[%s2 + $0x170] sm:$0xff]
  %v128 = vld [vmem:[%s2 + $0x178] sm:$0xff]
  %v129 = vld [vmem:[%s2 + $0x180] sm:$0xff]
  %v130 = vld [vmem:[%s2 + $0x188] sm:$0xff]
  %v131 = vld [vmem:[%s2 + $0x190] sm:$0xff]
  %v132 = vld [vmem:[%s2 + $0x198] sm:$0xff]
  %v133 = vld [vmem:[%s2 + $0x1a0] sm:$0xff]
  %v134 = vld [vmem:[%s2 + $0x1a8] sm:$0xff]
  %v135 = vld [vmem:[%s2 + $0x1b0] sm:$0xff]
  %v136 = vld [vmem:[%s2 + $0x1b8] sm:$0xff]
  %v137 = vld [vmem:[%s2 + $0x1c0] sm:$0xff]
  %v138 = vld [vmem:[%s2 + $0x1c8] sm:$0xff]
  %v139 = vld [vmem:[%s2 + $0x1d0] sm:$0xff]
  %v140 = vld [vmem:[%s2 + $0x1d8] sm:$0xff]
  %v141 = vld [vmem:[%s2 + $0x1e0] sm:$0xff]
  %v142 = vld [vmem:[%s2 + $0x1e8] sm:$0xff]
  %v143 = vld [vmem:[%s2 + $0x1f0] sm:$0xff]
  %v144 = vld [vmem:[%s2 + $0x1f8] sm:$0xff]
  %146 = vset.pattern.permute.xlu0 0
  %147 = vperm.xlu0 %146, %v81
  %v148 = vpop.permute.xlu0 %147
  %151 = vset.pattern.permute.xlu0 0
  %152 = vperm.xlu0 %151, %v82
  %v153 = vpop.permute.xlu0 %152
  %156 = vset.pattern.permute.xlu0 0
  %157 = vperm.xlu0 %156, %v83
  %v158 = vpop.permute.xlu0 %157
  %161 = vset.pattern.permute.xlu0 0
  %162 = vperm.xlu0 %161, %v84
  %v163 = vpop.permute.xlu0 %162
  %166 = vset.pattern.permute.xlu0 0
  %167 = vperm.xlu0 %166, %v85
  %v168 = vpop.permute.xlu0 %167
  %171 = vset.pattern.permute.xlu0 0
  %172 = vperm.xlu0 %171, %v86
  %v173 = vpop.permute.xlu0 %172
  %176 = vset.pattern.permute.xlu0 0
  %177 = vperm.xlu0 %176, %v87
  %v178 = vpop.permute.xlu0 %177
  %181 = vset.pattern.permute.xlu0 0
  %182 = vperm.xlu0 %181, %v88
  %v183 = vpop.permute.xlu0 %182
  %186 = vset.pattern.permute.xlu0 0
  %187 = vperm.xlu0 %186, %v89
  %v188 = vpop.permute.xlu0 %187
  %191 = vset.pattern.permute.xlu0 0
  %192 = vperm.xlu0 %191, %v90
  %v193 = vpop.permute.xlu0 %192
  %196 = vset.pattern.permute.xlu0 0
  %197 = vperm.xlu0 %196, %v91
  %v198 = vpop.permute.xlu0 %197
  %201 = vset.pattern.permute.xlu0 0
  %202 = vperm.xlu0 %201, %v92
  %v203 = vpop.permute.xlu0 %202
  %206 = vset.pattern.permute.xlu0 0
  %207 = vperm.xlu0 %206, %v93
  %v208 = vpop.permute.xlu0 %207
  %211 = vset.pattern.permute.xlu0 0
  %212 = vperm.xlu0 %211, %v94
  %v213 = vpop.permute.xlu0 %212
  %216 = vset.pattern.permute.xlu0 0
  %217 = vperm.xlu0 %216, %v95
  %v218 = vpop.permute.xlu0 %217
  %221 = vset.pattern.permute.xlu0 0
  %222 = vperm.xlu0 %221, %v96
  %v223 = vpop.permute.xlu0 %222
  %226 = vset.pattern.permute.xlu0 0
  %227 = vperm.xlu0 %226, %v97
  %v228 = vpop.permute.xlu0 %227
  %231 = vset.pattern.permute.xlu0 0
  %232 = vperm.xlu0 %231, %v98
  %v233 = vpop.permute.xlu0 %232
  %236 = vset.pattern.permute.xlu0 0
  %237 = vperm.xlu0 %236, %v99
  %v238 = vpop.permute.xlu0 %237
  %241 = vset.pattern.permute.xlu0 0
  %242 = vperm.xlu0 %241, %v100
  %v243 = vpop.permute.xlu0 %242
  %246 = vset.pattern.permute.xlu0 0
  %247 = vperm.xlu0 %246, %v101
  %v248 = vpop.permute.xlu0 %247
  %251 = vset.pattern.permute.xlu0 0
  %252 = vperm.xlu0 %251, %v102
  %v253 = vpop.permute.xlu0 %252
  %256 = vset.pattern.permute.xlu0 0
  %257 = vperm.xlu0 %256, %v103
  %v258 = vpop.permute.xlu0 %257
  %261 = vset.pattern.permute.xlu0 0
  %262 = vperm.xlu0 %261, %v104
  %v263 = vpop.permute.xlu0 %262
  %266 = vset.pattern.permute.xlu0 0
  %267 = vperm.xlu0 %266, %v105
  %v268 = vpop.permute.xlu0 %267
  %271 = vset.pattern.permute.xlu0 0
  %272 = vperm.xlu0 %271, %v106
  %v273 = vpop.permute.xlu0 %272
  %276 = vset.pattern.permute.xlu0 0
  %277 = vperm.xlu0 %276, %v107
  %v278 = vpop.permute.xlu0 %277
  %281 = vset.pattern.permute.xlu0 0
  %282 = vperm.xlu0 %281, %v108
  %v283 = vpop.permute.xlu0 %282
  %286 = vset.pattern.permute.xlu0 0
  %287 = vperm.xlu0 %286, %v109
  %v288 = vpop.permute.xlu0 %287
  %291 = vset.pattern.permute.xlu0 0
  %292 = vperm.xlu0 %291, %v110
  %v293 = vpop.permute.xlu0 %292
  %296 = vset.pattern.permute.xlu0 0
  %297 = vperm.xlu0 %296, %v111
  %v298 = vpop.permute.xlu0 %297
  %301 = vset.pattern.permute.xlu0 0
  %302 = vperm.xlu0 %301, %v112
  %v303 = vpop.permute.xlu0 %302
  %306 = vset.pattern.permute.xlu0 0
  %307 = vperm.xlu0 %306, %v113
  %v308 = vpop.permute.xlu0 %307
  %311 = vset.pattern.permute.xlu0 0
  %312 = vperm.xlu0 %311, %v114
  %v313 = vpop.permute.xlu0 %312
  %316 = vset.pattern.permute.xlu0 0
  %317 = vperm.xlu0 %316, %v115
  %v318 = vpop.permute.xlu0 %317
  %321 = vset.pattern.permute.xlu0 0
  %322 = vperm.xlu0 %321, %v116
  %v323 = vpop.permute.xlu0 %322
  %326 = vset.pattern.permute.xlu0 0
  %327 = vperm.xlu0 %326, %v117
  %v328 = vpop.permute.xlu0 %327
  %331 = vset.pattern.permute.xlu0 0
  %332 = vperm.xlu0 %331, %v118
  %v333 = vpop.permute.xlu0 %332
  %336 = vset.pattern.permute.xlu0 0
  %337 = vperm.xlu0 %336, %v119
  %v338 = vpop.permute.xlu0 %337
  %341 = vset.pattern.permute.xlu0 0
  %342 = vperm.xlu0 %341, %v120
  %v343 = vpop.permute.xlu0 %342
  %346 = vset.pattern.permute.xlu0 0
  %347 = vperm.xlu0 %346, %v121
  %v348 = vpop.permute.xlu0 %347
  %351 = vset.pattern.permute.xlu0 0
  %352 = vperm.xlu0 %351, %v122
  %v353 = vpop.permute.xlu0 %352
  %356 = vset.pattern.permute.xlu0 0
  %357 = vperm.xlu0 %356, %v123
  %v358 = vpop.permute.xlu0 %357
  %361 = vset.pattern.permute.xlu0 0
  %362 = vperm.xlu0 %361, %v124
  %v363 = vpop.permute.xlu0 %362
  %366 = vset.pattern.permute.xlu0 0
  %367 = vperm.xlu0 %366, %v125
  %v368 = vpop.permute.xlu0 %367
  %371 = vset.pattern.permute.xlu0 0
  %372 = vperm.xlu0 %371, %v126
  %v373 = vpop.permute.xlu0 %372
  %376 = vset.pattern.permute.xlu0 0
  %377 = vperm.xlu0 %376, %v127
  %v378 = vpop.permute.xlu0 %377
  %381 = vset.pattern.permute.xlu0 0
  %382 = vperm.xlu0 %381, %v128
  %v383 = vpop.permute.xlu0 %382
  %386 = vset.pattern.permute.xlu0 0
  %387 = vperm.xlu0 %386, %v129
  %v388 = vpop.permute.xlu0 %387
  %391 = vset.pattern.permute.xlu0 0
  %392 = vperm.xlu0 %391, %v130
  %v393 = vpop.permute.xlu0 %392
  %396 = vset.pattern.permute.xlu0 0
  %397 = vperm.xlu0 %396, %v131
  %v398 = vpop.permute.xlu0 %397
  %401 = vset.pattern.permute.xlu0 0
  %402 = vperm.xlu0 %401, %v132
  %v403 = vpop.permute.xlu0 %402
  %406 = vset.pattern.permute.xlu0 0
  %407 = vperm.xlu0 %406, %v133
  %v408 = vpop.permute.xlu0 %407
  %411 = vset.pattern.permute.xlu0 0
  %412 = vperm.xlu0 %411, %v134
  %v413 = vpop.permute.xlu0 %412
  %416 = vset.pattern.permute.xlu0 0
  %417 = vperm.xlu0 %416, %v135
  %v418 = vpop.permute.xlu0 %417
  %421 = vset.pattern.permute.xlu0 0
  %422 = vperm.xlu0 %421, %v136
  %v423 = vpop.permute.xlu0 %422
  %426 = vset.pattern.permute.xlu0 0
  %427 = vperm.xlu0 %426, %v137
  %v428 = vpop.permute.xlu0 %427
  %431 = vset.pattern.permute.xlu0 0
  %432 = vperm.xlu0 %431, %v138
  %v433 = vpop.permute.xlu0 %432
  %436 = vset.pattern.permute.xlu0 0
  %437 = vperm.xlu0 %436, %v139
  %v438 = vpop.permute.xlu0 %437
  %441 = vset.pattern.permute.xlu0 0
  %442 = vperm.xlu0 %441, %v140
  %v443 = vpop.permute.xlu0 %442
  %446 = vset.pattern.permute.xlu0 0
  %447 = vperm.xlu0 %446, %v141
  %v448 = vpop.permute.xlu0 %447
  %451 = vset.pattern.permute.xlu0 0
  %452 = vperm.xlu0 %451, %v142
  %v453 = vpop.permute.xlu0 %452
  %456 = vset.pattern.permute.xlu0 0
  %457 = vperm.xlu0 %456, %v143
  %v458 = vpop.permute.xlu0 %457
  %461 = vset.pattern.permute.xlu0 0
  %462 = vperm.xlu0 %461, %v144
  %v463 = vpop.permute.xlu0 %462
  %v529 = vunpack.c.l.b16 %v15
  %v530 = vunpack.c.l.b16 %v16
  %v531 = vunpack.c.l.b16 %v17
  %v532 = vunpack.c.l.b16 %v18
  %v533 = vunpack.c.l.b16 %v19
  %v534 = vunpack.c.l.b16 %v20
  %v535 = vunpack.c.l.b16 %v21
  %v536 = vunpack.c.l.b16 %v22
  %v537 = vunpack.c.l.b16 %v23
  %v538 = vunpack.c.l.b16 %v24
  %v539 = vunpack.c.l.b16 %v25
  %v540 = vunpack.c.l.b16 %v26
  %v541 = vunpack.c.l.b16 %v27
  %v542 = vunpack.c.l.b16 %v28
  %v543 = vunpack.c.l.b16 %v29
  %v544 = vunpack.c.l.b16 %v30
  %v545 = vunpack.c.l.b16 %v31
  %v546 = vunpack.c.l.b16 %v32
  %v547 = vunpack.c.l.b16 %v33
  %v548 = vunpack.c.l.b16 %v34
  %v549 = vunpack.c.l.b16 %v35
  %v550 = vunpack.c.l.b16 %v36
  %v551 = vunpack.c.l.b16 %v37
  %v552 = vunpack.c.l.b16 %v38
  %v553 = vunpack.c.l.b16 %v39
  %v554 = vunpack.c.l.b16 %v40
  %v555 = vunpack.c.l.b16 %v41
  %v556 = vunpack.c.l.b16 %v42
  %v557 = vunpack.c.l.b16 %v43
  %v558 = vunpack.c.l.b16 %v44
  %v559 = vunpack.c.l.b16 %v45
  %v560 = vunpack.c.l.b16 %v46
  %v561 = vunpack.c.l.b16 %v47
  %v562 = vunpack.c.l.b16 %v48
  %v563 = vunpack.c.l.b16 %v49
  %v564 = vunpack.c.l.b16 %v50
  %v565 = vunpack.c.l.b16 %v51
  %v566 = vunpack.c.l.b16 %v52
  %v567 = vunpack.c.l.b16 %v53
  %v568 = vunpack.c.l.b16 %v54
  %v569 = vunpack.c.l.b16 %v55
  %v570 = vunpack.c.l.b16 %v56
  %v571 = vunpack.c.l.b16 %v57
  %v572 = vunpack.c.l.b16 %v58
  %v573 = vunpack.c.l.b16 %v59
  %v574 = vunpack.c.l.b16 %v60
  %v575 = vunpack.c.l.b16 %v61
  %v576 = vunpack.c.l.b16 %v62
  %v577 = vunpack.c.l.b16 %v63
  %v578 = vunpack.c.l.b16 %v64
  %v579 = vunpack.c.l.b16 %v65
  %v580 = vunpack.c.l.b16 %v66
  %v581 = vunpack.c.l.b16 %v67
  %v582 = vunpack.c.l.b16 %v68
  %v583 = vunpack.c.l.b16 %v69
  %v584 = vunpack.c.l.b16 %v70
  %v585 = vunpack.c.l.b16 %v71
  %v586 = vunpack.c.l.b16 %v72
  %v587 = vunpack.c.l.b16 %v73
  %v588 = vunpack.c.l.b16 %v74
  %v589 = vunpack.c.l.b16 %v75
  %v590 = vunpack.c.l.b16 %v76
  %v591 = vunpack.c.l.b16 %v77
  %v592 = vunpack.c.l.b16 %v78
  %v593 = vpack.c.b16 %v530, %v529
  %v594 = vpack.c.b16 %v532, %v531
  %v595 = vpack.c.b16 %v534, %v533
  %v596 = vpack.c.b16 %v536, %v535
  %v597 = vpack.c.b16 %v538, %v537
  %v598 = vpack.c.b16 %v540, %v539
  %v599 = vpack.c.b16 %v542, %v541
  %v600 = vpack.c.b16 %v544, %v543
  %v601 = vpack.c.b16 %v546, %v545
  %v602 = vpack.c.b16 %v548, %v547
  %v603 = vpack.c.b16 %v550, %v549
  %v604 = vpack.c.b16 %v552, %v551
  %v605 = vpack.c.b16 %v554, %v553
  %v606 = vpack.c.b16 %v556, %v555
  %v607 = vpack.c.b16 %v558, %v557
  %v608 = vpack.c.b16 %v560, %v559
  %v609 = vpack.c.b16 %v562, %v561
  %v610 = vpack.c.b16 %v564, %v563
  %v611 = vpack.c.b16 %v566, %v565
  %v612 = vpack.c.b16 %v568, %v567
  %v613 = vpack.c.b16 %v570, %v569
  %v614 = vpack.c.b16 %v572, %v571
  %v615 = vpack.c.b16 %v574, %v573
  %v616 = vpack.c.b16 %v576, %v575
  %v617 = vpack.c.b16 %v578, %v577
  %v618 = vpack.c.b16 %v580, %v579
  %v619 = vpack.c.b16 %v582, %v581
  %v620 = vpack.c.b16 %v584, %v583
  %v621 = vpack.c.b16 %v586, %v585
  %v622 = vpack.c.b16 %v588, %v587
  %v623 = vpack.c.b16 %v590, %v589
  %v624 = vpack.c.b16 %v592, %v591
  %v627 = vunpack.c.l.b16 %v79
  %v628 = vunpack.c.h.b16 %v79
  %v629 = vunpack.c.l.b16 %v80
  %v630 = vunpack.c.h.b16 %v80
  %v631 = vpack.c.b16 %v627, %v627
  %v632 = vpack.c.b16 %v628, %v628
  %v633 = vpack.c.b16 %v629, %v629
  %v634 = vpack.c.b16 %v630, %v630
  %vm635 = vcmask 64512
  %v637 = vsel %vm635, %v593, 0
  %v640 = vsel %vm635, %v594, 0
  %v643 = vsel %vm635, %v595, 0
  %v646 = vsel %vm635, %v596, 0
  %v649 = vsel %vm635, %v597, 0
  %v652 = vsel %vm635, %v598, 0
  %v655 = vsel %vm635, %v599, 0
  %v658 = vsel %vm635, %v600, 0
  %v661 = vsel %vm635, %v601, 0
  %v664 = vsel %vm635, %v602, 0
  %v667 = vsel %vm635, %v603, 0
  %v670 = vsel %vm635, %v604, 0
  %v673 = vsel %vm635, %v605, 0
  %v676 = vsel %vm635, %v606, 0
  %v679 = vsel %vm635, %v607, 0
  %v682 = vsel %vm635, %v608, 0
  %v685 = vsel %vm635, %v609, 0
  %v688 = vsel %vm635, %v610, 0
  %v691 = vsel %vm635, %v611, 0
  %v694 = vsel %vm635, %v612, 0
  %v697 = vsel %vm635, %v613, 0
  %v700 = vsel %vm635, %v614, 0
  %v703 = vsel %vm635, %v615, 0
  %v706 = vsel %vm635, %v616, 0
  %v709 = vsel %vm635, %v617, 0
  %v712 = vsel %vm635, %v618, 0
  %v715 = vsel %vm635, %v619, 0
  %v718 = vsel %vm635, %v620, 0
  %v721 = vsel %vm635, %v621, 0
  %v724 = vsel %vm635, %v622, 0
  %v727 = vsel %vm635, %v623, 0
  %v730 = vsel %vm635, %v624, 0
  %vm732 = vcmask 1043456
  %v734 = vsel %vm732, %v631, 0
  %v737 = vsel %vm732, %v632, 0
  %v740 = vsel %vm732, %v633, 0
  %v743 = vsel %vm732, %v634, 0
  %745 = vmatprep.subr.bf16.mxu0 %v737
  %746 = vmatpush1.bf16.msra.mxu0 %v734
  %747 = vmatprep.subr.bf16.mxu0 0
  %748 = vmatpush1.bf16.msra.mxu0 0
  %749 = vmatprep.subr.bf16.mxu0 0
  %750 = vmatpush1.bf16.msra.mxu0 0
  %751 = vmatprep.subr.bf16.mxu0 0
  %752 = vmatpush1.bf16.msra.mxu0 0
  %753 = vmatprep.subr.bf16.mxu0 0
  %754 = vmatpush1.bf16.msra.mxu0 0
  %755 = vmatprep.subr.bf16.mxu0 0
  %756 = vmatpush1.bf16.msra.mxu0 0
  %757 = vmatprep.subr.bf16.mxu0 0
  %758 = vmatpush1.bf16.msra.mxu0 0
  %759 = vmatprep.subr.bf16.mxu0 0
  %760 = vmatpush1.bf16.msra.mxu0 0
  %761 = vmatprep.subr.bf16.mxu0 0
  %762 = vmatpush1.bf16.msra.mxu0 0
  %763 = vmatprep.subr.bf16.mxu0 0
  %764 = vmatpush1.bf16.msra.mxu0 0
  %765 = vmatprep.subr.bf16.mxu0 0
  %766 = vmatpush1.bf16.msra.mxu0 0
  %767 = vmatprep.subr.bf16.mxu0 0
  %768 = vmatpush1.bf16.msra.mxu0 0
  %769 = vmatprep.subr.bf16.mxu0 0
  %770 = vmatpush1.bf16.msra.mxu0 0
  %771 = vmatprep.subr.bf16.mxu0 0
  %772 = vmatpush1.bf16.msra.mxu0 0
  %773 = vmatprep.subr.bf16.mxu0 0
  %774 = vmatpush1.bf16.msra.mxu0 0
  %775 = vmatprep.subr.bf16.mxu0 0
  %776 = vmatpush1.bf16.msra.mxu0 0
  %777 = vmatprep.mubr.bf16.mxu0 0
  %778 = vmatmul.mubr.bf16.gmra.mrb[0].mxu0 %v637
  %v779 = vpop.f32.mrb[0].mxu0
  %v780 = vadd.f32 %v148, %v779
  %v781 = vpop.f32.mrb[0].mxu0
  %v782 = vadd.f32 %v148, %v781
  %v783 = vpop.f32.mrb[0].mxu0
  %v784 = vadd.f32 %v153, %v783
  %v785 = vpop.f32.mrb[0].mxu0
  %v786 = vadd.f32 %v153, %v785
  %787 = vmatprep.mubr.bf16.mxu0 0
  %788 = vmatmul.mubr.bf16.gmra.mrb[0].mxu0 %v640
  %v789 = vpop.f32.mrb[0].mxu0
  %v790 = vadd.f32 %v158, %v789
  %v791 = vpop.f32.mrb[0].mxu0
  %v792 = vadd.f32 %v158, %v791
  %v793 = vpop.f32.mrb[0].mxu0
  %v794 = vadd.f32 %v163, %v793
  %v795 = vpop.f32.mrb[0].mxu0
  %v796 = vadd.f32 %v163, %v795
  %797 = vmatprep.mubr.bf16.mxu0 0
  %798 = vmatmul.mubr.bf16.gmra.mrb[0].mxu0 %v643
  %v799 = vpop.f32.mrb[0].mxu0
  %v800 = vadd.f32 %v168, %v799
  %v801 = vpop.f32.mrb[0].mxu0
  %v802 = vadd.f32 %v168, %v801
  %v803 = vpop.f32.mrb[0].mxu0
  %v804 = vadd.f32 %v173, %v803
  %v805 = vpop.f32.mrb[0].mxu0
  %v806 = vadd.f32 %v173, %v805
  %807 = vmatprep.mubr.bf16.mxu0 0
  %808 = vmatmul.mubr.bf16.gmra.mrb[0].mxu0 %v646
  %v809 = vpop.f32.mrb[0].mxu0
  %v810 = vadd.f32 %v178, %v809
  %v811 = vpop.f32.mrb[0].mxu0
  %v812 = vadd.f32 %v178, %v811
  %v813 = vpop.f32.mrb[0].mxu0
  %v814 = vadd.f32 %v183, %v813
  %v815 = vpop.f32.mrb[0].mxu0
  %v816 = vadd.f32 %v183, %v815
  %817 = vmatprep.mubr.bf16.mxu0 0
  %818 = vmatmul.mubr.bf16.gmra.mrb[0].mxu0 %v649
  %v819 = vpop.f32.mrb[0].mxu0
  %v820 = vadd.f32 %v188, %v819
  %v821 = vpop.f32.mrb[0].mxu0
  %v822 = vadd.f32 %v188, %v821
  %v823 = vpop.f32.mrb[0].mxu0
  %v824 = vadd.f32 %v193, %v823
  %v825 = vpop.f32.mrb[0].mxu0
  %v826 = vadd.f32 %v193, %v825
  %827 = vmatprep.mubr.bf16.mxu0 0
  %828 = vmatmul.mubr.bf16.gmra.mrb[0].mxu0 %v652
  %v829 = vpop.f32.mrb[0].mxu0
  %v830 = vadd.f32 %v198, %v829
  %v831 = vpop.f32.mrb[0].mxu0
  %v832 = vadd.f32 %v198, %v831
  %v833 = vpop.f32.mrb[0].mxu0
  %v834 = vadd.f32 %v203, %v833
  %v835 = vpop.f32.mrb[0].mxu0
  %v836 = vadd.f32 %v203, %v835
  %837 = vmatprep.mubr.bf16.mxu0 0
  %838 = vmatmul.mubr.bf16.gmra.mrb[0].mxu0 %v655
  %v839 = vpop.f32.mrb[0].mxu0
  %v840 = vadd.f32 %v208, %v839
  %v841 = vpop.f32.mrb[0].mxu0
  %v842 = vadd.f32 %v208, %v841
  %v843 = vpop.f32.mrb[0].mxu0
  %v844 = vadd.f32 %v213, %v843
  %v845 = vpop.f32.mrb[0].mxu0
  %v846 = vadd.f32 %v213, %v845
  %847 = vmatprep.mubr.bf16.mxu0 0
  %848 = vmatmul.mubr.bf16.gmra.mrb[0].mxu0 %v658
  %v849 = vpop.f32.mrb[0].mxu0
  %v850 = vadd.f32 %v218, %v849
  %v851 = vpop.f32.mrb[0].mxu0
  %v852 = vadd.f32 %v218, %v851
  %v853 = vpop.f32.mrb[0].mxu0
  %v854 = vadd.f32 %v223, %v853
  %v855 = vpop.f32.mrb[0].mxu0
  %v856 = vadd.f32 %v223, %v855
  %857 = vmatprep.mubr.bf16.mxu0 0
  %858 = vmatmul.mubr.bf16.gmra.mrb[0].mxu0 %v661
  %v859 = vpop.f32.mrb[0].mxu0
  %v860 = vadd.f32 %v228, %v859
  %v861 = vpop.f32.mrb[0].mxu0
  %v862 = vadd.f32 %v228, %v861
  %v863 = vpop.f32.mrb[0].mxu0
  %v864 = vadd.f32 %v233, %v863
  %v865 = vpop.f32.mrb[0].mxu0
  %v866 = vadd.f32 %v233, %v865
  %867 = vmatprep.mubr.bf16.mxu0 0
  %868 = vmatmul.mubr.bf16.gmra.mrb[0].mxu0 %v664
  %v869 = vpop.f32.mrb[0].mxu0
  %v870 = vadd.f32 %v238, %v869
  %v871 = vpop.f32.mrb[0].mxu0
  %v872 = vadd.f32 %v238, %v871
  %v873 = vpop.f32.mrb[0].mxu0
  %v874 = vadd.f32 %v243, %v873
  %v875 = vpop.f32.mrb[0].mxu0
  %v876 = vadd.f32 %v243, %v875
  %877 = vmatprep.mubr.bf16.mxu0 0
  %878 = vmatmul.mubr.bf16.gmra.mrb[0].mxu0 %v667
  %v879 = vpop.f32.mrb[0].mxu0
  %v880 = vadd.f32 %v248, %v879
  %v881 = vpop.f32.mrb[0].mxu0
  %v882 = vadd.f32 %v248, %v881
  %v883 = vpop.f32.mrb[0].mxu0
  %v884 = vadd.f32 %v253, %v883
  %v885 = vpop.f32.mrb[0].mxu0
  %v886 = vadd.f32 %v253, %v885
  %887 = vmatprep.mubr.bf16.mxu0 0
  %888 = vmatmul.mubr.bf16.gmra.mrb[0].mxu0 %v670
  %v889 = vpop.f32.mrb[0].mxu0
  %v890 = vadd.f32 %v258, %v889
  %v891 = vpop.f32.mrb[0].mxu0
  %v892 = vadd.f32 %v258, %v891
  %v893 = vpop.f32.mrb[0].mxu0
  %v894 = vadd.f32 %v263, %v893
  %v895 = vpop.f32.mrb[0].mxu0
  %v896 = vadd.f32 %v263, %v895
  %897 = vmatprep.mubr.bf16.mxu0 0
  %898 = vmatmul.mubr.bf16.gmra.mrb[0].mxu0 %v673
  %v899 = vpop.f32.mrb[0].mxu0
  %v900 = vadd.f32 %v268, %v899
  %v901 = vpop.f32.mrb[0].mxu0
  %v902 = vadd.f32 %v268, %v901
  %v903 = vpop.f32.mrb[0].mxu0
  %v904 = vadd.f32 %v273, %v903
  %v905 = vpop.f32.mrb[0].mxu0
  %v906 = vadd.f32 %v273, %v905
  %907 = vmatprep.mubr.bf16.mxu0 0
  %908 = vmatmul.mubr.bf16.gmra.mrb[0].mxu0 %v676
  %v909 = vpop.f32.mrb[0].mxu0
  %v910 = vadd.f32 %v278, %v909
  %v911 = vpop.f32.mrb[0].mxu0
  %v912 = vadd.f32 %v278, %v911
  %v913 = vpop.f32.mrb[0].mxu0
  %v914 = vadd.f32 %v283, %v913
  %v915 = vpop.f32.mrb[0].mxu0
  %v916 = vadd.f32 %v283, %v915
  %917 = vmatprep.mubr.bf16.mxu0 0
  %918 = vmatmul.mubr.bf16.gmra.mrb[0].mxu0 %v679
  %v919 = vpop.f32.mrb[0].mxu0
  %v920 = vadd.f32 %v288, %v919
  %v921 = vpop.f32.mrb[0].mxu0
  %v922 = vadd.f32 %v288, %v921
  %v923 = vpop.f32.mrb[0].mxu0
  %v924 = vadd.f32 %v293, %v923
  %v925 = vpop.f32.mrb[0].mxu0
  %v926 = vadd.f32 %v293, %v925
  %927 = vmatprep.mubr.bf16.mxu0 0
  %928 = vmatmul.mubr.bf16.gmra.mrb[0].mxu0 %v682
  %v929 = vpop.f32.mrb[0].mxu0
  %v930 = vadd.f32 %v298, %v929
  %v931 = vpop.f32.mrb[0].mxu0
  %v932 = vadd.f32 %v298, %v931
  %v933 = vpop.f32.mrb[0].mxu0
  %v934 = vadd.f32 %v303, %v933
  %v935 = vpop.f32.mrb[0].mxu0
  %v936 = vadd.f32 %v303, %v935
  %937 = vmatprep.mubr.bf16.mxu0 0
  %938 = vmatmul.mubr.bf16.gmra.mrb[0].mxu0 %v685
  %v939 = vpop.f32.mrb[0].mxu0
  %v940 = vadd.f32 %v308, %v939
  %v941 = vpop.f32.mrb[0].mxu0
  %v942 = vadd.f32 %v308, %v941
  %v943 = vpop.f32.mrb[0].mxu0
  %v944 = vadd.f32 %v313, %v943
  %v945 = vpop.f32.mrb[0].mxu0
  %v946 = vadd.f32 %v313, %v945
  %947 = vmatprep.mubr.bf16.mxu0 0
  %948 = vmatmul.mubr.bf16.gmra.mrb[0].mxu0 %v688
  %v949 = vpop.f32.mrb[0].mxu0
  %v950 = vadd.f32 %v318, %v949
  %v951 = vpop.f32.mrb[0].mxu0
  %v952 = vadd.f32 %v318, %v951
  %v953 = vpop.f32.mrb[0].mxu0
  %v954 = vadd.f32 %v323, %v953
  %v955 = vpop.f32.mrb[0].mxu0
  %v956 = vadd.f32 %v323, %v955
  %957 = vmatprep.mubr.bf16.mxu0 0
  %958 = vmatmul.mubr.bf16.gmra.mrb[0].mxu0 %v691
  %v959 = vpop.f32.mrb[0].mxu0
  %v960 = vadd.f32 %v328, %v959
  %v961 = vpop.f32.mrb[0].mxu0
  %v962 = vadd.f32 %v328, %v961
  %v963 = vpop.f32.mrb[0].mxu0
  %v964 = vadd.f32 %v333, %v963
  %v965 = vpop.f32.mrb[0].mxu0
  %v966 = vadd.f32 %v333, %v965
  %967 = vmatprep.mubr.bf16.mxu0 0
  %968 = vmatmul.mubr.bf16.gmra.mrb[0].mxu0 %v694
  %v969 = vpop.f32.mrb[0].mxu0
  %v970 = vadd.f32 %v338, %v969
  %v971 = vpop.f32.mrb[0].mxu0
  %v972 = vadd.f32 %v338, %v971
  %v973 = vpop.f32.mrb[0].mxu0
  %v974 = vadd.f32 %v343, %v973
  %v975 = vpop.f32.mrb[0].mxu0
  %v976 = vadd.f32 %v343, %v975
  %977 = vmatprep.mubr.bf16.mxu0 0
  %978 = vmatmul.mubr.bf16.gmra.mrb[0].mxu0 %v697
  %v979 = vpop.f32.mrb[0].mxu0
  %v980 = vadd.f32 %v348, %v979
  %v981 = vpop.f32.mrb[0].mxu0
  %v982 = vadd.f32 %v348, %v981
  %v983 = vpop.f32.mrb[0].mxu0
  %v984 = vadd.f32 %v353, %v983
  %v985 = vpop.f32.mrb[0].mxu0
  %v986 = vadd.f32 %v353, %v985
  %987 = vmatprep.mubr.bf16.mxu0 0
  %988 = vmatmul.mubr.bf16.gmra.mrb[0].mxu0 %v700
  %v989 = vpop.f32.mrb[0].mxu0
  %v990 = vadd.f32 %v358, %v989
  %v991 = vpop.f32.mrb[0].mxu0
  %v992 = vadd.f32 %v358, %v991
  %v993 = vpop.f32.mrb[0].mxu0
  %v994 = vadd.f32 %v363, %v993
  %v995 = vpop.f32.mrb[0].mxu0
  %v996 = vadd.f32 %v363, %v995
  %997 = vmatprep.mubr.bf16.mxu0 0
  %998 = vmatmul.mubr.bf16.gmra.mrb[0].mxu0 %v703
  %v999 = vpop.f32.mrb[0].mxu0
  %v1000 = vadd.f32 %v368, %v999
  %v1001 = vpop.f32.mrb[0].mxu0
  %v1002 = vadd.f32 %v368, %v1001
  %v1003 = vpop.f32.mrb[0].mxu0
  %v1004 = vadd.f32 %v373, %v1003
  %v1005 = vpop.f32.mrb[0].mxu0
  %v1006 = vadd.f32 %v373, %v1005
  %1007 = vmatprep.mubr.bf16.mxu0 0
  %1008 = vmatmul.mubr.bf16.gmra.mrb[0].mxu0 %v706
  %v1009 = vpop.f32.mrb[0].mxu0
  %v1010 = vadd.f32 %v378, %v1009
  %v1011 = vpop.f32.mrb[0].mxu0
  %v1012 = vadd.f32 %v378, %v1011
  %v1013 = vpop.f32.mrb[0].mxu0
  %v1014 = vadd.f32 %v383, %v1013
  %v1015 = vpop.f32.mrb[0].mxu0
  %v1016 = vadd.f32 %v383, %v1015
  %1017 = vmatprep.mubr.bf16.mxu0 0
  %1018 = vmatmul.mubr.bf16.gmra.mrb[0].mxu0 %v709
  %v1019 = vpop.f32.mrb[0].mxu0
  %v1020 = vadd.f32 %v388, %v1019
  %v1021 = vpop.f32.mrb[0].mxu0
  %v1022 = vadd.f32 %v388, %v1021
  %v1023 = vpop.f32.mrb[0].mxu0
  %v1024 = vadd.f32 %v393, %v1023
  %v1025 = vpop.f32.mrb[0].mxu0
  %v1026 = vadd.f32 %v393, %v1025
  %1027 = vmatprep.mubr.bf16.mxu0 0
  %1028 = vmatmul.mubr.bf16.gmra.mrb[0].mxu0 %v712
  %v1029 = vpop.f32.mrb[0].mxu0
  %v1030 = vadd.f32 %v398, %v1029
  %v1031 = vpop.f32.mrb[0].mxu0
  %v1032 = vadd.f32 %v398, %v1031
  %v1033 = vpop.f32.mrb[0].mxu0
  %v1034 = vadd.f32 %v403, %v1033
  %v1035 = vpop.f32.mrb[0].mxu0
  %v1036 = vadd.f32 %v403, %v1035
  %1037 = vmatprep.mubr.bf16.mxu0 0
  %1038 = vmatmul.mubr.bf16.gmra.mrb[0].mxu0 %v715
  %v1039 = vpop.f32.mrb[0].mxu0
  %v1040 = vadd.f32 %v408, %v1039
  %v1041 = vpop.f32.mrb[0].mxu0
  %v1042 = vadd.f32 %v408, %v1041
  %v1043 = vpop.f32.mrb[0].mxu0
  %v1044 = vadd.f32 %v413, %v1043
  %v1045 = vpop.f32.mrb[0].mxu0
  %v1046 = vadd.f32 %v413, %v1045
  %1047 = vmatprep.mubr.bf16.mxu0 0
  %1048 = vmatmul.mubr.bf16.gmra.mrb[0].mxu0 %v718
  %v1049 = vpop.f32.mrb[0].mxu0
  %v1050 = vadd.f32 %v418, %v1049
  %v1051 = vpop.f32.mrb[0].mxu0
  %v1052 = vadd.f32 %v418, %v1051
  %v1053 = vpop.f32.mrb[0].mxu0
  %v1054 = vadd.f32 %v423, %v1053
  %v1055 = vpop.f32.mrb[0].mxu0
  %v1056 = vadd.f32 %v423, %v1055
  %1057 = vmatprep.mubr.bf16.mxu0 0
  %1058 = vmatmul.mubr.bf16.gmra.mrb[0].mxu0 %v721
  %v1059 = vpop.f32.mrb[0].mxu0
  %v1060 = vadd.f32 %v428, %v1059
  %v1061 = vpop.f32.mrb[0].mxu0
  %v1062 = vadd.f32 %v428, %v1061
  %v1063 = vpop.f32.mrb[0].mxu0
  %v1064 = vadd.f32 %v433, %v1063
  %v1065 = vpop.f32.mrb[0].mxu0
  %v1066 = vadd.f32 %v433, %v1065
  %1067 = vmatprep.mubr.bf16.mxu0 0
  %1068 = vmatmul.mubr.bf16.gmra.mrb[0].mxu0 %v724
  %v1069 = vpop.f32.mrb[0].mxu0
  %v1070 = vadd.f32 %v438, %v1069
  %v1071 = vpop.f32.mrb[0].mxu0
  %v1072 = vadd.f32 %v438, %v1071
  %v1073 = vpop.f32.mrb[0].mxu0
  %v1074 = vadd.f32 %v443, %v1073
  %v1075 = vpop.f32.mrb[0].mxu0
  %v1076 = vadd.f32 %v443, %v1075
  %1077 = vmatprep.mubr.bf16.mxu0 0
  %1078 = vmatmul.mubr.bf16.gmra.mrb[0].mxu0 %v727
  %v1079 = vpop.f32.mrb[0].mxu0
  %v1080 = vadd.f32 %v448, %v1079
  %v1081 = vpop.f32.mrb[0].mxu0
  %v1082 = vadd.f32 %v448, %v1081
  %v1083 = vpop.f32.mrb[0].mxu0
  %v1084 = vadd.f32 %v453, %v1083
  %v1085 = vpop.f32.mrb[0].mxu0
  %v1086 = vadd.f32 %v453, %v1085
  %1087 = vmatprep.mubr.bf16.mxu0 0
  %1088 = vmatmul.mubr.bf16.gmra.mrb[0].mxu0 %v730
  %v1089 = vpop.f32.mrb[0].mxu0
  %v1090 = vadd.f32 %v458, %v1089
  %v1091 = vpop.f32.mrb[0].mxu0
  %v1092 = vadd.f32 %v458, %v1091
  %v1093 = vpop.f32.mrb[0].mxu0
  %v1094 = vadd.f32 %v463, %v1093
  %v1095 = vpop.f32.mrb[0].mxu0
  %v1096 = vadd.f32 %v463, %v1095
  %1097 = vdwg.mxu0
  %1098 = vmatprep.subr.bf16.mxu0 %v743
  %1099 = vmatpush1.bf16.msra.mxu0 %v740
  %1100 = vmatprep.subr.bf16.mxu0 0
  %1101 = vmatpush1.bf16.msra.mxu0 0
  %1102 = vmatprep.subr.bf16.mxu0 0
  %1103 = vmatpush1.bf16.msra.mxu0 0
  %1104 = vmatprep.subr.bf16.mxu0 0
  %1105 = vmatpush1.bf16.msra.mxu0 0
  %1106 = vmatprep.subr.bf16.mxu0 0
  %1107 = vmatpush1.bf16.msra.mxu0 0
  %1108 = vmatprep.subr.bf16.mxu0 0
  %1109 = vmatpush1.bf16.msra.mxu0 0
  %1110 = vmatprep.subr.bf16.mxu0 0
  %1111 = vmatpush1.bf16.msra.mxu0 0
  %1112 = vmatprep.subr.bf16.mxu0 0
  %1113 = vmatpush1.bf16.msra.mxu0 0
  %1114 = vmatprep.subr.bf16.mxu0 0
  %1115 = vmatpush1.bf16.msra.mxu0 0
  %1116 = vmatprep.subr.bf16.mxu0 0
  %1117 = vmatpush1.bf16.msra.mxu0 0
  %1118 = vmatprep.subr.bf16.mxu0 0
  %1119 = vmatpush1.bf16.msra.mxu0 0
  %1120 = vmatprep.subr.bf16.mxu0 0
  %1121 = vmatpush1.bf16.msra.mxu0 0
  %1122 = vmatprep.subr.bf16.mxu0 0
  %1123 = vmatpush1.bf16.msra.mxu0 0
  %1124 = vmatprep.subr.bf16.mxu0 0
  %1125 = vmatpush1.bf16.msra.mxu0 0
  %1126 = vmatprep.subr.bf16.mxu0 0
  %1127 = vmatpush1.bf16.msra.mxu0 0
  %1128 = vmatprep.subr.bf16.mxu0 0
  %1129 = vmatpush1.bf16.msra.mxu0 0
  %1130 = vmatprep.mubr.bf16.mxu0 0
  %1131 = vmatmul.mubr.bf16.gmra.mrb[0].mxu0 %v637
  %v1132 = vpop.f32.mrb[0].mxu0
  %v1133 = vadd.f32 %v148, %v1132
  %v1134 = vpop.f32.mrb[0].mxu0
  %v1135 = vadd.f32 %v148, %v1134
  %v1136 = vpop.f32.mrb[0].mxu0
  %v1137 = vadd.f32 %v153, %v1136
  %v1138 = vpop.f32.mrb[0].mxu0
  %v1139 = vadd.f32 %v153, %v1138
  %1140 = vmatprep.mubr.bf16.mxu0 0
  %1141 = vmatmul.mubr.bf16.gmra.mrb[0].mxu0 %v640
  %v1142 = vpop.f32.mrb[0].mxu0
  %v1143 = vadd.f32 %v158, %v1142
  %v1144 = vpop.f32.mrb[0].mxu0
  %v1145 = vadd.f32 %v158, %v1144
  %v1146 = vpop.f32.mrb[0].mxu0
  %v1147 = vadd.f32 %v163, %v1146
  %v1148 = vpop.f32.mrb[0].mxu0
  %v1149 = vadd.f32 %v163, %v1148
  %1150 = vmatprep.mubr.bf16.mxu0 0
  %1151 = vmatmul.mubr.bf16.gmra.mrb[0].mxu0 %v643
  %v1152 = vpop.f32.mrb[0].mxu0
  %v1153 = vadd.f32 %v168, %v1152
  %v1154 = vpop.f32.mrb[0].mxu0
  %v1155 = vadd.f32 %v168, %v1154
  %v1156 = vpop.f32.mrb[0].mxu0
  %v1157 = vadd.f32 %v173, %v1156
  %v1158 = vpop.f32.mrb[0].mxu0
  %v1159 = vadd.f32 %v173, %v1158
  %1160 = vmatprep.mubr.bf16.mxu0 0
  %1161 = vmatmul.mubr.bf16.gmra.mrb[0].mxu0 %v646
  %v1162 = vpop.f32.mrb[0].mxu0
  %v1163 = vadd.f32 %v178, %v1162
  %v1164 = vpop.f32.mrb[0].mxu0
  %v1165 = vadd.f32 %v178, %v1164
  %v1166 = vpop.f32.mrb[0].mxu0
  %v1167 = vadd.f32 %v183, %v1166
  %v1168 = vpop.f32.mrb[0].mxu0
  %v1169 = vadd.f32 %v183, %v1168
  %1170 = vmatprep.mubr.bf16.mxu0 0
  %1171 = vmatmul.mubr.bf16.gmra.mrb[0].mxu0 %v649
  %v1172 = vpop.f32.mrb[0].mxu0
  %v1173 = vadd.f32 %v188, %v1172
  %v1174 = vpop.f32.mrb[0].mxu0
  %v1175 = vadd.f32 %v188, %v1174
  %v1176 = vpop.f32.mrb[0].mxu0
  %v1177 = vadd.f32 %v193, %v1176
  %v1178 = vpop.f32.mrb[0].mxu0
  %v1179 = vadd.f32 %v193, %v1178
  %1180 = vmatprep.mubr.bf16.mxu0 0
  %1181 = vmatmul.mubr.bf16.gmra.mrb[0].mxu0 %v652
  %v1182 = vpop.f32.mrb[0].mxu0
  %v1183 = vadd.f32 %v198, %v1182
  %v1184 = vpop.f32.mrb[0].mxu0
  %v1185 = vadd.f32 %v198, %v1184
  %v1186 = vpop.f32.mrb[0].mxu0
  %v1187 = vadd.f32 %v203, %v1186
  %v1188 = vpop.f32.mrb[0].mxu0
  %v1189 = vadd.f32 %v203, %v1188
  %1190 = vmatprep.mubr.bf16.mxu0 0
  %1191 = vmatmul.mubr.bf16.gmra.mrb[0].mxu0 %v655
  %v1192 = vpop.f32.mrb[0].mxu0
  %v1193 = vadd.f32 %v208, %v1192
  %v1194 = vpop.f32.mrb[0].mxu0
  %v1195 = vadd.f32 %v208, %v1194
  %v1196 = vpop.f32.mrb[0].mxu0
  %v1197 = vadd.f32 %v213, %v1196
  %v1198 = vpop.f32.mrb[0].mxu0
  %v1199 = vadd.f32 %v213, %v1198
  %1200 = vmatprep.mubr.bf16.mxu0 0
  %1201 = vmatmul.mubr.bf16.gmra.mrb[0].mxu0 %v658
  %v1202 = vpop.f32.mrb[0].mxu0
  %v1203 = vadd.f32 %v218, %v1202
  %v1204 = vpop.f32.mrb[0].mxu0
  %v1205 = vadd.f32 %v218, %v1204
  %v1206 = vpop.f32.mrb[0].mxu0
  %v1207 = vadd.f32 %v223, %v1206
  %v1208 = vpop.f32.mrb[0].mxu0
  %v1209 = vadd.f32 %v223, %v1208
  %1210 = vmatprep.mubr.bf16.mxu0 0
  %1211 = vmatmul.mubr.bf16.gmra.mrb[0].mxu0 %v661
  %v1212 = vpop.f32.mrb[0].mxu0
  %v1213 = vadd.f32 %v228, %v1212
  %v1214 = vpop.f32.mrb[0].mxu0
  %v1215 = vadd.f32 %v228, %v1214
  %v1216 = vpop.f32.mrb[0].mxu0
  %v1217 = vadd.f32 %v233, %v1216
  %v1218 = vpop.f32.mrb[0].mxu0
  %v1219 = vadd.f32 %v233, %v1218
  %1220 = vmatprep.mubr.bf16.mxu0 0
  %1221 = vmatmul.mubr.bf16.gmra.mrb[0].mxu0 %v664
  %v1222 = vpop.f32.mrb[0].mxu0
  %v1223 = vadd.f32 %v238, %v1222
  %v1224 = vpop.f32.mrb[0].mxu0
  %v1225 = vadd.f32 %v238, %v1224
  %v1226 = vpop.f32.mrb[0].mxu0
  %v1227 = vadd.f32 %v243, %v1226
  %v1228 = vpop.f32.mrb[0].mxu0
  %v1229 = vadd.f32 %v243, %v1228
  %1230 = vmatprep.mubr.bf16.mxu0 0
  %1231 = vmatmul.mubr.bf16.gmra.mrb[0].mxu0 %v667
  %v1232 = vpop.f32.mrb[0].mxu0
  %v1233 = vadd.f32 %v248, %v1232
  %v1234 = vpop.f32.mrb[0].mxu0
  %v1235 = vadd.f32 %v248, %v1234
  %v1236 = vpop.f32.mrb[0].mxu0
  %v1237 = vadd.f32 %v253, %v1236
  %v1238 = vpop.f32.mrb[0].mxu0
  %v1239 = vadd.f32 %v253, %v1238
  %1240 = vmatprep.mubr.bf16.mxu0 0
  %1241 = vmatmul.mubr.bf16.gmra.mrb[0].mxu0 %v670
  %v1242 = vpop.f32.mrb[0].mxu0
  %v1243 = vadd.f32 %v258, %v1242
  %v1244 = vpop.f32.mrb[0].mxu0
  %v1245 = vadd.f32 %v258, %v1244
  %v1246 = vpop.f32.mrb[0].mxu0
  %v1247 = vadd.f32 %v263, %v1246
  %v1248 = vpop.f32.mrb[0].mxu0
  %v1249 = vadd.f32 %v263, %v1248
  %1250 = vmatprep.mubr.bf16.mxu0 0
  %1251 = vmatmul.mubr.bf16.gmra.mrb[0].mxu0 %v673
  %v1252 = vpop.f32.mrb[0].mxu0
  %v1253 = vadd.f32 %v268, %v1252
  %v1254 = vpop.f32.mrb[0].mxu0
  %v1255 = vadd.f32 %v268, %v1254
  %v1256 = vpop.f32.mrb[0].mxu0
  %v1257 = vadd.f32 %v273, %v1256
  %v1258 = vpop.f32.mrb[0].mxu0
  %v1259 = vadd.f32 %v273, %v1258
  %1260 = vmatprep.mubr.bf16.mxu0 0
  %1261 = vmatmul.mubr.bf16.gmra.mrb[0].mxu0 %v676
  %v1262 = vpop.f32.mrb[0].mxu0
  %v1263 = vadd.f32 %v278, %v1262
  %v1264 = vpop.f32.mrb[0].mxu0
  %v1265 = vadd.f32 %v278, %v1264
  %v1266 = vpop.f32.mrb[0].mxu0
  %v1267 = vadd.f32 %v283, %v1266
  %v1268 = vpop.f32.mrb[0].mxu0
  %v1269 = vadd.f32 %v283, %v1268
  %1270 = vmatprep.mubr.bf16.mxu0 0
  %1271 = vmatmul.mubr.bf16.gmra.mrb[0].mxu0 %v679
  %v1272 = vpop.f32.mrb[0].mxu0
  %v1273 = vadd.f32 %v288, %v1272
  %v1274 = vpop.f32.mrb[0].mxu0
  %v1275 = vadd.f32 %v288, %v1274
  %v1276 = vpop.f32.mrb[0].mxu0
  %v1277 = vadd.f32 %v293, %v1276
  %v1278 = vpop.f32.mrb[0].mxu0
  %v1279 = vadd.f32 %v293, %v1278
  %1280 = vmatprep.mubr.bf16.mxu0 0
  %1281 = vmatmul.mubr.bf16.gmra.mrb[0].mxu0 %v682
  %v1282 = vpop.f32.mrb[0].mxu0
  %v1283 = vadd.f32 %v298, %v1282
  %v1284 = vpop.f32.mrb[0].mxu0
  %v1285 = vadd.f32 %v298, %v1284
  %v1286 = vpop.f32.mrb[0].mxu0
  %v1287 = vadd.f32 %v303, %v1286
  %v1288 = vpop.f32.mrb[0].mxu0
  %v1289 = vadd.f32 %v303, %v1288
  %1290 = vmatprep.mubr.bf16.mxu0 0
  %1291 = vmatmul.mubr.bf16.gmra.mrb[0].mxu0 %v685
  %v1292 = vpop.f32.mrb[0].mxu0
  %v1293 = vadd.f32 %v308, %v1292
  %v1294 = vpop.f32.mrb[0].mxu0
  %v1295 = vadd.f32 %v308, %v1294
  %v1296 = vpop.f32.mrb[0].mxu0
  %v1297 = vadd.f32 %v313, %v1296
  %v1298 = vpop.f32.mrb[0].mxu0
  %v1299 = vadd.f32 %v313, %v1298
  %1300 = vmatprep.mubr.bf16.mxu0 0
  %1301 = vmatmul.mubr.bf16.gmra.mrb[0].mxu0 %v688
  %v1302 = vpop.f32.mrb[0].mxu0
  %v1303 = vadd.f32 %v318, %v1302
  %v1304 = vpop.f32.mrb[0].mxu0
  %v1305 = vadd.f32 %v318, %v1304
  %v1306 = vpop.f32.mrb[0].mxu0
  %v1307 = vadd.f32 %v323, %v1306
  %v1308 = vpop.f32.mrb[0].mxu0
  %v1309 = vadd.f32 %v323, %v1308
  %1310 = vmatprep.mubr.bf16.mxu0 0
  %1311 = vmatmul.mubr.bf16.gmra.mrb[0].mxu0 %v691
  %v1312 = vpop.f32.mrb[0].mxu0
  %v1313 = vadd.f32 %v328, %v1312
  %v1314 = vpop.f32.mrb[0].mxu0
  %v1315 = vadd.f32 %v328, %v1314
  %v1316 = vpop.f32.mrb[0].mxu0
  %v1317 = vadd.f32 %v333, %v1316
  %v1318 = vpop.f32.mrb[0].mxu0
  %v1319 = vadd.f32 %v333, %v1318
  %1320 = vmatprep.mubr.bf16.mxu0 0
  %1321 = vmatmul.mubr.bf16.gmra.mrb[0].mxu0 %v694
  %v1322 = vpop.f32.mrb[0].mxu0
  %v1323 = vadd.f32 %v338, %v1322
  %v1324 = vpop.f32.mrb[0].mxu0
  %v1325 = vadd.f32 %v338, %v1324
  %v1326 = vpop.f32.mrb[0].mxu0
  %v1327 = vadd.f32 %v343, %v1326
  %v1328 = vpop.f32.mrb[0].mxu0
  %v1329 = vadd.f32 %v343, %v1328
  %1330 = vmatprep.mubr.bf16.mxu0 0
  %1331 = vmatmul.mubr.bf16.gmra.mrb[0].mxu0 %v697
  %v1332 = vpop.f32.mrb[0].mxu0
  %v1333 = vadd.f32 %v348, %v1332
  %v1334 = vpop.f32.mrb[0].mxu0
  %v1335 = vadd.f32 %v348, %v1334
  %v1336 = vpop.f32.mrb[0].mxu0
  %v1337 = vadd.f32 %v353, %v1336
  %v1338 = vpop.f32.mrb[0].mxu0
  %v1339 = vadd.f32 %v353, %v1338
  %1340 = vmatprep.mubr.bf16.mxu0 0
  %1341 = vmatmul.mubr.bf16.gmra.mrb[0].mxu0 %v700
  %v1342 = vpop.f32.mrb[0].mxu0
  %v1343 = vadd.f32 %v358, %v1342
  %v1344 = vpop.f32.mrb[0].mxu0
  %v1345 = vadd.f32 %v358, %v1344
  %v1346 = vpop.f32.mrb[0].mxu0
  %v1347 = vadd.f32 %v363, %v1346
  %v1348 = vpop.f32.mrb[0].mxu0
  %v1349 = vadd.f32 %v363, %v1348
  %1350 = vmatprep.mubr.bf16.mxu0 0
  %1351 = vmatmul.mubr.bf16.gmra.mrb[0].mxu0 %v703
  %v1352 = vpop.f32.mrb[0].mxu0
  %v1353 = vadd.f32 %v368, %v1352
  %v1354 = vpop.f32.mrb[0].mxu0
  %v1355 = vadd.f32 %v368, %v1354
  %v1356 = vpop.f32.mrb[0].mxu0
  %v1357 = vadd.f32 %v373, %v1356
  %v1358 = vpop.f32.mrb[0].mxu0
  %v1359 = vadd.f32 %v373, %v1358
  %1360 = vmatprep.mubr.bf16.mxu0 0
  %1361 = vmatmul.mubr.bf16.gmra.mrb[0].mxu0 %v706
  %v1362 = vpop.f32.mrb[0].mxu0
  %v1363 = vadd.f32 %v378, %v1362
  %v1364 = vpop.f32.mrb[0].mxu0
  %v1365 = vadd.f32 %v378, %v1364
  %v1366 = vpop.f32.mrb[0].mxu0
  %v1367 = vadd.f32 %v383, %v1366
  %v1368 = vpop.f32.mrb[0].mxu0
  %v1369 = vadd.f32 %v383, %v1368
  %1370 = vmatprep.mubr.bf16.mxu0 0
  %1371 = vmatmul.mubr.bf16.gmra.mrb[0].mxu0 %v709
  %v1372 = vpop.f32.mrb[0].mxu0
  %v1373 = vadd.f32 %v388, %v1372
  %v1374 = vpop.f32.mrb[0].mxu0
  %v1375 = vadd.f32 %v388, %v1374
  %v1376 = vpop.f32.mrb[0].mxu0
  %v1377 = vadd.f32 %v393, %v1376
  %v1378 = vpop.f32.mrb[0].mxu0
  %v1379 = vadd.f32 %v393, %v1378
  %1380 = vmatprep.mubr.bf16.mxu0 0
  %1381 = vmatmul.mubr.bf16.gmra.mrb[0].mxu0 %v712
  %v1382 = vpop.f32.mrb[0].mxu0
  %v1383 = vadd.f32 %v398, %v1382
  %v1384 = vpop.f32.mrb[0].mxu0
  %v1385 = vadd.f32 %v398, %v1384
  %v1386 = vpop.f32.mrb[0].mxu0
  %v1387 = vadd.f32 %v403, %v1386
  %v1388 = vpop.f32.mrb[0].mxu0
  %v1389 = vadd.f32 %v403, %v1388
  %1390 = vmatprep.mubr.bf16.mxu0 0
  %1391 = vmatmul.mubr.bf16.gmra.mrb[0].mxu0 %v715
  %v1392 = vpop.f32.mrb[0].mxu0
  %v1393 = vadd.f32 %v408, %v1392
  %v1394 = vpop.f32.mrb[0].mxu0
  %v1395 = vadd.f32 %v408, %v1394
  %v1396 = vpop.f32.mrb[0].mxu0
  %v1397 = vadd.f32 %v413, %v1396
  %v1398 = vpop.f32.mrb[0].mxu0
  %v1399 = vadd.f32 %v413, %v1398
  %1400 = vmatprep.mubr.bf16.mxu0 0
  %1401 = vmatmul.mubr.bf16.gmra.mrb[0].mxu0 %v718
  %v1402 = vpop.f32.mrb[0].mxu0
  %v1403 = vadd.f32 %v418, %v1402
  %v1404 = vpop.f32.mrb[0].mxu0
  %v1405 = vadd.f32 %v418, %v1404
  %v1406 = vpop.f32.mrb[0].mxu0
  %v1407 = vadd.f32 %v423, %v1406
  %v1408 = vpop.f32.mrb[0].mxu0
  %v1409 = vadd.f32 %v423, %v1408
  %1410 = vmatprep.mubr.bf16.mxu0 0
  %1411 = vmatmul.mubr.bf16.gmra.mrb[0].mxu0 %v721
  %v1412 = vpop.f32.mrb[0].mxu0
  %v1413 = vadd.f32 %v428, %v1412
  %v1414 = vpop.f32.mrb[0].mxu0
  %v1415 = vadd.f32 %v428, %v1414
  %v1416 = vpop.f32.mrb[0].mxu0
  %v1417 = vadd.f32 %v433, %v1416
  %v1418 = vpop.f32.mrb[0].mxu0
  %v1419 = vadd.f32 %v433, %v1418
  %1420 = vmatprep.mubr.bf16.mxu0 0
  %1421 = vmatmul.mubr.bf16.gmra.mrb[0].mxu0 %v724
  %v1422 = vpop.f32.mrb[0].mxu0
  %v1423 = vadd.f32 %v438, %v1422
  %v1424 = vpop.f32.mrb[0].mxu0
  %v1425 = vadd.f32 %v438, %v1424
  %v1426 = vpop.f32.mrb[0].mxu0
  %v1427 = vadd.f32 %v443, %v1426
  %v1428 = vpop.f32.mrb[0].mxu0
  %v1429 = vadd.f32 %v443, %v1428
  %1430 = vmatprep.mubr.bf16.mxu0 0
  %1431 = vmatmul.mubr.bf16.gmra.mrb[0].mxu0 %v727
  %v1432 = vpop.f32.mrb[0].mxu0
  %v1433 = vadd.f32 %v448, %v1432
  %v1434 = vpop.f32.mrb[0].mxu0
  %v1435 = vadd.f32 %v448, %v1434
  %v1436 = vpop.f32.mrb[0].mxu0
  %v1437 = vadd.f32 %v453, %v1436
  %v1438 = vpop.f32.mrb[0].mxu0
  %v1439 = vadd.f32 %v453, %v1438
  %1440 = vmatprep.mubr.bf16.mxu0 0
  %1441 = vmatmul.mubr.bf16.gmra.mrb[0].mxu0 %v730
  %v1442 = vpop.f32.mrb[0].mxu0
  %v1443 = vadd.f32 %v458, %v1442
  %v1444 = vpop.f32.mrb[0].mxu0
  %v1445 = vadd.f32 %v458, %v1444
  %v1446 = vpop.f32.mrb[0].mxu0
  %v1447 = vadd.f32 %v463, %v1446
  %v1448 = vpop.f32.mrb[0].mxu0
  %v1449 = vadd.f32 %v463, %v1448
  %1450 = vdwg.mxu0
  %1451 = vst [vmem:[%s3] sm:$0xff] %v780
  %1452 = vst [vmem:[%s3 + $0x8] sm:$0xff] %v782
  %1453 = vst [vmem:[%s3 + $0x10] sm:$0xff] %v1133
  %1454 = vst [vmem:[%s3 + $0x18] sm:$0xff] %v1135
  %1455 = vst [vmem:[%s3 + $0x20] sm:$0xff] %v784
  %1456 = vst [vmem:[%s3 + $0x28] sm:$0xff] %v786
  %1457 = vst [vmem:[%s3 + $0x30] sm:$0xff] %v1137
  %1458 = vst [vmem:[%s3 + $0x38] sm:$0xff] %v1139
  %1459 = vst [vmem:[%s3 + $0x40] sm:$0xff] %v790
  %1460 = vst [vmem:[%s3 + $0x48] sm:$0xff] %v792
  %1461 = vst [vmem:[%s3 + $0x50] sm:$0xff] %v1143
  %1462 = vst [vmem:[%s3 + $0x58] sm:$0xff] %v1145
  %1463 = vst [vmem:[%s3 + $0x60] sm:$0xff] %v794
  %1464 = vst [vmem:[%s3 + $0x68] sm:$0xff] %v796
  %1465 = vst [vmem:[%s3 + $0x70] sm:$0xff] %v1147
  %1466 = vst [vmem:[%s3 + $0x78] sm:$0xff] %v1149
  %1467 = vst [vmem:[%s3 + $0x80] sm:$0xff] %v800
  %1468 = vst [vmem:[%s3 + $0x88] sm:$0xff] %v802
  %1469 = vst [vmem:[%s3 + $0x90] sm:$0xff] %v1153
  %1470 = vst [vmem:[%s3 + $0x98] sm:$0xff] %v1155
  %1471 = vst [vmem:[%s3 + $0xa0] sm:$0xff] %v804
  %1472 = vst [vmem:[%s3 + $0xa8] sm:$0xff] %v806
  %1473 = vst [vmem:[%s3 + $0xb0] sm:$0xff] %v1157
  %1474 = vst [vmem:[%s3 + $0xb8] sm:$0xff] %v1159
  %1475 = vst [vmem:[%s3 + $0xc0] sm:$0xff] %v810
  %1476 = vst [vmem:[%s3 + $0xc8] sm:$0xff] %v812
  %1477 = vst [vmem:[%s3 + $0xd0] sm:$0xff] %v1163
  %1478 = vst [vmem:[%s3 + $0xd8] sm:$0xff] %v1165
  %1479 = vst [vmem:[%s3 + $0xe0] sm:$0xff] %v814
  %1480 = vst [vmem:[%s3 + $0xe8] sm:$0xff] %v816
  %1481 = vst [vmem:[%s3 + $0xf0] sm:$0xff] %v1167
  %1482 = vst [vmem:[%s3 + $0xf8] sm:$0xff] %v1169
  %1483 = vst [vmem:[%s3 + $0x100] sm:$0xff] %v820
  %1484 = vst [vmem:[%s3 + $0x108] sm:$0xff] %v822
  %1485 = vst [vmem:[%s3 + $0x110] sm:$0xff] %v1173
  %1486 = vst [vmem:[%s3 + $0x118] sm:$0xff] %v1175
  %1487 = vst [vmem:[%s3 + $0x120] sm:$0xff] %v824
  %1488 = vst [vmem:[%s3 + $0x128] sm:$0xff] %v826
  %1489 = vst [vmem:[%s3 + $0x130] sm:$0xff] %v1177
  %1490 = vst [vmem:[%s3 + $0x138] sm:$0xff] %v1179
  %1491 = vst [vmem:[%s3 + $0x140] sm:$0xff] %v830
  %1492 = vst [vmem:[%s3 + $0x148] sm:$0xff] %v832
  %1493 = vst [vmem:[%s3 + $0x150] sm:$0xff] %v1183
  %1494 = vst [vmem:[%s3 + $0x158] sm:$0xff] %v1185
  %1495 = vst [vmem:[%s3 + $0x160] sm:$0xff] %v834
  %1496 = vst [vmem:[%s3 + $0x168] sm:$0xff] %v836
  %1497 = vst [vmem:[%s3 + $0x170] sm:$0xff] %v1187
  %1498 = vst [vmem:[%s3 + $0x178] sm:$0xff] %v1189
  %1499 = vst [vmem:[%s3 + $0x180] sm:$0xff] %v840
  %1500 = vst [vmem:[%s3 + $0x188] sm:$0xff] %v842
  %1501 = vst [vmem:[%s3 + $0x190] sm:$0xff] %v1193
  %1502 = vst [vmem:[%s3 + $0x198] sm:$0xff] %v1195
  %1503 = vst [vmem:[%s3 + $0x1a0] sm:$0xff] %v844
  %1504 = vst [vmem:[%s3 + $0x1a8] sm:$0xff] %v846
  %1505 = vst [vmem:[%s3 + $0x1b0] sm:$0xff] %v1197
  %1506 = vst [vmem:[%s3 + $0x1b8] sm:$0xff] %v1199
  %1507 = vst [vmem:[%s3 + $0x1c0] sm:$0xff] %v850
  %1508 = vst [vmem:[%s3 + $0x1c8] sm:$0xff] %v852
  %1509 = vst [vmem:[%s3 + $0x1d0] sm:$0xff] %v1203
  %1510 = vst [vmem:[%s3 + $0x1d8] sm:$0xff] %v1205
  %1511 = vst [vmem:[%s3 + $0x1e0] sm:$0xff] %v854
  %1512 = vst [vmem:[%s3 + $0x1e8] sm:$0xff] %v856
  %1513 = vst [vmem:[%s3 + $0x1f0] sm:$0xff] %v1207
  %1514 = vst [vmem:[%s3 + $0x1f8] sm:$0xff] %v1209
  %1515 = vst [vmem:[%s3 + $0x200] sm:$0xff] %v860
  %1516 = vst [vmem:[%s3 + $0x208] sm:$0xff] %v862
  %1517 = vst [vmem:[%s3 + $0x210] sm:$0xff] %v1213
  %1518 = vst [vmem:[%s3 + $0x218] sm:$0xff] %v1215
  %1519 = vst [vmem:[%s3 + $0x220] sm:$0xff] %v864
  %1520 = vst [vmem:[%s3 + $0x228] sm:$0xff] %v866
  %1521 = vst [vmem:[%s3 + $0x230] sm:$0xff] %v1217
  %1522 = vst [vmem:[%s3 + $0x238] sm:$0xff] %v1219
  %1523 = vst [vmem:[%s3 + $0x240] sm:$0xff] %v870
  %1524 = vst [vmem:[%s3 + $0x248] sm:$0xff] %v872
  %1525 = vst [vmem:[%s3 + $0x250] sm:$0xff] %v1223
  %1526 = vst [vmem:[%s3 + $0x258] sm:$0xff] %v1225
  %1527 = vst [vmem:[%s3 + $0x260] sm:$0xff] %v874
  %1528 = vst [vmem:[%s3 + $0x268] sm:$0xff] %v876
  %1529 = vst [vmem:[%s3 + $0x270] sm:$0xff] %v1227
  %1530 = vst [vmem:[%s3 + $0x278] sm:$0xff] %v1229
  %1531 = vst [vmem:[%s3 + $0x280] sm:$0xff] %v880
  %1532 = vst [vmem:[%s3 + $0x288] sm:$0xff] %v882
  %1533 = vst [vmem:[%s3 + $0x290] sm:$0xff] %v1233
  %1534 = vst [vmem:[%s3 + $0x298] sm:$0xff] %v1235
  %1535 = vst [vmem:[%s3 + $0x2a0] sm:$0xff] %v884
  %1536 = vst [vmem:[%s3 + $0x2a8] sm:$0xff] %v886
  %1537 = vst [vmem:[%s3 + $0x2b0] sm:$0xff] %v1237
  %1538 = vst [vmem:[%s3 + $0x2b8] sm:$0xff] %v1239
  %1539 = vst [vmem:[%s3 + $0x2c0] sm:$0xff] %v890
  %1540 = vst [vmem:[%s3 + $0x2c8] sm:$0xff] %v892
  %1541 = vst [vmem:[%s3 + $0x2d0] sm:$0xff] %v1243
  %1542 = vst [vmem:[%s3 + $0x2d8] sm:$0xff] %v1245
  %1543 = vst [vmem:[%s3 + $0x2e0] sm:$0xff] %v894
  %1544 = vst [vmem:[%s3 + $0x2e8] sm:$0xff] %v896
  %1545 = vst [vmem:[%s3 + $0x2f0] sm:$0xff] %v1247
  %1546 = vst [vmem:[%s3 + $0x2f8] sm:$0xff] %v1249
  %1547 = vst [vmem:[%s3 + $0x300] sm:$0xff] %v900
  %1548 = vst [vmem:[%s3 + $0x308] sm:$0xff] %v902
  %1549 = vst [vmem:[%s3 + $0x310] sm:$0xff] %v1253
  %1550 = vst [vmem:[%s3 + $0x318] sm:$0xff] %v1255
  %1551 = vst [vmem:[%s3 + $0x320] sm:$0xff] %v904
  %1552 = vst [vmem:[%s3 + $0x328] sm:$0xff] %v906
  %1553 = vst [vmem:[%s3 + $0x330] sm:$0xff] %v1257
  %1554 = vst [vmem:[%s3 + $0x338] sm:$0xff] %v1259
  %1555 = vst [vmem:[%s3 + $0x340] sm:$0xff] %v910
  %1556 = vst [vmem:[%s3 + $0x348] sm:$0xff] %v912
  %1557 = vst [vmem:[%s3 + $0x350] sm:$0xff] %v1263
  %1558 = vst [vmem:[%s3 + $0x358] sm:$0xff] %v1265
  %1559 = vst [vmem:[%s3 + $0x360] sm:$0xff] %v914
  %1560 = vst [vmem:[%s3 + $0x368] sm:$0xff] %v916
  %1561 = vst [vmem:[%s3 + $0x370] sm:$0xff] %v1267
  %1562 = vst [vmem:[%s3 + $0x378] sm:$0xff] %v1269
  %1563 = vst [vmem:[%s3 + $0x380] sm:$0xff] %v920
  %1564 = vst [vmem:[%s3 + $0x388] sm:$0xff] %v922
  %1565 = vst [vmem:[%s3 + $0x390] sm:$0xff] %v1273
  %1566 = vst [vmem:[%s3 + $0x398] sm:$0xff] %v1275
  %1567 = vst [vmem:[%s3 + $0x3a0] sm:$0xff] %v924
  %1568 = vst [vmem:[%s3 + $0x3a8] sm:$0xff] %v926
  %1569 = vst [vmem:[%s3 + $0x3b0] sm:$0xff] %v1277
  %1570 = vst [vmem:[%s3 + $0x3b8] sm:$0xff] %v1279
  %1571 = vst [vmem:[%s3 + $0x3c0] sm:$0xff] %v930
  %1572 = vst [vmem:[%s3 + $0x3c8] sm:$0xff] %v932
  %1573 = vst [vmem:[%s3 + $0x3d0] sm:$0xff] %v1283
  %1574 = vst [vmem:[%s3 + $0x3d8] sm:$0xff] %v1285
  %1575 = vst [vmem:[%s3 + $0x3e0] sm:$0xff] %v934
  %1576 = vst [vmem:[%s3 + $0x3e8] sm:$0xff] %v936
  %1577 = vst [vmem:[%s3 + $0x3f0] sm:$0xff] %v1287
  %1578 = vst [vmem:[%s3 + $0x3f8] sm:$0xff] %v1289
  %1579 = vst [vmem:[%s3 + $0x400] sm:$0xff] %v940
  %1580 = vst [vmem:[%s3 + $0x408] sm:$0xff] %v942
  %1581 = vst [vmem:[%s3 + $0x410] sm:$0xff] %v1293
  %1582 = vst [vmem:[%s3 + $0x418] sm:$0xff] %v1295
  %1583 = vst [vmem:[%s3 + $0x420] sm:$0xff] %v944
  %1584 = vst [vmem:[%s3 + $0x428] sm:$0xff] %v946
  %1585 = vst [vmem:[%s3 + $0x430] sm:$0xff] %v1297
  %1586 = vst [vmem:[%s3 + $0x438] sm:$0xff] %v1299
  %1587 = vst [vmem:[%s3 + $0x440] sm:$0xff] %v950
  %1588 = vst [vmem:[%s3 + $0x448] sm:$0xff] %v952
  %1589 = vst [vmem:[%s3 + $0x450] sm:$0xff] %v1303
  %1590 = vst [vmem:[%s3 + $0x458] sm:$0xff] %v1305
  %1591 = vst [vmem:[%s3 + $0x460] sm:$0xff] %v954
  %1592 = vst [vmem:[%s3 + $0x468] sm:$0xff] %v956
  %1593 = vst [vmem:[%s3 + $0x470] sm:$0xff] %v1307
  %1594 = vst [vmem:[%s3 + $0x478] sm:$0xff] %v1309
  %1595 = vst [vmem:[%s3 + $0x480] sm:$0xff] %v960
  %1596 = vst [vmem:[%s3 + $0x488] sm:$0xff] %v962
  %1597 = vst [vmem:[%s3 + $0x490] sm:$0xff] %v1313
  %1598 = vst [vmem:[%s3 + $0x498] sm:$0xff] %v1315
  %1599 = vst [vmem:[%s3 + $0x4a0] sm:$0xff] %v964
  %1600 = vst [vmem:[%s3 + $0x4a8] sm:$0xff] %v966
  %1601 = vst [vmem:[%s3 + $0x4b0] sm:$0xff] %v1317
  %1602 = vst [vmem:[%s3 + $0x4b8] sm:$0xff] %v1319
  %1603 = vst [vmem:[%s3 + $0x4c0] sm:$0xff] %v970
  %1604 = vst [vmem:[%s3 + $0x4c8] sm:$0xff] %v972
  %1605 = vst [vmem:[%s3 + $0x4d0] sm:$0xff] %v1323
  %1606 = vst [vmem:[%s3 + $0x4d8] sm:$0xff] %v1325
  %1607 = vst [vmem:[%s3 + $0x4e0] sm:$0xff] %v974
  %1608 = vst [vmem:[%s3 + $0x4e8] sm:$0xff] %v976
  %1609 = vst [vmem:[%s3 + $0x4f0] sm:$0xff] %v1327
  %1610 = vst [vmem:[%s3 + $0x4f8] sm:$0xff] %v1329
  %1611 = vst [vmem:[%s3 + $0x500] sm:$0xff] %v980
  %1612 = vst [vmem:[%s3 + $0x508] sm:$0xff] %v982
  %1613 = vst [vmem:[%s3 + $0x510] sm:$0xff] %v1333
  %1614 = vst [vmem:[%s3 + $0x518] sm:$0xff] %v1335
  %1615 = vst [vmem:[%s3 + $0x520] sm:$0xff] %v984
  %1616 = vst [vmem:[%s3 + $0x528] sm:$0xff] %v986
  %1617 = vst [vmem:[%s3 + $0x530] sm:$0xff] %v1337
  %1618 = vst [vmem:[%s3 + $0x538] sm:$0xff] %v1339
  %1619 = vst [vmem:[%s3 + $0x540] sm:$0xff] %v990
  %1620 = vst [vmem:[%s3 + $0x548] sm:$0xff] %v992
  %1621 = vst [vmem:[%s3 + $0x550] sm:$0xff] %v1343
  %1622 = vst [vmem:[%s3 + $0x558] sm:$0xff] %v1345
  %1623 = vst [vmem:[%s3 + $0x560] sm:$0xff] %v994
  %1624 = vst [vmem:[%s3 + $0x568] sm:$0xff] %v996
  %1625 = vst [vmem:[%s3 + $0x570] sm:$0xff] %v1347
  %1626 = vst [vmem:[%s3 + $0x578] sm:$0xff] %v1349
  %1627 = vst [vmem:[%s3 + $0x580] sm:$0xff] %v1000
  %1628 = vst [vmem:[%s3 + $0x588] sm:$0xff] %v1002
  %1629 = vst [vmem:[%s3 + $0x590] sm:$0xff] %v1353
  %1630 = vst [vmem:[%s3 + $0x598] sm:$0xff] %v1355
  %1631 = vst [vmem:[%s3 + $0x5a0] sm:$0xff] %v1004
  %1632 = vst [vmem:[%s3 + $0x5a8] sm:$0xff] %v1006
  %1633 = vst [vmem:[%s3 + $0x5b0] sm:$0xff] %v1357
  %1634 = vst [vmem:[%s3 + $0x5b8] sm:$0xff] %v1359
  %1635 = vst [vmem:[%s3 + $0x5c0] sm:$0xff] %v1010
  %1636 = vst [vmem:[%s3 + $0x5c8] sm:$0xff] %v1012
  %1637 = vst [vmem:[%s3 + $0x5d0] sm:$0xff] %v1363
  %1638 = vst [vmem:[%s3 + $0x5d8] sm:$0xff] %v1365
  %1639 = vst [vmem:[%s3 + $0x5e0] sm:$0xff] %v1014
  %1640 = vst [vmem:[%s3 + $0x5e8] sm:$0xff] %v1016
  %1641 = vst [vmem:[%s3 + $0x5f0] sm:$0xff] %v1367
  %1642 = vst [vmem:[%s3 + $0x5f8] sm:$0xff] %v1369
  %1643 = vst [vmem:[%s3 + $0x600] sm:$0xff] %v1020
  %1644 = vst [vmem:[%s3 + $0x608] sm:$0xff] %v1022
  %1645 = vst [vmem:[%s3 + $0x610] sm:$0xff] %v1373
  %1646 = vst [vmem:[%s3 + $0x618] sm:$0xff] %v1375
  %1647 = vst [vmem:[%s3 + $0x620] sm:$0xff] %v1024
  %1648 = vst [vmem:[%s3 + $0x628] sm:$0xff] %v1026
  %1649 = vst [vmem:[%s3 + $0x630] sm:$0xff] %v1377
  %1650 = vst [vmem:[%s3 + $0x638] sm:$0xff] %v1379
  %1651 = vst [vmem:[%s3 + $0x640] sm:$0xff] %v1030
  %1652 = vst [vmem:[%s3 + $0x648] sm:$0xff] %v1032
  %1653 = vst [vmem:[%s3 + $0x650] sm:$0xff] %v1383
  %1654 = vst [vmem:[%s3 + $0x658] sm:$0xff] %v1385
  %1655 = vst [vmem:[%s3 + $0x660] sm:$0xff] %v1034
  %1656 = vst [vmem:[%s3 + $0x668] sm:$0xff] %v1036
  %1657 = vst [vmem:[%s3 + $0x670] sm:$0xff] %v1387
  %1658 = vst [vmem:[%s3 + $0x678] sm:$0xff] %v1389
  %1659 = vst [vmem:[%s3 + $0x680] sm:$0xff] %v1040
  %1660 = vst [vmem:[%s3 + $0x688] sm:$0xff] %v1042
  %1661 = vst [vmem:[%s3 + $0x690] sm:$0xff] %v1393
  %1662 = vst [vmem:[%s3 + $0x698] sm:$0xff] %v1395
  %1663 = vst [vmem:[%s3 + $0x6a0] sm:$0xff] %v1044
  %1664 = vst [vmem:[%s3 + $0x6a8] sm:$0xff] %v1046
  %1665 = vst [vmem:[%s3 + $0x6b0] sm:$0xff] %v1397
  %1666 = vst [vmem:[%s3 + $0x6b8] sm:$0xff] %v1399
  %1667 = vst [vmem:[%s3 + $0x6c0] sm:$0xff] %v1050
  %1668 = vst [vmem:[%s3 + $0x6c8] sm:$0xff] %v1052
  %1669 = vst [vmem:[%s3 + $0x6d0] sm:$0xff] %v1403
  %1670 = vst [vmem:[%s3 + $0x6d8] sm:$0xff] %v1405
  %1671 = vst [vmem:[%s3 + $0x6e0] sm:$0xff] %v1054
  %1672 = vst [vmem:[%s3 + $0x6e8] sm:$0xff] %v1056
  %1673 = vst [vmem:[%s3 + $0x6f0] sm:$0xff] %v1407
  %1674 = vst [vmem:[%s3 + $0x6f8] sm:$0xff] %v1409
  %1675 = vst [vmem:[%s3 + $0x700] sm:$0xff] %v1060
  %1676 = vst [vmem:[%s3 + $0x708] sm:$0xff] %v1062
  %1677 = vst [vmem:[%s3 + $0x710] sm:$0xff] %v1413
  %1678 = vst [vmem:[%s3 + $0x718] sm:$0xff] %v1415
  %1679 = vst [vmem:[%s3 + $0x720] sm:$0xff] %v1064
  %1680 = vst [vmem:[%s3 + $0x728] sm:$0xff] %v1066
  %1681 = vst [vmem:[%s3 + $0x730] sm:$0xff] %v1417
  %1682 = vst [vmem:[%s3 + $0x738] sm:$0xff] %v1419
  %1683 = vst [vmem:[%s3 + $0x740] sm:$0xff] %v1070
  %1684 = vst [vmem:[%s3 + $0x748] sm:$0xff] %v1072
  %1685 = vst [vmem:[%s3 + $0x750] sm:$0xff] %v1423
  %1686 = vst [vmem:[%s3 + $0x758] sm:$0xff] %v1425
  %1687 = vst [vmem:[%s3 + $0x760] sm:$0xff] %v1074
  %1688 = vst [vmem:[%s3 + $0x768] sm:$0xff] %v1076
  %1689 = vst [vmem:[%s3 + $0x770] sm:$0xff] %v1427
  %1690 = vst [vmem:[%s3 + $0x778] sm:$0xff] %v1429
  %1691 = vst [vmem:[%s3 + $0x780] sm:$0xff] %v1080
  %1692 = vst [vmem:[%s3 + $0x788] sm:$0xff] %v1082
  %1693 = vst [vmem:[%s3 + $0x790] sm:$0xff] %v1433
  %1694 = vst [vmem:[%s3 + $0x798] sm:$0xff] %v1435
  %1695 = vst [vmem:[%s3 + $0x7a0] sm:$0xff] %v1084
  %1696 = vst [vmem:[%s3 + $0x7a8] sm:$0xff] %v1086
  %1697 = vst [vmem:[%s3 + $0x7b0] sm:$0xff] %v1437
  %1698 = vst [vmem:[%s3 + $0x7b8] sm:$0xff] %v1439
  %1699 = vst [vmem:[%s3 + $0x7c0] sm:$0xff] %v1090
  %1700 = vst [vmem:[%s3 + $0x7c8] sm:$0xff] %v1092
  %1701 = vst [vmem:[%s3 + $0x7d0] sm:$0xff] %v1443
  %1702 = vst [vmem:[%s3 + $0x7d8] sm:$0xff] %v1445
  %1703 = vst [vmem:[%s3 + $0x7e0] sm:$0xff] %v1094
  %1704 = vst [vmem:[%s3 + $0x7e8] sm:$0xff] %v1096
  %1705 = vst [vmem:[%s3 + $0x7f0] sm:$0xff] %v1447
  %1706 = vst [vmem:[%s3 + $0x7f8] sm:$0xff] %v1449
  // Predicated region
  $region14: #{sr_projection_forward.13} parent=0 // pred_check
    _
  $region15: #{sr_projection_forward.13} parent=0 // pred_check_branch
    %1708 = sbr.rel (0) target = $region17
  $region16: #{sr_projection_forward.13} parent=0 // pred_region
    _
  $region17: #{sr_projection_forward.13} parent=0 // pred_fallthru
    _
  // Predicated region
  $region18: #{sr_projection_forward.13} parent=0 // pred_check
    _
  $region19: #{sr_projection_forward.13} parent=0 // pred_check_branch
    %1710 = sbr.rel (0) target = $region21
  $region20: #{sr_projection_forward.13} parent=0 // pred_region
    _
  $region21: #{sr_projection_forward.13} parent=0 // pred_fallthru
    _

// kernel: sr_projection_forward.15
$region0: #{sr_projection_forward.15}
  #allocation0 [shape = 'u32[]', space=smem, size = 0x4, offset = 0x4, fixed_abs, tag = 'smem constant byte address 0x4 - core index']
  #allocation1 [shape = 'u32[144,128]{1,0:T(1,128)}', space=vmem, size = 0x12000, scoped, tag = 'internal scratch']
  %s0 = inlined_call_operand.vmem [shape: bf16[8,16], index: 0, kind: input, shape index: {}]
  %s1 = inlined_call_operand.vmem [shape: bf16[16,8192], index: 1, kind: input, shape index: {}]
  %s2 = inlined_call_operand.vmem [shape: f32[8,1], index: 2, kind: input, shape index: {}]
  %s3 = inlined_call_operand.vmem [shape: bf16[8,8192], index: 3, kind: output, shape index: {}]
  %s4 = sld [smem:[#allocation0]]
  $region68: #{sr_projection_forward.15} parent=0
    _
  %s6 = ssub.s32 1, %s4
  %s7 = scalar_select 0, %s6, %s4
  $region1: #{sr_projection_forward.15} parent=0
    #allocation2 [shape = 'u8[131072]{0}', space=vmem, size = 0x20000, scoped, tag = 'input window, operand 1']
    loop: start=0, step=1, limit=6
    $region2: #{sr_projection_forward.15} parent=1 // loop_pre_header
      _
    $region3: #{sr_projection_forward.15} parent=1 // loop_header
      %s9 = sphi 0, %s13
      %p10 = scmp.ge.s32.totalorder %s9, 6
      %s16 = sphi 0, %s28
      %s17 = sphi 0, %s24
      %s18 = sphi 0, %s16
      %s19 = sphi 0, %s17
      %s20 = sphi 0, %s18
      %s21 = sphi 0, %s19
      %s31 = sphi 0, %s33
      %s34 = sphi 0, %s31
      %s35 = sphi 0, %s34
      %s51 = sphi 0, %s35
      %s57 = sphi 0, %s59
      %s60 = sphi 0, %s57
      %s61 = sphi 0, %s60
      %s77 = sphi 0, %s61
      %s83 = sphi 0, %s85
      %s86 = sphi 0, %s83
      %s87 = sphi 0, %s86
      %s103 = sphi 0, %s87
      %s111 = sphi 0, %s113
      %s114 = sphi 0, %s111
      %s115 = sphi 0, %s114
      %s131 = sphi 0, %s115
    $region4: #{sr_projection_forward.15} parent=1 // loop_header_branch
      %12 = sbr.rel (%p10) target = $region8
    $region5: #{sr_projection_forward.15} parent=1 // loop_body
      %s14 = ssub.s32 %s9, 1
      %s15 = ssub.s32 %s9, 2
      %s22 = sadd.s32 1, %s17
      %p23 = scmp.ge.s32.totalorder %s22, 4
      %s24 = scalar_select %p23, 0, %s22
      %s25 = sadd.s32 1, %s16
      %s26 = scalar_select %p23, %s25, %s16
      %p27 = scmp.ge.s32.totalorder %s26, 1
      %s28 = scalar_select %p27, 0, %s26
      %s29 = ssub.s32 %s16, %s28
      %p30 = scmp.eq.s32.totalorder %s29, 0
      %s32 = sadd.s32 %s31, 1
      %s33 = scalar_select %p30, %s31, %s32
      %p36 = pneg %p30
      %p37 = scmp.eq.s32.totalorder %s9, 3
      %p38 = por %p36, %p37
      %p39 = scmp.ne.s32.totalorder %s31, %s34
      %p40 = scmp.eq.s32.totalorder %s9, 0
      %p41 = por %p39, %p40
      %p42 = scmp.ne.s32.totalorder %s31, %s34
      %p43 = scmp.eq.s32.totalorder %s14, 3
      %p44 = por %p42, %p43
      %p45 = scmp.ne.s32.totalorder %s34, %s35
      %p46 = scmp.eq.s32.totalorder %s14, 0
      %p47 = por %p45, %p46
      %p48 = scmp.ne.s32.totalorder %s34, %s35
      %p49 = scmp.eq.s32.totalorder %s15, 3
      %p50 = por %p48, %p49
      %p52 = scmp.ne.s32.totalorder %s35, %s51
      %p53 = scmp.eq.s32.totalorder %s15, 0
      %p54 = por %p52, %p53
      %s55 = ssub.s32 %s17, %s24
      %p56 = scmp.eq.s32.totalorder %s55, 0
      %s58 = sadd.s32 %s57, 1
      %s59 = scalar_select %p56, %s57, %s58
      %p62 = pneg %p56
      %p63 = scmp.eq.s32.totalorder %s9, 3
      %p64 = por %p62, %p63
      %p65 = scmp.ne.s32.totalorder %s57, %s60
      %p66 = scmp.eq.s32.totalorder %s9, 0
      %p67 = por %p65, %p66
      %p68 = scmp.ne.s32.totalorder %s57, %s60
      %p69 = scmp.eq.s32.totalorder %s14, 3
      %p70 = por %p68, %p69
      %p71 = scmp.ne.s32.totalorder %s60, %s61
      %p72 = scmp.eq.s32.totalorder %s14, 0
      %p73 = por %p71, %p72
      %p74 = scmp.ne.s32.totalorder %s60, %s61
      %p75 = scmp.eq.s32.totalorder %s15, 3
      %p76 = por %p74, %p75
      %p78 = scmp.ne.s32.totalorder %s61, %s77
      %p79 = scmp.eq.s32.totalorder %s15, 0
      %p80 = por %p78, %p79
      %s81 = ssub.s32 %s16, %s28
      %p82 = scmp.eq.s32.totalorder %s81, 0
      %s84 = sadd.s32 %s83, 1
      %s85 = scalar_select %p82, %s83, %s84
      %p88 = pneg %p82
      %p89 = scmp.eq.s32.totalorder %s9, 3
      %p90 = por %p88, %p89
      %p91 = scmp.ne.s32.totalorder %s83, %s86
      %p92 = scmp.eq.s32.totalorder %s9, 0
      %p93 = por %p91, %p92
      %p94 = scmp.ne.s32.totalorder %s83, %s86
      %p95 = scmp.eq.s32.totalorder %s14, 3
      %p96 = por %p94, %p95
      %p97 = scmp.ne.s32.totalorder %s86, %s87
      %p98 = scmp.eq.s32.totalorder %s14, 0
      %p99 = por %p97, %p98
      %p100 = scmp.ne.s32.totalorder %s86, %s87
      %p101 = scmp.eq.s32.totalorder %s15, 3
      %p102 = por %p100, %p101
      %p104 = scmp.ne.s32.totalorder %s87, %s103
      %p105 = scmp.eq.s32.totalorder %s15, 0
      %p106 = por %p104, %p105
      %s107 = ssub.s32 %s16, %s28
      %s108 = ssub.s32 %s17, %s24
      %s109 = sor.u32 %s107, %s108
      %p110 = scmp.eq.s32.totalorder %s109, 0
      %s112 = sadd.s32 %s111, 1
      %s113 = scalar_select %p110, %s111, %s112
      %p116 = pneg %p110
      %p117 = scmp.eq.s32.totalorder %s9, 3
      %p118 = por %p116, %p117
      %p119 = scmp.ne.s32.totalorder %s111, %s114
      %p120 = scmp.eq.s32.totalorder %s9, 0
      %p121 = por %p119, %p120
      %p122 = scmp.ne.s32.totalorder %s111, %s114
      %p123 = scmp.eq.s32.totalorder %s14, 3
      %p124 = por %p122, %p123
      %p125 = scmp.ne.s32.totalorder %s114, %s115
      %p126 = scmp.eq.s32.totalorder %s14, 0
      %p127 = por %p125, %p126
      %p128 = scmp.ne.s32.totalorder %s114, %s115
      %p129 = scmp.eq.s32.totalorder %s15, 3
      %p130 = por %p128, %p129
      %p132 = scmp.ne.s32.totalorder %s115, %s131
      %p133 = scmp.eq.s32.totalorder %s15, 0
      %p134 = por %p132, %p133
      %p135 = scmp.le.s32.totalorder 1, %s9
      %p136 = scmp.lt.s32.totalorder %s9, 5
      %p137 = pnand %p135, %p136
      %p138 = pneg %p137
      // Predicated region
      $region9: #{sr_projection_forward.15} parent=5 // pred_check
        _
      $region10: #{sr_projection_forward.15} parent=5 // pred_check_branch
        %140 = sbr.rel (%p137) target = $region12
      $region11: #{sr_projection_forward.15} parent=5 // pred_region
        %s141 = ssub.s32 %s9, 1
        // Predicated region
        $region13: #{sr_projection_forward.15} parent=11 // pred_check
          %p142 = pneg %p47
        $region14: #{sr_projection_forward.15} parent=11 // pred_check_branch
          %144 = sbr.rel (%p142) target = $region16
        $region15: #{sr_projection_forward.15} parent=11 // pred_region
          %p145 = scmp.lt.s32.totalorder %s18, 0
          %s146 = scalar_select %p145, %s18, 0
          %s147 = smul.addr %s146, 4
          %s148 = scalar_lea.vmem %s0, %s147
        $region16: #{sr_projection_forward.15} parent=11 // pred_fallthru
          _
        // Predicated region
        $region17: #{sr_projection_forward.15} parent=11 // pred_check
          %p149 = pneg %p99
        $region18: #{sr_projection_forward.15} parent=11 // pred_check_branch
          %151 = sbr.rel (%p149) target = $region20
        $region19: #{sr_projection_forward.15} parent=11 // pred_region
          %p152 = scmp.lt.s32.totalorder %s18, 0
          %s153 = scalar_select %p152, %s18, 0
          %s154 = smul.addr %s153, 8
          %s155 = scalar_lea.vmem %s2, %s154
        $region20: #{sr_projection_forward.15} parent=11 // pred_fallthru
          _
      $region12: #{sr_projection_forward.15} parent=5 // pred_fallthru
        _
      %p156 = scmp.lt.s32.totalorder %s9, 4
      // Predicated region
      $region21: #{sr_projection_forward.15} parent=5 // pred_check
        %p157 = pneg %p156
      $region22: #{sr_projection_forward.15} parent=5 // pred_check_branch
        %159 = sbr.rel (%p157) target = $region24
      $region23: #{sr_projection_forward.15} parent=5 // pred_region
        // Predicated region
        $region25: #{sr_projection_forward.15} parent=23 // pred_check
          %p160 = pneg %p67
        $region26: #{sr_projection_forward.15} parent=23 // pred_check_branch
          %162 = sbr.rel (%p160) target = $region28
        $region27: #{sr_projection_forward.15} parent=23 // pred_region
          %s163 = sand.u32 %s57, 1
          %s164 = sand.u32 %s57, 1
          %s165 = smul.addr %s164, 128
          %s166 = scalar_lea.vmem [#allocation2], %s165
          %s167 = smul.u32 16, %s17
          %s168 = smul.addr %s167, 4
          %s169 = scalar_lea.vmem %s1, %s168
          // Predicated region
          $region29: #{sr_projection_forward.15} parent=27 // pred_check
            _
          $region30: #{sr_projection_forward.15} parent=27 // pred_check_branch
            %171 = sbr.rel (0) target = $region32
          $region31: #{sr_projection_forward.15} parent=27 // pred_region
            // Predicated region
            $region33: #{sr_projection_forward.15} parent=31 // pred_check
              _
            $region34: #{sr_projection_forward.15} parent=31 // pred_check_branch
              %173 = sbr.rel (0) target = $region36
            $region35: #{sr_projection_forward.15} parent=31 // pred_region
              loop: start=0, step=1, limit=1
              $region37: #{sr_projection_forward.15} parent=35 // loop_pre_header
                _
              $region38: #{sr_projection_forward.15} parent=35 // loop_header
                %s175 = sphi 0, %s179
                %p176 = scmp.ge.s32.totalorder %s175, 1
                %s180 = sphi %s169, %s169
                %s181 = sphi %s166, %s166
              $region39: #{sr_projection_forward.15} parent=35 // loop_header_branch
                %178 = sbr.rel (%p176) target = $region43
              $region40: #{sr_projection_forward.15} parent=35 // loop_body
                %v182 = vld [vmem:[%s180] sm:$0xff]
                %183 = vst [vmem:[%s181] sm:$0xff] %v182
                %v184 = vld [vmem:[%s180 + $0x8] sm:$0xff]
                %185 = vst [vmem:[%s181 + $0x8] sm:$0xff] %v184
                %v186 = vld [vmem:[%s180 + $0x10] sm:$0xff]
                %187 = vst [vmem:[%s181 + $0x10] sm:$0xff] %v186
                %v188 = vld [vmem:[%s180 + $0x18] sm:$0xff]
                %189 = vst [vmem:[%s181 + $0x18] sm:$0xff] %v188
                %v190 = vld [vmem:[%s180 + $0x20] sm:$0xff]
                %191 = vst [vmem:[%s181 + $0x20] sm:$0xff] %v190
                %v192 = vld [vmem:[%s180 + $0x28] sm:$0xff]
                %193 = vst [vmem:[%s181 + $0x28] sm:$0xff] %v192
                %v194 = vld [vmem:[%s180 + $0x30] sm:$0xff]
                %195 = vst [vmem:[%s181 + $0x30] sm:$0xff] %v194
                %v196 = vld [vmem:[%s180 + $0x38] sm:$0xff]
                %197 = vst [vmem:[%s181 + $0x38] sm:$0xff] %v196
                %v198 = vld [vmem:[%s180 + $0x100] sm:$0xff]
                %199 = vst [vmem:[%s181 + $0x40] sm:$0xff] %v198
                %v200 = vld [vmem:[%s180 + $0x108] sm:$0xff]
                %201 = vst [vmem:[%s181 + $0x48] sm:$0xff] %v200
                %v202 = vld [vmem:[%s180 + $0x110] sm:$0xff]
                %203 = vst [vmem:[%s181 + $0x50] sm:$0xff] %v202
                %v204 = vld [vmem:[%s180 + $0x118] sm:$0xff]
                %205 = vst [vmem:[%s181 + $0x58] sm:$0xff] %v204
                %v206 = vld [vmem:[%s180 + $0x120] sm:$0xff]
                %207 = vst [vmem:[%s181 + $0x60] sm:$0xff] %v206
                %v208 = vld [vmem:[%s180 + $0x128] sm:$0xff]
                %209 = vst [vmem:[%s181 + $0x68] sm:$0xff] %v208
                %v210 = vld [vmem:[%s180 + $0x130] sm:$0xff]
                %211 = vst [vmem:[%s181 + $0x70] sm:$0xff] %v210
                %v212 = vld [vmem:[%s180 + $0x138] sm:$0xff]
                %213 = vst [vmem:[%s181 + $0x78] sm:$0xff] %v212
              $region41: #{sr_projection_forward.15} parent=35 // loop_footer
                %s179 = sadd.s32 1, %s175
              $region42: #{sr_projection_forward.15} parent=35 // loop_footer_branch
                %174 = sbr.rel target = $region38
              $region43: #{sr_projection_forward.15} parent=35 // loop_exit
                _
            $region36: #{sr_projection_forward.15} parent=31 // pred_fallthru
              _
            // Predicated region
            $region44: #{sr_projection_forward.15} parent=31 // pred_check
              _
            $region45: #{sr_projection_forward.15} parent=31 // pred_check_branch
              %215 = sbr.rel target = $region47
            $region46: #{sr_projection_forward.15} parent=31 // pred_region
              _
            $region47: #{sr_projection_forward.15} parent=31 // pred_fallthru
              _
          $region32: #{sr_projection_forward.15} parent=27 // pred_fallthru
            _
          %216 = vnop
        $region28: #{sr_projection_forward.15} parent=23 // pred_fallthru
          _
      $region24: #{sr_projection_forward.15} parent=5 // pred_fallthru
        _
      %p217 = scmp.le.s32.totalorder 1, %s9
      %p218 = scmp.lt.s32.totalorder %s9, 5
      %p219 = pnand %p217, %p218
      %p220 = pneg %p219
      // Predicated region
      $region48: #{sr_projection_forward.15} parent=5 // pred_check
        _
      $region49: #{sr_projection_forward.15} parent=5 // pred_check_branch
        %222 = sbr.rel (%p219) target = $region51
      $region50: #{sr_projection_forward.15} parent=5 // pred_region
        %s223 = ssub.s32 %s9, 1
        %s224 = sand.u32 %s60, 1
        %s225 = sand.u32 %s60, 1
        %s226 = smul.addr %s225, 128
        %s227 = scalar_lea.vmem [#allocation2], %s226
        // Predicated region
        $region52: #{sr_projection_forward.15} parent=50 // pred_check
          %p228 = pneg %p73
        $region53: #{sr_projection_forward.15} parent=50 // pred_check_branch
          %230 = sbr.rel (%p228) target = $region55
        $region54: #{sr_projection_forward.15} parent=50 // pred_region
          _
        $region55: #{sr_projection_forward.15} parent=50 // pred_fallthru
          _
        %p231 = scmp.lt.s32.totalorder %s18, 0
        %s232 = scalar_select %p231, %s18, 0
        %s233 = smul.addr %s232, 4
        %s234 = scalar_lea.vmem %s0, %s233
        %p235 = pneg %p47
        %p236 = pneg %p44
        %s237 = sand.u32 %s60, 1
        %s238 = sand.u32 %s60, 1
        %s239 = smul.addr %s238, 128
        %s240 = scalar_lea.vmem [#allocation2], %s239
        %p241 = pneg %p73
        %p242 = pneg %p70
        %p243 = scmp.lt.s32.totalorder %s18, 0
        %s244 = scalar_select %p243, %s18, 0
        %s245 = smul.addr %s244, 8
        %s246 = scalar_lea.vmem %s2, %s245
        %p247 = pneg %p99
        %p248 = pneg %p96
        %p249 = pneg %p127
        %p250 = pneg %p124
        %s251 = smul.u32 16, %s19
        %p252 = scmp.lt.s32.totalorder %s18, 0
        %s253 = scalar_select %p252, %s18, 0
        %p254 = scmp.lt.s32.totalorder %s251, 63
        %s255 = scalar_select %p254, %s251, 63
        %s256 = smul.addr %s253, 64
        %s257 = sadd.s32 %s255, %s256
        %s258 = smul.addr %s257, 4
        %s259 = scalar_lea.vmem %s3, %s258
        %p260 = scmp.lt.s32.totalorder %s18, 0
        %s261 = scalar_select %p260, %s18, 0
        %s262 = smul.addr %s261, 4
        %s263 = scalar_lea.vmem %s0, %s262
        %s264 = smul.u32 16, %s19
        %p265 = scmp.lt.s32.totalorder %s18, 0
        %s266 = scalar_select %p265, %s18, 0
        %s267 = smul.addr %s266, 8
        %s268 = scalar_lea.vmem %s2, %s267
        %s269 = smul.u32 16, %s19
        %p270 = scmp.lt.s32.totalorder %s18, 0
        %s271 = scalar_select %p270, %s18, 0
        %p272 = scmp.lt.s32.totalorder %s269, 63
        %s273 = scalar_select %p272, %s269, 63
        %s274 = smul.addr %s271, 64
        %s275 = sadd.s32 %s273, %s274
        %s276 = smul.addr %s275, 4
        %s277 = scalar_lea.vmem %s3, %s276
        %s278 = smul.u32 16, %s19
        %v280 = vld [vmem:[%s263] sm:$0xf]
        %v281 = vld [vmem:[%s227] sm:$0xff]
        %v282 = vld [vmem:[%s227 + $0x8] sm:$0xff]
        %v283 = vld [vmem:[%s227 + $0x10] sm:$0xff]
        %v284 = vld [vmem:[%s227 + $0x18] sm:$0xff]
        %v285 = vld [vmem:[%s227 + $0x20] sm:$0xff]
        %v286 = vld [vmem:[%s227 + $0x28] sm:$0xff]
        %v287 = vld [vmem:[%s227 + $0x30] sm:$0xff]
        %v288 = vld [vmem:[%s227 + $0x38] sm:$0xff]
        %v289 = vld [vmem:[%s227 + $0x40] sm:$0xff]
        %v290 = vld [vmem:[%s227 + $0x48] sm:$0xff]
        %v291 = vld [vmem:[%s227 + $0x50] sm:$0xff]
        %v292 = vld [vmem:[%s227 + $0x58] sm:$0xff]
        %v293 = vld [vmem:[%s227 + $0x60] sm:$0xff]
        %v294 = vld [vmem:[%s227 + $0x68] sm:$0xff]
        %v295 = vld [vmem:[%s227 + $0x70] sm:$0xff]
        %v296 = vld [vmem:[%s227 + $0x78] sm:$0xff]
        %v297 = vld [vmem:[%s268] sm:$0xff]
        %299 = vset.pattern.permute.xlu0 0
        %300 = vperm.xlu0 %299, %v297
        %v301 = vpop.permute.xlu0 %300
        %v319 = vunpack.c.l.b16 %v281
        %v320 = vunpack.c.h.b16 %v281
        %v321 = vunpack.c.l.b16 %v282
        %v322 = vunpack.c.h.b16 %v282
        %v323 = vunpack.c.l.b16 %v283
        %v324 = vunpack.c.h.b16 %v283
        %v325 = vunpack.c.l.b16 %v284
        %v326 = vunpack.c.h.b16 %v284
        %v327 = vunpack.c.l.b16 %v285
        %v328 = vunpack.c.h.b16 %v285
        %v329 = vunpack.c.l.b16 %v286
        %v330 = vunpack.c.h.b16 %v286
        %v331 = vunpack.c.l.b16 %v287
        %v332 = vunpack.c.h.b16 %v287
        %v333 = vunpack.c.l.b16 %v288
        %v334 = vunpack.c.h.b16 %v288
        %v335 = vunpack.c.l.b16 %v289
        %v336 = vunpack.c.h.b16 %v289
        %v337 = vunpack.c.l.b16 %v290
        %v338 = vunpack.c.h.b16 %v290
        %v339 = vunpack.c.l.b16 %v291
        %v340 = vunpack.c.h.b16 %v291
        %v341 = vunpack.c.l.b16 %v292
        %v342 = vunpack.c.h.b16 %v292
        %v343 = vunpack.c.l.b16 %v293
        %v344 = vunpack.c.h.b16 %v293
        %v345 = vunpack.c.l.b16 %v294
        %v346 = vunpack.c.h.b16 %v294
        %v347 = vunpack.c.l.b16 %v295
        %v348 = vunpack.c.h.b16 %v295
        %v349 = vunpack.c.l.b16 %v296
        %v350 = vunpack.c.h.b16 %v296
        %v351 = vpack.c.b16 %v335, %v319
        %v352 = vpack.c.b16 %v336, %v320
        %v353 = vpack.c.b16 %v337, %v321
        %v354 = vpack.c.b16 %v338, %v322
        %v355 = vpack.c.b16 %v339, %v323
        %v356 = vpack.c.b16 %v340, %v324
        %v357 = vpack.c.b16 %v341, %v325
        %v358 = vpack.c.b16 %v342, %v326
        %v359 = vpack.c.b16 %v343, %v327
        %v360 = vpack.c.b16 %v344, %v328
        %v361 = vpack.c.b16 %v345, %v329
        %v362 = vpack.c.b16 %v346, %v330
        %v363 = vpack.c.b16 %v347, %v331
        %v364 = vpack.c.b16 %v348, %v332
        %v365 = vpack.c.b16 %v349, %v333
        %v366 = vpack.c.b16 %v350, %v334
        %vm383 = vcmask 130048
        %v385 = vsel %vm383, %v280, 0
        %387 = vmatprep.subr.bf16.mxu0 %v352
        %388 = vmatpush1.bf16.msra.mxu0 %v351
        %389 = vmatprep.subr.bf16.mxu0 0
        %390 = vmatpush1.bf16.msra.mxu0 0
        %391 = vmatprep.subr.bf16.mxu0 0
        %392 = vmatpush1.bf16.msra.mxu0 0
        %393 = vmatprep.subr.bf16.mxu0 0
        %394 = vmatpush1.bf16.msra.mxu0 0
        %395 = vmatprep.subr.bf16.mxu0 0
        %396 = vmatpush1.bf16.msra.mxu0 0
        %397 = vmatprep.subr.bf16.mxu0 0
        %398 = vmatpush1.bf16.msra.mxu0 0
        %399 = vmatprep.subr.bf16.mxu0 0
        %400 = vmatpush1.bf16.msra.mxu0 0
        %401 = vmatprep.subr.bf16.mxu0 0
        %402 = vmatpush1.bf16.msra.mxu0 0
        %403 = vmatprep.subr.bf16.mxu0 0
        %404 = vmatpush1.bf16.msra.mxu0 0
        %405 = vmatprep.subr.bf16.mxu0 0
        %406 = vmatpush1.bf16.msra.mxu0 0
        %407 = vmatprep.subr.bf16.mxu0 0
        %408 = vmatpush1.bf16.msra.mxu0 0
        %409 = vmatprep.subr.bf16.mxu0 0
        %410 = vmatpush1.bf16.msra.mxu0 0
        %411 = vmatprep.subr.bf16.mxu0 0
        %412 = vmatpush1.bf16.msra.mxu0 0
        %413 = vmatprep.subr.bf16.mxu0 0
        %414 = vmatpush1.bf16.msra.mxu0 0
        %415 = vmatprep.subr.bf16.mxu0 0
        %416 = vmatpush1.bf16.msra.mxu0 0
        %417 = vmatprep.subr.bf16.mxu0 0
        %418 = vmatpush1.bf16.msra.mxu0 0
        %419 = vmatprep.mubr.bf16.mxu0 0
        %420 = vmatmul.mubr.bf16.gmra.mrb[0].mxu0 %v385
        %v421 = vpop.f32.mrb[0].mxu0
        %v422 = vadd.f32 %v301, %v421
        %v423 = vpop.f32.mrb[0].mxu0
        %v424 = vadd.f32 %v301, %v423
        %v425 = vpop.f32.mrb[0].mxu0
        %v426 = vpop.f32.mrb[0].mxu0
        %427 = vdwg.mxu0
        %428 = vmatprep.subr.bf16.mxu0 %v354
        %429 = vmatpush1.bf16.msra.mxu0 %v353
        %430 = vmatprep.subr.bf16.mxu0 0
        %431 = vmatpush1.bf16.msra.mxu0 0
        %432 = vmatprep.subr.bf16.mxu0 0
        %433 = vmatpush1.bf16.msra.mxu0 0
        %434 = vmatprep.subr.bf16.mxu0 0
        %435 = vmatpush1.bf16.msra.mxu0 0
        %436 = vmatprep.subr.bf16.mxu0 0
        %437 = vmatpush1.bf16.msra.mxu0 0
        %438 = vmatprep.subr.bf16.mxu0 0
        %439 = vmatpush1.bf16.msra.mxu0 0
        %440 = vmatprep.subr.bf16.mxu0 0
        %441 = vmatpush1.bf16.msra.mxu0 0
        %442 = vmatprep.subr.bf16.mxu0 0
        %443 = vmatpush1.bf16.msra.mxu0 0
        %444 = vmatprep.subr.bf16.mxu0 0
        %445 = vmatpush1.bf16.msra.mxu0 0
        %446 = vmatprep.subr.bf16.mxu0 0
        %447 = vmatpush1.bf16.msra.mxu0 0
        %448 = vmatprep.subr.bf16.mxu0 0
        %449 = vmatpush1.bf16.msra.mxu0 0
        %450 = vmatprep.subr.bf16.mxu0 0
        %451 = vmatpush1.bf16.msra.mxu0 0
        %452 = vmatprep.subr.bf16.mxu0 0
        %453 = vmatpush1.bf16.msra.mxu0 0
        %454 = vmatprep.subr.bf16.mxu0 0
        %455 = vmatpush1.bf16.msra.mxu0 0
        %456 = vmatprep.subr.bf16.mxu0 0
        %457 = vmatpush1.bf16.msra.mxu0 0
        %458 = vmatprep.subr.bf16.mxu0 0
        %459 = vmatpush1.bf16.msra.mxu0 0
        %460 = vmatprep.mubr.bf16.mxu0 0
        %461 = vmatmul.mubr.bf16.gmra.mrb[0].mxu0 %v385
        %v462 = vpop.f32.mrb[0].mxu0
        %v463 = vadd.f32 %v301, %v462
        %v464 = vpop.f32.mrb[0].mxu0
        %v465 = vadd.f32 %v301, %v464
        %v466 = vpop.f32.mrb[0].mxu0
        %v467 = vpop.f32.mrb[0].mxu0
        %468 = vdwg.mxu0
        %469 = vmatprep.subr.bf16.mxu0 %v356
        %470 = vmatpush1.bf16.msra.mxu0 %v355
        %471 = vmatprep.subr.bf16.mxu0 0
        %472 = vmatpush1.bf16.msra.mxu0 0
        %473 = vmatprep.subr.bf16.mxu0 0
        %474 = vmatpush1.bf16.msra.mxu0 0
        %475 = vmatprep.subr.bf16.mxu0 0
        %476 = vmatpush1.bf16.msra.mxu0 0
        %477 = vmatprep.subr.bf16.mxu0 0
        %478 = vmatpush1.bf16.msra.mxu0 0
        %479 = vmatprep.subr.bf16.mxu0 0
        %480 = vmatpush1.bf16.msra.mxu0 0
        %481 = vmatprep.subr.bf16.mxu0 0
        %482 = vmatpush1.bf16.msra.mxu0 0
        %483 = vmatprep.subr.bf16.mxu0 0
        %484 = vmatpush1.bf16.msra.mxu0 0
        %485 = vmatprep.subr.bf16.mxu0 0
        %486 = vmatpush1.bf16.msra.mxu0 0
        %487 = vmatprep.subr.bf16.mxu0 0
        %488 = vmatpush1.bf16.msra.mxu0 0
        %489 = vmatprep.subr.bf16.mxu0 0
        %490 = vmatpush1.bf16.msra.mxu0 0
        %491 = vmatprep.subr.bf16.mxu0 0
        %492 = vmatpush1.bf16.msra.mxu0 0
        %493 = vmatprep.subr.bf16.mxu0 0
        %494 = vmatpush1.bf16.msra.mxu0 0
        %495 = vmatprep.subr.bf16.mxu0 0
        %496 = vmatpush1.bf16.msra.mxu0 0
        %497 = vmatprep.subr.bf16.mxu0 0
        %498 = vmatpush1.bf16.msra.mxu0 0
        %499 = vmatprep.subr.bf16.mxu0 0
        %500 = vmatpush1.bf16.msra.mxu0 0
        %501 = vmatprep.mubr.bf16.mxu0 0
        %502 = vmatmul.mubr.bf16.gmra.mrb[0].mxu0 %v385
        %v503 = vpop.f32.mrb[0].mxu0
        %v504 = vadd.f32 %v301, %v503
        %v505 = vpop.f32.mrb[0].mxu0
        %v506 = vadd.f32 %v301, %v505
        %v507 = vpop.f32.mrb[0].mxu0
        %v508 = vpop.f32.mrb[0].mxu0
        %509 = vdwg.mxu0
        %510 = vmatprep.subr.bf16.mxu0 %v358
        %511 = vmatpush1.bf16.msra.mxu0 %v357
        %512 = vmatprep.subr.bf16.mxu0 0
        %513 = vmatpush1.bf16.msra.mxu0 0
        %514 = vmatprep.subr.bf16.mxu0 0
        %515 = vmatpush1.bf16.msra.mxu0 0
        %516 = vmatprep.subr.bf16.mxu0 0
        %517 = vmatpush1.bf16.msra.mxu0 0
        %518 = vmatprep.subr.bf16.mxu0 0
        %519 = vmatpush1.bf16.msra.mxu0 0
        %520 = vmatprep.subr.bf16.mxu0 0
        %521 = vmatpush1.bf16.msra.mxu0 0
        %522 = vmatprep.subr.bf16.mxu0 0
        %523 = vmatpush1.bf16.msra.mxu0 0
        %524 = vmatprep.subr.bf16.mxu0 0
        %525 = vmatpush1.bf16.msra.mxu0 0
        %526 = vmatprep.subr.bf16.mxu0 0
        %527 = vmatpush1.bf16.msra.mxu0 0
        %528 = vmatprep.subr.bf16.mxu0 0
        %529 = vmatpush1.bf16.msra.mxu0 0
        %530 = vmatprep.subr.bf16.mxu0 0
        %531 = vmatpush1.bf16.msra.mxu0 0
        %532 = vmatprep.subr.bf16.mxu0 0
        %533 = vmatpush1.bf16.msra.mxu0 0
        %534 = vmatprep.subr.bf16.mxu0 0
        %535 = vmatpush1.bf16.msra.mxu0 0
        %536 = vmatprep.subr.bf16.mxu0 0
        %537 = vmatpush1.bf16.msra.mxu0 0
        %538 = vmatprep.subr.bf16.mxu0 0
        %539 = vmatpush1.bf16.msra.mxu0 0
        %540 = vmatprep.subr.bf16.mxu0 0
        %541 = vmatpush1.bf16.msra.mxu0 0
        %542 = vmatprep.mubr.bf16.mxu0 0
        %543 = vmatmul.mubr.bf16.gmra.mrb[0].mxu0 %v385
        %v544 = vpop.f32.mrb[0].mxu0
        %v545 = vadd.f32 %v301, %v544
        %v546 = vpop.f32.mrb[0].mxu0
        %v547 = vadd.f32 %v301, %v546
        %v548 = vpop.f32.mrb[0].mxu0
        %v549 = vpop.f32.mrb[0].mxu0
        %550 = vdwg.mxu0
        %551 = vmatprep.subr.bf16.mxu0 %v360
        %552 = vmatpush1.bf16.msra.mxu0 %v359
        %553 = vmatprep.subr.bf16.mxu0 0
        %554 = vmatpush1.bf16.msra.mxu0 0
        %555 = vmatprep.subr.bf16.mxu0 0
        %556 = vmatpush1.bf16.msra.mxu0 0
        %557 = vmatprep.subr.bf16.mxu0 0
        %558 = vmatpush1.bf16.msra.mxu0 0
        %559 = vmatprep.subr.bf16.mxu0 0
        %560 = vmatpush1.bf16.msra.mxu0 0
        %561 = vmatprep.subr.bf16.mxu0 0
        %562 = vmatpush1.bf16.msra.mxu0 0
        %563 = vmatprep.subr.bf16.mxu0 0
        %564 = vmatpush1.bf16.msra.mxu0 0
        %565 = vmatprep.subr.bf16.mxu0 0
        %566 = vmatpush1.bf16.msra.mxu0 0
        %567 = vmatprep.subr.bf16.mxu0 0
        %568 = vmatpush1.bf16.msra.mxu0 0
        %569 = vmatprep.subr.bf16.mxu0 0
        %570 = vmatpush1.bf16.msra.mxu0 0
        %571 = vmatprep.subr.bf16.mxu0 0
        %572 = vmatpush1.bf16.msra.mxu0 0
        %573 = vmatprep.subr.bf16.mxu0 0
        %574 = vmatpush1.bf16.msra.mxu0 0
        %575 = vmatprep.subr.bf16.mxu0 0
        %576 = vmatpush1.bf16.msra.mxu0 0
        %577 = vmatprep.subr.bf16.mxu0 0
        %578 = vmatpush1.bf16.msra.mxu0 0
        %579 = vmatprep.subr.bf16.mxu0 0
        %580 = vmatpush1.bf16.msra.mxu0 0
        %581 = vmatprep.subr.bf16.mxu0 0
        %582 = vmatpush1.bf16.msra.mxu0 0
        %583 = vmatprep.mubr.bf16.mxu0 0
        %584 = vmatmul.mubr.bf16.gmra.mrb[0].mxu0 %v385
        %v585 = vpop.f32.mrb[0].mxu0
        %v586 = vadd.f32 %v301, %v585
        %v587 = vpop.f32.mrb[0].mxu0
        %v588 = vadd.f32 %v301, %v587
        %v589 = vpop.f32.mrb[0].mxu0
        %v590 = vpop.f32.mrb[0].mxu0
        %591 = vdwg.mxu0
        %592 = vmatprep.subr.bf16.mxu0 %v362
        %593 = vmatpush1.bf16.msra.mxu0 %v361
        %594 = vmatprep.subr.bf16.mxu0 0
        %595 = vmatpush1.bf16.msra.mxu0 0
        %596 = vmatprep.subr.bf16.mxu0 0
        %597 = vmatpush1.bf16.msra.mxu0 0
        %598 = vmatprep.subr.bf16.mxu0 0
        %599 = vmatpush1.bf16.msra.mxu0 0
        %600 = vmatprep.subr.bf16.mxu0 0
        %601 = vmatpush1.bf16.msra.mxu0 0
        %602 = vmatprep.subr.bf16.mxu0 0
        %603 = vmatpush1.bf16.msra.mxu0 0
        %604 = vmatprep.subr.bf16.mxu0 0
        %605 = vmatpush1.bf16.msra.mxu0 0
        %606 = vmatprep.subr.bf16.mxu0 0
        %607 = vmatpush1.bf16.msra.mxu0 0
        %608 = vmatprep.subr.bf16.mxu0 0
        %609 = vmatpush1.bf16.msra.mxu0 0
        %610 = vmatprep.subr.bf16.mxu0 0
        %611 = vmatpush1.bf16.msra.mxu0 0
        %612 = vmatprep.subr.bf16.mxu0 0
        %613 = vmatpush1.bf16.msra.mxu0 0
        %614 = vmatprep.subr.bf16.mxu0 0
        %615 = vmatpush1.bf16.msra.mxu0 0
        %616 = vmatprep.subr.bf16.mxu0 0
        %617 = vmatpush1.bf16.msra.mxu0 0
        %618 = vmatprep.subr.bf16.mxu0 0
        %619 = vmatpush1.bf16.msra.mxu0 0
        %620 = vmatprep.subr.bf16.mxu0 0
        %621 = vmatpush1.bf16.msra.mxu0 0
        %622 = vmatprep.subr.bf16.mxu0 0
        %623 = vmatpush1.bf16.msra.mxu0 0
        %624 = vmatprep.mubr.bf16.mxu0 0
        %625 = vmatmul.mubr.bf16.gmra.mrb[0].mxu0 %v385
        %v626 = vpop.f32.mrb[0].mxu0
        %v627 = vadd.f32 %v301, %v626
        %v628 = vpop.f32.mrb[0].mxu0
        %v629 = vadd.f32 %v301, %v628
        %v630 = vpop.f32.mrb[0].mxu0
        %v631 = vpop.f32.mrb[0].mxu0
        %632 = vdwg.mxu0
        %633 = vmatprep.subr.bf16.mxu0 %v364
        %634 = vmatpush1.bf16.msra.mxu0 %v363
        %635 = vmatprep.subr.bf16.mxu0 0
        %636 = vmatpush1.bf16.msra.mxu0 0
        %637 = vmatprep.subr.bf16.mxu0 0
        %638 = vmatpush1.bf16.msra.mxu0 0
        %639 = vmatprep.subr.bf16.mxu0 0
        %640 = vmatpush1.bf16.msra.mxu0 0
        %641 = vmatprep.subr.bf16.mxu0 0
        %642 = vmatpush1.bf16.msra.mxu0 0
        %643 = vmatprep.subr.bf16.mxu0 0
        %644 = vmatpush1.bf16.msra.mxu0 0
        %645 = vmatprep.subr.bf16.mxu0 0
        %646 = vmatpush1.bf16.msra.mxu0 0
        %647 = vmatprep.subr.bf16.mxu0 0
        %648 = vmatpush1.bf16.msra.mxu0 0
        %649 = vmatprep.subr.bf16.mxu0 0
        %650 = vmatpush1.bf16.msra.mxu0 0
        %651 = vmatprep.subr.bf16.mxu0 0
        %652 = vmatpush1.bf16.msra.mxu0 0
        %653 = vmatprep.subr.bf16.mxu0 0
        %654 = vmatpush1.bf16.msra.mxu0 0
        %655 = vmatprep.subr.bf16.mxu0 0
        %656 = vmatpush1.bf16.msra.mxu0 0
        %657 = vmatprep.subr.bf16.mxu0 0
        %658 = vmatpush1.bf16.msra.mxu0 0
        %659 = vmatprep.subr.bf16.mxu0 0
        %660 = vmatpush1.bf16.msra.mxu0 0
        %661 = vmatprep.subr.bf16.mxu0 0
        %662 = vmatpush1.bf16.msra.mxu0 0
        %663 = vmatprep.subr.bf16.mxu0 0
        %664 = vmatpush1.bf16.msra.mxu0 0
        %665 = vmatprep.mubr.bf16.mxu0 0
        %666 = vmatmul.mubr.bf16.gmra.mrb[0].mxu0 %v385
        %v667 = vpop.f32.mrb[0].mxu0
        %v668 = vadd.f32 %v301, %v667
        %v669 = vpop.f32.mrb[0].mxu0
        %v670 = vadd.f32 %v301, %v669
        %v671 = vpop.f32.mrb[0].mxu0
        %v672 = vpop.f32.mrb[0].mxu0
        %673 = vdwg.mxu0
        %674 = vmatprep.subr.bf16.mxu0 %v366
        %675 = vmatpush1.bf16.msra.mxu0 %v365
        %676 = vmatprep.subr.bf16.mxu0 0
        %677 = vmatpush1.bf16.msra.mxu0 0
        %678 = vmatprep.subr.bf16.mxu0 0
        %679 = vmatpush1.bf16.msra.mxu0 0
        %680 = vmatprep.subr.bf16.mxu0 0
        %681 = vmatpush1.bf16.msra.mxu0 0
        %682 = vmatprep.subr.bf16.mxu0 0
        %683 = vmatpush1.bf16.msra.mxu0 0
        %684 = vmatprep.subr.bf16.mxu0 0
        %685 = vmatpush1.bf16.msra.mxu0 0
        %686 = vmatprep.subr.bf16.mxu0 0
        %687 = vmatpush1.bf16.msra.mxu0 0
        %688 = vmatprep.subr.bf16.mxu0 0
        %689 = vmatpush1.bf16.msra.mxu0 0
        %690 = vmatprep.subr.bf16.mxu0 0
        %691 = vmatpush1.bf16.msra.mxu0 0
        %692 = vmatprep.subr.bf16.mxu0 0
        %693 = vmatpush1.bf16.msra.mxu0 0
        %694 = vmatprep.subr.bf16.mxu0 0
        %695 = vmatpush1.bf16.msra.mxu0 0
        %696 = vmatprep.subr.bf16.mxu0 0
        %697 = vmatpush1.bf16.msra.mxu0 0
        %698 = vmatprep.subr.bf16.mxu0 0
        %699 = vmatpush1.bf16.msra.mxu0 0
        %700 = vmatprep.subr.bf16.mxu0 0
        %701 = vmatpush1.bf16.msra.mxu0 0
        %702 = vmatprep.subr.bf16.mxu0 0
        %703 = vmatpush1.bf16.msra.mxu0 0
        %704 = vmatprep.subr.bf16.mxu0 0
        %705 = vmatpush1.bf16.msra.mxu0 0
        %706 = vmatprep.mubr.bf16.mxu0 0
        %707 = vmatmul.mubr.bf16.gmra.mrb[0].mxu0 %v385
        %v708 = vpop.f32.mrb[0].mxu0
        %v709 = vadd.f32 %v301, %v708
        %v710 = vpop.f32.mrb[0].mxu0
        %v711 = vadd.f32 %v301, %v710
        %v712 = vpop.f32.mrb[0].mxu0
        %v713 = vpop.f32.mrb[0].mxu0
        %714 = vdwg.mxu0
        %vm715 = vcmp.ge.f32.partialorder %v422, 0.0
        %vm716 = vcmp.ge.f32.partialorder %v424, 0.0
        %vm717 = vcmp.ge.f32.partialorder %v463, 0.0
        %vm718 = vcmp.ge.f32.partialorder %v465, 0.0
        %vm719 = vcmp.ge.f32.partialorder %v504, 0.0
        %vm720 = vcmp.ge.f32.partialorder %v506, 0.0
        %vm721 = vcmp.ge.f32.partialorder %v545, 0.0
        %vm722 = vcmp.ge.f32.partialorder %v547, 0.0
        %vm723 = vcmp.ge.f32.partialorder %v586, 0.0
        %vm724 = vcmp.ge.f32.partialorder %v588, 0.0
        %vm725 = vcmp.ge.f32.partialorder %v627, 0.0
        %vm726 = vcmp.ge.f32.partialorder %v629, 0.0
        %vm727 = vcmp.ge.f32.partialorder %v668, 0.0
        %vm728 = vcmp.ge.f32.partialorder %v670, 0.0
        %vm729 = vcmp.ge.f32.partialorder %v709, 0.0
        %vm730 = vcmp.ge.f32.partialorder %v711, 0.0
        %v731 = vmul.f32 %v422, 0.2
        %v732 = vmul.f32 %v424, 0.2
        %v733 = vmul.f32 %v463, 0.2
        %v734 = vmul.f32 %v465, 0.2
        %v735 = vmul.f32 %v504, 0.2
        %v736 = vmul.f32 %v506, 0.2
        %v737 = vmul.f32 %v545, 0.2
        %v738 = vmul.f32 %v547, 0.2
        %v739 = vmul.f32 %v586, 0.2
        %v740 = vmul.f32 %v588, 0.2
        %v741 = vmul.f32 %v627, 0.2
        %v742 = vmul.f32 %v629, 0.2
        %v743 = vmul.f32 %v668, 0.2
        %v744 = vmul.f32 %v670, 0.2
        %v745 = vmul.f32 %v709, 0.2
        %v746 = vmul.f32 %v711, 0.2
        %v747 = vsel %vm715, %v422, %v731
        %v748 = vsel %vm716, %v424, %v732
        %v749 = vsel %vm717, %v463, %v733
        %v750 = vsel %vm718, %v465, %v734
        %v751 = vsel %vm719, %v504, %v735
        %v752 = vsel %vm720, %v506, %v736
        %v753 = vsel %vm721, %v545, %v737
        %v754 = vsel %vm722, %v547, %v738
        %v755 = vsel %vm723, %v586, %v739
        %v756 = vsel %vm724, %v588, %v740
        %v757 = vsel %vm725, %v627, %v741
        %v758 = vsel %vm726, %v629, %v742
        %v759 = vsel %vm727, %v668, %v743
        %v760 = vsel %vm728, %v670, %v744
        %v761 = vsel %vm729, %v709, %v745
        %v762 = vsel %vm730, %v711, %v746
        %v763 = vpack.c.bf16 %v747, %v747
        %v764 = vpack.c.bf16 %v748, %v748
        %v765 = vpack.c.bf16 %v749, %v749
        %v766 = vpack.c.bf16 %v750, %v750
        %v767 = vpack.c.bf16 %v751, %v751
        %v768 = vpack.c.bf16 %v752, %v752
        %v769 = vpack.c.bf16 %v753, %v753
        %v770 = vpack.c.bf16 %v754, %v754
        %v771 = vpack.c.bf16 %v755, %v755
        %v772 = vpack.c.bf16 %v756, %v756
        %v773 = vpack.c.bf16 %v757, %v757
        %v774 = vpack.c.bf16 %v758, %v758
        %v775 = vpack.c.bf16 %v759, %v759
        %v776 = vpack.c.bf16 %v760, %v760
        %v777 = vpack.c.bf16 %v761, %v761
        %v778 = vpack.c.bf16 %v762, %v762
        %v795 = vunpack.c.l.b16 %v763
        %v796 = vunpack.c.l.b16 %v764
        %v797 = vunpack.c.l.b16 %v765
        %v798 = vunpack.c.l.b16 %v766
        %v799 = vunpack.c.l.b16 %v767
        %v800 = vunpack.c.l.b16 %v768
        %v801 = vunpack.c.l.b16 %v769
        %v802 = vunpack.c.l.b16 %v770
        %v803 = vunpack.c.l.b16 %v771
        %v804 = vunpack.c.l.b16 %v772
        %v805 = vunpack.c.l.b16 %v773
        %v806 = vunpack.c.l.b16 %v774
        %v807 = vunpack.c.l.b16 %v775
        %v808 = vunpack.c.l.b16 %v776
        %v809 = vunpack.c.l.b16 %v777
        %v810 = vunpack.c.l.b16 %v778
        %v811 = vpack.c.b16 %v796, %v795
        %v812 = vpack.c.b16 %v798, %v797
        %v813 = vpack.c.b16 %v800, %v799
        %v814 = vpack.c.b16 %v802, %v801
        %v815 = vpack.c.b16 %v804, %v803
        %v816 = vpack.c.b16 %v806, %v805
        %v817 = vpack.c.b16 %v808, %v807
        %v818 = vpack.c.b16 %v810, %v809
        %827 = vst [vmem:[%s277] sm:$0xff] %v811
        %828 = vst [vmem:[%s277 + $0x8] sm:$0xff] %v812
        %829 = vst [vmem:[%s277 + $0x10] sm:$0xff] %v813
        %830 = vst [vmem:[%s277 + $0x18] sm:$0xff] %v814
        %831 = vst [vmem:[%s277 + $0x20] sm:$0xff] %v815
        %832 = vst [vmem:[%s277 + $0x28] sm:$0xff] %v816
        %833 = vst [vmem:[%s277 + $0x30] sm:$0xff] %v817
        %834 = vst [vmem:[%s277 + $0x38] sm:$0xff] %v818
        %s835 = smul.u32 16, %s19
        %p836 = scmp.lt.s32.totalorder %s18, 0
        %s837 = scalar_select %p836, %s18, 0
        %p838 = scmp.lt.s32.totalorder %s835, 63
        %s839 = scalar_select %p838, %s835, 63
        %s840 = smul.addr %s837, 64
        %s841 = sadd.s32 %s839, %s840
        %s842 = smul.addr %s841, 4
        %s843 = scalar_lea.vmem %s3, %s842
        // Predicated region
        $region56: #{sr_projection_forward.15} parent=50 // pred_check
          %p844 = pneg %p124
        $region57: #{sr_projection_forward.15} parent=50 // pred_check_branch
          %846 = sbr.rel (%p844) target = $region59
        $region58: #{sr_projection_forward.15} parent=50 // pred_region
          %s847 = smul.u32 16, %s19
        $region59: #{sr_projection_forward.15} parent=50 // pred_fallthru
          _
      $region51: #{sr_projection_forward.15} parent=5 // pred_fallthru
        _
      %p848 = scmp.le.s32.totalorder 2, %s9
      // Predicated region
      $region60: #{sr_projection_forward.15} parent=5 // pred_check
        %p849 = pneg %p848
      $region61: #{sr_projection_forward.15} parent=5 // pred_check_branch
        %851 = sbr.rel (%p849) target = $region63
      $region62: #{sr_projection_forward.15} parent=5 // pred_region
        %s852 = ssub.s32 %s9, 2
        // Predicated region
        $region64: #{sr_projection_forward.15} parent=62 // pred_check
          %p853 = pneg %p130
        $region65: #{sr_projection_forward.15} parent=62 // pred_check_branch
          %855 = sbr.rel (%p853) target = $region67
        $region66: #{sr_projection_forward.15} parent=62 // pred_region
          %s856 = smul.u32 16, %s21
          %p857 = scmp.lt.s32.totalorder %s20, 0
          %s858 = scalar_select %p857, %s20, 0
          %p859 = scmp.lt.s32.totalorder %s856, 63
          %s860 = scalar_select %p859, %s856, 63
          %s861 = smul.addr %s858, 64
          %s862 = sadd.s32 %s860, %s861
          %s863 = smul.addr %s862, 4
          %s864 = scalar_lea.vmem %s3, %s863
        $region67: #{sr_projection_forward.15} parent=62 // pred_fallthru
          _
      $region63: #{sr_projection_forward.15} parent=5 // pred_fallthru
        _
    $region6: #{sr_projection_forward.15} parent=1 // loop_footer
      %s13 = sadd.s32 1, %s9
    $region7: #{sr_projection_forward.15} parent=1 // loop_footer_branch
      %8 = sbr.rel target = $region3
    $region8: #{sr_projection_forward.15} parent=1 // loop_exit
      _

// kernel: sr_projection_forward.16
$region0: #{sr_projection_forward.16}
  #allocation0 [shape = 'u32[]', space=smem, size = 0x4, offset = 0x4, fixed_abs, tag = 'smem constant byte address 0x4 - core index']
  #allocation1 [shape = 'u32[144,128]{1,0:T(1,128)}', space=vmem, size = 0x12000, scoped, tag = 'internal scratch']
  %s0 = inlined_call_operand.vmem [shape: bf16[8,512], index: 0, kind: input, shape index: {}]
  %s1 = inlined_call_operand.vmem [shape: bf16[512,512], index: 1, kind: input, shape index: {}]
  %s2 = inlined_call_operand.vmem [shape: f32[8,1], index: 2, kind: input, shape index: {}]
  %s3 = inlined_call_operand.hbm [shape: bf16[8,512], index: 3, kind: output, shape index: {}]
  %s4 = sld [smem:[#allocation0]]
  $region22: #{sr_projection_forward.16} parent=0
    _
  %s6 = ssub.s32 1, %s4
  %s7 = scalar_select 0, %s6, %s4
  $region1: #{sr_projection_forward.16} parent=0
    #allocation2 [shape = 'u8[8192]{0}', space=vmem, size = 0x2000, scoped, tag = 'output window, operand 0, single buffered']
    #allocation3 [shape = 's32[1]{0}', space=sflag, size = 0x4, scoped, tag = 'scoped memory for sr_projection_forward.16']
    %8 = vsyncpa [#allocation3], 0
    // Predicated region
    $region2: #{sr_projection_forward.16} parent=1 // pred_check
      _
    $region3: #{sr_projection_forward.16} parent=1 // pred_check_branch
      %10 = sbr.rel (0) target = $region5
    $region4: #{sr_projection_forward.16} parent=1 // pred_region
      _
    $region5: #{sr_projection_forward.16} parent=1 // pred_fallthru
      _
    // Predicated region
    $region6: #{sr_projection_forward.16} parent=1 // pred_check
      _
    $region7: #{sr_projection_forward.16} parent=1 // pred_check_branch
      %12 = sbr.rel (0) target = $region9
    $region8: #{sr_projection_forward.16} parent=1 // pred_region
      _
    $region9: #{sr_projection_forward.16} parent=1 // pred_fallthru
      _
    // Predicated region
    $region10: #{sr_projection_forward.16} parent=1 // pred_check
      _
    $region11: #{sr_projection_forward.16} parent=1 // pred_check_branch
      %14 = sbr.rel (0) target = $region13
    $region12: #{sr_projection_forward.16} parent=1 // pred_region
      _
    $region13: #{sr_projection_forward.16} parent=1 // pred_fallthru
      _
    %v15 = vld [vmem:[%s0] sm:$0xff]
    %v16 = vld [vmem:[%s0 + $0x8] sm:$0xff]
    %v17 = vld [vmem:[%s1] sm:$0xff]
    %v18 = vld [vmem:[%s1 + $0x8] sm:$0xff]
    %v19 = vld [vmem:[%s1 + $0x10] sm:$0xff]
    %v20 = vld [vmem:[%s1 + $0x18] sm:$0xff]
    %v21 = vld [vmem:[%s1 + $0x20] sm:$0xff]
    %v22 = vld [vmem:[%s1 + $0x28] sm:$0xff]
    %v23 = vld [vmem:[%s1 + $0x30] sm:$0xff]
    %v24 = vld [vmem:[%s1 + $0x38] sm:$0xff]
    %v25 = vld [vmem:[%s1 + $0x40] sm:$0xff]
    %v26 = vld [vmem:[%s1 + $0x48] sm:$0xff]
    %v27 = vld [vmem:[%s1 + $0x50] sm:$0xff]
    %v28 = vld [vmem:[%s1 + $0x58] sm:$0xff]
    %v29 = vld [vmem:[%s1 + $0x60] sm:$0xff]
    %v30 = vld [vmem:[%s1 + $0x68] sm:$0xff]
    %v31 = vld [vmem:[%s1 + $0x70] sm:$0xff]
    %v32 = vld [vmem:[%s1 + $0x78] sm:$0xff]
    %v33 = vld [vmem:[%s1 + $0x80] sm:$0xff]
    %v34 = vld [vmem:[%s1 + $0x88] sm:$0xff]
    %v35 = vld [vmem:[%s1 + $0x90] sm:$0xff]
    %v36 = vld [vmem:[%s1 + $0x98] sm:$0xff]
    %v37 = vld [vmem:[%s1 + $0xa0] sm:$0xff]
    %v38 = vld [vmem:[%s1 + $0xa8] sm:$0xff]
    %v39 = vld [vmem:[%s1 + $0xb0] sm:$0xff]
    %v40 = vld [vmem:[%s1 + $0xb8] sm:$0xff]
    %v41 = vld [vmem:[%s1 + $0xc0] sm:$0xff]
    %v42 = vld [vmem:[%s1 + $0xc8] sm:$0xff]
    %v43 = vld [vmem:[%s1 + $0xd0] sm:$0xff]
    %v44 = vld [vmem:[%s1 + $0xd8] sm:$0xff]
    %v45 = vld [vmem:[%s1 + $0xe0] sm:$0xff]
    %v46 = vld [vmem:[%s1 + $0xe8] sm:$0xff]
    %v47 = vld [vmem:[%s1 + $0xf0] sm:$0xff]
    %v48 = vld [vmem:[%s1 + $0xf8] sm:$0xff]
    %v49 = vld [vmem:[%s1 + $0x100] sm:$0xff]
    %v50 = vld [vmem:[%s1 + $0x108] sm:$0xff]
    %v51 = vld [vmem:[%s1 + $0x110] sm:$0xff]
    %v52 = vld [vmem:[%s1 + $0x118] sm:$0xff]
    %v53 = vld [vmem:[%s1 + $0x120] sm:$0xff]
    %v54 = vld [vmem:[%s1 + $0x128] sm:$0xff]
    %v55 = vld [vmem:[%s1 + $0x130] sm:$0xff]
    %v56 = vld [vmem:[%s1 + $0x138] sm:$0xff]
    %v57 = vld [vmem:[%s1 + $0x140] sm:$0xff]
    %v58 = vld [vmem:[%s1 + $0x148] sm:$0xff]
    %v59 = vld [vmem:[%s1 + $0x150] sm:$0xff]
    %v60 = vld [vmem:[%s1 + $0x158] sm:$0xff]
    %v61 = vld [vmem:[%s1 + $0x160] sm:$0xff]
    %v62 = vld [vmem:[%s1 + $0x168] sm:$0xff]
    %v63 = vld [vmem:[%s1 + $0x170] sm:$0xff]
    %v64 = vld [vmem:[%s1 + $0x178] sm:$0xff]
    %v65 = vld [vmem:[%s1 + $0x180] sm:$0xff]
    %v66 = vld [vmem:[%s1 + $0x188] sm:$0xff]
    %v67 = vld [vmem:[%s1 + $0x190] sm:$0xff]
    %v68 = vld [vmem:[%s1 + $0x198] sm:$0xff]
    %v69 = vld [vmem:[%s1 + $0x1a0] sm:$0xff]
    %v70 = vld [vmem:[%s1 + $0x1a8] sm:$0xff]
    %v71 = vld [vmem:[%s1 + $0x1b0] sm:$0xff]
    %v72 = vld [vmem:[%s1 + $0x1b8] sm:$0xff]
    %v73 = vld [vmem:[%s1 + $0x1c0] sm:$0xff]
    %v74 = vld [vmem:[%s1 + $0x1c8] sm:$0xff]
    %v75 = vld [vmem:[%s1 + $0x1d0] sm:$0xff]
    %v76 = vld [vmem:[%s1 + $0x1d8] sm:$0xff]
    %v77 = vld [vmem:[%s1 + $0x1e0] sm:$0xff]
    %v78 = vld [vmem:[%s1 + $0x1e8] sm:$0xff]
    %v79 = vld [vmem:[%s1 + $0x1f0] sm:$0xff]
    %v80 = vld [vmem:[%s1 + $0x1f8] sm:$0xff]
    %v81 = vld [vmem:[%s1 + $0x200] sm:$0xff]
    %v82 = vld [vmem:[%s1 + $0x208] sm:$0xff]
    %v83 = vld [vmem:[%s1 + $0x210] sm:$0xff]
    %v84 = vld [vmem:[%s1 + $0x218] sm:$0xff]
    %v85 = vld [vmem:[%s1 + $0x220] sm:$0xff]
    %v86 = vld [vmem:[%s1 + $0x228] sm:$0xff]
    %v87 = vld [vmem:[%s1 + $0x230] sm:$0xff]
    %v88 = vld [vmem:[%s1 + $0x238] sm:$0xff]
    %v89 = vld [vmem:[%s1 + $0x240] sm:$0xff]
    %v90 = vld [vmem:[%s1 + $0x248] sm:$0xff]
    %v91 = vld [vmem:[%s1 + $0x250] sm:$0xff]
    %v92 = vld [vmem:[%s1 + $0x258] sm:$0xff]
    %v93 = vld [vmem:[%s1 + $0x260] sm:$0xff]
    %v94 = vld [vmem:[%s1 + $0x268] sm:$0xff]
    %v95 = vld [vmem:[%s1 + $0x270] sm:$0xff]
    %v96 = vld [vmem:[%s1 + $0x278] sm:$0xff]
    %v97 = vld [vmem:[%s1 + $0x280] sm:$0xff]
    %v98 = vld [vmem:[%s1 + $0x288] sm:$0xff]
    %v99 = vld [vmem:[%s1 + $0x290] sm:$0xff]
    %v100 = vld [vmem:[%s1 + $0x298] sm:$0xff]
    %v101 = vld [vmem:[%s1 + $0x2a0] sm:$0xff]
    %v102 = vld [vmem:[%s1 + $0x2a8] sm:$0xff]
    %v103 = vld [vmem:[%s1 + $0x2b0] sm:$0xff]
    %v104 = vld [vmem:[%s1 + $0x2b8] sm:$0xff]
    %v105 = vld [vmem:[%s1 + $0x2c0] sm:$0xff]
    %v106 = vld [vmem:[%s1 + $0x2c8] sm:$0xff]
    %v107 = vld [vmem:[%s1 + $0x2d0] sm:$0xff]
    %v108 = vld [vmem:[%s1 + $0x2d8] sm:$0xff]
    %v109 = vld [vmem:[%s1 + $0x2e0] sm:$0xff]
    %v110 = vld [vmem:[%s1 + $0x2e8] sm:$0xff]
    %v111 = vld [vmem:[%s1 + $0x2f0] sm:$0xff]
    %v112 = vld [vmem:[%s1 + $0x2f8] sm:$0xff]
    %v113 = vld [vmem:[%s1 + $0x300] sm:$0xff]
    %v114 = vld [vmem:[%s1 + $0x308] sm:$0xff]
    %v115 = vld [vmem:[%s1 + $0x310] sm:$0xff]
    %v116 = vld [vmem:[%s1 + $0x318] sm:$0xff]
    %v117 = vld [vmem:[%s1 + $0x320] sm:$0xff]
    %v118 = vld [vmem:[%s1 + $0x328] sm:$0xff]
    %v119 = vld [vmem:[%s1 + $0x330] sm:$0xff]
    %v120 = vld [vmem:[%s1 + $0x338] sm:$0xff]
    %v121 = vld [vmem:[%s1 + $0x340] sm:$0xff]
    %v122 = vld [vmem:[%s1 + $0x348] sm:$0xff]
    %v123 = vld [vmem:[%s1 + $0x350] sm:$0xff]
    %v124 = vld [vmem:[%s1 + $0x358] sm:$0xff]
    %v125 = vld [vmem:[%s1 + $0x360] sm:$0xff]
    %v126 = vld [vmem:[%s1 + $0x368] sm:$0xff]
    %v127 = vld [vmem:[%s1 + $0x370] sm:$0xff]
    %v128 = vld [vmem:[%s1 + $0x378] sm:$0xff]
    %v129 = vld [vmem:[%s1 + $0x380] sm:$0xff]
    %v130 = vld [vmem:[%s1 + $0x388] sm:$0xff]
    %v131 = vld [vmem:[%s1 + $0x390] sm:$0xff]
    %v132 = vld [vmem:[%s1 + $0x398] sm:$0xff]
    %v133 = vld [vmem:[%s1 + $0x3a0] sm:$0xff]
    %v134 = vld [vmem:[%s1 + $0x3a8] sm:$0xff]
    %v135 = vld [vmem:[%s1 + $0x3b0] sm:$0xff]
    %v136 = vld [vmem:[%s1 + $0x3b8] sm:$0xff]
    %v137 = vld [vmem:[%s1 + $0x3c0] sm:$0xff]
    %v138 = vld [vmem:[%s1 + $0x3c8] sm:$0xff]
    %v139 = vld [vmem:[%s1 + $0x3d0] sm:$0xff]
    %v140 = vld [vmem:[%s1 + $0x3d8] sm:$0xff]
    %v141 = vld [vmem:[%s1 + $0x3e0] sm:$0xff]
    %v142 = vld [vmem:[%s1 + $0x3e8] sm:$0xff]
    %v143 = vld [vmem:[%s1 + $0x3f0] sm:$0xff]
    %v144 = vld [vmem:[%s1 + $0x3f8] sm:$0xff]
    %v145 = vld [vmem:[%s2] sm:$0xff]
    %147 = vset.pattern.permute.xlu0 0
    %148 = vperm.xlu0 %147, %v145
    %v149 = vpop.permute.xlu0 %148
    %v153 = vunpack.c.l.b16 %v15
    %v154 = vunpack.c.h.b16 %v15
    %v155 = vunpack.c.l.b16 %v16
    %v156 = vunpack.c.h.b16 %v16
    %v157 = vpack.c.b16 %v153, %v153
    %v158 = vpack.c.b16 %v154, %v154
    %v159 = vpack.c.b16 %v155, %v155
    %v160 = vpack.c.b16 %v156, %v156
    %v293 = vunpack.c.l.b16 %v17
    %v294 = vunpack.c.h.b16 %v17
    %v295 = vunpack.c.l.b16 %v18
    %v296 = vunpack.c.h.b16 %v18
    %v297 = vunpack.c.l.b16 %v19
    %v298 = vunpack.c.h.b16 %v19
    %v299 = vunpack.c.l.b16 %v20
    %v300 = vunpack.c.h.b16 %v20
    %v301 = vunpack.c.l.b16 %v21
    %v302 = vunpack.c.h.b16 %v21
    %v303 = vunpack.c.l.b16 %v22
    %v304 = vunpack.c.h.b16 %v22
    %v305 = vunpack.c.l.b16 %v23
    %v306 = vunpack.c.h.b16 %v23
    %v307 = vunpack.c.l.b16 %v24
    %v308 = vunpack.c.h.b16 %v24
    %v309 = vunpack.c.l.b16 %v25
    %v310 = vunpack.c.h.b16 %v25
    %v311 = vunpack.c.l.b16 %v26
    %v312 = vunpack.c.h.b16 %v26
    %v313 = vunpack.c.l.b16 %v27
    %v314 = vunpack.c.h.b16 %v27
    %v315 = vunpack.c.l.b16 %v28
    %v316 = vunpack.c.h.b16 %v28
    %v317 = vunpack.c.l.b16 %v29
    %v318 = vunpack.c.h.b16 %v29
    %v319 = vunpack.c.l.b16 %v30
    %v320 = vunpack.c.h.b16 %v30
    %v321 = vunpack.c.l.b16 %v31
    %v322 = vunpack.c.h.b16 %v31
    %v323 = vunpack.c.l.b16 %v32
    %v324 = vunpack.c.h.b16 %v32
    %v325 = vunpack.c.l.b16 %v33
    %v326 = vunpack.c.h.b16 %v33
    %v327 = vunpack.c.l.b16 %v34
    %v328 = vunpack.c.h.b16 %v34
    %v329 = vunpack.c.l.b16 %v35
    %v330 = vunpack.c.h.b16 %v35
    %v331 = vunpack.c.l.b16 %v36
    %v332 = vunpack.c.h.b16 %v36
    %v333 = vunpack.c.l.b16 %v37
    %v334 = vunpack.c.h.b16 %v37
    %v335 = vunpack.c.l.b16 %v38
    %v336 = vunpack.c.h.b16 %v38
    %v337 = vunpack.c.l.b16 %v39
    %v338 = vunpack.c.h.b16 %v39
    %v339 = vunpack.c.l.b16 %v40
    %v340 = vunpack.c.h.b16 %v40
    %v341 = vunpack.c.l.b16 %v41
    %v342 = vunpack.c.h.b16 %v41
    %v343 = vunpack.c.l.b16 %v42
    %v344 = vunpack.c.h.b16 %v42
    %v345 = vunpack.c.l.b16 %v43
    %v346 = vunpack.c.h.b16 %v43
    %v347 = vunpack.c.l.b16 %v44
    %v348 = vunpack.c.h.b16 %v44
    %v349 = vunpack.c.l.b16 %v45
    %v350 = vunpack.c.h.b16 %v45
    %v351 = vunpack.c.l.b16 %v46
    %v352 = vunpack.c.h.b16 %v46
    %v353 = vunpack.c.l.b16 %v47
    %v354 = vunpack.c.h.b16 %v47
    %v355 = vunpack.c.l.b16 %v48
    %v356 = vunpack.c.h.b16 %v48
    %v357 = vunpack.c.l.b16 %v49
    %v358 = vunpack.c.h.b16 %v49
    %v359 = vunpack.c.l.b16 %v50
    %v360 = vunpack.c.h.b16 %v50
    %v361 = vunpack.c.l.b16 %v51
    %v362 = vunpack.c.h.b16 %v51
    %v363 = vunpack.c.l.b16 %v52
    %v364 = vunpack.c.h.b16 %v52
    %v365 = vunpack.c.l.b16 %v53
    %v366 = vunpack.c.h.b16 %v53
    %v367 = vunpack.c.l.b16 %v54
    %v368 = vunpack.c.h.b16 %v54
    %v369 = vunpack.c.l.b16 %v55
    %v370 = vunpack.c.h.b16 %v55
    %v371 = vunpack.c.l.b16 %v56
    %v372 = vunpack.c.h.b16 %v56
    %v373 = vunpack.c.l.b16 %v57
    %v374 = vunpack.c.h.b16 %v57
    %v375 = vunpack.c.l.b16 %v58
    %v376 = vunpack.c.h.b16 %v58
    %v377 = vunpack.c.l.b16 %v59
    %v378 = vunpack.c.h.b16 %v59
    %v379 = vunpack.c.l.b16 %v60
    %v380 = vunpack.c.h.b16 %v60
    %v381 = vunpack.c.l.b16 %v61
    %v382 = vunpack.c.h.b16 %v61
    %v383 = vunpack.c.l.b16 %v62
    %v384 = vunpack.c.h.b16 %v62
    %v385 = vunpack.c.l.b16 %v63
    %v386 = vunpack.c.h.b16 %v63
    %v387 = vunpack.c.l.b16 %v64
    %v388 = vunpack.c.h.b16 %v64
    %v389 = vunpack.c.l.b16 %v65
    %v390 = vunpack.c.h.b16 %v65
    %v391 = vunpack.c.l.b16 %v66
    %v392 = vunpack.c.h.b16 %v66
    %v393 = vunpack.c.l.b16 %v67
    %v394 = vunpack.c.h.b16 %v67
    %v395 = vunpack.c.l.b16 %v68
    %v396 = vunpack.c.h.b16 %v68
    %v397 = vunpack.c.l.b16 %v69
    %v398 = vunpack.c.h.b16 %v69
    %v399 = vunpack.c.l.b16 %v70
    %v400 = vunpack.c.h.b16 %v70
    %v401 = vunpack.c.l.b16 %v71
    %v402 = vunpack.c.h.b16 %v71
    %v403 = vunpack.c.l.b16 %v72
    %v404 = vunpack.c.h.b16 %v72
    %v405 = vunpack.c.l.b16 %v73
    %v406 = vunpack.c.h.b16 %v73
    %v407 = vunpack.c.l.b16 %v74
    %v408 = vunpack.c.h.b16 %v74
    %v409 = vunpack.c.l.b16 %v75
    %v410 = vunpack.c.h.b16 %v75
    %v411 = vunpack.c.l.b16 %v76
    %v412 = vunpack.c.h.b16 %v76
    %v413 = vunpack.c.l.b16 %v77
    %v414 = vunpack.c.h.b16 %v77
    %v415 = vunpack.c.l.b16 %v78
    %v416 = vunpack.c.h.b16 %v78
    %v417 = vunpack.c.l.b16 %v79
    %v418 = vunpack.c.h.b16 %v79
    %v419 = vunpack.c.l.b16 %v80
    %v420 = vunpack.c.h.b16 %v80
    %v421 = vunpack.c.l.b16 %v81
    %v422 = vunpack.c.h.b16 %v81
    %v423 = vunpack.c.l.b16 %v82
    %v424 = vunpack.c.h.b16 %v82
    %v425 = vunpack.c.l.b16 %v83
    %v426 = vunpack.c.h.b16 %v83
    %v427 = vunpack.c.l.b16 %v84
    %v428 = vunpack.c.h.b16 %v84
    %v429 = vunpack.c.l.b16 %v85
    %v430 = vunpack.c.h.b16 %v85
    %v431 = vunpack.c.l.b16 %v86
    %v432 = vunpack.c.h.b16 %v86
    %v433 = vunpack.c.l.b16 %v87
    %v434 = vunpack.c.h.b16 %v87
    %v435 = vunpack.c.l.b16 %v88
    %v436 = vunpack.c.h.b16 %v88
    %v437 = vunpack.c.l.b16 %v89
    %v438 = vunpack.c.h.b16 %v89
    %v439 = vunpack.c.l.b16 %v90
    %v440 = vunpack.c.h.b16 %v90
    %v441 = vunpack.c.l.b16 %v91
    %v442 = vunpack.c.h.b16 %v91
    %v443 = vunpack.c.l.b16 %v92
    %v444 = vunpack.c.h.b16 %v92
    %v445 = vunpack.c.l.b16 %v93
    %v446 = vunpack.c.h.b16 %v93
    %v447 = vunpack.c.l.b16 %v94
    %v448 = vunpack.c.h.b16 %v94
    %v449 = vunpack.c.l.b16 %v95
    %v450 = vunpack.c.h.b16 %v95
    %v451 = vunpack.c.l.b16 %v96
    %v452 = vunpack.c.h.b16 %v96
    %v453 = vunpack.c.l.b16 %v97
    %v454 = vunpack.c.h.b16 %v97
    %v455 = vunpack.c.l.b16 %v98
    %v456 = vunpack.c.h.b16 %v98
    %v457 = vunpack.c.l.b16 %v99
    %v458 = vunpack.c.h.b16 %v99
    %v459 = vunpack.c.l.b16 %v100
    %v460 = vunpack.c.h.b16 %v100
    %v461 = vunpack.c.l.b16 %v101
    %v462 = vunpack.c.h.b16 %v101
    %v463 = vunpack.c.l.b16 %v102
    %v464 = vunpack.c.h.b16 %v102
    %v465 = vunpack.c.l.b16 %v103
    %v466 = vunpack.c.h.b16 %v103
    %v467 = vunpack.c.l.b16 %v104
    %v468 = vunpack.c.h.b16 %v104
    %v469 = vunpack.c.l.b16 %v105
    %v470 = vunpack.c.h.b16 %v105
    %v471 = vunpack.c.l.b16 %v106
    %v472 = vunpack.c.h.b16 %v106
    %v473 = vunpack.c.l.b16 %v107
    %v474 = vunpack.c.h.b16 %v107
    %v475 = vunpack.c.l.b16 %v108
    %v476 = vunpack.c.h.b16 %v108
    %v477 = vunpack.c.l.b16 %v109
    %v478 = vunpack.c.h.b16 %v109
    %v479 = vunpack.c.l.b16 %v110
    %v480 = vunpack.c.h.b16 %v110
    %v481 = vunpack.c.l.b16 %v111
    %v482 = vunpack.c.h.b16 %v111
    %v483 = vunpack.c.l.b16 %v112
    %v484 = vunpack.c.h.b16 %v112
    %v485 = vunpack.c.l.b16 %v113
    %v486 = vunpack.c.h.b16 %v113
    %v487 = vunpack.c.l.b16 %v114
    %v488 = vunpack.c.h.b16 %v114
    %v489 = vunpack.c.l.b16 %v115
    %v490 = vunpack.c.h.b16 %v115
    %v491 = vunpack.c.l.b16 %v116
    %v492 = vunpack.c.h.b16 %v116
    %v493 = vunpack.c.l.b16 %v117
    %v494 = vunpack.c.h.b16 %v117
    %v495 = vunpack.c.l.b16 %v118
    %v496 = vunpack.c.h.b16 %v118
    %v497 = vunpack.c.l.b16 %v119
    %v498 = vunpack.c.h.b16 %v119
    %v499 = vunpack.c.l.b16 %v120
    %v500 = vunpack.c.h.b16 %v120
    %v501 = vunpack.c.l.b16 %v121
    %v502 = vunpack.c.h.b16 %v121
    %v503 = vunpack.c.l.b16 %v122
    %v504 = vunpack.c.h.b16 %v122
    %v505 = vunpack.c.l.b16 %v123
    %v506 = vunpack.c.h.b16 %v123
    %v507 = vunpack.c.l.b16 %v124
    %v508 = vunpack.c.h.b16 %v124
    %v509 = vunpack.c.l.b16 %v125
    %v510 = vunpack.c.h.b16 %v125
    %v511 = vunpack.c.l.b16 %v126
    %v512 = vunpack.c.h.b16 %v126
    %v513 = vunpack.c.l.b16 %v127
    %v514 = vunpack.c.h.b16 %v127
    %v515 = vunpack.c.l.b16 %v128
    %v516 = vunpack.c.h.b16 %v128
    %v517 = vunpack.c.l.b16 %v129
    %v518 = vunpack.c.h.b16 %v129
    %v519 = vunpack.c.l.b16 %v130
    %v520 = vunpack.c.h.b16 %v130
    %v521 = vunpack.c.l.b16 %v131
    %v522 = vunpack.c.h.b16 %v131
    %v523 = vunpack.c.l.b16 %v132
    %v524 = vunpack.c.h.b16 %v132
    %v525 = vunpack.c.l.b16 %v133
    %v526 = vunpack.c.h.b16 %v133
    %v527 = vunpack.c.l.b16 %v134
    %v528 = vunpack.c.h.b16 %v134
    %v529 = vunpack.c.l.b16 %v135
    %v530 = vunpack.c.h.b16 %v135
    %v531 = vunpack.c.l.b16 %v136
    %v532 = vunpack.c.h.b16 %v136
    %v533 = vunpack.c.l.b16 %v137
    %v534 = vunpack.c.h.b16 %v137
    %v535 = vunpack.c.l.b16 %v138
    %v536 = vunpack.c.h.b16 %v138
    %v537 = vunpack.c.l.b16 %v139
    %v538 = vunpack.c.h.b16 %v139
    %v539 = vunpack.c.l.b16 %v140
    %v540 = vunpack.c.h.b16 %v140
    %v541 = vunpack.c.l.b16 %v141
    %v542 = vunpack.c.h.b16 %v141
    %v543 = vunpack.c.l.b16 %v142
    %v544 = vunpack.c.h.b16 %v142
    %v545 = vunpack.c.l.b16 %v143
    %v546 = vunpack.c.h.b16 %v143
    %v547 = vunpack.c.l.b16 %v144
    %v548 = vunpack.c.h.b16 %v144
    %v549 = vpack.c.b16 %v297, %v293
    %v550 = vpack.c.b16 %v298, %v294
    %v551 = vpack.c.b16 %v299, %v295
    %v552 = vpack.c.b16 %v300, %v296
    %v553 = vpack.c.b16 %v305, %v301
    %v554 = vpack.c.b16 %v306, %v302
    %v555 = vpack.c.b16 %v307, %v303
    %v556 = vpack.c.b16 %v308, %v304
    %v557 = vpack.c.b16 %v313, %v309
    %v558 = vpack.c.b16 %v314, %v310
    %v559 = vpack.c.b16 %v315, %v311
    %v560 = vpack.c.b16 %v316, %v312
    %v561 = vpack.c.b16 %v321, %v317
    %v562 = vpack.c.b16 %v322, %v318
    %v563 = vpack.c.b16 %v323, %v319
    %v564 = vpack.c.b16 %v324, %v320
    %v565 = vpack.c.b16 %v329, %v325
    %v566 = vpack.c.b16 %v330, %v326
    %v567 = vpack.c.b16 %v331, %v327
    %v568 = vpack.c.b16 %v332, %v328
    %v569 = vpack.c.b16 %v337, %v333
    %v570 = vpack.c.b16 %v338, %v334
    %v571 = vpack.c.b16 %v339, %v335
    %v572 = vpack.c.b16 %v340, %v336
    %v573 = vpack.c.b16 %v345, %v341
    %v574 = vpack.c.b16 %v346, %v342
    %v575 = vpack.c.b16 %v347, %v343
    %v576 = vpack.c.b16 %v348, %v344
    %v577 = vpack.c.b16 %v353, %v349
    %v578 = vpack.c.b16 %v354, %v350
    %v579 = vpack.c.b16 %v355, %v351
    %v580 = vpack.c.b16 %v356, %v352
    %v581 = vpack.c.b16 %v361, %v357
    %v582 = vpack.c.b16 %v362, %v358
    %v583 = vpack.c.b16 %v363, %v359
    %v584 = vpack.c.b16 %v364, %v360
    %v585 = vpack.c.b16 %v369, %v365
    %v586 = vpack.c.b16 %v370, %v366
    %v587 = vpack.c.b16 %v371, %v367
    %v588 = vpack.c.b16 %v372, %v368
    %v589 = vpack.c.b16 %v377, %v373
    %v590 = vpack.c.b16 %v378, %v374
    %v591 = vpack.c.b16 %v379, %v375
    %v592 = vpack.c.b16 %v380, %v376
    %v593 = vpack.c.b16 %v385, %v381
    %v594 = vpack.c.b16 %v386, %v382
    %v595 = vpack.c.b16 %v387, %v383
    %v596 = vpack.c.b16 %v388, %v384
    %v597 = vpack.c.b16 %v393, %v389
    %v598 = vpack.c.b16 %v394, %v390
    %v599 = vpack.c.b16 %v395, %v391
    %v600 = vpack.c.b16 %v396, %v392
    %v601 = vpack.c.b16 %v401, %v397
    %v602 = vpack.c.b16 %v402, %v398
    %v603 = vpack.c.b16 %v403, %v399
    %v604 = vpack.c.b16 %v404, %v400
    %v605 = vpack.c.b16 %v409, %v405
    %v606 = vpack.c.b16 %v410, %v406
    %v607 = vpack.c.b16 %v411, %v407
    %v608 = vpack.c.b16 %v412, %v408
    %v609 = vpack.c.b16 %v417, %v413
    %v610 = vpack.c.b16 %v418, %v414
    %v611 = vpack.c.b16 %v419, %v415
    %v612 = vpack.c.b16 %v420, %v416
    %v613 = vpack.c.b16 %v425, %v421
    %v614 = vpack.c.b16 %v426, %v422
    %v615 = vpack.c.b16 %v427, %v423
    %v616 = vpack.c.b16 %v428, %v424
    %v617 = vpack.c.b16 %v433, %v429
    %v618 = vpack.c.b16 %v434, %v430
    %v619 = vpack.c.b16 %v435, %v431
    %v620 = vpack.c.b16 %v436, %v432
    %v621 = vpack.c.b16 %v441, %v437
    %v622 = vpack.c.b16 %v442, %v438
    %v623 = vpack.c.b16 %v443, %v439
    %v624 = vpack.c.b16 %v444, %v440
    %v625 = vpack.c.b16 %v449, %v445
    %v626 = vpack.c.b16 %v450, %v446
    %v627 = vpack.c.b16 %v451, %v447
    %v628 = vpack.c.b16 %v452, %v448
    %v629 = vpack.c.b16 %v457, %v453
    %v630 = vpack.c.b16 %v458, %v454
    %v631 = vpack.c.b16 %v459, %v455
    %v632 = vpack.c.b16 %v460, %v456
    %v633 = vpack.c.b16 %v465, %v461
    %v634 = vpack.c.b16 %v466, %v462
    %v635 = vpack.c.b16 %v467, %v463
    %v636 = vpack.c.b16 %v468, %v464
    %v637 = vpack.c.b16 %v473, %v469
    %v638 = vpack.c.b16 %v474, %v470
    %v639 = vpack.c.b16 %v475, %v471
    %v640 = vpack.c.b16 %v476, %v472
    %v641 = vpack.c.b16 %v481, %v477
    %v642 = vpack.c.b16 %v482, %v478
    %v643 = vpack.c.b16 %v483, %v479
    %v644 = vpack.c.b16 %v484, %v480
    %v645 = vpack.c.b16 %v489, %v485
    %v646 = vpack.c.b16 %v490, %v486
    %v647 = vpack.c.b16 %v491, %v487
    %v648 = vpack.c.b16 %v492, %v488
    %v649 = vpack.c.b16 %v497, %v493
    %v650 = vpack.c.b16 %v498, %v494
    %v651 = vpack.c.b16 %v499, %v495
    %v652 = vpack.c.b16 %v500, %v496
    %v653 = vpack.c.b16 %v505, %v501
    %v654 = vpack.c.b16 %v506, %v502
    %v655 = vpack.c.b16 %v507, %v503
    %v656 = vpack.c.b16 %v508, %v504
    %v657 = vpack.c.b16 %v513, %v509
    %v658 = vpack.c.b16 %v514, %v510
    %v659 = vpack.c.b16 %v515, %v511
    %v660 = vpack.c.b16 %v516, %v512
    %v661 = vpack.c.b16 %v521, %v517
    %v662 = vpack.c.b16 %v522, %v518
    %v663 = vpack.c.b16 %v523, %v519
    %v664 = vpack.c.b16 %v524, %v520
    %v665 = vpack.c.b16 %v529, %v525
    %v666 = vpack.c.b16 %v530, %v526
    %v667 = vpack.c.b16 %v531, %v527
    %v668 = vpack.c.b16 %v532, %v528
    %v669 = vpack.c.b16 %v537, %v533
    %v670 = vpack.c.b16 %v538, %v534
    %v671 = vpack.c.b16 %v539, %v535
    %v672 = vpack.c.b16 %v540, %v536
    %v673 = vpack.c.b16 %v545, %v541
    %v674 = vpack.c.b16 %v546, %v542
    %v675 = vpack.c.b16 %v547, %v543
    %v676 = vpack.c.b16 %v548, %v544
    %805 = vmatprep.subr.bf16.mxu0 %v550
    %806 = vmatpush1.bf16.msra.mxu0 %v549
    %807 = vmatprep.subr.bf16.mxu0 %v554
    %808 = vmatpush1.bf16.msra.mxu0 %v553
    %809 = vmatprep.subr.bf16.mxu0 %v558
    %810 = vmatpush1.bf16.msra.mxu0 %v557
    %811 = vmatprep.subr.bf16.mxu0 %v562
    %812 = vmatpush1.bf16.msra.mxu0 %v561
    %813 = vmatprep.subr.bf16.mxu0 %v566
    %814 = vmatpush1.bf16.msra.mxu0 %v565
    %815 = vmatprep.subr.bf16.mxu0 %v570
    %816 = vmatpush1.bf16.msra.mxu0 %v569
    %817 = vmatprep.subr.bf16.mxu0 %v574
    %818 = vmatpush1.bf16.msra.mxu0 %v573
    %819 = vmatprep.subr.bf16.mxu0 %v578
    %820 = vmatpush1.bf16.msra.mxu0 %v577
    %821 = vmatprep.subr.bf16.mxu0 %v582
    %822 = vmatpush1.bf16.msra.mxu0 %v581
    %823 = vmatprep.subr.bf16.mxu0 %v586
    %824 = vmatpush1.bf16.msra.mxu0 %v585
    %825 = vmatprep.subr.bf16.mxu0 %v590
    %826 = vmatpush1.bf16.msra.mxu0 %v589
    %827 = vmatprep.subr.bf16.mxu0 %v594
    %828 = vmatpush1.bf16.msra.mxu0 %v593
    %829 = vmatprep.subr.bf16.mxu0 %v598
    %830 = vmatpush1.bf16.msra.mxu0 %v597
    %831 = vmatprep.subr.bf16.mxu0 %v602
    %832 = vmatpush1.bf16.msra.mxu0 %v601
    %833 = vmatprep.subr.bf16.mxu0 %v606
    %834 = vmatpush1.bf16.msra.mxu0 %v605
    %835 = vmatprep.subr.bf16.mxu0 %v610
    %836 = vmatpush1.bf16.msra.mxu0 %v609
    %837 = vmatprep.mubr.bf16.mxu0 %v158
    %838 = vmatmul.mubr.bf16.gmra.mrb[0].mxu0 %v157
    %v839 = vpop.f32.mrb[0].mxu0
    %v840 = vadd.f32 %v149, %v839
    %v841 = vpop.f32.mrb[0].mxu0
    %v842 = vadd.f32 %v149, %v841
    %v843 = vpop.f32.mrb[0].mxu0
    %v844 = vpop.f32.mrb[0].mxu0
    %845 = vdwg.mxu0
    %846 = vmatprep.subr.bf16.mxu0 %v614
    %847 = vmatpush1.bf16.msra.mxu0 %v613
    %848 = vmatprep.subr.bf16.mxu0 %v618
    %849 = vmatpush1.bf16.msra.mxu0 %v617
    %850 = vmatprep.subr.bf16.mxu0 %v622
    %851 = vmatpush1.bf16.msra.mxu0 %v621
    %852 = vmatprep.subr.bf16.mxu0 %v626
    %853 = vmatpush1.bf16.msra.mxu0 %v625
    %854 = vmatprep.subr.bf16.mxu0 %v630
    %855 = vmatpush1.bf16.msra.mxu0 %v629
    %856 = vmatprep.subr.bf16.mxu0 %v634
    %857 = vmatpush1.bf16.msra.mxu0 %v633
    %858 = vmatprep.subr.bf16.mxu0 %v638
    %859 = vmatpush1.bf16.msra.mxu0 %v637
    %860 = vmatprep.subr.bf16.mxu0 %v642
    %861 = vmatpush1.bf16.msra.mxu0 %v641
    %862 = vmatprep.subr.bf16.mxu0 %v646
    %863 = vmatpush1.bf16.msra.mxu0 %v645
    %864 = vmatprep.subr.bf16.mxu0 %v650
    %865 = vmatpush1.bf16.msra.mxu0 %v649
    %866 = vmatprep.subr.bf16.mxu0 %v654
    %867 = vmatpush1.bf16.msra.mxu0 %v653
    %868 = vmatprep.subr.bf16.mxu0 %v658
    %869 = vmatpush1.bf16.msra.mxu0 %v657
    %870 = vmatprep.subr.bf16.mxu0 %v662
    %871 = vmatpush1.bf16.msra.mxu0 %v661
    %872 = vmatprep.subr.bf16.mxu0 %v666
    %873 = vmatpush1.bf16.msra.mxu0 %v665
    %874 = vmatprep.subr.bf16.mxu0 %v670
    %875 = vmatpush1.bf16.msra.mxu0 %v669
    %876 = vmatprep.subr.bf16.mxu0 %v674
    %877 = vmatpush1.bf16.msra.mxu0 %v673
    %878 = vmatprep.mubr.bf16.mxu0 %v160
    %879 = vmatmul.mubr.bf16.gmra.mrb[0].mxu0 %v159
    %v880 = vpop.f32.mrb[0].mxu0
    %v881 = vadd.f32 %v840, %v880
    %v882 = vpop.f32.mrb[0].mxu0
    %v883 = vadd.f32 %v842, %v882
    %v884 = vpop.f32.mrb[0].mxu0
    %v885 = vpop.f32.mrb[0].mxu0
    %886 = vdwg.mxu0
    %887 = vmatprep.subr.bf16.mxu0 %v552
    %888 = vmatpush1.bf16.msra.mxu0 %v551
    %889 = vmatprep.subr.bf16.mxu0 %v556
    %890 = vmatpush1.bf16.msra.mxu0 %v555
    %891 = vmatprep.subr.bf16.mxu0 %v560
    %892 = vmatpush1.bf16.msra.mxu0 %v559
    %893 = vmatprep.subr.bf16.mxu0 %v564
    %894 = vmatpush1.bf16.msra.mxu0 %v563
    %895 = vmatprep.subr.bf16.mxu0 %v568
    %896 = vmatpush1.bf16.msra.mxu0 %v567
    %897 = vmatprep.subr.bf16.mxu0 %v572
    %898 = vmatpush1.bf16.msra.mxu0 %v571
    %899 = vmatprep.subr.bf16.mxu0 %v576
    %900 = vmatpush1.bf16.msra.mxu0 %v575
    %901 = vmatprep.subr.bf16.mxu0 %v580
    %902 = vmatpush1.bf16.msra.mxu0 %v579
    %903 = vmatprep.subr.bf16.mxu0 %v584
    %904 = vmatpush1.bf16.msra.mxu0 %v583
    %905 = vmatprep.subr.bf16.mxu0 %v588
    %906 = vmatpush1.bf16.msra.mxu0 %v587
    %907 = vmatprep.subr.bf16.mxu0 %v592
    %908 = vmatpush1.bf16.msra.mxu0 %v591
    %909 = vmatprep.subr.bf16.mxu0 %v596
    %910 = vmatpush1.bf16.msra.mxu0 %v595
    %911 = vmatprep.subr.bf16.mxu0 %v600
    %912 = vmatpush1.bf16.msra.mxu0 %v599
    %913 = vmatprep.subr.bf16.mxu0 %v604
    %914 = vmatpush1.bf16.msra.mxu0 %v603
    %915 = vmatprep.subr.bf16.mxu0 %v608
    %916 = vmatpush1.bf16.msra.mxu0 %v607
    %917 = vmatprep.subr.bf16.mxu0 %v612
    %918 = vmatpush1.bf16.msra.mxu0 %v611
    %919 = vmatprep.mubr.bf16.mxu0 %v158
    %920 = vmatmul.mubr.bf16.gmra.mrb[0].mxu0 %v157
    %v921 = vpop.f32.mrb[0].mxu0
    %v922 = vadd.f32 %v149, %v921
    %v923 = vpop.f32.mrb[0].mxu0
    %v924 = vadd.f32 %v149, %v923
    %v925 = vpop.f32.mrb[0].mxu0
    %v926 = vpop.f32.mrb[0].mxu0
    %927 = vdwg.mxu0
    %928 = vmatprep.subr.bf16.mxu0 %v616
    %929 = vmatpush1.bf16.msra.mxu0 %v615
    %930 = vmatprep.subr.bf16.mxu0 %v620
    %931 = vmatpush1.bf16.msra.mxu0 %v619
    %932 = vmatprep.subr.bf16.mxu0 %v624
    %933 = vmatpush1.bf16.msra.mxu0 %v623
    %934 = vmatprep.subr.bf16.mxu0 %v628
    %935 = vmatpush1.bf16.msra.mxu0 %v627
    %936 = vmatprep.subr.bf16.mxu0 %v632
    %937 = vmatpush1.bf16.msra.mxu0 %v631
    %938 = vmatprep.subr.bf16.mxu0 %v636
    %939 = vmatpush1.bf16.msra.mxu0 %v635
    %940 = vmatprep.subr.bf16.mxu0 %v640
    %941 = vmatpush1.bf16.msra.mxu0 %v639
    %942 = vmatprep.subr.bf16.mxu0 %v644
    %943 = vmatpush1.bf16.msra.mxu0 %v643
    %944 = vmatprep.subr.bf16.mxu0 %v648
    %945 = vmatpush1.bf16.msra.mxu0 %v647
    %946 = vmatprep.subr.bf16.mxu0 %v652
    %947 = vmatpush1.bf16.msra.mxu0 %v651
    %948 = vmatprep.subr.bf16.mxu0 %v656
    %949 = vmatpush1.bf16.msra.mxu0 %v655
    %950 = vmatprep.subr.bf16.mxu0 %v660
    %951 = vmatpush1.bf16.msra.mxu0 %v659
    %952 = vmatprep.subr.bf16.mxu0 %v664
    %953 = vmatpush1.bf16.msra.mxu0 %v663
    %954 = vmatprep.subr.bf16.mxu0 %v668
    %955 = vmatpush1.bf16.msra.mxu0 %v667
    %956 = vmatprep.subr.bf16.mxu0 %v672
    %957 = vmatpush1.bf16.msra.mxu0 %v671
    %958 = vmatprep.subr.bf16.mxu0 %v676
    %959 = vmatpush1.bf16.msra.mxu0 %v675
    %960 = vmatprep.mubr.bf16.mxu0 %v160
    %961 = vmatmul.mubr.bf16.gmra.mrb[0].mxu0 %v159
    %v962 = vpop.f32.mrb[0].mxu0
    %v963 = vadd.f32 %v922, %v962
    %v964 = vpop.f32.mrb[0].mxu0
    %v965 = vadd.f32 %v924, %v964
    %v966 = vpop.f32.mrb[0].mxu0
    %v967 = vpop.f32.mrb[0].mxu0
    %968 = vdwg.mxu0
    %vm969 = vcmp.ge.f32.partialorder %v881, 0.0
    %vm970 = vcmp.ge.f32.partialorder %v883, 0.0
    %vm971 = vcmp.ge.f32.partialorder %v963, 0.0
    %vm972 = vcmp.ge.f32.partialorder %v965, 0.0
    %v973 = vmul.f32 %v881, 0.2
    %v974 = vmul.f32 %v883, 0.2
    %v975 = vmul.f32 %v963, 0.2
    %v976 = vmul.f32 %v965, 0.2
    %v977 = vsel %vm969, %v881, %v973
    %v978 = vsel %vm970, %v883, %v974
    %v979 = vsel %vm971, %v963, %v975
    %v980 = vsel %vm972, %v965, %v976
    %v981 = vpack.c.bf16 %v977, %v977
    %v982 = vpack.c.bf16 %v978, %v978
    %v983 = vpack.c.bf16 %v979, %v979
    %v984 = vpack.c.bf16 %v980, %v980
    %v989 = vunpack.c.l.b16 %v981
    %v990 = vunpack.c.l.b16 %v982
    %v991 = vunpack.c.l.b16 %v983
    %v992 = vunpack.c.l.b16 %v984
    %v993 = vpack.c.b16 %v990, %v989
    %v994 = vpack.c.b16 %v992, %v991
    %997 = vst [vmem:[#allocation2] sm:$0xff] %v993
    %998 = vst [vmem:[#allocation2 + $0x8] sm:$0xff] %v994
    // Predicated region
    $region14: #{sr_projection_forward.16} parent=1 // pred_check
      _
    $region15: #{sr_projection_forward.16} parent=1 // pred_check_branch
      %1000 = sbr.rel (0) target = $region17
    $region16: #{sr_projection_forward.16} parent=1 // pred_region
      %s1002 = ssub.s32 256, 256
      %1003 = vsyncadd [#allocation3], %s1002
      %s1005 = sshll.u32 [#allocation2], 4
      %s1006 = int_to_ptr.vmem [resolvable:$true] %s1005
      %1008 = dma.vmem_to_hbm [thread:$0]  %s1006, 256, %s3, [#allocation3]
    $region17: #{sr_projection_forward.16} parent=1 // pred_fallthru
      _
    // Predicated region
    $region18: #{sr_projection_forward.16} parent=1 // pred_check
      _
    $region19: #{sr_projection_forward.16} parent=1 // pred_check_branch
      %1010 = sbr.rel (0) target = $region21
    $region20: #{sr_projection_forward.16} parent=1 // pred_region
      %1011 = dma.done [#allocation3], 256
    $region21: #{sr_projection_forward.16} parent=1 // pred_fallthru
      _
    %1012 = vsyncpa [#allocation3], 1

// kernel: sr_projection_forward.17
$region0: #{sr_projection_forward.17}
  #allocation0 [shape = 'u32[]', space=smem, size = 0x4, offset = 0x4, fixed_abs, tag = 'smem constant byte address 0x4 - core index']
  #allocation1 [shape = 'u32[144,128]{1,0:T(1,128)}', space=vmem, size = 0x12000, scoped, tag = 'internal scratch']
  %s0 = inlined_call_operand.vmem [shape: bf16[8,16], index: 0, kind: input, shape index: {}]
  %s1 = inlined_call_operand.vmem [shape: bf16[16,512], index: 1, kind: input, shape index: {}]
  %s2 = inlined_call_operand.vmem [shape: f32[8,1], index: 2, kind: input, shape index: {}]
  %s3 = inlined_call_operand.vmem [shape: bf16[8,512], index: 3, kind: output, shape index: {}]
  %s4 = sld [smem:[#allocation0]]
  $region22: #{sr_projection_forward.17} parent=0
    _
  %s6 = ssub.s32 1, %s4
  %s7 = scalar_select 0, %s6, %s4
  // Predicated region
  $region2: #{sr_projection_forward.17} parent=0 // pred_check
    _
  $region3: #{sr_projection_forward.17} parent=0 // pred_check_branch
    %9 = sbr.rel (0) target = $region5
  $region4: #{sr_projection_forward.17} parent=0 // pred_region
    _
  $region5: #{sr_projection_forward.17} parent=0 // pred_fallthru
    _
  // Predicated region
  $region6: #{sr_projection_forward.17} parent=0 // pred_check
    _
  $region7: #{sr_projection_forward.17} parent=0 // pred_check_branch
    %11 = sbr.rel (0) target = $region9
  $region8: #{sr_projection_forward.17} parent=0 // pred_region
    _
  $region9: #{sr_projection_forward.17} parent=0 // pred_fallthru
    _
  // Predicated region
  $region10: #{sr_projection_forward.17} parent=0 // pred_check
    _
  $region11: #{sr_projection_forward.17} parent=0 // pred_check_branch
    %13 = sbr.rel (0) target = $region13
  $region12: #{sr_projection_forward.17} parent=0 // pred_region
    _
  $region13: #{sr_projection_forward.17} parent=0 // pred_fallthru
    _
  %v15 = vld [vmem:[%s0] sm:$0xf]
  %v16 = vld [vmem:[%s1] sm:$0xff]
  %v17 = vld [vmem:[%s1 + $0x8] sm:$0xff]
  %v18 = vld [vmem:[%s1 + $0x10] sm:$0xff]
  %v19 = vld [vmem:[%s1 + $0x18] sm:$0xff]
  %v20 = vld [vmem:[%s2] sm:$0xff]
  %22 = vset.pattern.permute.xlu0 0
  %23 = vperm.xlu0 %22, %v20
  %v24 = vpop.permute.xlu0 %23
  %v30 = vunpack.c.l.b16 %v16
  %v31 = vunpack.c.h.b16 %v16
  %v32 = vunpack.c.l.b16 %v17
  %v33 = vunpack.c.h.b16 %v17
  %v34 = vunpack.c.l.b16 %v18
  %v35 = vunpack.c.h.b16 %v18
  %v36 = vunpack.c.l.b16 %v19
  %v37 = vunpack.c.h.b16 %v19
  %v38 = vpack.c.b16 %v34, %v30
  %v39 = vpack.c.b16 %v35, %v31
  %v40 = vpack.c.b16 %v36, %v32
  %v41 = vpack.c.b16 %v37, %v33
  %vm46 = vcmask 130048
  %v48 = vsel %vm46, %v15, 0
  %50 = vmatprep.subr.bf16.mxu0 %v39
  %51 = vmatpush1.bf16.msra.mxu0 %v38
  %52 = vmatprep.subr.bf16.mxu0 0
  %53 = vmatpush1.bf16.msra.mxu0 0
  %54 = vmatprep.subr.bf16.mxu0 0
  %55 = vmatpush1.bf16.msra.mxu0 0
  %56 = vmatprep.subr.bf16.mxu0 0
  %57 = vmatpush1.bf16.msra.mxu0 0
  %58 = vmatprep.subr.bf16.mxu0 0
  %59 = vmatpush1.bf16.msra.mxu0 0
  %60 = vmatprep.subr.bf16.mxu0 0
  %61 = vmatpush1.bf16.msra.mxu0 0
  %62 = vmatprep.subr.bf16.mxu0 0
  %63 = vmatpush1.bf16.msra.mxu0 0
  %64 = vmatprep.subr.bf16.mxu0 0
  %65 = vmatpush1.bf16.msra.mxu0 0
  %66 = vmatprep.subr.bf16.mxu0 0
  %67 = vmatpush1.bf16.msra.mxu0 0
  %68 = vmatprep.subr.bf16.mxu0 0
  %69 = vmatpush1.bf16.msra.mxu0 0
  %70 = vmatprep.subr.bf16.mxu0 0
  %71 = vmatpush1.bf16.msra.mxu0 0
  %72 = vmatprep.subr.bf16.mxu0 0
  %73 = vmatpush1.bf16.msra.mxu0 0
  %74 = vmatprep.subr.bf16.mxu0 0
  %75 = vmatpush1.bf16.msra.mxu0 0
  %76 = vmatprep.subr.bf16.mxu0 0
  %77 = vmatpush1.bf16.msra.mxu0 0
  %78 = vmatprep.subr.bf16.mxu0 0
  %79 = vmatpush1.bf16.msra.mxu0 0
  %80 = vmatprep.subr.bf16.mxu0 0
  %81 = vmatpush1.bf16.msra.mxu0 0
  %82 = vmatprep.mubr.bf16.mxu0 0
  %83 = vmatmul.mubr.bf16.gmra.mrb[0].mxu0 %v48
  %v84 = vpop.f32.mrb[0].mxu0
  %v85 = vadd.f32 %v24, %v84
  %v86 = vpop.f32.mrb[0].mxu0
  %v87 = vadd.f32 %v24, %v86
  %v88 = vpop.f32.mrb[0].mxu0
  %v89 = vpop.f32.mrb[0].mxu0
  %90 = vdwg.mxu0
  %91 = vmatprep.subr.bf16.mxu0 %v41
  %92 = vmatpush1.bf16.msra.mxu0 %v40
  %93 = vmatprep.subr.bf16.mxu0 0
  %94 = vmatpush1.bf16.msra.mxu0 0
  %95 = vmatprep.subr.bf16.mxu0 0
  %96 = vmatpush1.bf16.msra.mxu0 0
  %97 = vmatprep.subr.bf16.mxu0 0
  %98 = vmatpush1.bf16.msra.mxu0 0
  %99 = vmatprep.subr.bf16.mxu0 0
  %100 = vmatpush1.bf16.msra.mxu0 0
  %101 = vmatprep.subr.bf16.mxu0 0
  %102 = vmatpush1.bf16.msra.mxu0 0
  %103 = vmatprep.subr.bf16.mxu0 0
  %104 = vmatpush1.bf16.msra.mxu0 0
  %105 = vmatprep.subr.bf16.mxu0 0
  %106 = vmatpush1.bf16.msra.mxu0 0
  %107 = vmatprep.subr.bf16.mxu0 0
  %108 = vmatpush1.bf16.msra.mxu0 0
  %109 = vmatprep.subr.bf16.mxu0 0
  %110 = vmatpush1.bf16.msra.mxu0 0
  %111 = vmatprep.subr.bf16.mxu0 0
  %112 = vmatpush1.bf16.msra.mxu0 0
  %113 = vmatprep.subr.bf16.mxu0 0
  %114 = vmatpush1.bf16.msra.mxu0 0
  %115 = vmatprep.subr.bf16.mxu0 0
  %116 = vmatpush1.bf16.msra.mxu0 0
  %117 = vmatprep.subr.bf16.mxu0 0
  %118 = vmatpush1.bf16.msra.mxu0 0
  %119 = vmatprep.subr.bf16.mxu0 0
  %120 = vmatpush1.bf16.msra.mxu0 0
  %121 = vmatprep.subr.bf16.mxu0 0
  %122 = vmatpush1.bf16.msra.mxu0 0
  %123 = vmatprep.mubr.bf16.mxu0 0
  %124 = vmatmul.mubr.bf16.gmra.mrb[0].mxu0 %v48
  %v125 = vpop.f32.mrb[0].mxu0
  %v126 = vadd.f32 %v24, %v125
  %v127 = vpop.f32.mrb[0].mxu0
  %v128 = vadd.f32 %v24, %v127
  %v129 = vpop.f32.mrb[0].mxu0
  %v130 = vpop.f32.mrb[0].mxu0
  %131 = vdwg.mxu0
  %vm132 = vcmp.ge.f32.partialorder %v85, 0.0
  %vm133 = vcmp.ge.f32.partialorder %v87, 0.0
  %vm134 = vcmp.ge.f32.partialorder %v126, 0.0
  %vm135 = vcmp.ge.f32.partialorder %v128, 0.0
  %v136 = vmul.f32 %v85, 0.2
  %v137 = vmul.f32 %v87, 0.2
  %v138 = vmul.f32 %v126, 0.2
  %v139 = vmul.f32 %v128, 0.2
  %v140 = vsel %vm132, %v85, %v136
  %v141 = vsel %vm133, %v87, %v137
  %v142 = vsel %vm134, %v126, %v138
  %v143 = vsel %vm135, %v128, %v139
  %v144 = vpack.c.bf16 %v140, %v140
  %v145 = vpack.c.bf16 %v141, %v141
  %v146 = vpack.c.bf16 %v142, %v142
  %v147 = vpack.c.bf16 %v143, %v143
  %v152 = vunpack.c.l.b16 %v144
  %v153 = vunpack.c.l.b16 %v145
  %v154 = vunpack.c.l.b16 %v146
  %v155 = vunpack.c.l.b16 %v147
  %v156 = vpack.c.b16 %v153, %v152
  %v157 = vpack.c.b16 %v155, %v154
  %160 = vst [vmem:[%s3] sm:$0xff] %v156
  %161 = vst [vmem:[%s3 + $0x8] sm:$0xff] %v157
  // Predicated region
  $region14: #{sr_projection_forward.17} parent=0 // pred_check
    _
  $region15: #{sr_projection_forward.17} parent=0 // pred_check_branch
    %163 = sbr.rel (0) target = $region17
  $region16: #{sr_projection_forward.17} parent=0 // pred_region
    _
  $region17: #{sr_projection_forward.17} parent=0 // pred_fallthru
    _
  // Predicated region
  $region18: #{sr_projection_forward.17} parent=0 // pred_check
    _
  $region19: #{sr_projection_forward.17} parent=0 // pred_check_branch
    %165 = sbr.rel (0) target = $region21
  $region20: #{sr_projection_forward.17} parent=0 // pred_region
    _
  $region21: #{sr_projection_forward.17} parent=0 // pred_fallthru
    _

// kernel: sr_projection_forward.14
$region0: #{sr_projection_forward.14}
  #allocation0 [shape = 'u32[]', space=smem, size = 0x4, offset = 0x4, fixed_abs, tag = 'smem constant byte address 0x4 - core index']
  #allocation1 [shape = 'u32[144,128]{1,0:T(1,128)}', space=vmem, size = 0x12000, scoped, tag = 'internal scratch']
  %s0 = inlined_call_operand.vmem [shape: bf16[8,512], index: 0, kind: input, shape index: {}]
  %s1 = inlined_call_operand.vmem [shape: bf16[512,512], index: 1, kind: input, shape index: {}]
  %s2 = inlined_call_operand.vmem [shape: f32[8,1], index: 2, kind: input, shape index: {}]
  %s3 = inlined_call_operand.vmem [shape: bf16[8,512], index: 3, kind: output, shape index: {}]
  %s4 = sld [smem:[#allocation0]]
  $region22: #{sr_projection_forward.14} parent=0
    _
  %s6 = ssub.s32 1, %s4
  %s7 = scalar_select 0, %s6, %s4
  // Predicated region
  $region2: #{sr_projection_forward.14} parent=0 // pred_check
    _
  $region3: #{sr_projection_forward.14} parent=0 // pred_check_branch
    %9 = sbr.rel (0) target = $region5
  $region4: #{sr_projection_forward.14} parent=0 // pred_region
    _
  $region5: #{sr_projection_forward.14} parent=0 // pred_fallthru
    _
  // Predicated region
  $region6: #{sr_projection_forward.14} parent=0 // pred_check
    _
  $region7: #{sr_projection_forward.14} parent=0 // pred_check_branch
    %11 = sbr.rel (0) target = $region9
  $region8: #{sr_projection_forward.14} parent=0 // pred_region
    _
  $region9: #{sr_projection_forward.14} parent=0 // pred_fallthru
    _
  // Predicated region
  $region10: #{sr_projection_forward.14} parent=0 // pred_check
    _
  $region11: #{sr_projection_forward.14} parent=0 // pred_check_branch
    %13 = sbr.rel (0) target = $region13
  $region12: #{sr_projection_forward.14} parent=0 // pred_region
    _
  $region13: #{sr_projection_forward.14} parent=0 // pred_fallthru
    _
  %v14 = vld [vmem:[%s0] sm:$0xff]
  %v15 = vld [vmem:[%s0 + $0x8] sm:$0xff]
  %v16 = vld [vmem:[%s1] sm:$0xff]
  %v17 = vld [vmem:[%s1 + $0x8] sm:$0xff]
  %v18 = vld [vmem:[%s1 + $0x10] sm:$0xff]
  %v19 = vld [vmem:[%s1 + $0x18] sm:$0xff]
  %v20 = vld [vmem:[%s1 + $0x20] sm:$0xff]
  %v21 = vld [vmem:[%s1 + $0x28] sm:$0xff]
  %v22 = vld [vmem:[%s1 + $0x30] sm:$0xff]
  %v23 = vld [vmem:[%s1 + $0x38] sm:$0xff]
  %v24 = vld [vmem:[%s1 + $0x40] sm:$0xff]
  %v25 = vld [vmem:[%s1 + $0x48] sm:$0xff]
  %v26 = vld [vmem:[%s1 + $0x50] sm:$0xff]
  %v27 = vld [vmem:[%s1 + $0x58] sm:$0xff]
  %v28 = vld [vmem:[%s1 + $0x60] sm:$0xff]
  %v29 = vld [vmem:[%s1 + $0x68] sm:$0xff]
  %v30 = vld [vmem:[%s1 + $0x70] sm:$0xff]
  %v31 = vld [vmem:[%s1 + $0x78] sm:$0xff]
  %v32 = vld [vmem:[%s1 + $0x80] sm:$0xff]
  %v33 = vld [vmem:[%s1 + $0x88] sm:$0xff]
  %v34 = vld [vmem:[%s1 + $0x90] sm:$0xff]
  %v35 = vld [vmem:[%s1 + $0x98] sm:$0xff]
  %v36 = vld [vmem:[%s1 + $0xa0] sm:$0xff]
  %v37 = vld [vmem:[%s1 + $0xa8] sm:$0xff]
  %v38 = vld [vmem:[%s1 + $0xb0] sm:$0xff]
  %v39 = vld [vmem:[%s1 + $0xb8] sm:$0xff]
  %v40 = vld [vmem:[%s1 + $0xc0] sm:$0xff]
  %v41 = vld [vmem:[%s1 + $0xc8] sm:$0xff]
  %v42 = vld [vmem:[%s1 + $0xd0] sm:$0xff]
  %v43 = vld [vmem:[%s1 + $0xd8] sm:$0xff]
  %v44 = vld [vmem:[%s1 + $0xe0] sm:$0xff]
  %v45 = vld [vmem:[%s1 + $0xe8] sm:$0xff]
  %v46 = vld [vmem:[%s1 + $0xf0] sm:$0xff]
  %v47 = vld [vmem:[%s1 + $0xf8] sm:$0xff]
  %v48 = vld [vmem:[%s1 + $0x100] sm:$0xff]
  %v49 = vld [vmem:[%s1 + $0x108] sm:$0xff]
  %v50 = vld [vmem:[%s1 + $0x110] sm:$0xff]
  %v51 = vld [vmem:[%s1 + $0x118] sm:$0xff]
  %v52 = vld [vmem:[%s1 + $0x120] sm:$0xff]
  %v53 = vld [vmem:[%s1 + $0x128] sm:$0xff]
  %v54 = vld [vmem:[%s1 + $0x130] sm:$0xff]
  %v55 = vld [vmem:[%s1 + $0x138] sm:$0xff]
  %v56 = vld [vmem:[%s1 + $0x140] sm:$0xff]
  %v57 = vld [vmem:[%s1 + $0x148] sm:$0xff]
  %v58 = vld [vmem:[%s1 + $0x150] sm:$0xff]
  %v59 = vld [vmem:[%s1 + $0x158] sm:$0xff]
  %v60 = vld [vmem:[%s1 + $0x160] sm:$0xff]
  %v61 = vld [vmem:[%s1 + $0x168] sm:$0xff]
  %v62 = vld [vmem:[%s1 + $0x170] sm:$0xff]
  %v63 = vld [vmem:[%s1 + $0x178] sm:$0xff]
  %v64 = vld [vmem:[%s1 + $0x180] sm:$0xff]
  %v65 = vld [vmem:[%s1 + $0x188] sm:$0xff]
  %v66 = vld [vmem:[%s1 + $0x190] sm:$0xff]
  %v67 = vld [vmem:[%s1 + $0x198] sm:$0xff]
  %v68 = vld [vmem:[%s1 + $0x1a0] sm:$0xff]
  %v69 = vld [vmem:[%s1 + $0x1a8] sm:$0xff]
  %v70 = vld [vmem:[%s1 + $0x1b0] sm:$0xff]
  %v71 = vld [vmem:[%s1 + $0x1b8] sm:$0xff]
  %v72 = vld [vmem:[%s1 + $0x1c0] sm:$0xff]
  %v73 = vld [vmem:[%s1 + $0x1c8] sm:$0xff]
  %v74 = vld [vmem:[%s1 + $0x1d0] sm:$0xff]
  %v75 = vld [vmem:[%s1 + $0x1d8] sm:$0xff]
  %v76 = vld [vmem:[%s1 + $0x1e0] sm:$0xff]
  %v77 = vld [vmem:[%s1 + $0x1e8] sm:$0xff]
  %v78 = vld [vmem:[%s1 + $0x1f0] sm:$0xff]
  %v79 = vld [vmem:[%s1 + $0x1f8] sm:$0xff]
  %v80 = vld [vmem:[%s1 + $0x200] sm:$0xff]
  %v81 = vld [vmem:[%s1 + $0x208] sm:$0xff]
  %v82 = vld [vmem:[%s1 + $0x210] sm:$0xff]
  %v83 = vld [vmem:[%s1 + $0x218] sm:$0xff]
  %v84 = vld [vmem:[%s1 + $0x220] sm:$0xff]
  %v85 = vld [vmem:[%s1 + $0x228] sm:$0xff]
  %v86 = vld [vmem:[%s1 + $0x230] sm:$0xff]
  %v87 = vld [vmem:[%s1 + $0x238] sm:$0xff]
  %v88 = vld [vmem:[%s1 + $0x240] sm:$0xff]
  %v89 = vld [vmem:[%s1 + $0x248] sm:$0xff]
  %v90 = vld [vmem:[%s1 + $0x250] sm:$0xff]
  %v91 = vld [vmem:[%s1 + $0x258] sm:$0xff]
  %v92 = vld [vmem:[%s1 + $0x260] sm:$0xff]
  %v93 = vld [vmem:[%s1 + $0x268] sm:$0xff]
  %v94 = vld [vmem:[%s1 + $0x270] sm:$0xff]
  %v95 = vld [vmem:[%s1 + $0x278] sm:$0xff]
  %v96 = vld [vmem:[%s1 + $0x280] sm:$0xff]
  %v97 = vld [vmem:[%s1 + $0x288] sm:$0xff]
  %v98 = vld [vmem:[%s1 + $0x290] sm:$0xff]
  %v99 = vld [vmem:[%s1 + $0x298] sm:$0xff]
  %v100 = vld [vmem:[%s1 + $0x2a0] sm:$0xff]
  %v101 = vld [vmem:[%s1 + $0x2a8] sm:$0xff]
  %v102 = vld [vmem:[%s1 + $0x2b0] sm:$0xff]
  %v103 = vld [vmem:[%s1 + $0x2b8] sm:$0xff]
  %v104 = vld [vmem:[%s1 + $0x2c0] sm:$0xff]
  %v105 = vld [vmem:[%s1 + $0x2c8] sm:$0xff]
  %v106 = vld [vmem:[%s1 + $0x2d0] sm:$0xff]
  %v107 = vld [vmem:[%s1 + $0x2d8] sm:$0xff]
  %v108 = vld [vmem:[%s1 + $0x2e0] sm:$0xff]
  %v109 = vld [vmem:[%s1 + $0x2e8] sm:$0xff]
  %v110 = vld [vmem:[%s1 + $0x2f0] sm:$0xff]
  %v111 = vld [vmem:[%s1 + $0x2f8] sm:$0xff]
  %v112 = vld [vmem:[%s1 + $0x300] sm:$0xff]
  %v113 = vld [vmem:[%s1 + $0x308] sm:$0xff]
  %v114 = vld [vmem:[%s1 + $0x310] sm:$0xff]
  %v115 = vld [vmem:[%s1 + $0x318] sm:$0xff]
  %v116 = vld [vmem:[%s1 + $0x320] sm:$0xff]
  %v117 = vld [vmem:[%s1 + $0x328] sm:$0xff]
  %v118 = vld [vmem:[%s1 + $0x330] sm:$0xff]
  %v119 = vld [vmem:[%s1 + $0x338] sm:$0xff]
  %v120 = vld [vmem:[%s1 + $0x340] sm:$0xff]
  %v121 = vld [vmem:[%s1 + $0x348] sm:$0xff]
  %v122 = vld [vmem:[%s1 + $0x350] sm:$0xff]
  %v123 = vld [vmem:[%s1 + $0x358] sm:$0xff]
  %v124 = vld [vmem:[%s1 + $0x360] sm:$0xff]
  %v125 = vld [vmem:[%s1 + $0x368] sm:$0xff]
  %v126 = vld [vmem:[%s1 + $0x370] sm:$0xff]
  %v127 = vld [vmem:[%s1 + $0x378] sm:$0xff]
  %v128 = vld [vmem:[%s1 + $0x380] sm:$0xff]
  %v129 = vld [vmem:[%s1 + $0x388] sm:$0xff]
  %v130 = vld [vmem:[%s1 + $0x390] sm:$0xff]
  %v131 = vld [vmem:[%s1 + $0x398] sm:$0xff]
  %v132 = vld [vmem:[%s1 + $0x3a0] sm:$0xff]
  %v133 = vld [vmem:[%s1 + $0x3a8] sm:$0xff]
  %v134 = vld [vmem:[%s1 + $0x3b0] sm:$0xff]
  %v135 = vld [vmem:[%s1 + $0x3b8] sm:$0xff]
  %v136 = vld [vmem:[%s1 + $0x3c0] sm:$0xff]
  %v137 = vld [vmem:[%s1 + $0x3c8] sm:$0xff]
  %v138 = vld [vmem:[%s1 + $0x3d0] sm:$0xff]
  %v139 = vld [vmem:[%s1 + $0x3d8] sm:$0xff]
  %v140 = vld [vmem:[%s1 + $0x3e0] sm:$0xff]
  %v141 = vld [vmem:[%s1 + $0x3e8] sm:$0xff]
  %v142 = vld [vmem:[%s1 + $0x3f0] sm:$0xff]
  %v143 = vld [vmem:[%s1 + $0x3f8] sm:$0xff]
  %v144 = vld [vmem:[%s2] sm:$0xff]
  %146 = vset.pattern.permute.xlu0 0
  %147 = vperm.xlu0 %146, %v144
  %v148 = vpop.permute.xlu0 %147
  %v152 = vunpack.c.l.b16 %v14
  %v153 = vunpack.c.h.b16 %v14
  %v154 = vunpack.c.l.b16 %v15
  %v155 = vunpack.c.h.b16 %v15
  %v156 = vpack.c.b16 %v152, %v152
  %v157 = vpack.c.b16 %v153, %v153
  %v158 = vpack.c.b16 %v154, %v154
  %v159 = vpack.c.b16 %v155, %v155
  %v292 = vunpack.c.l.b16 %v16
  %v293 = vunpack.c.h.b16 %v16
  %v294 = vunpack.c.l.b16 %v17
  %v295 = vunpack.c.h.b16 %v17
  %v296 = vunpack.c.l.b16 %v18
  %v297 = vunpack.c.h.b16 %v18
  %v298 = vunpack.c.l.b16 %v19
  %v299 = vunpack.c.h.b16 %v19
  %v300 = vunpack.c.l.b16 %v20
  %v301 = vunpack.c.h.b16 %v20
  %v302 = vunpack.c.l.b16 %v21
  %v303 = vunpack.c.h.b16 %v21
  %v304 = vunpack.c.l.b16 %v22
  %v305 = vunpack.c.h.b16 %v22
  %v306 = vunpack.c.l.b16 %v23
  %v307 = vunpack.c.h.b16 %v23
  %v308 = vunpack.c.l.b16 %v24
  %v309 = vunpack.c.h.b16 %v24
  %v310 = vunpack.c.l.b16 %v25
  %v311 = vunpack.c.h.b16 %v25
  %v312 = vunpack.c.l.b16 %v26
  %v313 = vunpack.c.h.b16 %v26
  %v314 = vunpack.c.l.b16 %v27
  %v315 = vunpack.c.h.b16 %v27
  %v316 = vunpack.c.l.b16 %v28
  %v317 = vunpack.c.h.b16 %v28
  %v318 = vunpack.c.l.b16 %v29
  %v319 = vunpack.c.h.b16 %v29
  %v320 = vunpack.c.l.b16 %v30
  %v321 = vunpack.c.h.b16 %v30
  %v322 = vunpack.c.l.b16 %v31
  %v323 = vunpack.c.h.b16 %v31
  %v324 = vunpack.c.l.b16 %v32
  %v325 = vunpack.c.h.b16 %v32
  %v326 = vunpack.c.l.b16 %v33
  %v327 = vunpack.c.h.b16 %v33
  %v328 = vunpack.c.l.b16 %v34
  %v329 = vunpack.c.h.b16 %v34
  %v330 = vunpack.c.l.b16 %v35
  %v331 = vunpack.c.h.b16 %v35
  %v332 = vunpack.c.l.b16 %v36
  %v333 = vunpack.c.h.b16 %v36
  %v334 = vunpack.c.l.b16 %v37
  %v335 = vunpack.c.h.b16 %v37
  %v336 = vunpack.c.l.b16 %v38
  %v337 = vunpack.c.h.b16 %v38
  %v338 = vunpack.c.l.b16 %v39
  %v339 = vunpack.c.h.b16 %v39
  %v340 = vunpack.c.l.b16 %v40
  %v341 = vunpack.c.h.b16 %v40
  %v342 = vunpack.c.l.b16 %v41
  %v343 = vunpack.c.h.b16 %v41
  %v344 = vunpack.c.l.b16 %v42
  %v345 = vunpack.c.h.b16 %v42
  %v346 = vunpack.c.l.b16 %v43
  %v347 = vunpack.c.h.b16 %v43
  %v348 = vunpack.c.l.b16 %v44
  %v349 = vunpack.c.h.b16 %v44
  %v350 = vunpack.c.l.b16 %v45
  %v351 = vunpack.c.h.b16 %v45
  %v352 = vunpack.c.l.b16 %v46
  %v353 = vunpack.c.h.b16 %v46
  %v354 = vunpack.c.l.b16 %v47
  %v355 = vunpack.c.h.b16 %v47
  %v356 = vunpack.c.l.b16 %v48
  %v357 = vunpack.c.h.b16 %v48
  %v358 = vunpack.c.l.b16 %v49
  %v359 = vunpack.c.h.b16 %v49
  %v360 = vunpack.c.l.b16 %v50
  %v361 = vunpack.c.h.b16 %v50
  %v362 = vunpack.c.l.b16 %v51
  %v363 = vunpack.c.h.b16 %v51
  %v364 = vunpack.c.l.b16 %v52
  %v365 = vunpack.c.h.b16 %v52
  %v366 = vunpack.c.l.b16 %v53
  %v367 = vunpack.c.h.b16 %v53
  %v368 = vunpack.c.l.b16 %v54
  %v369 = vunpack.c.h.b16 %v54
  %v370 = vunpack.c.l.b16 %v55
  %v371 = vunpack.c.h.b16 %v55
  %v372 = vunpack.c.l.b16 %v56
  %v373 = vunpack.c.h.b16 %v56
  %v374 = vunpack.c.l.b16 %v57
  %v375 = vunpack.c.h.b16 %v57
  %v376 = vunpack.c.l.b16 %v58
  %v377 = vunpack.c.h.b16 %v58
  %v378 = vunpack.c.l.b16 %v59
  %v379 = vunpack.c.h.b16 %v59
  %v380 = vunpack.c.l.b16 %v60
  %v381 = vunpack.c.h.b16 %v60
  %v382 = vunpack.c.l.b16 %v61
  %v383 = vunpack.c.h.b16 %v61
  %v384 = vunpack.c.l.b16 %v62
  %v385 = vunpack.c.h.b16 %v62
  %v386 = vunpack.c.l.b16 %v63
  %v387 = vunpack.c.h.b16 %v63
  %v388 = vunpack.c.l.b16 %v64
  %v389 = vunpack.c.h.b16 %v64
  %v390 = vunpack.c.l.b16 %v65
  %v391 = vunpack.c.h.b16 %v65
  %v392 = vunpack.c.l.b16 %v66
  %v393 = vunpack.c.h.b16 %v66
  %v394 = vunpack.c.l.b16 %v67
  %v395 = vunpack.c.h.b16 %v67
  %v396 = vunpack.c.l.b16 %v68
  %v397 = vunpack.c.h.b16 %v68
  %v398 = vunpack.c.l.b16 %v69
  %v399 = vunpack.c.h.b16 %v69
  %v400 = vunpack.c.l.b16 %v70
  %v401 = vunpack.c.h.b16 %v70
  %v402 = vunpack.c.l.b16 %v71
  %v403 = vunpack.c.h.b16 %v71
  %v404 = vunpack.c.l.b16 %v72
  %v405 = vunpack.c.h.b16 %v72
  %v406 = vunpack.c.l.b16 %v73
  %v407 = vunpack.c.h.b16 %v73
  %v408 = vunpack.c.l.b16 %v74
  %v409 = vunpack.c.h.b16 %v74
  %v410 = vunpack.c.l.b16 %v75
  %v411 = vunpack.c.h.b16 %v75
  %v412 = vunpack.c.l.b16 %v76
  %v413 = vunpack.c.h.b16 %v76
  %v414 = vunpack.c.l.b16 %v77
  %v415 = vunpack.c.h.b16 %v77
  %v416 = vunpack.c.l.b16 %v78
  %v417 = vunpack.c.h.b16 %v78
  %v418 = vunpack.c.l.b16 %v79
  %v419 = vunpack.c.h.b16 %v79
  %v420 = vunpack.c.l.b16 %v80
  %v421 = vunpack.c.h.b16 %v80
  %v422 = vunpack.c.l.b16 %v81
  %v423 = vunpack.c.h.b16 %v81
  %v424 = vunpack.c.l.b16 %v82
  %v425 = vunpack.c.h.b16 %v82
  %v426 = vunpack.c.l.b16 %v83
  %v427 = vunpack.c.h.b16 %v83
  %v428 = vunpack.c.l.b16 %v84
  %v429 = vunpack.c.h.b16 %v84
  %v430 = vunpack.c.l.b16 %v85
  %v431 = vunpack.c.h.b16 %v85
  %v432 = vunpack.c.l.b16 %v86
  %v433 = vunpack.c.h.b16 %v86
  %v434 = vunpack.c.l.b16 %v87
  %v435 = vunpack.c.h.b16 %v87
  %v436 = vunpack.c.l.b16 %v88
  %v437 = vunpack.c.h.b16 %v88
  %v438 = vunpack.c.l.b16 %v89
  %v439 = vunpack.c.h.b16 %v89
  %v440 = vunpack.c.l.b16 %v90
  %v441 = vunpack.c.h.b16 %v90
  %v442 = vunpack.c.l.b16 %v91
  %v443 = vunpack.c.h.b16 %v91
  %v444 = vunpack.c.l.b16 %v92
  %v445 = vunpack.c.h.b16 %v92
  %v446 = vunpack.c.l.b16 %v93
  %v447 = vunpack.c.h.b16 %v93
  %v448 = vunpack.c.l.b16 %v94
  %v449 = vunpack.c.h.b16 %v94
  %v450 = vunpack.c.l.b16 %v95
  %v451 = vunpack.c.h.b16 %v95
  %v452 = vunpack.c.l.b16 %v96
  %v453 = vunpack.c.h.b16 %v96
  %v454 = vunpack.c.l.b16 %v97
  %v455 = vunpack.c.h.b16 %v97
  %v456 = vunpack.c.l.b16 %v98
  %v457 = vunpack.c.h.b16 %v98
  %v458 = vunpack.c.l.b16 %v99
  %v459 = vunpack.c.h.b16 %v99
  %v460 = vunpack.c.l.b16 %v100
  %v461 = vunpack.c.h.b16 %v100
  %v462 = vunpack.c.l.b16 %v101
  %v463 = vunpack.c.h.b16 %v101
  %v464 = vunpack.c.l.b16 %v102
  %v465 = vunpack.c.h.b16 %v102
  %v466 = vunpack.c.l.b16 %v103
  %v467 = vunpack.c.h.b16 %v103
  %v468 = vunpack.c.l.b16 %v104
  %v469 = vunpack.c.h.b16 %v104
  %v470 = vunpack.c.l.b16 %v105
  %v471 = vunpack.c.h.b16 %v105
  %v472 = vunpack.c.l.b16 %v106
  %v473 = vunpack.c.h.b16 %v106
  %v474 = vunpack.c.l.b16 %v107
  %v475 = vunpack.c.h.b16 %v107
  %v476 = vunpack.c.l.b16 %v108
  %v477 = vunpack.c.h.b16 %v108
  %v478 = vunpack.c.l.b16 %v109
  %v479 = vunpack.c.h.b16 %v109
  %v480 = vunpack.c.l.b16 %v110
  %v481 = vunpack.c.h.b16 %v110
  %v482 = vunpack.c.l.b16 %v111
  %v483 = vunpack.c.h.b16 %v111
  %v484 = vunpack.c.l.b16 %v112
  %v485 = vunpack.c.h.b16 %v112
  %v486 = vunpack.c.l.b16 %v113
  %v487 = vunpack.c.h.b16 %v113
  %v488 = vunpack.c.l.b16 %v114
  %v489 = vunpack.c.h.b16 %v114
  %v490 = vunpack.c.l.b16 %v115
  %v491 = vunpack.c.h.b16 %v115
  %v492 = vunpack.c.l.b16 %v116
  %v493 = vunpack.c.h.b16 %v116
  %v494 = vunpack.c.l.b16 %v117
  %v495 = vunpack.c.h.b16 %v117
  %v496 = vunpack.c.l.b16 %v118
  %v497 = vunpack.c.h.b16 %v118
  %v498 = vunpack.c.l.b16 %v119
  %v499 = vunpack.c.h.b16 %v119
  %v500 = vunpack.c.l.b16 %v120
  %v501 = vunpack.c.h.b16 %v120
  %v502 = vunpack.c.l.b16 %v121
  %v503 = vunpack.c.h.b16 %v121
  %v504 = vunpack.c.l.b16 %v122
  %v505 = vunpack.c.h.b16 %v122
  %v506 = vunpack.c.l.b16 %v123
  %v507 = vunpack.c.h.b16 %v123
  %v508 = vunpack.c.l.b16 %v124
  %v509 = vunpack.c.h.b16 %v124
  %v510 = vunpack.c.l.b16 %v125
  %v511 = vunpack.c.h.b16 %v125
  %v512 = vunpack.c.l.b16 %v126
  %v513 = vunpack.c.h.b16 %v126
  %v514 = vunpack.c.l.b16 %v127
  %v515 = vunpack.c.h.b16 %v127
  %v516 = vunpack.c.l.b16 %v128
  %v517 = vunpack.c.h.b16 %v128
  %v518 = vunpack.c.l.b16 %v129
  %v519 = vunpack.c.h.b16 %v129
  %v520 = vunpack.c.l.b16 %v130
  %v521 = vunpack.c.h.b16 %v130
  %v522 = vunpack.c.l.b16 %v131
  %v523 = vunpack.c.h.b16 %v131
  %v524 = vunpack.c.l.b16 %v132
  %v525 = vunpack.c.h.b16 %v132
  %v526 = vunpack.c.l.b16 %v133
  %v527 = vunpack.c.h.b16 %v133
  %v528 = vunpack.c.l.b16 %v134
  %v529 = vunpack.c.h.b16 %v134
  %v530 = vunpack.c.l.b16 %v135
  %v531 = vunpack.c.h.b16 %v135
  %v532 = vunpack.c.l.b16 %v136
  %v533 = vunpack.c.h.b16 %v136
  %v534 = vunpack.c.l.b16 %v137
  %v535 = vunpack.c.h.b16 %v137
  %v536 = vunpack.c.l.b16 %v138
  %v537 = vunpack.c.h.b16 %v138
  %v538 = vunpack.c.l.b16 %v139
  %v539 = vunpack.c.h.b16 %v139
  %v540 = vunpack.c.l.b16 %v140
  %v541 = vunpack.c.h.b16 %v140
  %v542 = vunpack.c.l.b16 %v141
  %v543 = vunpack.c.h.b16 %v141
  %v544 = vunpack.c.l.b16 %v142
  %v545 = vunpack.c.h.b16 %v142
  %v546 = vunpack.c.l.b16 %v143
  %v547 = vunpack.c.h.b16 %v143
  %v548 = vpack.c.b16 %v296, %v292
  %v549 = vpack.c.b16 %v297, %v293
  %v550 = vpack.c.b16 %v298, %v294
  %v551 = vpack.c.b16 %v299, %v295
  %v552 = vpack.c.b16 %v304, %v300
  %v553 = vpack.c.b16 %v305, %v301
  %v554 = vpack.c.b16 %v306, %v302
  %v555 = vpack.c.b16 %v307, %v303
  %v556 = vpack.c.b16 %v312, %v308
  %v557 = vpack.c.b16 %v313, %v309
  %v558 = vpack.c.b16 %v314, %v310
  %v559 = vpack.c.b16 %v315, %v311
  %v560 = vpack.c.b16 %v320, %v316
  %v561 = vpack.c.b16 %v321, %v317
  %v562 = vpack.c.b16 %v322, %v318
  %v563 = vpack.c.b16 %v323, %v319
  %v564 = vpack.c.b16 %v328, %v324
  %v565 = vpack.c.b16 %v329, %v325
  %v566 = vpack.c.b16 %v330, %v326
  %v567 = vpack.c.b16 %v331, %v327
  %v568 = vpack.c.b16 %v336, %v332
  %v569 = vpack.c.b16 %v337, %v333
  %v570 = vpack.c.b16 %v338, %v334
  %v571 = vpack.c.b16 %v339, %v335
  %v572 = vpack.c.b16 %v344, %v340
  %v573 = vpack.c.b16 %v345, %v341
  %v574 = vpack.c.b16 %v346, %v342
  %v575 = vpack.c.b16 %v347, %v343
  %v576 = vpack.c.b16 %v352, %v348
  %v577 = vpack.c.b16 %v353, %v349
  %v578 = vpack.c.b16 %v354, %v350
  %v579 = vpack.c.b16 %v355, %v351
  %v580 = vpack.c.b16 %v360, %v356
  %v581 = vpack.c.b16 %v361, %v357
  %v582 = vpack.c.b16 %v362, %v358
  %v583 = vpack.c.b16 %v363, %v359
  %v584 = vpack.c.b16 %v368, %v364
  %v585 = vpack.c.b16 %v369, %v365
  %v586 = vpack.c.b16 %v370, %v366
  %v587 = vpack.c.b16 %v371, %v367
  %v588 = vpack.c.b16 %v376, %v372
  %v589 = vpack.c.b16 %v377, %v373
  %v590 = vpack.c.b16 %v378, %v374
  %v591 = vpack.c.b16 %v379, %v375
  %v592 = vpack.c.b16 %v384, %v380
  %v593 = vpack.c.b16 %v385, %v381
  %v594 = vpack.c.b16 %v386, %v382
  %v595 = vpack.c.b16 %v387, %v383
  %v596 = vpack.c.b16 %v392, %v388
  %v597 = vpack.c.b16 %v393, %v389
  %v598 = vpack.c.b16 %v394, %v390
  %v599 = vpack.c.b16 %v395, %v391
  %v600 = vpack.c.b16 %v400, %v396
  %v601 = vpack.c.b16 %v401, %v397
  %v602 = vpack.c.b16 %v402, %v398
  %v603 = vpack.c.b16 %v403, %v399
  %v604 = vpack.c.b16 %v408, %v404
  %v605 = vpack.c.b16 %v409, %v405
  %v606 = vpack.c.b16 %v410, %v406
  %v607 = vpack.c.b16 %v411, %v407
  %v608 = vpack.c.b16 %v416, %v412
  %v609 = vpack.c.b16 %v417, %v413
  %v610 = vpack.c.b16 %v418, %v414
  %v611 = vpack.c.b16 %v419, %v415
  %v612 = vpack.c.b16 %v424, %v420
  %v613 = vpack.c.b16 %v425, %v421
  %v614 = vpack.c.b16 %v426, %v422
  %v615 = vpack.c.b16 %v427, %v423
  %v616 = vpack.c.b16 %v432, %v428
  %v617 = vpack.c.b16 %v433, %v429
  %v618 = vpack.c.b16 %v434, %v430
  %v619 = vpack.c.b16 %v435, %v431
  %v620 = vpack.c.b16 %v440, %v436
  %v621 = vpack.c.b16 %v441, %v437
  %v622 = vpack.c.b16 %v442, %v438
  %v623 = vpack.c.b16 %v443, %v439
  %v624 = vpack.c.b16 %v448, %v444
  %v625 = vpack.c.b16 %v449, %v445
  %v626 = vpack.c.b16 %v450, %v446
  %v627 = vpack.c.b16 %v451, %v447
  %v628 = vpack.c.b16 %v456, %v452
  %v629 = vpack.c.b16 %v457, %v453
  %v630 = vpack.c.b16 %v458, %v454
  %v631 = vpack.c.b16 %v459, %v455
  %v632 = vpack.c.b16 %v464, %v460
  %v633 = vpack.c.b16 %v465, %v461
  %v634 = vpack.c.b16 %v466, %v462
  %v635 = vpack.c.b16 %v467, %v463
  %v636 = vpack.c.b16 %v472, %v468
  %v637 = vpack.c.b16 %v473, %v469
  %v638 = vpack.c.b16 %v474, %v470
  %v639 = vpack.c.b16 %v475, %v471
  %v640 = vpack.c.b16 %v480, %v476
  %v641 = vpack.c.b16 %v481, %v477
  %v642 = vpack.c.b16 %v482, %v478
  %v643 = vpack.c.b16 %v483, %v479
  %v644 = vpack.c.b16 %v488, %v484
  %v645 = vpack.c.b16 %v489, %v485
  %v646 = vpack.c.b16 %v490, %v486
  %v647 = vpack.c.b16 %v491, %v487
  %v648 = vpack.c.b16 %v496, %v492
  %v649 = vpack.c.b16 %v497, %v493
  %v650 = vpack.c.b16 %v498, %v494
  %v651 = vpack.c.b16 %v499, %v495
  %v652 = vpack.c.b16 %v504, %v500
  %v653 = vpack.c.b16 %v505, %v501
  %v654 = vpack.c.b16 %v506, %v502
  %v655 = vpack.c.b16 %v507, %v503
  %v656 = vpack.c.b16 %v512, %v508
  %v657 = vpack.c.b16 %v513, %v509
  %v658 = vpack.c.b16 %v514, %v510
  %v659 = vpack.c.b16 %v515, %v511
  %v660 = vpack.c.b16 %v520, %v516
  %v661 = vpack.c.b16 %v521, %v517
  %v662 = vpack.c.b16 %v522, %v518
  %v663 = vpack.c.b16 %v523, %v519
  %v664 = vpack.c.b16 %v528, %v524
  %v665 = vpack.c.b16 %v529, %v525
  %v666 = vpack.c.b16 %v530, %v526
  %v667 = vpack.c.b16 %v531, %v527
  %v668 = vpack.c.b16 %v536, %v532
  %v669 = vpack.c.b16 %v537, %v533
  %v670 = vpack.c.b16 %v538, %v534
  %v671 = vpack.c.b16 %v539, %v535
  %v672 = vpack.c.b16 %v544, %v540
  %v673 = vpack.c.b16 %v545, %v541
  %v674 = vpack.c.b16 %v546, %v542
  %v675 = vpack.c.b16 %v547, %v543
  %804 = vmatprep.subr.bf16.mxu0 %v549
  %805 = vmatpush1.bf16.msra.mxu0 %v548
  %806 = vmatprep.subr.bf16.mxu0 %v553
  %807 = vmatpush1.bf16.msra.mxu0 %v552
  %808 = vmatprep.subr.bf16.mxu0 %v557
  %809 = vmatpush1.bf16.msra.mxu0 %v556
  %810 = vmatprep.subr.bf16.mxu0 %v561
  %811 = vmatpush1.bf16.msra.mxu0 %v560
  %812 = vmatprep.subr.bf16.mxu0 %v565
  %813 = vmatpush1.bf16.msra.mxu0 %v564
  %814 = vmatprep.subr.bf16.mxu0 %v569
  %815 = vmatpush1.bf16.msra.mxu0 %v568
  %816 = vmatprep.subr.bf16.mxu0 %v573
  %817 = vmatpush1.bf16.msra.mxu0 %v572
  %818 = vmatprep.subr.bf16.mxu0 %v577
  %819 = vmatpush1.bf16.msra.mxu0 %v576
  %820 = vmatprep.subr.bf16.mxu0 %v581
  %821 = vmatpush1.bf16.msra.mxu0 %v580
  %822 = vmatprep.subr.bf16.mxu0 %v585
  %823 = vmatpush1.bf16.msra.mxu0 %v584
  %824 = vmatprep.subr.bf16.mxu0 %v589
  %825 = vmatpush1.bf16.msra.mxu0 %v588
  %826 = vmatprep.subr.bf16.mxu0 %v593
  %827 = vmatpush1.bf16.msra.mxu0 %v592
  %828 = vmatprep.subr.bf16.mxu0 %v597
  %829 = vmatpush1.bf16.msra.mxu0 %v596
  %830 = vmatprep.subr.bf16.mxu0 %v601
  %831 = vmatpush1.bf16.msra.mxu0 %v600
  %832 = vmatprep.subr.bf16.mxu0 %v605
  %833 = vmatpush1.bf16.msra.mxu0 %v604
  %834 = vmatprep.subr.bf16.mxu0 %v609
  %835 = vmatpush1.bf16.msra.mxu0 %v608
  %836 = vmatprep.mubr.bf16.mxu0 %v157
  %837 = vmatmul.mubr.bf16.gmra.mrb[0].mxu0 %v156
  %v838 = vpop.f32.mrb[0].mxu0
  %v839 = vadd.f32 %v148, %v838
  %v840 = vpop.f32.mrb[0].mxu0
  %v841 = vadd.f32 %v148, %v840
  %v842 = vpop.f32.mrb[0].mxu0
  %v843 = vpop.f32.mrb[0].mxu0
  %844 = vdwg.mxu0
  %845 = vmatprep.subr.bf16.mxu0 %v613
  %846 = vmatpush1.bf16.msra.mxu0 %v612
  %847 = vmatprep.subr.bf16.mxu0 %v617
  %848 = vmatpush1.bf16.msra.mxu0 %v616
  %849 = vmatprep.subr.bf16.mxu0 %v621
  %850 = vmatpush1.bf16.msra.mxu0 %v620
  %851 = vmatprep.subr.bf16.mxu0 %v625
  %852 = vmatpush1.bf16.msra.mxu0 %v624
  %853 = vmatprep.subr.bf16.mxu0 %v629
  %854 = vmatpush1.bf16.msra.mxu0 %v628
  %855 = vmatprep.subr.bf16.mxu0 %v633
  %856 = vmatpush1.bf16.msra.mxu0 %v632
  %857 = vmatprep.subr.bf16.mxu0 %v637
  %858 = vmatpush1.bf16.msra.mxu0 %v636
  %859 = vmatprep.subr.bf16.mxu0 %v641
  %860 = vmatpush1.bf16.msra.mxu0 %v640
  %861 = vmatprep.subr.bf16.mxu0 %v645
  %862 = vmatpush1.bf16.msra.mxu0 %v644
  %863 = vmatprep.subr.bf16.mxu0 %v649
  %864 = vmatpush1.bf16.msra.mxu0 %v648
  %865 = vmatprep.subr.bf16.mxu0 %v653
  %866 = vmatpush1.bf16.msra.mxu0 %v652
  %867 = vmatprep.subr.bf16.mxu0 %v657
  %868 = vmatpush1.bf16.msra.mxu0 %v656
  %869 = vmatprep.subr.bf16.mxu0 %v661
  %870 = vmatpush1.bf16.msra.mxu0 %v660
  %871 = vmatprep.subr.bf16.mxu0 %v665
  %872 = vmatpush1.bf16.msra.mxu0 %v664
  %873 = vmatprep.subr.bf16.mxu0 %v669
  %874 = vmatpush1.bf16.msra.mxu0 %v668
  %875 = vmatprep.subr.bf16.mxu0 %v673
  %876 = vmatpush1.bf16.msra.mxu0 %v672
  %877 = vmatprep.mubr.bf16.mxu0 %v159
  %878 = vmatmul.mubr.bf16.gmra.mrb[0].mxu0 %v158
  %v879 = vpop.f32.mrb[0].mxu0
  %v880 = vadd.f32 %v839, %v879
  %v881 = vpop.f32.mrb[0].mxu0
  %v882 = vadd.f32 %v841, %v881
  %v883 = vpop.f32.mrb[0].mxu0
  %v884 = vpop.f32.mrb[0].mxu0
  %885 = vdwg.mxu0
  %886 = vmatprep.subr.bf16.mxu0 %v551
  %887 = vmatpush1.bf16.msra.mxu0 %v550
  %888 = vmatprep.subr.bf16.mxu0 %v555
  %889 = vmatpush1.bf16.msra.mxu0 %v554
  %890 = vmatprep.subr.bf16.mxu0 %v559
  %891 = vmatpush1.bf16.msra.mxu0 %v558
  %892 = vmatprep.subr.bf16.mxu0 %v563
  %893 = vmatpush1.bf16.msra.mxu0 %v562
  %894 = vmatprep.subr.bf16.mxu0 %v567
  %895 = vmatpush1.bf16.msra.mxu0 %v566
  %896 = vmatprep.subr.bf16.mxu0 %v571
  %897 = vmatpush1.bf16.msra.mxu0 %v570
  %898 = vmatprep.subr.bf16.mxu0 %v575
  %899 = vmatpush1.bf16.msra.mxu0 %v574
  %900 = vmatprep.subr.bf16.mxu0 %v579
  %901 = vmatpush1.bf16.msra.mxu0 %v578
  %902 = vmatprep.subr.bf16.mxu0 %v583
  %903 = vmatpush1.bf16.msra.mxu0 %v582
  %904 = vmatprep.subr.bf16.mxu0 %v587
  %905 = vmatpush1.bf16.msra.mxu0 %v586
  %906 = vmatprep.subr.bf16.mxu0 %v591
  %907 = vmatpush1.bf16.msra.mxu0 %v590
  %908 = vmatprep.subr.bf16.mxu0 %v595
  %909 = vmatpush1.bf16.msra.mxu0 %v594
  %910 = vmatprep.subr.bf16.mxu0 %v599
  %911 = vmatpush1.bf16.msra.mxu0 %v598
  %912 = vmatprep.subr.bf16.mxu0 %v603
  %913 = vmatpush1.bf16.msra.mxu0 %v602
  %914 = vmatprep.subr.bf16.mxu0 %v607
  %915 = vmatpush1.bf16.msra.mxu0 %v606
  %916 = vmatprep.subr.bf16.mxu0 %v611
  %917 = vmatpush1.bf16.msra.mxu0 %v610
  %918 = vmatprep.mubr.bf16.mxu0 %v157
  %919 = vmatmul.mubr.bf16.gmra.mrb[0].mxu0 %v156
  %v920 = vpop.f32.mrb[0].mxu0
  %v921 = vadd.f32 %v148, %v920
  %v922 = vpop.f32.mrb[0].mxu0
  %v923 = vadd.f32 %v148, %v922
  %v924 = vpop.f32.mrb[0].mxu0
  %v925 = vpop.f32.mrb[0].mxu0
  %926 = vdwg.mxu0
  %927 = vmatprep.subr.bf16.mxu0 %v615
  %928 = vmatpush1.bf16.msra.mxu0 %v614
  %929 = vmatprep.subr.bf16.mxu0 %v619
  %930 = vmatpush1.bf16.msra.mxu0 %v618
  %931 = vmatprep.subr.bf16.mxu0 %v623
  %932 = vmatpush1.bf16.msra.mxu0 %v622
  %933 = vmatprep.subr.bf16.mxu0 %v627
  %934 = vmatpush1.bf16.msra.mxu0 %v626
  %935 = vmatprep.subr.bf16.mxu0 %v631
  %936 = vmatpush1.bf16.msra.mxu0 %v630
  %937 = vmatprep.subr.bf16.mxu0 %v635
  %938 = vmatpush1.bf16.msra.mxu0 %v634
  %939 = vmatprep.subr.bf16.mxu0 %v639
  %940 = vmatpush1.bf16.msra.mxu0 %v638
  %941 = vmatprep.subr.bf16.mxu0 %v643
  %942 = vmatpush1.bf16.msra.mxu0 %v642
  %943 = vmatprep.subr.bf16.mxu0 %v647
  %944 = vmatpush1.bf16.msra.mxu0 %v646
  %945 = vmatprep.subr.bf16.mxu0 %v651
  %946 = vmatpush1.bf16.msra.mxu0 %v650
  %947 = vmatprep.subr.bf16.mxu0 %v655
  %948 = vmatpush1.bf16.msra.mxu0 %v654
  %949 = vmatprep.subr.bf16.mxu0 %v659
  %950 = vmatpush1.bf16.msra.mxu0 %v658
  %951 = vmatprep.subr.bf16.mxu0 %v663
  %952 = vmatpush1.bf16.msra.mxu0 %v662
  %953 = vmatprep.subr.bf16.mxu0 %v667
  %954 = vmatpush1.bf16.msra.mxu0 %v666
  %955 = vmatprep.subr.bf16.mxu0 %v671
  %956 = vmatpush1.bf16.msra.mxu0 %v670
  %957 = vmatprep.subr.bf16.mxu0 %v675
  %958 = vmatpush1.bf16.msra.mxu0 %v674
  %959 = vmatprep.mubr.bf16.mxu0 %v159
  %960 = vmatmul.mubr.bf16.gmra.mrb[0].mxu0 %v158
  %v961 = vpop.f32.mrb[0].mxu0
  %v962 = vadd.f32 %v921, %v961
  %v963 = vpop.f32.mrb[0].mxu0
  %v964 = vadd.f32 %v923, %v963
  %v965 = vpop.f32.mrb[0].mxu0
  %v966 = vpop.f32.mrb[0].mxu0
  %967 = vdwg.mxu0
  %vm968 = vcmp.ge.f32.partialorder %v880, 0.0
  %vm969 = vcmp.ge.f32.partialorder %v882, 0.0
  %vm970 = vcmp.ge.f32.partialorder %v962, 0.0
  %vm971 = vcmp.ge.f32.partialorder %v964, 0.0
  %v972 = vmul.f32 %v880, 0.2
  %v973 = vmul.f32 %v882, 0.2
  %v974 = vmul.f32 %v962, 0.2
  %v975 = vmul.f32 %v964, 0.2
  %v976 = vsel %vm968, %v880, %v972
  %v977 = vsel %vm969, %v882, %v973
  %v978 = vsel %vm970, %v962, %v974
  %v979 = vsel %vm971, %v964, %v975
  %v980 = vpack.c.bf16 %v976, %v976
  %v981 = vpack.c.bf16 %v977, %v977
  %v982 = vpack.c.bf16 %v978, %v978
  %v983 = vpack.c.bf16 %v979, %v979
  %v988 = vunpack.c.l.b16 %v980
  %v989 = vunpack.c.l.b16 %v981
  %v990 = vunpack.c.l.b16 %v982
  %v991 = vunpack.c.l.b16 %v983
  %v992 = vpack.c.b16 %v989, %v988
  %v993 = vpack.c.b16 %v991, %v990
  %996 = vst [vmem:[%s3] sm:$0xff] %v992
  %997 = vst [vmem:[%s3 + $0x8] sm:$0xff] %v993
  // Predicated region
  $region14: #{sr_projection_forward.14} parent=0 // pred_check
    _
  $region15: #{sr_projection_forward.14} parent=0 // pred_check_branch
    %999 = sbr.rel (0) target = $region17
  $region16: #{sr_projection_forward.14} parent=0 // pred_region
    _
  $region17: #{sr_projection_forward.14} parent=0 // pred_fallthru
    _
  // Predicated region
  $region18: #{sr_projection_forward.14} parent=0 // pred_check
    _
  $region19: #{sr_projection_forward.14} parent=0 // pred_check_branch
    %1001 = sbr.rel (0) target = $region21
  $region20: #{sr_projection_forward.14} parent=0 // pred_region
    _
  $region21: #{sr_projection_forward.14} parent=0 // pred_fallthru
    _

// kernel: sr_projection_forward.18
$region0: #{sr_projection_forward.18}
  #allocation0 [shape = 'u32[]', space=smem, size = 0x4, offset = 0x4, fixed_abs, tag = 'smem constant byte address 0x4 - core index']
  #allocation1 [shape = 'u32[144,128]{1,0:T(1,128)}', space=vmem, size = 0x12000, scoped, tag = 'internal scratch']
  %s0 = inlined_call_operand.vmem [shape: bf16[512,8], index: 0, kind: input, shape index: {}]
  %s1 = inlined_call_operand.vmem [shape: bf16[8,512], index: 1, kind: input, shape index: {}]
  %s2 = inlined_call_operand.hbm [shape: f32[512,1], index: 2, kind: input, shape index: {}]
  %s3 = inlined_call_operand.vmem [shape: f32[512,512], index: 3, kind: output, shape index: {}]
  %s4 = sld [smem:[#allocation0]]
  $region26: #{sr_projection_forward.18} parent=0
    _
  %s6 = ssub.s32 1, %s4
  %s7 = scalar_select 0, %s6, %s4
  $region1: #{sr_projection_forward.18} parent=0
    #allocation2 [shape = 'u8[262144]{0}', space=vmem, size = 0x40000, scoped, tag = 'input window, operand 2, single buffered']
    #allocation3 [shape = 's32[1]{0}', space=sflag, size = 0x4, scoped, tag = 'scoped memory for sr_projection_forward.18']
    %8 = vsyncpa [#allocation3], 0
    // Predicated region
    $region2: #{sr_projection_forward.18} parent=1 // pred_check
      _
    $region3: #{sr_projection_forward.18} parent=1 // pred_check_branch
      %10 = sbr.rel (0) target = $region5
    $region4: #{sr_projection_forward.18} parent=1 // pred_region
      _
    $region5: #{sr_projection_forward.18} parent=1 // pred_fallthru
      _
    // Predicated region
    $region6: #{sr_projection_forward.18} parent=1 // pred_check
      _
    $region7: #{sr_projection_forward.18} parent=1 // pred_check_branch
      %12 = sbr.rel (0) target = $region9
    $region8: #{sr_projection_forward.18} parent=1 // pred_region
      _
    $region9: #{sr_projection_forward.18} parent=1 // pred_fallthru
      _
    // Predicated region
    $region10: #{sr_projection_forward.18} parent=1 // pred_check
      _
    $region11: #{sr_projection_forward.18} parent=1 // pred_check_branch
      %14 = sbr.rel (0) target = $region13
    $region12: #{sr_projection_forward.18} parent=1 // pred_region
      %s16 = ssub.s32 8192, 8192
      %17 = vsyncadd [#allocation3], %s16
      %s18 = sshll.u32 [#allocation2], 4
      %s19 = int_to_ptr.vmem [resolvable:$true] %s18
      %24 = dma.hbm_to_vmem [thread:$0]  %s2, 8192, %s19, [#allocation3], 128, 128, 8
    $region13: #{sr_projection_forward.18} parent=1 // pred_fallthru
      _
    // Predicated region
    $region14: #{sr_projection_forward.18} parent=1 // pred_check
      _
    $region15: #{sr_projection_forward.18} parent=1 // pred_check_branch
      %26 = sbr.rel (0) target = $region17
    $region16: #{sr_projection_forward.18} parent=1 // pred_region
      %27 = dma.done [#allocation3], 8192
    $region17: #{sr_projection_forward.18} parent=1 // pred_fallthru
      _
    %v29 = vld [vmem:[%s0] sm:$0xf]
    %v30 = vld [vmem:[%s0 + $0x4] sm:$0xf]
    %v31 = vld [vmem:[%s0 + $0x8] sm:$0xf]
    %v32 = vld [vmem:[%s0 + $0xc] sm:$0xf]
    %v33 = vld [vmem:[%s0 + $0x10] sm:$0xf]
    %v34 = vld [vmem:[%s0 + $0x14] sm:$0xf]
    %v35 = vld [vmem:[%s0 + $0x18] sm:$0xf]
    %v36 = vld [vmem:[%s0 + $0x1c] sm:$0xf]
    %v37 = vld [vmem:[%s0 + $0x20] sm:$0xf]
    %v38 = vld [vmem:[%s0 + $0x24] sm:$0xf]
    %v39 = vld [vmem:[%s0 + $0x28] sm:$0xf]
    %v40 = vld [vmem:[%s0 + $0x2c] sm:$0xf]
    %v41 = vld [vmem:[%s0 + $0x30] sm:$0xf]
    %v42 = vld [vmem:[%s0 + $0x34] sm:$0xf]
    %v43 = vld [vmem:[%s0 + $0x38] sm:$0xf]
    %v44 = vld [vmem:[%s0 + $0x3c] sm:$0xf]
    %v45 = vld [vmem:[%s0 + $0x40] sm:$0xf]
    %v46 = vld [vmem:[%s0 + $0x44] sm:$0xf]
    %v47 = vld [vmem:[%s0 + $0x48] sm:$0xf]
    %v48 = vld [vmem:[%s0 + $0x4c] sm:$0xf]
    %v49 = vld [vmem:[%s0 + $0x50] sm:$0xf]
    %v50 = vld [vmem:[%s0 + $0x54] sm:$0xf]
    %v51 = vld [vmem:[%s0 + $0x58] sm:$0xf]
    %v52 = vld [vmem:[%s0 + $0x5c] sm:$0xf]
    %v53 = vld [vmem:[%s0 + $0x60] sm:$0xf]
    %v54 = vld [vmem:[%s0 + $0x64] sm:$0xf]
    %v55 = vld [vmem:[%s0 + $0x68] sm:$0xf]
    %v56 = vld [vmem:[%s0 + $0x6c] sm:$0xf]
    %v57 = vld [vmem:[%s0 + $0x70] sm:$0xf]
    %v58 = vld [vmem:[%s0 + $0x74] sm:$0xf]
    %v59 = vld [vmem:[%s0 + $0x78] sm:$0xf]
    %v60 = vld [vmem:[%s0 + $0x7c] sm:$0xf]
    %v61 = vld [vmem:[%s0 + $0x80] sm:$0xf]
    %v62 = vld [vmem:[%s0 + $0x84] sm:$0xf]
    %v63 = vld [vmem:[%s0 + $0x88] sm:$0xf]
    %v64 = vld [vmem:[%s0 + $0x8c] sm:$0xf]
    %v65 = vld [vmem:[%s0 + $0x90] sm:$0xf]
    %v66 = vld [vmem:[%s0 + $0x94] sm:$0xf]
    %v67 = vld [vmem:[%s0 + $0x98] sm:$0xf]
    %v68 = vld [vmem:[%s0 + $0x9c] sm:$0xf]
    %v69 = vld [vmem:[%s0 + $0xa0] sm:$0xf]
    %v70 = vld [vmem:[%s0 + $0xa4] sm:$0xf]
    %v71 = vld [vmem:[%s0 + $0xa8] sm:$0xf]
    %v72 = vld [vmem:[%s0 + $0xac] sm:$0xf]
    %v73 = vld [vmem:[%s0 + $0xb0] sm:$0xf]
    %v74 = vld [vmem:[%s0 + $0xb4] sm:$0xf]
    %v75 = vld [vmem:[%s0 + $0xb8] sm:$0xf]
    %v76 = vld [vmem:[%s0 + $0xbc] sm:$0xf]
    %v77 = vld [vmem:[%s0 + $0xc0] sm:$0xf]
    %v78 = vld [vmem:[%s0 + $0xc4] sm:$0xf]
    %v79 = vld [vmem:[%s0 + $0xc8] sm:$0xf]
    %v80 = vld [vmem:[%s0 + $0xcc] sm:$0xf]
    %v81 = vld [vmem:[%s0 + $0xd0] sm:$0xf]
    %v82 = vld [vmem:[%s0 + $0xd4] sm:$0xf]
    %v83 = vld [vmem:[%s0 + $0xd8] sm:$0xf]
    %v84 = vld [vmem:[%s0 + $0xdc] sm:$0xf]
    %v85 = vld [vmem:[%s0 + $0xe0] sm:$0xf]
    %v86 = vld [vmem:[%s0 + $0xe4] sm:$0xf]
    %v87 = vld [vmem:[%s0 + $0xe8] sm:$0xf]
    %v88 = vld [vmem:[%s0 + $0xec] sm:$0xf]
    %v89 = vld [vmem:[%s0 + $0xf0] sm:$0xf]
    %v90 = vld [vmem:[%s0 + $0xf4] sm:$0xf]
    %v91 = vld [vmem:[%s0 + $0xf8] sm:$0xf]
    %v92 = vld [vmem:[%s0 + $0xfc] sm:$0xf]
    %v93 = vld [vmem:[%s1] sm:$0xff]
    %v94 = vld [vmem:[%s1 + $0x8] sm:$0xff]
    %v95 = vld [vmem:[#allocation2] sm:$0xff]
    %v96 = vld [vmem:[#allocation2 + $0x8] sm:$0xff]
    %v97 = vld [vmem:[#allocation2 + $0x10] sm:$0xff]
    %v98 = vld [vmem:[#allocation2 + $0x18] sm:$0xff]
    %v99 = vld [vmem:[#allocation2 + $0x20] sm:$0xff]
    %v100 = vld [vmem:[#allocation2 + $0x28] sm:$0xff]
    %v101 = vld [vmem:[#allocation2 + $0x30] sm:$0xff]
    %v102 = vld [vmem:[#allocation2 + $0x38] sm:$0xff]
    %v103 = vld [vmem:[#allocation2 + $0x40] sm:$0xff]
    %v104 = vld [vmem:[#allocation2 + $0x48] sm:$0xff]
    %v105 = vld [vmem:[#allocation2 + $0x50] sm:$0xff]
    %v106 = vld [vmem:[#allocation2 + $0x58] sm:$0xff]
    %v107 = vld [vmem:[#allocation2 + $0x60] sm:$0xff]
    %v108 = vld [vmem:[#allocation2 + $0x68] sm:$0xff]
    %v109 = vld [vmem:[#allocation2 + $0x70] sm:$0xff]
    %v110 = vld [vmem:[#allocation2 + $0x78] sm:$0xff]
    %v111 = vld [vmem:[#allocation2 + $0x80] sm:$0xff]
    %v112 = vld [vmem:[#allocation2 + $0x88] sm:$0xff]
    %v113 = vld [vmem:[#allocation2 + $0x90] sm:$0xff]
    %v114 = vld [vmem:[#allocation2 + $0x98] sm:$0xff]
    %v115 = vld [vmem:[#allocation2 + $0xa0] sm:$0xff]
    %v116 = vld [vmem:[#allocation2 + $0xa8] sm:$0xff]
    %v117 = vld [vmem:[#allocation2 + $0xb0] sm:$0xff]
    %v118 = vld [vmem:[#allocation2 + $0xb8] sm:$0xff]
    %v119 = vld [vmem:[#allocation2 + $0xc0] sm:$0xff]
    %v120 = vld [vmem:[#allocation2 + $0xc8] sm:$0xff]
    %v121 = vld [vmem:[#allocation2 + $0xd0] sm:$0xff]
    %v122 = vld [vmem:[#allocation2 + $0xd8] sm:$0xff]
    %v123 = vld [vmem:[#allocation2 + $0xe0] sm:$0xff]
    %v124 = vld [vmem:[#allocation2 + $0xe8] sm:$0xff]
    %v125 = vld [vmem:[#allocation2 + $0xf0] sm:$0xff]
    %v126 = vld [vmem:[#allocation2 + $0xf8] sm:$0xff]
    %v127 = vld [vmem:[#allocation2 + $0x100] sm:$0xff]
    %v128 = vld [vmem:[#allocation2 + $0x108] sm:$0xff]
    %v129 = vld [vmem:[#allocation2 + $0x110] sm:$0xff]
    %v130 = vld [vmem:[#allocation2 + $0x118] sm:$0xff]
    %v131 = vld [vmem:[#allocation2 + $0x120] sm:$0xff]
    %v132 = vld [vmem:[#allocation2 + $0x128] sm:$0xff]
    %v133 = vld [vmem:[#allocation2 + $0x130] sm:$0xff]
    %v134 = vld [vmem:[#allocation2 + $0x138] sm:$0xff]
    %v135 = vld [vmem:[#allocation2 + $0x140] sm:$0xff]
    %v136 = vld [vmem:[#allocation2 + $0x148] sm:$0xff]
    %v137 = vld [vmem:[#allocation2 + $0x150] sm:$0xff]
    %v138 = vld [vmem:[#allocation2 + $0x158] sm:$0xff]
    %v139 = vld [vmem:[#allocation2 + $0x160] sm:$0xff]
    %v140 = vld [vmem:[#allocation2 + $0x168] sm:$0xff]
    %v141 = vld [vmem:[#allocation2 + $0x170] sm:$0xff]
    %v142 = vld [vmem:[#allocation2 + $0x178] sm:$0xff]
    %v143 = vld [vmem:[#allocation2 + $0x180] sm:$0xff]
    %v144 = vld [vmem:[#allocation2 + $0x188] sm:$0xff]
    %v145 = vld [vmem:[#allocation2 + $0x190] sm:$0xff]
    %v146 = vld [vmem:[#allocation2 + $0x198] sm:$0xff]
    %v147 = vld [vmem:[#allocation2 + $0x1a0] sm:$0xff]
    %v148 = vld [vmem:[#allocation2 + $0x1a8] sm:$0xff]
    %v149 = vld [vmem:[#allocation2 + $0x1b0] sm:$0xff]
    %v150 = vld [vmem:[#allocation2 + $0x1b8] sm:$0xff]
    %v151 = vld [vmem:[#allocation2 + $0x1c0] sm:$0xff]
    %v152 = vld [vmem:[#allocation2 + $0x1c8] sm:$0xff]
    %v153 = vld [vmem:[#allocation2 + $0x1d0] sm:$0xff]
    %v154 = vld [vmem:[#allocation2 + $0x1d8] sm:$0xff]
    %v155 = vld [vmem:[#allocation2 + $0x1e0] sm:$0xff]
    %v156 = vld [vmem:[#allocation2 + $0x1e8] sm:$0xff]
    %v157 = vld [vmem:[#allocation2 + $0x1f0] sm:$0xff]
    %v158 = vld [vmem:[#allocation2 + $0x1f8] sm:$0xff]
    %160 = vset.pattern.permute.xlu0 0
    %161 = vperm.xlu0 %160, %v95
    %v162 = vpop.permute.xlu0 %161
    %165 = vset.pattern.permute.xlu0 0
    %166 = vperm.xlu0 %165, %v96
    %v167 = vpop.permute.xlu0 %166
    %170 = vset.pattern.permute.xlu0 0
    %171 = vperm.xlu0 %170, %v97
    %v172 = vpop.permute.xlu0 %171
    %175 = vset.pattern.permute.xlu0 0
    %176 = vperm.xlu0 %175, %v98
    %v177 = vpop.permute.xlu0 %176
    %180 = vset.pattern.permute.xlu0 0
    %181 = vperm.xlu0 %180, %v99
    %v182 = vpop.permute.xlu0 %181
    %185 = vset.pattern.permute.xlu0 0
    %186 = vperm.xlu0 %185, %v100
    %v187 = vpop.permute.xlu0 %186
    %190 = vset.pattern.permute.xlu0 0
    %191 = vperm.xlu0 %190, %v101
    %v192 = vpop.permute.xlu0 %191
    %195 = vset.pattern.permute.xlu0 0
    %196 = vperm.xlu0 %195, %v102
    %v197 = vpop.permute.xlu0 %196
    %200 = vset.pattern.permute.xlu0 0
    %201 = vperm.xlu0 %200, %v103
    %v202 = vpop.permute.xlu0 %201
    %205 = vset.pattern.permute.xlu0 0
    %206 = vperm.xlu0 %205, %v104
    %v207 = vpop.permute.xlu0 %206
    %210 = vset.pattern.permute.xlu0 0
    %211 = vperm.xlu0 %210, %v105
    %v212 = vpop.permute.xlu0 %211
    %215 = vset.pattern.permute.xlu0 0
    %216 = vperm.xlu0 %215, %v106
    %v217 = vpop.permute.xlu0 %216
    %220 = vset.pattern.permute.xlu0 0
    %221 = vperm.xlu0 %220, %v107
    %v222 = vpop.permute.xlu0 %221
    %225 = vset.pattern.permute.xlu0 0
    %226 = vperm.xlu0 %225, %v108
    %v227 = vpop.permute.xlu0 %226
    %230 = vset.pattern.permute.xlu0 0
    %231 = vperm.xlu0 %230, %v109
    %v232 = vpop.permute.xlu0 %231
    %235 = vset.pattern.permute.xlu0 0
    %236 = vperm.xlu0 %235, %v110
    %v237 = vpop.permute.xlu0 %236
    %240 = vset.pattern.permute.xlu0 0
    %241 = vperm.xlu0 %240, %v111
    %v242 = vpop.permute.xlu0 %241
    %245 = vset.pattern.permute.xlu0 0
    %246 = vperm.xlu0 %245, %v112
    %v247 = vpop.permute.xlu0 %246
    %250 = vset.pattern.permute.xlu0 0
    %251 = vperm.xlu0 %250, %v113
    %v252 = vpop.permute.xlu0 %251
    %255 = vset.pattern.permute.xlu0 0
    %256 = vperm.xlu0 %255, %v114
    %v257 = vpop.permute.xlu0 %256
    %260 = vset.pattern.permute.xlu0 0
    %261 = vperm.xlu0 %260, %v115
    %v262 = vpop.permute.xlu0 %261
    %265 = vset.pattern.permute.xlu0 0
    %266 = vperm.xlu0 %265, %v116
    %v267 = vpop.permute.xlu0 %266
    %270 = vset.pattern.permute.xlu0 0
    %271 = vperm.xlu0 %270, %v117
    %v272 = vpop.permute.xlu0 %271
    %275 = vset.pattern.permute.xlu0 0
    %276 = vperm.xlu0 %275, %v118
    %v277 = vpop.permute.xlu0 %276
    %280 = vset.pattern.permute.xlu0 0
    %281 = vperm.xlu0 %280, %v119
    %v282 = vpop.permute.xlu0 %281
    %285 = vset.pattern.permute.xlu0 0
    %286 = vperm.xlu0 %285, %v120
    %v287 = vpop.permute.xlu0 %286
    %290 = vset.pattern.permute.xlu0 0
    %291 = vperm.xlu0 %290, %v121
    %v292 = vpop.permute.xlu0 %291
    %295 = vset.pattern.permute.xlu0 0
    %296 = vperm.xlu0 %295, %v122
    %v297 = vpop.permute.xlu0 %296
    %300 = vset.pattern.permute.xlu0 0
    %301 = vperm.xlu0 %300, %v123
    %v302 = vpop.permute.xlu0 %301
    %305 = vset.pattern.permute.xlu0 0
    %306 = vperm.xlu0 %305, %v124
    %v307 = vpop.permute.xlu0 %306
    %310 = vset.pattern.permute.xlu0 0
    %311 = vperm.xlu0 %310, %v125
    %v312 = vpop.permute.xlu0 %311
    %315 = vset.pattern.permute.xlu0 0
    %316 = vperm.xlu0 %315, %v126
    %v317 = vpop.permute.xlu0 %316
    %320 = vset.pattern.permute.xlu0 0
    %321 = vperm.xlu0 %320, %v127
    %v322 = vpop.permute.xlu0 %321
    %325 = vset.pattern.permute.xlu0 0
    %326 = vperm.xlu0 %325, %v128
    %v327 = vpop.permute.xlu0 %326
    %330 = vset.pattern.permute.xlu0 0
    %331 = vperm.xlu0 %330, %v129
    %v332 = vpop.permute.xlu0 %331
    %335 = vset.pattern.permute.xlu0 0
    %336 = vperm.xlu0 %335, %v130
    %v337 = vpop.permute.xlu0 %336
    %340 = vset.pattern.permute.xlu0 0
    %341 = vperm.xlu0 %340, %v131
    %v342 = vpop.permute.xlu0 %341
    %345 = vset.pattern.permute.xlu0 0
    %346 = vperm.xlu0 %345, %v132
    %v347 = vpop.permute.xlu0 %346
    %350 = vset.pattern.permute.xlu0 0
    %351 = vperm.xlu0 %350, %v133
    %v352 = vpop.permute.xlu0 %351
    %355 = vset.pattern.permute.xlu0 0
    %356 = vperm.xlu0 %355, %v134
    %v357 = vpop.permute.xlu0 %356
    %360 = vset.pattern.permute.xlu0 0
    %361 = vperm.xlu0 %360, %v135
    %v362 = vpop.permute.xlu0 %361
    %365 = vset.pattern.permute.xlu0 0
    %366 = vperm.xlu0 %365, %v136
    %v367 = vpop.permute.xlu0 %366
    %370 = vset.pattern.permute.xlu0 0
    %371 = vperm.xlu0 %370, %v137
    %v372 = vpop.permute.xlu0 %371
    %375 = vset.pattern.permute.xlu0 0
    %376 = vperm.xlu0 %375, %v138
    %v377 = vpop.permute.xlu0 %376
    %380 = vset.pattern.permute.xlu0 0
    %381 = vperm.xlu0 %380, %v139
    %v382 = vpop.permute.xlu0 %381
    %385 = vset.pattern.permute.xlu0 0
    %386 = vperm.xlu0 %385, %v140
    %v387 = vpop.permute.xlu0 %386
    %390 = vset.pattern.permute.xlu0 0
    %391 = vperm.xlu0 %390, %v141
    %v392 = vpop.permute.xlu0 %391
    %395 = vset.pattern.permute.xlu0 0
    %396 = vperm.xlu0 %395, %v142
    %v397 = vpop.permute.xlu0 %396
    %400 = vset.pattern.permute.xlu0 0
    %401 = vperm.xlu0 %400, %v143
    %v402 = vpop.permute.xlu0 %401
    %405 = vset.pattern.permute.xlu0 0
    %406 = vperm.xlu0 %405, %v144
    %v407 = vpop.permute.xlu0 %406
    %410 = vset.pattern.permute.xlu0 0
    %411 = vperm.xlu0 %410, %v145
    %v412 = vpop.permute.xlu0 %411
    %415 = vset.pattern.permute.xlu0 0
    %416 = vperm.xlu0 %415, %v146
    %v417 = vpop.permute.xlu0 %416
    %420 = vset.pattern.permute.xlu0 0
    %421 = vperm.xlu0 %420, %v147
    %v422 = vpop.permute.xlu0 %421
    %425 = vset.pattern.permute.xlu0 0
    %426 = vperm.xlu0 %425, %v148
    %v427 = vpop.permute.xlu0 %426
    %430 = vset.pattern.permute.xlu0 0
    %431 = vperm.xlu0 %430, %v149
    %v432 = vpop.permute.xlu0 %431
    %435 = vset.pattern.permute.xlu0 0
    %436 = vperm.xlu0 %435, %v150
    %v437 = vpop.permute.xlu0 %436
    %440 = vset.pattern.permute.xlu0 0
    %441 = vperm.xlu0 %440, %v151
    %v442 = vpop.permute.xlu0 %441
    %445 = vset.pattern.permute.xlu0 0
    %446 = vperm.xlu0 %445, %v152
    %v447 = vpop.permute.xlu0 %446
    %450 = vset.pattern.permute.xlu0 0
    %451 = vperm.xlu0 %450, %v153
    %v452 = vpop.permute.xlu0 %451
    %455 = vset.pattern.permute.xlu0 0
    %456 = vperm.xlu0 %455, %v154
    %v457 = vpop.permute.xlu0 %456
    %460 = vset.pattern.permute.xlu0 0
    %461 = vperm.xlu0 %460, %v155
    %v462 = vpop.permute.xlu0 %461
    %465 = vset.pattern.permute.xlu0 0
    %466 = vperm.xlu0 %465, %v156
    %v467 = vpop.permute.xlu0 %466
    %470 = vset.pattern.permute.xlu0 0
    %471 = vperm.xlu0 %470, %v157
    %v472 = vpop.permute.xlu0 %471
    %475 = vset.pattern.permute.xlu0 0
    %476 = vperm.xlu0 %475, %v158
    %v477 = vpop.permute.xlu0 %476
    %v543 = vunpack.c.l.b16 %v29
    %v544 = vunpack.c.l.b16 %v30
    %v545 = vunpack.c.l.b16 %v31
    %v546 = vunpack.c.l.b16 %v32
    %v547 = vunpack.c.l.b16 %v33
    %v548 = vunpack.c.l.b16 %v34
    %v549 = vunpack.c.l.b16 %v35
    %v550 = vunpack.c.l.b16 %v36
    %v551 = vunpack.c.l.b16 %v37
    %v552 = vunpack.c.l.b16 %v38
    %v553 = vunpack.c.l.b16 %v39
    %v554 = vunpack.c.l.b16 %v40
    %v555 = vunpack.c.l.b16 %v41
    %v556 = vunpack.c.l.b16 %v42
    %v557 = vunpack.c.l.b16 %v43
    %v558 = vunpack.c.l.b16 %v44
    %v559 = vunpack.c.l.b16 %v45
    %v560 = vunpack.c.l.b16 %v46
    %v561 = vunpack.c.l.b16 %v47
    %v562 = vunpack.c.l.b16 %v48
    %v563 = vunpack.c.l.b16 %v49
    %v564 = vunpack.c.l.b16 %v50
    %v565 = vunpack.c.l.b16 %v51
    %v566 = vunpack.c.l.b16 %v52
    %v567 = vunpack.c.l.b16 %v53
    %v568 = vunpack.c.l.b16 %v54
    %v569 = vunpack.c.l.b16 %v55
    %v570 = vunpack.c.l.b16 %v56
    %v571 = vunpack.c.l.b16 %v57
    %v572 = vunpack.c.l.b16 %v58
    %v573 = vunpack.c.l.b16 %v59
    %v574 = vunpack.c.l.b16 %v60
    %v575 = vunpack.c.l.b16 %v61
    %v576 = vunpack.c.l.b16 %v62
    %v577 = vunpack.c.l.b16 %v63
    %v578 = vunpack.c.l.b16 %v64
    %v579 = vunpack.c.l.b16 %v65
    %v580 = vunpack.c.l.b16 %v66
    %v581 = vunpack.c.l.b16 %v67
    %v582 = vunpack.c.l.b16 %v68
    %v583 = vunpack.c.l.b16 %v69
    %v584 = vunpack.c.l.b16 %v70
    %v585 = vunpack.c.l.b16 %v71
    %v586 = vunpack.c.l.b16 %v72
    %v587 = vunpack.c.l.b16 %v73
    %v588 = vunpack.c.l.b16 %v74
    %v589 = vunpack.c.l.b16 %v75
    %v590 = vunpack.c.l.b16 %v76
    %v591 = vunpack.c.l.b16 %v77
    %v592 = vunpack.c.l.b16 %v78
    %v593 = vunpack.c.l.b16 %v79
    %v594 = vunpack.c.l.b16 %v80
    %v595 = vunpack.c.l.b16 %v81
    %v596 = vunpack.c.l.b16 %v82
    %v597 = vunpack.c.l.b16 %v83
    %v598 = vunpack.c.l.b16 %v84
    %v599 = vunpack.c.l.b16 %v85
    %v600 = vunpack.c.l.b16 %v86
    %v601 = vunpack.c.l.b16 %v87
    %v602 = vunpack.c.l.b16 %v88
    %v603 = vunpack.c.l.b16 %v89
    %v604 = vunpack.c.l.b16 %v90
    %v605 = vunpack.c.l.b16 %v91
    %v606 = vunpack.c.l.b16 %v92
    %v607 = vpack.c.b16 %v544, %v543
    %v608 = vpack.c.b16 %v546, %v545
    %v609 = vpack.c.b16 %v548, %v547
    %v610 = vpack.c.b16 %v550, %v549
    %v611 = vpack.c.b16 %v552, %v551
    %v612 = vpack.c.b16 %v554, %v553
    %v613 = vpack.c.b16 %v556, %v555
    %v614 = vpack.c.b16 %v558, %v557
    %v615 = vpack.c.b16 %v560, %v559
    %v616 = vpack.c.b16 %v562, %v561
    %v617 = vpack.c.b16 %v564, %v563
    %v618 = vpack.c.b16 %v566, %v565
    %v619 = vpack.c.b16 %v568, %v567
    %v620 = vpack.c.b16 %v570, %v569
    %v621 = vpack.c.b16 %v572, %v571
    %v622 = vpack.c.b16 %v574, %v573
    %v623 = vpack.c.b16 %v576, %v575
    %v624 = vpack.c.b16 %v578, %v577
    %v625 = vpack.c.b16 %v580, %v579
    %v626 = vpack.c.b16 %v582, %v581
    %v627 = vpack.c.b16 %v584, %v583
    %v628 = vpack.c.b16 %v586, %v585
    %v629 = vpack.c.b16 %v588, %v587
    %v630 = vpack.c.b16 %v590, %v589
    %v631 = vpack.c.b16 %v592, %v591
    %v632 = vpack.c.b16 %v594, %v593
    %v633 = vpack.c.b16 %v596, %v595
    %v634 = vpack.c.b16 %v598, %v597
    %v635 = vpack.c.b16 %v600, %v599
    %v636 = vpack.c.b16 %v602, %v601
    %v637 = vpack.c.b16 %v604, %v603
    %v638 = vpack.c.b16 %v606, %v605
    %v641 = vunpack.c.l.b16 %v93
    %v642 = vunpack.c.h.b16 %v93
    %v643 = vunpack.c.l.b16 %v94
    %v644 = vunpack.c.h.b16 %v94
    %v645 = vpack.c.b16 %v641, %v641
    %v646 = vpack.c.b16 %v642, %v642
    %v647 = vpack.c.b16 %v643, %v643
    %v648 = vpack.c.b16 %v644, %v644
    %vm649 = vcmask 64512
    %v651 = vsel %vm649, %v607, 0
    %v654 = vsel %vm649, %v608, 0
    %v657 = vsel %vm649, %v609, 0
    %v660 = vsel %vm649, %v610, 0
    %v663 = vsel %vm649, %v611, 0
    %v666 = vsel %vm649, %v612, 0
    %v669 = vsel %vm649, %v613, 0
    %v672 = vsel %vm649, %v614, 0
    %v675 = vsel %vm649, %v615, 0
    %v678 = vsel %vm649, %v616, 0
    %v681 = vsel %vm649, %v617, 0
    %v684 = vsel %vm649, %v618, 0
    %v687 = vsel %vm649, %v619, 0
    %v690 = vsel %vm649, %v620, 0
    %v693 = vsel %vm649, %v621, 0
    %v696 = vsel %vm649, %v622, 0
    %v699 = vsel %vm649, %v623, 0
    %v702 = vsel %vm649, %v624, 0
    %v705 = vsel %vm649, %v625, 0
    %v708 = vsel %vm649, %v626, 0
    %v711 = vsel %vm649, %v627, 0
    %v714 = vsel %vm649, %v628, 0
    %v717 = vsel %vm649, %v629, 0
    %v720 = vsel %vm649, %v630, 0
    %v723 = vsel %vm649, %v631, 0
    %v726 = vsel %vm649, %v632, 0
    %v729 = vsel %vm649, %v633, 0
    %v732 = vsel %vm649, %v634, 0
    %v735 = vsel %vm649, %v635, 0
    %v738 = vsel %vm649, %v636, 0
    %v741 = vsel %vm649, %v637, 0
    %v744 = vsel %vm649, %v638, 0
    %vm746 = vcmask 1043456
    %v748 = vsel %vm746, %v645, 0
    %v751 = vsel %vm746, %v646, 0
    %v754 = vsel %vm746, %v647, 0
    %v757 = vsel %vm746, %v648, 0
    %759 = vmatprep.subr.bf16.mxu0 %v751
    %760 = vmatpush1.bf16.msra.mxu0 %v748
    %761 = vmatprep.subr.bf16.mxu0 0
    %762 = vmatpush1.bf16.msra.mxu0 0
    %763 = vmatprep.subr.bf16.mxu0 0
    %764 = vmatpush1.bf16.msra.mxu0 0
    %765 = vmatprep.subr.bf16.mxu0 0
    %766 = vmatpush1.bf16.msra.mxu0 0
    %767 = vmatprep.subr.bf16.mxu0 0
    %768 = vmatpush1.bf16.msra.mxu0 0
    %769 = vmatprep.subr.bf16.mxu0 0
    %770 = vmatpush1.bf16.msra.mxu0 0
    %771 = vmatprep.subr.bf16.mxu0 0
    %772 = vmatpush1.bf16.msra.mxu0 0
    %773 = vmatprep.subr.bf16.mxu0 0
    %774 = vmatpush1.bf16.msra.mxu0 0
    %775 = vmatprep.subr.bf16.mxu0 0
    %776 = vmatpush1.bf16.msra.mxu0 0
    %777 = vmatprep.subr.bf16.mxu0 0
    %778 = vmatpush1.bf16.msra.mxu0 0
    %779 = vmatprep.subr.bf16.mxu0 0
    %780 = vmatpush1.bf16.msra.mxu0 0
    %781 = vmatprep.subr.bf16.mxu0 0
    %782 = vmatpush1.bf16.msra.mxu0 0
    %783 = vmatprep.subr.bf16.mxu0 0
    %784 = vmatpush1.bf16.msra.mxu0 0
    %785 = vmatprep.subr.bf16.mxu0 0
    %786 = vmatpush1.bf16.msra.mxu0 0
    %787 = vmatprep.subr.bf16.mxu0 0
    %788 = vmatpush1.bf16.msra.mxu0 0
    %789 = vmatprep.subr.bf16.mxu0 0
    %790 = vmatpush1.bf16.msra.mxu0 0
    %791 = vmatprep.mubr.bf16.mxu0 0
    %792 = vmatmul.mubr.bf16.gmra.mrb[0].mxu0 %v651
    %v793 = vpop.f32.mrb[0].mxu0
    %v794 = vadd.f32 %v162, %v793
    %v795 = vpop.f32.mrb[0].mxu0
    %v796 = vadd.f32 %v162, %v795
    %v797 = vpop.f32.mrb[0].mxu0
    %v798 = vadd.f32 %v167, %v797
    %v799 = vpop.f32.mrb[0].mxu0
    %v800 = vadd.f32 %v167, %v799
    %801 = vmatprep.mubr.bf16.mxu0 0
    %802 = vmatmul.mubr.bf16.gmra.mrb[0].mxu0 %v654
    %v803 = vpop.f32.mrb[0].mxu0
    %v804 = vadd.f32 %v172, %v803
    %v805 = vpop.f32.mrb[0].mxu0
    %v806 = vadd.f32 %v172, %v805
    %v807 = vpop.f32.mrb[0].mxu0
    %v808 = vadd.f32 %v177, %v807
    %v809 = vpop.f32.mrb[0].mxu0
    %v810 = vadd.f32 %v177, %v809
    %811 = vmatprep.mubr.bf16.mxu0 0
    %812 = vmatmul.mubr.bf16.gmra.mrb[0].mxu0 %v657
    %v813 = vpop.f32.mrb[0].mxu0
    %v814 = vadd.f32 %v182, %v813
    %v815 = vpop.f32.mrb[0].mxu0
    %v816 = vadd.f32 %v182, %v815
    %v817 = vpop.f32.mrb[0].mxu0
    %v818 = vadd.f32 %v187, %v817
    %v819 = vpop.f32.mrb[0].mxu0
    %v820 = vadd.f32 %v187, %v819
    %821 = vmatprep.mubr.bf16.mxu0 0
    %822 = vmatmul.mubr.bf16.gmra.mrb[0].mxu0 %v660
    %v823 = vpop.f32.mrb[0].mxu0
    %v824 = vadd.f32 %v192, %v823
    %v825 = vpop.f32.mrb[0].mxu0
    %v826 = vadd.f32 %v192, %v825
    %v827 = vpop.f32.mrb[0].mxu0
    %v828 = vadd.f32 %v197, %v827
    %v829 = vpop.f32.mrb[0].mxu0
    %v830 = vadd.f32 %v197, %v829
    %831 = vmatprep.mubr.bf16.mxu0 0
    %832 = vmatmul.mubr.bf16.gmra.mrb[0].mxu0 %v663
    %v833 = vpop.f32.mrb[0].mxu0
    %v834 = vadd.f32 %v202, %v833
    %v835 = vpop.f32.mrb[0].mxu0
    %v836 = vadd.f32 %v202, %v835
    %v837 = vpop.f32.mrb[0].mxu0
    %v838 = vadd.f32 %v207, %v837
    %v839 = vpop.f32.mrb[0].mxu0
    %v840 = vadd.f32 %v207, %v839
    %841 = vmatprep.mubr.bf16.mxu0 0
    %842 = vmatmul.mubr.bf16.gmra.mrb[0].mxu0 %v666
    %v843 = vpop.f32.mrb[0].mxu0
    %v844 = vadd.f32 %v212, %v843
    %v845 = vpop.f32.mrb[0].mxu0
    %v846 = vadd.f32 %v212, %v845
    %v847 = vpop.f32.mrb[0].mxu0
    %v848 = vadd.f32 %v217, %v847
    %v849 = vpop.f32.mrb[0].mxu0
    %v850 = vadd.f32 %v217, %v849
    %851 = vmatprep.mubr.bf16.mxu0 0
    %852 = vmatmul.mubr.bf16.gmra.mrb[0].mxu0 %v669
    %v853 = vpop.f32.mrb[0].mxu0
    %v854 = vadd.f32 %v222, %v853
    %v855 = vpop.f32.mrb[0].mxu0
    %v856 = vadd.f32 %v222, %v855
    %v857 = vpop.f32.mrb[0].mxu0
    %v858 = vadd.f32 %v227, %v857
    %v859 = vpop.f32.mrb[0].mxu0
    %v860 = vadd.f32 %v227, %v859
    %861 = vmatprep.mubr.bf16.mxu0 0
    %862 = vmatmul.mubr.bf16.gmra.mrb[0].mxu0 %v672
    %v863 = vpop.f32.mrb[0].mxu0
    %v864 = vadd.f32 %v232, %v863
    %v865 = vpop.f32.mrb[0].mxu0
    %v866 = vadd.f32 %v232, %v865
    %v867 = vpop.f32.mrb[0].mxu0
    %v868 = vadd.f32 %v237, %v867
    %v869 = vpop.f32.mrb[0].mxu0
    %v870 = vadd.f32 %v237, %v869
    %871 = vmatprep.mubr.bf16.mxu0 0
    %872 = vmatmul.mubr.bf16.gmra.mrb[0].mxu0 %v675
    %v873 = vpop.f32.mrb[0].mxu0
    %v874 = vadd.f32 %v242, %v873
    %v875 = vpop.f32.mrb[0].mxu0
    %v876 = vadd.f32 %v242, %v875
    %v877 = vpop.f32.mrb[0].mxu0
    %v878 = vadd.f32 %v247, %v877
    %v879 = vpop.f32.mrb[0].mxu0
    %v880 = vadd.f32 %v247, %v879
    %881 = vmatprep.mubr.bf16.mxu0 0
    %882 = vmatmul.mubr.bf16.gmra.mrb[0].mxu0 %v678
    %v883 = vpop.f32.mrb[0].mxu0
    %v884 = vadd.f32 %v252, %v883
    %v885 = vpop.f32.mrb[0].mxu0
    %v886 = vadd.f32 %v252, %v885
    %v887 = vpop.f32.mrb[0].mxu0
    %v888 = vadd.f32 %v257, %v887
    %v889 = vpop.f32.mrb[0].mxu0
    %v890 = vadd.f32 %v257, %v889
    %891 = vmatprep.mubr.bf16.mxu0 0
    %892 = vmatmul.mubr.bf16.gmra.mrb[0].mxu0 %v681
    %v893 = vpop.f32.mrb[0].mxu0
    %v894 = vadd.f32 %v262, %v893
    %v895 = vpop.f32.mrb[0].mxu0
    %v896 = vadd.f32 %v262, %v895
    %v897 = vpop.f32.mrb[0].mxu0
    %v898 = vadd.f32 %v267, %v897
    %v899 = vpop.f32.mrb[0].mxu0
    %v900 = vadd.f32 %v267, %v899
    %901 = vmatprep.mubr.bf16.mxu0 0
    %902 = vmatmul.mubr.bf16.gmra.mrb[0].mxu0 %v684
    %v903 = vpop.f32.mrb[0].mxu0
    %v904 = vadd.f32 %v272, %v903
    %v905 = vpop.f32.mrb[0].mxu0
    %v906 = vadd.f32 %v272, %v905
    %v907 = vpop.f32.mrb[0].mxu0
    %v908 = vadd.f32 %v277, %v907
    %v909 = vpop.f32.mrb[0].mxu0
    %v910 = vadd.f32 %v277, %v909
    %911 = vmatprep.mubr.bf16.mxu0 0
    %912 = vmatmul.mubr.bf16.gmra.mrb[0].mxu0 %v687
    %v913 = vpop.f32.mrb[0].mxu0
    %v914 = vadd.f32 %v282, %v913
    %v915 = vpop.f32.mrb[0].mxu0
    %v916 = vadd.f32 %v282, %v915
    %v917 = vpop.f32.mrb[0].mxu0
    %v918 = vadd.f32 %v287, %v917
    %v919 = vpop.f32.mrb[0].mxu0
    %v920 = vadd.f32 %v287, %v919
    %921 = vmatprep.mubr.bf16.mxu0 0
    %922 = vmatmul.mubr.bf16.gmra.mrb[0].mxu0 %v690
    %v923 = vpop.f32.mrb[0].mxu0
    %v924 = vadd.f32 %v292, %v923
    %v925 = vpop.f32.mrb[0].mxu0
    %v926 = vadd.f32 %v292, %v925
    %v927 = vpop.f32.mrb[0].mxu0
    %v928 = vadd.f32 %v297, %v927
    %v929 = vpop.f32.mrb[0].mxu0
    %v930 = vadd.f32 %v297, %v929
    %931 = vmatprep.mubr.bf16.mxu0 0
    %932 = vmatmul.mubr.bf16.gmra.mrb[0].mxu0 %v693
    %v933 = vpop.f32.mrb[0].mxu0
    %v934 = vadd.f32 %v302, %v933
    %v935 = vpop.f32.mrb[0].mxu0
    %v936 = vadd.f32 %v302, %v935
    %v937 = vpop.f32.mrb[0].mxu0
    %v938 = vadd.f32 %v307, %v937
    %v939 = vpop.f32.mrb[0].mxu0
    %v940 = vadd.f32 %v307, %v939
    %941 = vmatprep.mubr.bf16.mxu0 0
    %942 = vmatmul.mubr.bf16.gmra.mrb[0].mxu0 %v696
    %v943 = vpop.f32.mrb[0].mxu0
    %v944 = vadd.f32 %v312, %v943
    %v945 = vpop.f32.mrb[0].mxu0
    %v946 = vadd.f32 %v312, %v945
    %v947 = vpop.f32.mrb[0].mxu0
    %v948 = vadd.f32 %v317, %v947
    %v949 = vpop.f32.mrb[0].mxu0
    %v950 = vadd.f32 %v317, %v949
    %951 = vmatprep.mubr.bf16.mxu0 0
    %952 = vmatmul.mubr.bf16.gmra.mrb[0].mxu0 %v699
    %v953 = vpop.f32.mrb[0].mxu0
    %v954 = vadd.f32 %v322, %v953
    %v955 = vpop.f32.mrb[0].mxu0
    %v956 = vadd.f32 %v322, %v955
    %v957 = vpop.f32.mrb[0].mxu0
    %v958 = vadd.f32 %v327, %v957
    %v959 = vpop.f32.mrb[0].mxu0
    %v960 = vadd.f32 %v327, %v959
    %961 = vmatprep.mubr.bf16.mxu0 0
    %962 = vmatmul.mubr.bf16.gmra.mrb[0].mxu0 %v702
    %v963 = vpop.f32.mrb[0].mxu0
    %v964 = vadd.f32 %v332, %v963
    %v965 = vpop.f32.mrb[0].mxu0
    %v966 = vadd.f32 %v332, %v965
    %v967 = vpop.f32.mrb[0].mxu0
    %v968 = vadd.f32 %v337, %v967
    %v969 = vpop.f32.mrb[0].mxu0
    %v970 = vadd.f32 %v337, %v969
    %971 = vmatprep.mubr.bf16.mxu0 0
    %972 = vmatmul.mubr.bf16.gmra.mrb[0].mxu0 %v705
    %v973 = vpop.f32.mrb[0].mxu0
    %v974 = vadd.f32 %v342, %v973
    %v975 = vpop.f32.mrb[0].mxu0
    %v976 = vadd.f32 %v342, %v975
    %v977 = vpop.f32.mrb[0].mxu0
    %v978 = vadd.f32 %v347, %v977
    %v979 = vpop.f32.mrb[0].mxu0
    %v980 = vadd.f32 %v347, %v979
    %981 = vmatprep.mubr.bf16.mxu0 0
    %982 = vmatmul.mubr.bf16.gmra.mrb[0].mxu0 %v708
    %v983 = vpop.f32.mrb[0].mxu0
    %v984 = vadd.f32 %v352, %v983
    %v985 = vpop.f32.mrb[0].mxu0
    %v986 = vadd.f32 %v352, %v985
    %v987 = vpop.f32.mrb[0].mxu0
    %v988 = vadd.f32 %v357, %v987
    %v989 = vpop.f32.mrb[0].mxu0
    %v990 = vadd.f32 %v357, %v989
    %991 = vmatprep.mubr.bf16.mxu0 0
    %992 = vmatmul.mubr.bf16.gmra.mrb[0].mxu0 %v711
    %v993 = vpop.f32.mrb[0].mxu0
    %v994 = vadd.f32 %v362, %v993
    %v995 = vpop.f32.mrb[0].mxu0
    %v996 = vadd.f32 %v362, %v995
    %v997 = vpop.f32.mrb[0].mxu0
    %v998 = vadd.f32 %v367, %v997
    %v999 = vpop.f32.mrb[0].mxu0
    %v1000 = vadd.f32 %v367, %v999
    %1001 = vmatprep.mubr.bf16.mxu0 0
    %1002 = vmatmul.mubr.bf16.gmra.mrb[0].mxu0 %v714
    %v1003 = vpop.f32.mrb[0].mxu0
    %v1004 = vadd.f32 %v372, %v1003
    %v1005 = vpop.f32.mrb[0].mxu0
    %v1006 = vadd.f32 %v372, %v1005
    %v1007 = vpop.f32.mrb[0].mxu0
    %v1008 = vadd.f32 %v377, %v1007
    %v1009 = vpop.f32.mrb[0].mxu0
    %v1010 = vadd.f32 %v377, %v1009
    %1011 = vmatprep.mubr.bf16.mxu0 0
    %1012 = vmatmul.mubr.bf16.gmra.mrb[0].mxu0 %v717
    %v1013 = vpop.f32.mrb[0].mxu0
    %v1014 = vadd.f32 %v382, %v1013
    %v1015 = vpop.f32.mrb[0].mxu0
    %v1016 = vadd.f32 %v382, %v1015
    %v1017 = vpop.f32.mrb[0].mxu0
    %v1018 = vadd.f32 %v387, %v1017
    %v1019 = vpop.f32.mrb[0].mxu0
    %v1020 = vadd.f32 %v387, %v1019
    %1021 = vmatprep.mubr.bf16.mxu0 0
    %1022 = vmatmul.mubr.bf16.gmra.mrb[0].mxu0 %v720
    %v1023 = vpop.f32.mrb[0].mxu0
    %v1024 = vadd.f32 %v392, %v1023
    %v1025 = vpop.f32.mrb[0].mxu0
    %v1026 = vadd.f32 %v392, %v1025
    %v1027 = vpop.f32.mrb[0].mxu0
    %v1028 = vadd.f32 %v397, %v1027
    %v1029 = vpop.f32.mrb[0].mxu0
    %v1030 = vadd.f32 %v397, %v1029
    %1031 = vmatprep.mubr.bf16.mxu0 0
    %1032 = vmatmul.mubr.bf16.gmra.mrb[0].mxu0 %v723
    %v1033 = vpop.f32.mrb[0].mxu0
    %v1034 = vadd.f32 %v402, %v1033
    %v1035 = vpop.f32.mrb[0].mxu0
    %v1036 = vadd.f32 %v402, %v1035
    %v1037 = vpop.f32.mrb[0].mxu0
    %v1038 = vadd.f32 %v407, %v1037
    %v1039 = vpop.f32.mrb[0].mxu0
    %v1040 = vadd.f32 %v407, %v1039
    %1041 = vmatprep.mubr.bf16.mxu0 0
    %1042 = vmatmul.mubr.bf16.gmra.mrb[0].mxu0 %v726
    %v1043 = vpop.f32.mrb[0].mxu0
    %v1044 = vadd.f32 %v412, %v1043
    %v1045 = vpop.f32.mrb[0].mxu0
    %v1046 = vadd.f32 %v412, %v1045
    %v1047 = vpop.f32.mrb[0].mxu0
    %v1048 = vadd.f32 %v417, %v1047
    %v1049 = vpop.f32.mrb[0].mxu0
    %v1050 = vadd.f32 %v417, %v1049
    %1051 = vmatprep.mubr.bf16.mxu0 0
    %1052 = vmatmul.mubr.bf16.gmra.mrb[0].mxu0 %v729
    %v1053 = vpop.f32.mrb[0].mxu0
    %v1054 = vadd.f32 %v422, %v1053
    %v1055 = vpop.f32.mrb[0].mxu0
    %v1056 = vadd.f32 %v422, %v1055
    %v1057 = vpop.f32.mrb[0].mxu0
    %v1058 = vadd.f32 %v427, %v1057
    %v1059 = vpop.f32.mrb[0].mxu0
    %v1060 = vadd.f32 %v427, %v1059
    %1061 = vmatprep.mubr.bf16.mxu0 0
    %1062 = vmatmul.mubr.bf16.gmra.mrb[0].mxu0 %v732
    %v1063 = vpop.f32.mrb[0].mxu0
    %v1064 = vadd.f32 %v432, %v1063
    %v1065 = vpop.f32.mrb[0].mxu0
    %v1066 = vadd.f32 %v432, %v1065
    %v1067 = vpop.f32.mrb[0].mxu0
    %v1068 = vadd.f32 %v437, %v1067
    %v1069 = vpop.f32.mrb[0].mxu0
    %v1070 = vadd.f32 %v437, %v1069
    %1071 = vmatprep.mubr.bf16.mxu0 0
    %1072 = vmatmul.mubr.bf16.gmra.mrb[0].mxu0 %v735
    %v1073 = vpop.f32.mrb[0].mxu0
    %v1074 = vadd.f32 %v442, %v1073
    %v1075 = vpop.f32.mrb[0].mxu0
    %v1076 = vadd.f32 %v442, %v1075
    %v1077 = vpop.f32.mrb[0].mxu0
    %v1078 = vadd.f32 %v447, %v1077
    %v1079 = vpop.f32.mrb[0].mxu0
    %v1080 = vadd.f32 %v447, %v1079
    %1081 = vmatprep.mubr.bf16.mxu0 0
    %1082 = vmatmul.mubr.bf16.gmra.mrb[0].mxu0 %v738
    %v1083 = vpop.f32.mrb[0].mxu0
    %v1084 = vadd.f32 %v452, %v1083
    %v1085 = vpop.f32.mrb[0].mxu0
    %v1086 = vadd.f32 %v452, %v1085
    %v1087 = vpop.f32.mrb[0].mxu0
    %v1088 = vadd.f32 %v457, %v1087
    %v1089 = vpop.f32.mrb[0].mxu0
    %v1090 = vadd.f32 %v457, %v1089
    %1091 = vmatprep.mubr.bf16.mxu0 0
    %1092 = vmatmul.mubr.bf16.gmra.mrb[0].mxu0 %v741
    %v1093 = vpop.f32.mrb[0].mxu0
    %v1094 = vadd.f32 %v462, %v1093
    %v1095 = vpop.f32.mrb[0].mxu0
    %v1096 = vadd.f32 %v462, %v1095
    %v1097 = vpop.f32.mrb[0].mxu0
    %v1098 = vadd.f32 %v467, %v1097
    %v1099 = vpop.f32.mrb[0].mxu0
    %v1100 = vadd.f32 %v467, %v1099
    %1101 = vmatprep.mubr.bf16.mxu0 0
    %1102 = vmatmul.mubr.bf16.gmra.mrb[0].mxu0 %v744
    %v1103 = vpop.f32.mrb[0].mxu0
    %v1104 = vadd.f32 %v472, %v1103
    %v1105 = vpop.f32.mrb[0].mxu0
    %v1106 = vadd.f32 %v472, %v1105
    %v1107 = vpop.f32.mrb[0].mxu0
    %v1108 = vadd.f32 %v477, %v1107
    %v1109 = vpop.f32.mrb[0].mxu0
    %v1110 = vadd.f32 %v477, %v1109
    %1111 = vdwg.mxu0
    %1112 = vmatprep.subr.bf16.mxu0 %v757
    %1113 = vmatpush1.bf16.msra.mxu0 %v754
    %1114 = vmatprep.subr.bf16.mxu0 0
    %1115 = vmatpush1.bf16.msra.mxu0 0
    %1116 = vmatprep.subr.bf16.mxu0 0
    %1117 = vmatpush1.bf16.msra.mxu0 0
    %1118 = vmatprep.subr.bf16.mxu0 0
    %1119 = vmatpush1.bf16.msra.mxu0 0
    %1120 = vmatprep.subr.bf16.mxu0 0
    %1121 = vmatpush1.bf16.msra.mxu0 0
    %1122 = vmatprep.subr.bf16.mxu0 0
    %1123 = vmatpush1.bf16.msra.mxu0 0
    %1124 = vmatprep.subr.bf16.mxu0 0
    %1125 = vmatpush1.bf16.msra.mxu0 0
    %1126 = vmatprep.subr.bf16.mxu0 0
    %1127 = vmatpush1.bf16.msra.mxu0 0
    %1128 = vmatprep.subr.bf16.mxu0 0
    %1129 = vmatpush1.bf16.msra.mxu0 0
    %1130 = vmatprep.subr.bf16.mxu0 0
    %1131 = vmatpush1.bf16.msra.mxu0 0
    %1132 = vmatprep.subr.bf16.mxu0 0
    %1133 = vmatpush1.bf16.msra.mxu0 0
    %1134 = vmatprep.subr.bf16.mxu0 0
    %1135 = vmatpush1.bf16.msra.mxu0 0
    %1136 = vmatprep.subr.bf16.mxu0 0
    %1137 = vmatpush1.bf16.msra.mxu0 0
    %1138 = vmatprep.subr.bf16.mxu0 0
    %1139 = vmatpush1.bf16.msra.mxu0 0
    %1140 = vmatprep.subr.bf16.mxu0 0
    %1141 = vmatpush1.bf16.msra.mxu0 0
    %1142 = vmatprep.subr.bf16.mxu0 0
    %1143 = vmatpush1.bf16.msra.mxu0 0
    %1144 = vmatprep.mubr.bf16.mxu0 0
    %1145 = vmatmul.mubr.bf16.gmra.mrb[0].mxu0 %v651
    %v1146 = vpop.f32.mrb[0].mxu0
    %v1147 = vadd.f32 %v162, %v1146
    %v1148 = vpop.f32.mrb[0].mxu0
    %v1149 = vadd.f32 %v162, %v1148
    %v1150 = vpop.f32.mrb[0].mxu0
    %v1151 = vadd.f32 %v167, %v1150
    %v1152 = vpop.f32.mrb[0].mxu0
    %v1153 = vadd.f32 %v167, %v1152
    %1154 = vmatprep.mubr.bf16.mxu0 0
    %1155 = vmatmul.mubr.bf16.gmra.mrb[0].mxu0 %v654
    %v1156 = vpop.f32.mrb[0].mxu0
    %v1157 = vadd.f32 %v172, %v1156
    %v1158 = vpop.f32.mrb[0].mxu0
    %v1159 = vadd.f32 %v172, %v1158
    %v1160 = vpop.f32.mrb[0].mxu0
    %v1161 = vadd.f32 %v177, %v1160
    %v1162 = vpop.f32.mrb[0].mxu0
    %v1163 = vadd.f32 %v177, %v1162
    %1164 = vmatprep.mubr.bf16.mxu0 0
    %1165 = vmatmul.mubr.bf16.gmra.mrb[0].mxu0 %v657
    %v1166 = vpop.f32.mrb[0].mxu0
    %v1167 = vadd.f32 %v182, %v1166
    %v1168 = vpop.f32.mrb[0].mxu0
    %v1169 = vadd.f32 %v182, %v1168
    %v1170 = vpop.f32.mrb[0].mxu0
    %v1171 = vadd.f32 %v187, %v1170
    %v1172 = vpop.f32.mrb[0].mxu0
    %v1173 = vadd.f32 %v187, %v1172
    %1174 = vmatprep.mubr.bf16.mxu0 0
    %1175 = vmatmul.mubr.bf16.gmra.mrb[0].mxu0 %v660
    %v1176 = vpop.f32.mrb[0].mxu0
    %v1177 = vadd.f32 %v192, %v1176
    %v1178 = vpop.f32.mrb[0].mxu0
    %v1179 = vadd.f32 %v192, %v1178
    %v1180 = vpop.f32.mrb[0].mxu0
    %v1181 = vadd.f32 %v197, %v1180
    %v1182 = vpop.f32.mrb[0].mxu0
    %v1183 = vadd.f32 %v197, %v1182
    %1184 = vmatprep.mubr.bf16.mxu0 0
    %1185 = vmatmul.mubr.bf16.gmra.mrb[0].mxu0 %v663
    %v1186 = vpop.f32.mrb[0].mxu0
    %v1187 = vadd.f32 %v202, %v1186
    %v1188 = vpop.f32.mrb[0].mxu0
    %v1189 = vadd.f32 %v202, %v1188
    %v1190 = vpop.f32.mrb[0].mxu0
    %v1191 = vadd.f32 %v207, %v1190
    %v1192 = vpop.f32.mrb[0].mxu0
    %v1193 = vadd.f32 %v207, %v1192
    %1194 = vmatprep.mubr.bf16.mxu0 0
    %1195 = vmatmul.mubr.bf16.gmra.mrb[0].mxu0 %v666
    %v1196 = vpop.f32.mrb[0].mxu0
    %v1197 = vadd.f32 %v212, %v1196
    %v1198 = vpop.f32.mrb[0].mxu0
    %v1199 = vadd.f32 %v212, %v1198
    %v1200 = vpop.f32.mrb[0].mxu0
    %v1201 = vadd.f32 %v217, %v1200
    %v1202 = vpop.f32.mrb[0].mxu0
    %v1203 = vadd.f32 %v217, %v1202
    %1204 = vmatprep.mubr.bf16.mxu0 0
    %1205 = vmatmul.mubr.bf16.gmra.mrb[0].mxu0 %v669
    %v1206 = vpop.f32.mrb[0].mxu0
    %v1207 = vadd.f32 %v222, %v1206
    %v1208 = vpop.f32.mrb[0].mxu0
    %v1209 = vadd.f32 %v222, %v1208
    %v1210 = vpop.f32.mrb[0].mxu0
    %v1211 = vadd.f32 %v227, %v1210
    %v1212 = vpop.f32.mrb[0].mxu0
    %v1213 = vadd.f32 %v227, %v1212
    %1214 = vmatprep.mubr.bf16.mxu0 0
    %1215 = vmatmul.mubr.bf16.gmra.mrb[0].mxu0 %v672
    %v1216 = vpop.f32.mrb[0].mxu0
    %v1217 = vadd.f32 %v232, %v1216
    %v1218 = vpop.f32.mrb[0].mxu0
    %v1219 = vadd.f32 %v232, %v1218
    %v1220 = vpop.f32.mrb[0].mxu0
    %v1221 = vadd.f32 %v237, %v1220
    %v1222 = vpop.f32.mrb[0].mxu0
    %v1223 = vadd.f32 %v237, %v1222
    %1224 = vmatprep.mubr.bf16.mxu0 0
    %1225 = vmatmul.mubr.bf16.gmra.mrb[0].mxu0 %v675
    %v1226 = vpop.f32.mrb[0].mxu0
    %v1227 = vadd.f32 %v242, %v1226
    %v1228 = vpop.f32.mrb[0].mxu0
    %v1229 = vadd.f32 %v242, %v1228
    %v1230 = vpop.f32.mrb[0].mxu0
    %v1231 = vadd.f32 %v247, %v1230
    %v1232 = vpop.f32.mrb[0].mxu0
    %v1233 = vadd.f32 %v247, %v1232
    %1234 = vmatprep.mubr.bf16.mxu0 0
    %1235 = vmatmul.mubr.bf16.gmra.mrb[0].mxu0 %v678
    %v1236 = vpop.f32.mrb[0].mxu0
    %v1237 = vadd.f32 %v252, %v1236
    %v1238 = vpop.f32.mrb[0].mxu0
    %v1239 = vadd.f32 %v252, %v1238
    %v1240 = vpop.f32.mrb[0].mxu0
    %v1241 = vadd.f32 %v257, %v1240
    %v1242 = vpop.f32.mrb[0].mxu0
    %v1243 = vadd.f32 %v257, %v1242
    %1244 = vmatprep.mubr.bf16.mxu0 0
    %1245 = vmatmul.mubr.bf16.gmra.mrb[0].mxu0 %v681
    %v1246 = vpop.f32.mrb[0].mxu0
    %v1247 = vadd.f32 %v262, %v1246
    %v1248 = vpop.f32.mrb[0].mxu0
    %v1249 = vadd.f32 %v262, %v1248
    %v1250 = vpop.f32.mrb[0].mxu0
    %v1251 = vadd.f32 %v267, %v1250
    %v1252 = vpop.f32.mrb[0].mxu0
    %v1253 = vadd.f32 %v267, %v1252
    %1254 = vmatprep.mubr.bf16.mxu0 0
    %1255 = vmatmul.mubr.bf16.gmra.mrb[0].mxu0 %v684
    %v1256 = vpop.f32.mrb[0].mxu0
    %v1257 = vadd.f32 %v272, %v1256
    %v1258 = vpop.f32.mrb[0].mxu0
    %v1259 = vadd.f32 %v272, %v1258
    %v1260 = vpop.f32.mrb[0].mxu0
    %v1261 = vadd.f32 %v277, %v1260
    %v1262 = vpop.f32.mrb[0].mxu0
    %v1263 = vadd.f32 %v277, %v1262
    %1264 = vmatprep.mubr.bf16.mxu0 0
    %1265 = vmatmul.mubr.bf16.gmra.mrb[0].mxu0 %v687
    %v1266 = vpop.f32.mrb[0].mxu0
    %v1267 = vadd.f32 %v282, %v1266
    %v1268 = vpop.f32.mrb[0].mxu0
    %v1269 = vadd.f32 %v282, %v1268
    %v1270 = vpop.f32.mrb[0].mxu0
    %v1271 = vadd.f32 %v287, %v1270
    %v1272 = vpop.f32.mrb[0].mxu0
    %v1273 = vadd.f32 %v287, %v1272
    %1274 = vmatprep.mubr.bf16.mxu0 0
    %1275 = vmatmul.mubr.bf16.gmra.mrb[0].mxu0 %v690
    %v1276 = vpop.f32.mrb[0].mxu0
    %v1277 = vadd.f32 %v292, %v1276
    %v1278 = vpop.f32.mrb[0].mxu0
    %v1279 = vadd.f32 %v292, %v1278
    %v1280 = vpop.f32.mrb[0].mxu0
    %v1281 = vadd.f32 %v297, %v1280
    %v1282 = vpop.f32.mrb[0].mxu0
    %v1283 = vadd.f32 %v297, %v1282
    %1284 = vmatprep.mubr.bf16.mxu0 0
    %1285 = vmatmul.mubr.bf16.gmra.mrb[0].mxu0 %v693
    %v1286 = vpop.f32.mrb[0].mxu0
    %v1287 = vadd.f32 %v302, %v1286
    %v1288 = vpop.f32.mrb[0].mxu0
    %v1289 = vadd.f32 %v302, %v1288
    %v1290 = vpop.f32.mrb[0].mxu0
    %v1291 = vadd.f32 %v307, %v1290
    %v1292 = vpop.f32.mrb[0].mxu0
    %v1293 = vadd.f32 %v307, %v1292
    %1294 = vmatprep.mubr.bf16.mxu0 0
    %1295 = vmatmul.mubr.bf16.gmra.mrb[0].mxu0 %v696
    %v1296 = vpop.f32.mrb[0].mxu0
    %v1297 = vadd.f32 %v312, %v1296
    %v1298 = vpop.f32.mrb[0].mxu0
    %v1299 = vadd.f32 %v312, %v1298
    %v1300 = vpop.f32.mrb[0].mxu0
    %v1301 = vadd.f32 %v317, %v1300
    %v1302 = vpop.f32.mrb[0].mxu0
    %v1303 = vadd.f32 %v317, %v1302
    %1304 = vmatprep.mubr.bf16.mxu0 0
    %1305 = vmatmul.mubr.bf16.gmra.mrb[0].mxu0 %v699
    %v1306 = vpop.f32.mrb[0].mxu0
    %v1307 = vadd.f32 %v322, %v1306
    %v1308 = vpop.f32.mrb[0].mxu0
    %v1309 = vadd.f32 %v322, %v1308
    %v1310 = vpop.f32.mrb[0].mxu0
    %v1311 = vadd.f32 %v327, %v1310
    %v1312 = vpop.f32.mrb[0].mxu0
    %v1313 = vadd.f32 %v327, %v1312
    %1314 = vmatprep.mubr.bf16.mxu0 0
    %1315 = vmatmul.mubr.bf16.gmra.mrb[0].mxu0 %v702
    %v1316 = vpop.f32.mrb[0].mxu0
    %v1317 = vadd.f32 %v332, %v1316
    %v1318 = vpop.f32.mrb[0].mxu0
    %v1319 = vadd.f32 %v332, %v1318
    %v1320 = vpop.f32.mrb[0].mxu0
    %v1321 = vadd.f32 %v337, %v1320
    %v1322 = vpop.f32.mrb[0].mxu0
    %v1323 = vadd.f32 %v337, %v1322
    %1324 = vmatprep.mubr.bf16.mxu0 0
    %1325 = vmatmul.mubr.bf16.gmra.mrb[0].mxu0 %v705
    %v1326 = vpop.f32.mrb[0].mxu0
    %v1327 = vadd.f32 %v342, %v1326
    %v1328 = vpop.f32.mrb[0].mxu0
    %v1329 = vadd.f32 %v342, %v1328
    %v1330 = vpop.f32.mrb[0].mxu0
    %v1331 = vadd.f32 %v347, %v1330
    %v1332 = vpop.f32.mrb[0].mxu0
    %v1333 = vadd.f32 %v347, %v1332
    %1334 = vmatprep.mubr.bf16.mxu0 0
    %1335 = vmatmul.mubr.bf16.gmra.mrb[0].mxu0 %v708
    %v1336 = vpop.f32.mrb[0].mxu0
    %v1337 = vadd.f32 %v352, %v1336
    %v1338 = vpop.f32.mrb[0].mxu0
    %v1339 = vadd.f32 %v352, %v1338
    %v1340 = vpop.f32.mrb[0].mxu0
    %v1341 = vadd.f32 %v357, %v1340
    %v1342 = vpop.f32.mrb[0].mxu0
    %v1343 = vadd.f32 %v357, %v1342
    %1344 = vmatprep.mubr.bf16.mxu0 0
    %1345 = vmatmul.mubr.bf16.gmra.mrb[0].mxu0 %v711
    %v1346 = vpop.f32.mrb[0].mxu0
    %v1347 = vadd.f32 %v362, %v1346
    %v1348 = vpop.f32.mrb[0].mxu0
    %v1349 = vadd.f32 %v362, %v1348
    %v1350 = vpop.f32.mrb[0].mxu0
    %v1351 = vadd.f32 %v367, %v1350
    %v1352 = vpop.f32.mrb[0].mxu0
    %v1353 = vadd.f32 %v367, %v1352
    %1354 = vmatprep.mubr.bf16.mxu0 0
    %1355 = vmatmul.mubr.bf16.gmra.mrb[0].mxu0 %v714
    %v1356 = vpop.f32.mrb[0].mxu0
    %v1357 = vadd.f32 %v372, %v1356
    %v1358 = vpop.f32.mrb[0].mxu0
    %v1359 = vadd.f32 %v372, %v1358
    %v1360 = vpop.f32.mrb[0].mxu0
    %v1361 = vadd.f32 %v377, %v1360
    %v1362 = vpop.f32.mrb[0].mxu0
    %v1363 = vadd.f32 %v377, %v1362
    %1364 = vmatprep.mubr.bf16.mxu0 0
    %1365 = vmatmul.mubr.bf16.gmra.mrb[0].mxu0 %v717
    %v1366 = vpop.f32.mrb[0].mxu0
    %v1367 = vadd.f32 %v382, %v1366
    %v1368 = vpop.f32.mrb[0].mxu0
    %v1369 = vadd.f32 %v382, %v1368
    %v1370 = vpop.f32.mrb[0].mxu0
    %v1371 = vadd.f32 %v387, %v1370
    %v1372 = vpop.f32.mrb[0].mxu0
    %v1373 = vadd.f32 %v387, %v1372
    %1374 = vmatprep.mubr.bf16.mxu0 0
    %1375 = vmatmul.mubr.bf16.gmra.mrb[0].mxu0 %v720
    %v1376 = vpop.f32.mrb[0].mxu0
    %v1377 = vadd.f32 %v392, %v1376
    %v1378 = vpop.f32.mrb[0].mxu0
    %v1379 = vadd.f32 %v392, %v1378
    %v1380 = vpop.f32.mrb[0].mxu0
    %v1381 = vadd.f32 %v397, %v1380
    %v1382 = vpop.f32.mrb[0].mxu0
    %v1383 = vadd.f32 %v397, %v1382
    %1384 = vmatprep.mubr.bf16.mxu0 0
    %1385 = vmatmul.mubr.bf16.gmra.mrb[0].mxu0 %v723
    %v1386 = vpop.f32.mrb[0].mxu0
    %v1387 = vadd.f32 %v402, %v1386
    %v1388 = vpop.f32.mrb[0].mxu0
    %v1389 = vadd.f32 %v402, %v1388
    %v1390 = vpop.f32.mrb[0].mxu0
    %v1391 = vadd.f32 %v407, %v1390
    %v1392 = vpop.f32.mrb[0].mxu0
    %v1393 = vadd.f32 %v407, %v1392
    %1394 = vmatprep.mubr.bf16.mxu0 0
    %1395 = vmatmul.mubr.bf16.gmra.mrb[0].mxu0 %v726
    %v1396 = vpop.f32.mrb[0].mxu0
    %v1397 = vadd.f32 %v412, %v1396
    %v1398 = vpop.f32.mrb[0].mxu0
    %v1399 = vadd.f32 %v412, %v1398
    %v1400 = vpop.f32.mrb[0].mxu0
    %v1401 = vadd.f32 %v417, %v1400
    %v1402 = vpop.f32.mrb[0].mxu0
    %v1403 = vadd.f32 %v417, %v1402
    %1404 = vmatprep.mubr.bf16.mxu0 0
    %1405 = vmatmul.mubr.bf16.gmra.mrb[0].mxu0 %v729
    %v1406 = vpop.f32.mrb[0].mxu0
    %v1407 = vadd.f32 %v422, %v1406
    %v1408 = vpop.f32.mrb[0].mxu0
    %v1409 = vadd.f32 %v422, %v1408
    %v1410 = vpop.f32.mrb[0].mxu0
    %v1411 = vadd.f32 %v427, %v1410
    %v1412 = vpop.f32.mrb[0].mxu0
    %v1413 = vadd.f32 %v427, %v1412
    %1414 = vmatprep.mubr.bf16.mxu0 0
    %1415 = vmatmul.mubr.bf16.gmra.mrb[0].mxu0 %v732
    %v1416 = vpop.f32.mrb[0].mxu0
    %v1417 = vadd.f32 %v432, %v1416
    %v1418 = vpop.f32.mrb[0].mxu0
    %v1419 = vadd.f32 %v432, %v1418
    %v1420 = vpop.f32.mrb[0].mxu0
    %v1421 = vadd.f32 %v437, %v1420
    %v1422 = vpop.f32.mrb[0].mxu0
    %v1423 = vadd.f32 %v437, %v1422
    %1424 = vmatprep.mubr.bf16.mxu0 0
    %1425 = vmatmul.mubr.bf16.gmra.mrb[0].mxu0 %v735
    %v1426 = vpop.f32.mrb[0].mxu0
    %v1427 = vadd.f32 %v442, %v1426
    %v1428 = vpop.f32.mrb[0].mxu0
    %v1429 = vadd.f32 %v442, %v1428
    %v1430 = vpop.f32.mrb[0].mxu0
    %v1431 = vadd.f32 %v447, %v1430
    %v1432 = vpop.f32.mrb[0].mxu0
    %v1433 = vadd.f32 %v447, %v1432
    %1434 = vmatprep.mubr.bf16.mxu0 0
    %1435 = vmatmul.mubr.bf16.gmra.mrb[0].mxu0 %v738
    %v1436 = vpop.f32.mrb[0].mxu0
    %v1437 = vadd.f32 %v452, %v1436
    %v1438 = vpop.f32.mrb[0].mxu0
    %v1439 = vadd.f32 %v452, %v1438
    %v1440 = vpop.f32.mrb[0].mxu0
    %v1441 = vadd.f32 %v457, %v1440
    %v1442 = vpop.f32.mrb[0].mxu0
    %v1443 = vadd.f32 %v457, %v1442
    %1444 = vmatprep.mubr.bf16.mxu0 0
    %1445 = vmatmul.mubr.bf16.gmra.mrb[0].mxu0 %v741
    %v1446 = vpop.f32.mrb[0].mxu0
    %v1447 = vadd.f32 %v462, %v1446
    %v1448 = vpop.f32.mrb[0].mxu0
    %v1449 = vadd.f32 %v462, %v1448
    %v1450 = vpop.f32.mrb[0].mxu0
    %v1451 = vadd.f32 %v467, %v1450
    %v1452 = vpop.f32.mrb[0].mxu0
    %v1453 = vadd.f32 %v467, %v1452
    %1454 = vmatprep.mubr.bf16.mxu0 0
    %1455 = vmatmul.mubr.bf16.gmra.mrb[0].mxu0 %v744
    %v1456 = vpop.f32.mrb[0].mxu0
    %v1457 = vadd.f32 %v472, %v1456
    %v1458 = vpop.f32.mrb[0].mxu0
    %v1459 = vadd.f32 %v472, %v1458
    %v1460 = vpop.f32.mrb[0].mxu0
    %v1461 = vadd.f32 %v477, %v1460
    %v1462 = vpop.f32.mrb[0].mxu0
    %v1463 = vadd.f32 %v477, %v1462
    %1464 = vdwg.mxu0
    %1465 = vst [vmem:[%s3] sm:$0xff] %v794
    %1466 = vst [vmem:[%s3 + $0x8] sm:$0xff] %v796
    %1467 = vst [vmem:[%s3 + $0x10] sm:$0xff] %v1147
    %1468 = vst [vmem:[%s3 + $0x18] sm:$0xff] %v1149
    %1469 = vst [vmem:[%s3 + $0x20] sm:$0xff] %v798
    %1470 = vst [vmem:[%s3 + $0x28] sm:$0xff] %v800
    %1471 = vst [vmem:[%s3 + $0x30] sm:$0xff] %v1151
    %1472 = vst [vmem:[%s3 + $0x38] sm:$0xff] %v1153
    %1473 = vst [vmem:[%s3 + $0x40] sm:$0xff] %v804
    %1474 = vst [vmem:[%s3 + $0x48] sm:$0xff] %v806
    %1475 = vst [vmem:[%s3 + $0x50] sm:$0xff] %v1157
    %1476 = vst [vmem:[%s3 + $0x58] sm:$0xff] %v1159
    %1477 = vst [vmem:[%s3 + $0x60] sm:$0xff] %v808
    %1478 = vst [vmem:[%s3 + $0x68] sm:$0xff] %v810
    %1479 = vst [vmem:[%s3 + $0x70] sm:$0xff] %v1161
    %1480 = vst [vmem:[%s3 + $0x78] sm:$0xff] %v1163
    %1481 = vst [vmem:[%s3 + $0x80] sm:$0xff] %v814
    %1482 = vst [vmem:[%s3 + $0x88] sm:$0xff] %v816
    %1483 = vst [vmem:[%s3 + $0x90] sm:$0xff] %v1167
    %1484 = vst [vmem:[%s3 + $0x98] sm:$0xff] %v1169
    %1485 = vst [vmem:[%s3 + $0xa0] sm:$0xff] %v818
    %1486 = vst [vmem:[%s3 + $0xa8] sm:$0xff] %v820
    %1487 = vst [vmem:[%s3 + $0xb0] sm:$0xff] %v1171
    %1488 = vst [vmem:[%s3 + $0xb8] sm:$0xff] %v1173
    %1489 = vst [vmem:[%s3 + $0xc0] sm:$0xff] %v824
    %1490 = vst [vmem:[%s3 + $0xc8] sm:$0xff] %v826
    %1491 = vst [vmem:[%s3 + $0xd0] sm:$0xff] %v1177
    %1492 = vst [vmem:[%s3 + $0xd8] sm:$0xff] %v1179
    %1493 = vst [vmem:[%s3 + $0xe0] sm:$0xff] %v828
    %1494 = vst [vmem:[%s3 + $0xe8] sm:$0xff] %v830
    %1495 = vst [vmem:[%s3 + $0xf0] sm:$0xff] %v1181
    %1496 = vst [vmem:[%s3 + $0xf8] sm:$0xff] %v1183
    %1497 = vst [vmem:[%s3 + $0x100] sm:$0xff] %v834
    %1498 = vst [vmem:[%s3 + $0x108] sm:$0xff] %v836
    %1499 = vst [vmem:[%s3 + $0x110] sm:$0xff] %v1187
    %1500 = vst [vmem:[%s3 + $0x118] sm:$0xff] %v1189
    %1501 = vst [vmem:[%s3 + $0x120] sm:$0xff] %v838
    %1502 = vst [vmem:[%s3 + $0x128] sm:$0xff] %v840
    %1503 = vst [vmem:[%s3 + $0x130] sm:$0xff] %v1191
    %1504 = vst [vmem:[%s3 + $0x138] sm:$0xff] %v1193
    %1505 = vst [vmem:[%s3 + $0x140] sm:$0xff] %v844
    %1506 = vst [vmem:[%s3 + $0x148] sm:$0xff] %v846
    %1507 = vst [vmem:[%s3 + $0x150] sm:$0xff] %v1197
    %1508 = vst [vmem:[%s3 + $0x158] sm:$0xff] %v1199
    %1509 = vst [vmem:[%s3 + $0x160] sm:$0xff] %v848
    %1510 = vst [vmem:[%s3 + $0x168] sm:$0xff] %v850
    %1511 = vst [vmem:[%s3 + $0x170] sm:$0xff] %v1201
    %1512 = vst [vmem:[%s3 + $0x178] sm:$0xff] %v1203
    %1513 = vst [vmem:[%s3 + $0x180] sm:$0xff] %v854
    %1514 = vst [vmem:[%s3 + $0x188] sm:$0xff] %v856
    %1515 = vst [vmem:[%s3 + $0x190] sm:$0xff] %v1207
    %1516 = vst [vmem:[%s3 + $0x198] sm:$0xff] %v1209
    %1517 = vst [vmem:[%s3 + $0x1a0] sm:$0xff] %v858
    %1518 = vst [vmem:[%s3 + $0x1a8] sm:$0xff] %v860
    %1519 = vst [vmem:[%s3 + $0x1b0] sm:$0xff] %v1211
    %1520 = vst [vmem:[%s3 + $0x1b8] sm:$0xff] %v1213
    %1521 = vst [vmem:[%s3 + $0x1c0] sm:$0xff] %v864
    %1522 = vst [vmem:[%s3 + $0x1c8] sm:$0xff] %v866
    %1523 = vst [vmem:[%s3 + $0x1d0] sm:$0xff] %v1217
    %1524 = vst [vmem:[%s3 + $0x1d8] sm:$0xff] %v1219
    %1525 = vst [vmem:[%s3 + $0x1e0] sm:$0xff] %v868
    %1526 = vst [vmem:[%s3 + $0x1e8] sm:$0xff] %v870
    %1527 = vst [vmem:[%s3 + $0x1f0] sm:$0xff] %v1221
    %1528 = vst [vmem:[%s3 + $0x1f8] sm:$0xff] %v1223
    %1529 = vst [vmem:[%s3 + $0x200] sm:$0xff] %v874
    %1530 = vst [vmem:[%s3 + $0x208] sm:$0xff] %v876
    %1531 = vst [vmem:[%s3 + $0x210] sm:$0xff] %v1227
    %1532 = vst [vmem:[%s3 + $0x218] sm:$0xff] %v1229
    %1533 = vst [vmem:[%s3 + $0x220] sm:$0xff] %v878
    %1534 = vst [vmem:[%s3 + $0x228] sm:$0xff] %v880
    %1535 = vst [vmem:[%s3 + $0x230] sm:$0xff] %v1231
    %1536 = vst [vmem:[%s3 + $0x238] sm:$0xff] %v1233
    %1537 = vst [vmem:[%s3 + $0x240] sm:$0xff] %v884
    %1538 = vst [vmem:[%s3 + $0x248] sm:$0xff] %v886
    %1539 = vst [vmem:[%s3 + $0x250] sm:$0xff] %v1237
    %1540 = vst [vmem:[%s3 + $0x258] sm:$0xff] %v1239
    %1541 = vst [vmem:[%s3 + $0x260] sm:$0xff] %v888
    %1542 = vst [vmem:[%s3 + $0x268] sm:$0xff] %v890
    %1543 = vst [vmem:[%s3 + $0x270] sm:$0xff] %v1241
    %1544 = vst [vmem:[%s3 + $0x278] sm:$0xff] %v1243
    %1545 = vst [vmem:[%s3 + $0x280] sm:$0xff] %v894
    %1546 = vst [vmem:[%s3 + $0x288] sm:$0xff] %v896
    %1547 = vst [vmem:[%s3 + $0x290] sm:$0xff] %v1247
    %1548 = vst [vmem:[%s3 + $0x298] sm:$0xff] %v1249
    %1549 = vst [vmem:[%s3 + $0x2a0] sm:$0xff] %v898
    %1550 = vst [vmem:[%s3 + $0x2a8] sm:$0xff] %v900
    %1551 = vst [vmem:[%s3 + $0x2b0] sm:$0xff] %v1251
    %1552 = vst [vmem:[%s3 + $0x2b8] sm:$0xff] %v1253
    %1553 = vst [vmem:[%s3 + $0x2c0] sm:$0xff] %v904
    %1554 = vst [vmem:[%s3 + $0x2c8] sm:$0xff] %v906
    %1555 = vst [vmem:[%s3 + $0x2d0] sm:$0xff] %v1257
    %1556 = vst [vmem:[%s3 + $0x2d8] sm:$0xff] %v1259
    %1557 = vst [vmem:[%s3 + $0x2e0] sm:$0xff] %v908
    %1558 = vst [vmem:[%s3 + $0x2e8] sm:$0xff] %v910
    %1559 = vst [vmem:[%s3 + $0x2f0] sm:$0xff] %v1261
    %1560 = vst [vmem:[%s3 + $0x2f8] sm:$0xff] %v1263
    %1561 = vst [vmem:[%s3 + $0x300] sm:$0xff] %v914
    %1562 = vst [vmem:[%s3 + $0x308] sm:$0xff] %v916
    %1563 = vst [vmem:[%s3 + $0x310] sm:$0xff] %v1267
    %1564 = vst [vmem:[%s3 + $0x318] sm:$0xff] %v1269
    %1565 = vst [vmem:[%s3 + $0x320] sm:$0xff] %v918
    %1566 = vst [vmem:[%s3 + $0x328] sm:$0xff] %v920
    %1567 = vst [vmem:[%s3 + $0x330] sm:$0xff] %v1271
    %1568 = vst [vmem:[%s3 + $0x338] sm:$0xff] %v1273
    %1569 = vst [vmem:[%s3 + $0x340] sm:$0xff] %v924
    %1570 = vst [vmem:[%s3 + $0x348] sm:$0xff] %v926
    %1571 = vst [vmem:[%s3 + $0x350] sm:$0xff] %v1277
    %1572 = vst [vmem:[%s3 + $0x358] sm:$0xff] %v1279
    %1573 = vst [vmem:[%s3 + $0x360] sm:$0xff] %v928
    %1574 = vst [vmem:[%s3 + $0x368] sm:$0xff] %v930
    %1575 = vst [vmem:[%s3 + $0x370] sm:$0xff] %v1281
    %1576 = vst [vmem:[%s3 + $0x378] sm:$0xff] %v1283
    %1577 = vst [vmem:[%s3 + $0x380] sm:$0xff] %v934
    %1578 = vst [vmem:[%s3 + $0x388] sm:$0xff] %v936
    %1579 = vst [vmem:[%s3 + $0x390] sm:$0xff] %v1287
    %1580 = vst [vmem:[%s3 + $0x398] sm:$0xff] %v1289
    %1581 = vst [vmem:[%s3 + $0x3a0] sm:$0xff] %v938
    %1582 = vst [vmem:[%s3 + $0x3a8] sm:$0xff] %v940
    %1583 = vst [vmem:[%s3 + $0x3b0] sm:$0xff] %v1291
    %1584 = vst [vmem:[%s3 + $0x3b8] sm:$0xff] %v1293
    %1585 = vst [vmem:[%s3 + $0x3c0] sm:$0xff] %v944
    %1586 = vst [vmem:[%s3 + $0x3c8] sm:$0xff] %v946
    %1587 = vst [vmem:[%s3 + $0x3d0] sm:$0xff] %v1297
    %1588 = vst [vmem:[%s3 + $0x3d8] sm:$0xff] %v1299
    %1589 = vst [vmem:[%s3 + $0x3e0] sm:$0xff] %v948
    %1590 = vst [vmem:[%s3 + $0x3e8] sm:$0xff] %v950
    %1591 = vst [vmem:[%s3 + $0x3f0] sm:$0xff] %v1301
    %1592 = vst [vmem:[%s3 + $0x3f8] sm:$0xff] %v1303
    %1593 = vst [vmem:[%s3 + $0x400] sm:$0xff] %v954
    %1594 = vst [vmem:[%s3 + $0x408] sm:$0xff] %v956
    %1595 = vst [vmem:[%s3 + $0x410] sm:$0xff] %v1307
    %1596 = vst [vmem:[%s3 + $0x418] sm:$0xff] %v1309
    %1597 = vst [vmem:[%s3 + $0x420] sm:$0xff] %v958
    %1598 = vst [vmem:[%s3 + $0x428] sm:$0xff] %v960
    %1599 = vst [vmem:[%s3 + $0x430] sm:$0xff] %v1311
    %1600 = vst [vmem:[%s3 + $0x438] sm:$0xff] %v1313
    %1601 = vst [vmem:[%s3 + $0x440] sm:$0xff] %v964
    %1602 = vst [vmem:[%s3 + $0x448] sm:$0xff] %v966
    %1603 = vst [vmem:[%s3 + $0x450] sm:$0xff] %v1317
    %1604 = vst [vmem:[%s3 + $0x458] sm:$0xff] %v1319
    %1605 = vst [vmem:[%s3 + $0x460] sm:$0xff] %v968
    %1606 = vst [vmem:[%s3 + $0x468] sm:$0xff] %v970
    %1607 = vst [vmem:[%s3 + $0x470] sm:$0xff] %v1321
    %1608 = vst [vmem:[%s3 + $0x478] sm:$0xff] %v1323
    %1609 = vst [vmem:[%s3 + $0x480] sm:$0xff] %v974
    %1610 = vst [vmem:[%s3 + $0x488] sm:$0xff] %v976
    %1611 = vst [vmem:[%s3 + $0x490] sm:$0xff] %v1327
    %1612 = vst [vmem:[%s3 + $0x498] sm:$0xff] %v1329
    %1613 = vst [vmem:[%s3 + $0x4a0] sm:$0xff] %v978
    %1614 = vst [vmem:[%s3 + $0x4a8] sm:$0xff] %v980
    %1615 = vst [vmem:[%s3 + $0x4b0] sm:$0xff] %v1331
    %1616 = vst [vmem:[%s3 + $0x4b8] sm:$0xff] %v1333
    %1617 = vst [vmem:[%s3 + $0x4c0] sm:$0xff] %v984
    %1618 = vst [vmem:[%s3 + $0x4c8] sm:$0xff] %v986
    %1619 = vst [vmem:[%s3 + $0x4d0] sm:$0xff] %v1337
    %1620 = vst [vmem:[%s3 + $0x4d8] sm:$0xff] %v1339
    %1621 = vst [vmem:[%s3 + $0x4e0] sm:$0xff] %v988
    %1622 = vst [vmem:[%s3 + $0x4e8] sm:$0xff] %v990
    %1623 = vst [vmem:[%s3 + $0x4f0] sm:$0xff] %v1341
    %1624 = vst [vmem:[%s3 + $0x4f8] sm:$0xff] %v1343
    %1625 = vst [vmem:[%s3 + $0x500] sm:$0xff] %v994
    %1626 = vst [vmem:[%s3 + $0x508] sm:$0xff] %v996
    %1627 = vst [vmem:[%s3 + $0x510] sm:$0xff] %v1347
    %1628 = vst [vmem:[%s3 + $0x518] sm:$0xff] %v1349
    %1629 = vst [vmem:[%s3 + $0x520] sm:$0xff] %v998
    %1630 = vst [vmem:[%s3 + $0x528] sm:$0xff] %v1000
    %1631 = vst [vmem:[%s3 + $0x530] sm:$0xff] %v1351
    %1632 = vst [vmem:[%s3 + $0x538] sm:$0xff] %v1353
    %1633 = vst [vmem:[%s3 + $0x540] sm:$0xff] %v1004
    %1634 = vst [vmem:[%s3 + $0x548] sm:$0xff] %v1006
    %1635 = vst [vmem:[%s3 + $0x550] sm:$0xff] %v1357
    %1636 = vst [vmem:[%s3 + $0x558] sm:$0xff] %v1359
    %1637 = vst [vmem:[%s3 + $0x560] sm:$0xff] %v1008
    %1638 = vst [vmem:[%s3 + $0x568] sm:$0xff] %v1010
    %1639 = vst [vmem:[%s3 + $0x570] sm:$0xff] %v1361
    %1640 = vst [vmem:[%s3 + $0x578] sm:$0xff] %v1363
    %1641 = vst [vmem:[%s3 + $0x580] sm:$0xff] %v1014
    %1642 = vst [vmem:[%s3 + $0x588] sm:$0xff] %v1016
    %1643 = vst [vmem:[%s3 + $0x590] sm:$0xff] %v1367
    %1644 = vst [vmem:[%s3 + $0x598] sm:$0xff] %v1369
    %1645 = vst [vmem:[%s3 + $0x5a0] sm:$0xff] %v1018
    %1646 = vst [vmem:[%s3 + $0x5a8] sm:$0xff] %v1020
    %1647 = vst [vmem:[%s3 + $0x5b0] sm:$0xff] %v1371
    %1648 = vst [vmem:[%s3 + $0x5b8] sm:$0xff] %v1373
    %1649 = vst [vmem:[%s3 + $0x5c0] sm:$0xff] %v1024
    %1650 = vst [vmem:[%s3 + $0x5c8] sm:$0xff] %v1026
    %1651 = vst [vmem:[%s3 + $0x5d0] sm:$0xff] %v1377
    %1652 = vst [vmem:[%s3 + $0x5d8] sm:$0xff] %v1379
    %1653 = vst [vmem:[%s3 + $0x5e0] sm:$0xff] %v1028
    %1654 = vst [vmem:[%s3 + $0x5e8] sm:$0xff] %v1030
    %1655 = vst [vmem:[%s3 + $0x5f0] sm:$0xff] %v1381
    %1656 = vst [vmem:[%s3 + $0x5f8] sm:$0xff] %v1383
    %1657 = vst [vmem:[%s3 + $0x600] sm:$0xff] %v1034
    %1658 = vst [vmem:[%s3 + $0x608] sm:$0xff] %v1036
    %1659 = vst [vmem:[%s3 + $0x610] sm:$0xff] %v1387
    %1660 = vst [vmem:[%s3 + $0x618] sm:$0xff] %v1389
    %1661 = vst [vmem:[%s3 + $0x620] sm:$0xff] %v1038
    %1662 = vst [vmem:[%s3 + $0x628] sm:$0xff] %v1040
    %1663 = vst [vmem:[%s3 + $0x630] sm:$0xff] %v1391
    %1664 = vst [vmem:[%s3 + $0x638] sm:$0xff] %v1393
    %1665 = vst [vmem:[%s3 + $0x640] sm:$0xff] %v1044
    %1666 = vst [vmem:[%s3 + $0x648] sm:$0xff] %v1046
    %1667 = vst [vmem:[%s3 + $0x650] sm:$0xff] %v1397
    %1668 = vst [vmem:[%s3 + $0x658] sm:$0xff] %v1399
    %1669 = vst [vmem:[%s3 + $0x660] sm:$0xff] %v1048
    %1670 = vst [vmem:[%s3 + $0x668] sm:$0xff] %v1050
    %1671 = vst [vmem:[%s3 + $0x670] sm:$0xff] %v1401
    %1672 = vst [vmem:[%s3 + $0x678] sm:$0xff] %v1403
    %1673 = vst [vmem:[%s3 + $0x680] sm:$0xff] %v1054
    %1674 = vst [vmem:[%s3 + $0x688] sm:$0xff] %v1056
    %1675 = vst [vmem:[%s3 + $0x690] sm:$0xff] %v1407
    %1676 = vst [vmem:[%s3 + $0x698] sm:$0xff] %v1409
    %1677 = vst [vmem:[%s3 + $0x6a0] sm:$0xff] %v1058
    %1678 = vst [vmem:[%s3 + $0x6a8] sm:$0xff] %v1060
    %1679 = vst [vmem:[%s3 + $0x6b0] sm:$0xff] %v1411
    %1680 = vst [vmem:[%s3 + $0x6b8] sm:$0xff] %v1413
    %1681 = vst [vmem:[%s3 + $0x6c0] sm:$0xff] %v1064
    %1682 = vst [vmem:[%s3 + $0x6c8] sm:$0xff] %v1066
    %1683 = vst [vmem:[%s3 + $0x6d0] sm:$0xff] %v1417
    %1684 = vst [vmem:[%s3 + $0x6d8] sm:$0xff] %v1419
    %1685 = vst [vmem:[%s3 + $0x6e0] sm:$0xff] %v1068
    %1686 = vst [vmem:[%s3 + $0x6e8] sm:$0xff] %v1070
    %1687 = vst [vmem:[%s3 + $0x6f0] sm:$0xff] %v1421
    %1688 = vst [vmem:[%s3 + $0x6f8] sm:$0xff] %v1423
    %1689 = vst [vmem:[%s3 + $0x700] sm:$0xff] %v1074
    %1690 = vst [vmem:[%s3 + $0x708] sm:$0xff] %v1076
    %1691 = vst [vmem:[%s3 + $0x710] sm:$0xff] %v1427
    %1692 = vst [vmem:[%s3 + $0x718] sm:$0xff] %v1429
    %1693 = vst [vmem:[%s3 + $0x720] sm:$0xff] %v1078
    %1694 = vst [vmem:[%s3 + $0x728] sm:$0xff] %v1080
    %1695 = vst [vmem:[%s3 + $0x730] sm:$0xff] %v1431
    %1696 = vst [vmem:[%s3 + $0x738] sm:$0xff] %v1433
    %1697 = vst [vmem:[%s3 + $0x740] sm:$0xff] %v1084
    %1698 = vst [vmem:[%s3 + $0x748] sm:$0xff] %v1086
    %1699 = vst [vmem:[%s3 + $0x750] sm:$0xff] %v1437
    %1700 = vst [vmem:[%s3 + $0x758] sm:$0xff] %v1439
    %1701 = vst [vmem:[%s3 + $0x760] sm:$0xff] %v1088
    %1702 = vst [vmem:[%s3 + $0x768] sm:$0xff] %v1090
    %1703 = vst [vmem:[%s3 + $0x770] sm:$0xff] %v1441
    %1704 = vst [vmem:[%s3 + $0x778] sm:$0xff] %v1443
    %1705 = vst [vmem:[%s3 + $0x780] sm:$0xff] %v1094
    %1706 = vst [vmem:[%s3 + $0x788] sm:$0xff] %v1096
    %1707 = vst [vmem:[%s3 + $0x790] sm:$0xff] %v1447
    %1708 = vst [vmem:[%s3 + $0x798] sm:$0xff] %v1449
    %1709 = vst [vmem:[%s3 + $0x7a0] sm:$0xff] %v1098
    %1710 = vst [vmem:[%s3 + $0x7a8] sm:$0xff] %v1100
    %1711 = vst [vmem:[%s3 + $0x7b0] sm:$0xff] %v1451
    %1712 = vst [vmem:[%s3 + $0x7b8] sm:$0xff] %v1453
    %1713 = vst [vmem:[%s3 + $0x7c0] sm:$0xff] %v1104
    %1714 = vst [vmem:[%s3 + $0x7c8] sm:$0xff] %v1106
    %1715 = vst [vmem:[%s3 + $0x7d0] sm:$0xff] %v1457
    %1716 = vst [vmem:[%s3 + $0x7d8] sm:$0xff] %v1459
    %1717 = vst [vmem:[%s3 + $0x7e0] sm:$0xff] %v1108
    %1718 = vst [vmem:[%s3 + $0x7e8] sm:$0xff] %v1110
    %1719 = vst [vmem:[%s3 + $0x7f0] sm:$0xff] %v1461
    %1720 = vst [vmem:[%s3 + $0x7f8] sm:$0xff] %v1463
    // Predicated region
    $region18: #{sr_projection_forward.18} parent=1 // pred_check
      _
    $region19: #{sr_projection_forward.18} parent=1 // pred_check_branch
      %1722 = sbr.rel (0) target = $region21
    $region20: #{sr_projection_forward.18} parent=1 // pred_region
      _
    $region21: #{sr_projection_forward.18} parent=1 // pred_fallthru
      _
    // Predicated region
    $region22: #{sr_projection_forward.18} parent=1 // pred_check
      _
    $region23: #{sr_projection_forward.18} parent=1 // pred_check_branch
      %1724 = sbr.rel (0) target = $region25
    $region24: #{sr_projection_forward.18} parent=1 // pred_region
      _
    $region25: #{sr_projection_forward.18} parent=1 // pred_fallthru
      _
    %1725 = vsyncpa [#allocation3], 1

// kernel: sr_projection_forward.19
$region0: #{sr_projection_forward.19}
  #allocation0 [shape = 'u32[]', space=smem, size = 0x4, offset = 0x4, fixed_abs, tag = 'smem constant byte address 0x4 - core index']
  #allocation1 [shape = 'u32[144,128]{1,0:T(1,128)}', space=vmem, size = 0x12000, scoped, tag = 'internal scratch']
  %s0 = inlined_call_operand.vmem [shape: bf16[8,72], index: 0, kind: input, shape index: {}]
  %s1 = inlined_call_operand.vmem [shape: bf16[72,8192], index: 1, kind: input, shape index: {}]
  %s2 = inlined_call_operand.vmem [shape: f32[8,1], index: 2, kind: input, shape index: {}]
  %s3 = inlined_call_operand.vmem [shape: f32[8,8192], index: 3, kind: output, shape index: {}]
  %s4 = sld [smem:[#allocation0]]
  $region68: #{sr_projection_forward.19} parent=0
    _
  %s6 = ssub.s32 1, %s4
  %s7 = scalar_select 0, %s6, %s4
  $region1: #{sr_projection_forward.19} parent=0
    #allocation2 [shape = 'u8[589824]{0}', space=vmem, size = 0x90000, scoped, tag = 'input window, operand 1']
    loop: start=0, step=1, limit=6
    $region2: #{sr_projection_forward.19} parent=1 // loop_pre_header
      _
    $region3: #{sr_projection_forward.19} parent=1 // loop_header
      %s9 = sphi 0, %s13
      %p10 = scmp.ge.s32.totalorder %s9, 6
      %s16 = sphi 0, %s28
      %s17 = sphi 0, %s24
      %s18 = sphi 0, %s16
      %s19 = sphi 0, %s17
      %s20 = sphi 0, %s18
      %s21 = sphi 0, %s19
      %s31 = sphi 0, %s33
      %s34 = sphi 0, %s31
      %s35 = sphi 0, %s34
      %s51 = sphi 0, %s35
      %s57 = sphi 0, %s59
      %s60 = sphi 0, %s57
      %s61 = sphi 0, %s60
      %s77 = sphi 0, %s61
      %s83 = sphi 0, %s85
      %s86 = sphi 0, %s83
      %s87 = sphi 0, %s86
      %s103 = sphi 0, %s87
      %s111 = sphi 0, %s113
      %s114 = sphi 0, %s111
      %s115 = sphi 0, %s114
      %s131 = sphi 0, %s115
    $region4: #{sr_projection_forward.19} parent=1 // loop_header_branch
      %12 = sbr.rel (%p10) target = $region8
    $region5: #{sr_projection_forward.19} parent=1 // loop_body
      %s14 = ssub.s32 %s9, 1
      %s15 = ssub.s32 %s9, 2
      %s22 = sadd.s32 1, %s17
      %p23 = scmp.ge.s32.totalorder %s22, 4
      %s24 = scalar_select %p23, 0, %s22
      %s25 = sadd.s32 1, %s16
      %s26 = scalar_select %p23, %s25, %s16
      %p27 = scmp.ge.s32.totalorder %s26, 1
      %s28 = scalar_select %p27, 0, %s26
      %s29 = ssub.s32 %s16, %s28
      %p30 = scmp.eq.s32.totalorder %s29, 0
      %s32 = sadd.s32 %s31, 1
      %s33 = scalar_select %p30, %s31, %s32
      %p36 = pneg %p30
      %p37 = scmp.eq.s32.totalorder %s9, 3
      %p38 = por %p36, %p37
      %p39 = scmp.ne.s32.totalorder %s31, %s34
      %p40 = scmp.eq.s32.totalorder %s9, 0
      %p41 = por %p39, %p40
      %p42 = scmp.ne.s32.totalorder %s31, %s34
      %p43 = scmp.eq.s32.totalorder %s14, 3
      %p44 = por %p42, %p43
      %p45 = scmp.ne.s32.totalorder %s34, %s35
      %p46 = scmp.eq.s32.totalorder %s14, 0
      %p47 = por %p45, %p46
      %p48 = scmp.ne.s32.totalorder %s34, %s35
      %p49 = scmp.eq.s32.totalorder %s15, 3
      %p50 = por %p48, %p49
      %p52 = scmp.ne.s32.totalorder %s35, %s51
      %p53 = scmp.eq.s32.totalorder %s15, 0
      %p54 = por %p52, %p53
      %s55 = ssub.s32 %s17, %s24
      %p56 = scmp.eq.s32.totalorder %s55, 0
      %s58 = sadd.s32 %s57, 1
      %s59 = scalar_select %p56, %s57, %s58
      %p62 = pneg %p56
      %p63 = scmp.eq.s32.totalorder %s9, 3
      %p64 = por %p62, %p63
      %p65 = scmp.ne.s32.totalorder %s57, %s60
      %p66 = scmp.eq.s32.totalorder %s9, 0
      %p67 = por %p65, %p66
      %p68 = scmp.ne.s32.totalorder %s57, %s60
      %p69 = scmp.eq.s32.totalorder %s14, 3
      %p70 = por %p68, %p69
      %p71 = scmp.ne.s32.totalorder %s60, %s61
      %p72 = scmp.eq.s32.totalorder %s14, 0
      %p73 = por %p71, %p72
      %p74 = scmp.ne.s32.totalorder %s60, %s61
      %p75 = scmp.eq.s32.totalorder %s15, 3
      %p76 = por %p74, %p75
      %p78 = scmp.ne.s32.totalorder %s61, %s77
      %p79 = scmp.eq.s32.totalorder %s15, 0
      %p80 = por %p78, %p79
      %s81 = ssub.s32 %s16, %s28
      %p82 = scmp.eq.s32.totalorder %s81, 0
      %s84 = sadd.s32 %s83, 1
      %s85 = scalar_select %p82, %s83, %s84
      %p88 = pneg %p82
      %p89 = scmp.eq.s32.totalorder %s9, 3
      %p90 = por %p88, %p89
      %p91 = scmp.ne.s32.totalorder %s83, %s86
      %p92 = scmp.eq.s32.totalorder %s9, 0
      %p93 = por %p91, %p92
      %p94 = scmp.ne.s32.totalorder %s83, %s86
      %p95 = scmp.eq.s32.totalorder %s14, 3
      %p96 = por %p94, %p95
      %p97 = scmp.ne.s32.totalorder %s86, %s87
      %p98 = scmp.eq.s32.totalorder %s14, 0
      %p99 = por %p97, %p98
      %p100 = scmp.ne.s32.totalorder %s86, %s87
      %p101 = scmp.eq.s32.totalorder %s15, 3
      %p102 = por %p100, %p101
      %p104 = scmp.ne.s32.totalorder %s87, %s103
      %p105 = scmp.eq.s32.totalorder %s15, 0
      %p106 = por %p104, %p105
      %s107 = ssub.s32 %s16, %s28
      %s108 = ssub.s32 %s17, %s24
      %s109 = sor.u32 %s107, %s108
      %p110 = scmp.eq.s32.totalorder %s109, 0
      %s112 = sadd.s32 %s111, 1
      %s113 = scalar_select %p110, %s111, %s112
      %p116 = pneg %p110
      %p117 = scmp.eq.s32.totalorder %s9, 3
      %p118 = por %p116, %p117
      %p119 = scmp.ne.s32.totalorder %s111, %s114
      %p120 = scmp.eq.s32.totalorder %s9, 0
      %p121 = por %p119, %p120
      %p122 = scmp.ne.s32.totalorder %s111, %s114
      %p123 = scmp.eq.s32.totalorder %s14, 3
      %p124 = por %p122, %p123
      %p125 = scmp.ne.s32.totalorder %s114, %s115
      %p126 = scmp.eq.s32.totalorder %s14, 0
      %p127 = por %p125, %p126
      %p128 = scmp.ne.s32.totalorder %s114, %s115
      %p129 = scmp.eq.s32.totalorder %s15, 3
      %p130 = por %p128, %p129
      %p132 = scmp.ne.s32.totalorder %s115, %s131
      %p133 = scmp.eq.s32.totalorder %s15, 0
      %p134 = por %p132, %p133
      %p135 = scmp.le.s32.totalorder 1, %s9
      %p136 = scmp.lt.s32.totalorder %s9, 5
      %p137 = pnand %p135, %p136
      %p138 = pneg %p137
      // Predicated region
      $region9: #{sr_projection_forward.19} parent=5 // pred_check
        _
      $region10: #{sr_projection_forward.19} parent=5 // pred_check_branch
        %140 = sbr.rel (%p137) target = $region12
      $region11: #{sr_projection_forward.19} parent=5 // pred_region
        %s141 = ssub.s32 %s9, 1
        // Predicated region
        $region13: #{sr_projection_forward.19} parent=11 // pred_check
          %p142 = pneg %p47
        $region14: #{sr_projection_forward.19} parent=11 // pred_check_branch
          %144 = sbr.rel (%p142) target = $region16
        $region15: #{sr_projection_forward.19} parent=11 // pred_region
          %p145 = scmp.lt.s32.totalorder %s18, 0
          %s146 = scalar_select %p145, %s18, 0
          %s147 = smul.addr %s146, 4
          %s148 = scalar_lea.vmem %s0, %s147
        $region16: #{sr_projection_forward.19} parent=11 // pred_fallthru
          _
        // Predicated region
        $region17: #{sr_projection_forward.19} parent=11 // pred_check
          %p149 = pneg %p99
        $region18: #{sr_projection_forward.19} parent=11 // pred_check_branch
          %151 = sbr.rel (%p149) target = $region20
        $region19: #{sr_projection_forward.19} parent=11 // pred_region
          %p152 = scmp.lt.s32.totalorder %s18, 0
          %s153 = scalar_select %p152, %s18, 0
          %s154 = smul.addr %s153, 8
          %s155 = scalar_lea.vmem %s2, %s154
        $region20: #{sr_projection_forward.19} parent=11 // pred_fallthru
          _
      $region12: #{sr_projection_forward.19} parent=5 // pred_fallthru
        _
      %p156 = scmp.lt.s32.totalorder %s9, 4
      // Predicated region
      $region21: #{sr_projection_forward.19} parent=5 // pred_check
        %p157 = pneg %p156
      $region22: #{sr_projection_forward.19} parent=5 // pred_check_branch
        %159 = sbr.rel (%p157) target = $region24
      $region23: #{sr_projection_forward.19} parent=5 // pred_region
        // Predicated region
        $region25: #{sr_projection_forward.19} parent=23 // pred_check
          %p160 = pneg %p67
        $region26: #{sr_projection_forward.19} parent=23 // pred_check_branch
          %162 = sbr.rel (%p160) target = $region28
        $region27: #{sr_projection_forward.19} parent=23 // pred_region
          %s163 = sand.u32 %s57, 1
          %s164 = sand.u32 %s57, 1
          %s165 = smul.addr %s164, 576
          %s166 = scalar_lea.vmem [#allocation2], %s165
          %s167 = smul.u32 16, %s17
          %s168 = smul.addr %s167, 4
          %s169 = scalar_lea.vmem %s1, %s168
          // Predicated region
          $region29: #{sr_projection_forward.19} parent=27 // pred_check
            _
          $region30: #{sr_projection_forward.19} parent=27 // pred_check_branch
            %171 = sbr.rel (0) target = $region32
          $region31: #{sr_projection_forward.19} parent=27 // pred_region
            // Predicated region
            $region33: #{sr_projection_forward.19} parent=31 // pred_check
              _
            $region34: #{sr_projection_forward.19} parent=31 // pred_check_branch
              %173 = sbr.rel (0) target = $region36
            $region35: #{sr_projection_forward.19} parent=31 // pred_region
              loop: start=0, step=1, limit=1
              $region37: #{sr_projection_forward.19} parent=35 // loop_pre_header
                _
              $region38: #{sr_projection_forward.19} parent=35 // loop_header
                %s175 = sphi 0, %s179
                %p176 = scmp.ge.s32.totalorder %s175, 1
                %s180 = sphi %s169, %s169
                %s181 = sphi %s166, %s166
              $region39: #{sr_projection_forward.19} parent=35 // loop_header_branch
                %178 = sbr.rel (%p176) target = $region43
              $region40: #{sr_projection_forward.19} parent=35 // loop_body
                %v182 = vld [vmem:[%s180] sm:$0xff]
                %183 = vst [vmem:[%s181] sm:$0xff] %v182
                %v184 = vld [vmem:[%s180 + $0x8] sm:$0xff]
                %185 = vst [vmem:[%s181 + $0x8] sm:$0xff] %v184
                %v186 = vld [vmem:[%s180 + $0x10] sm:$0xff]
                %187 = vst [vmem:[%s181 + $0x10] sm:$0xff] %v186
                %v188 = vld [vmem:[%s180 + $0x18] sm:$0xff]
                %189 = vst [vmem:[%s181 + $0x18] sm:$0xff] %v188
                %v190 = vld [vmem:[%s180 + $0x20] sm:$0xff]
                %191 = vst [vmem:[%s181 + $0x20] sm:$0xff] %v190
                %v192 = vld [vmem:[%s180 + $0x28] sm:$0xff]
                %193 = vst [vmem:[%s181 + $0x28] sm:$0xff] %v192
                %v194 = vld [vmem:[%s180 + $0x30] sm:$0xff]
                %195 = vst [vmem:[%s181 + $0x30] sm:$0xff] %v194
                %v196 = vld [vmem:[%s180 + $0x38] sm:$0xff]
                %197 = vst [vmem:[%s181 + $0x38] sm:$0xff] %v196
                %v198 = vld [vmem:[%s180 + $0x100] sm:$0xff]
                %199 = vst [vmem:[%s181 + $0x40] sm:$0xff] %v198
                %v200 = vld [vmem:[%s180 + $0x108] sm:$0xff]
                %201 = vst [vmem:[%s181 + $0x48] sm:$0xff] %v200
                %v202 = vld [vmem:[%s180 + $0x110] sm:$0xff]
                %203 = vst [vmem:[%s181 + $0x50] sm:$0xff] %v202
                %v204 = vld [vmem:[%s180 + $0x118] sm:$0xff]
                %205 = vst [vmem:[%s181 + $0x58] sm:$0xff] %v204
                %v206 = vld [vmem:[%s180 + $0x120] sm:$0xff]
                %207 = vst [vmem:[%s181 + $0x60] sm:$0xff] %v206
                %v208 = vld [vmem:[%s180 + $0x128] sm:$0xff]
                %209 = vst [vmem:[%s181 + $0x68] sm:$0xff] %v208
                %v210 = vld [vmem:[%s180 + $0x130] sm:$0xff]
                %211 = vst [vmem:[%s181 + $0x70] sm:$0xff] %v210
                %v212 = vld [vmem:[%s180 + $0x138] sm:$0xff]
                %213 = vst [vmem:[%s181 + $0x78] sm:$0xff] %v212
                %v214 = vld [vmem:[%s180 + $0x200] sm:$0xff]
                %215 = vst [vmem:[%s181 + $0x80] sm:$0xff] %v214
                %v216 = vld [vmem:[%s180 + $0x208] sm:$0xff]
                %217 = vst [vmem:[%s181 + $0x88] sm:$0xff] %v216
                %v218 = vld [vmem:[%s180 + $0x210] sm:$0xff]
                %219 = vst [vmem:[%s181 + $0x90] sm:$0xff] %v218
                %v220 = vld [vmem:[%s180 + $0x218] sm:$0xff]
                %221 = vst [vmem:[%s181 + $0x98] sm:$0xff] %v220
                %v222 = vld [vmem:[%s180 + $0x220] sm:$0xff]
                %223 = vst [vmem:[%s181 + $0xa0] sm:$0xff] %v222
                %v224 = vld [vmem:[%s180 + $0x228] sm:$0xff]
                %225 = vst [vmem:[%s181 + $0xa8] sm:$0xff] %v224
                %v226 = vld [vmem:[%s180 + $0x230] sm:$0xff]
                %227 = vst [vmem:[%s181 + $0xb0] sm:$0xff] %v226
                %v228 = vld [vmem:[%s180 + $0x238] sm:$0xff]
                %229 = vst [vmem:[%s181 + $0xb8] sm:$0xff] %v228
                %v230 = vld [vmem:[%s180 + $0x300] sm:$0xff]
                %231 = vst [vmem:[%s181 + $0xc0] sm:$0xff] %v230
                %v232 = vld [vmem:[%s180 + $0x308] sm:$0xff]
                %233 = vst [vmem:[%s181 + $0xc8] sm:$0xff] %v232
                %v234 = vld [vmem:[%s180 + $0x310] sm:$0xff]
                %235 = vst [vmem:[%s181 + $0xd0] sm:$0xff] %v234
                %v236 = vld [vmem:[%s180 + $0x318] sm:$0xff]
                %237 = vst [vmem:[%s181 + $0xd8] sm:$0xff] %v236
                %v238 = vld [vmem:[%s180 + $0x320] sm:$0xff]
                %239 = vst [vmem:[%s181 + $0xe0] sm:$0xff] %v238
                %v240 = vld [vmem:[%s180 + $0x328] sm:$0xff]
                %241 = vst [vmem:[%s181 + $0xe8] sm:$0xff] %v240
                %v242 = vld [vmem:[%s180 + $0x330] sm:$0xff]
                %243 = vst [vmem:[%s181 + $0xf0] sm:$0xff] %v242
                %v244 = vld [vmem:[%s180 + $0x338] sm:$0xff]
                %245 = vst [vmem:[%s181 + $0xf8] sm:$0xff] %v244
                %v246 = vld [vmem:[%s180 + $0x400] sm:$0xff]
                %247 = vst [vmem:[%s181 + $0x100] sm:$0xff] %v246
                %v248 = vld [vmem:[%s180 + $0x408] sm:$0xff]
                %249 = vst [vmem:[%s181 + $0x108] sm:$0xff] %v248
                %v250 = vld [vmem:[%s180 + $0x410] sm:$0xff]
                %251 = vst [vmem:[%s181 + $0x110] sm:$0xff] %v250
                %v252 = vld [vmem:[%s180 + $0x418] sm:$0xff]
                %253 = vst [vmem:[%s181 + $0x118] sm:$0xff] %v252
                %v254 = vld [vmem:[%s180 + $0x420] sm:$0xff]
                %255 = vst [vmem:[%s181 + $0x120] sm:$0xff] %v254
                %v256 = vld [vmem:[%s180 + $0x428] sm:$0xff]
                %257 = vst [vmem:[%s181 + $0x128] sm:$0xff] %v256
                %v258 = vld [vmem:[%s180 + $0x430] sm:$0xff]
                %259 = vst [vmem:[%s181 + $0x130] sm:$0xff] %v258
                %v260 = vld [vmem:[%s180 + $0x438] sm:$0xff]
                %261 = vst [vmem:[%s181 + $0x138] sm:$0xff] %v260
                %v262 = vld [vmem:[%s180 + $0x500] sm:$0xff]
                %263 = vst [vmem:[%s181 + $0x140] sm:$0xff] %v262
                %v264 = vld [vmem:[%s180 + $0x508] sm:$0xff]
                %265 = vst [vmem:[%s181 + $0x148] sm:$0xff] %v264
                %v266 = vld [vmem:[%s180 + $0x510] sm:$0xff]
                %267 = vst [vmem:[%s181 + $0x150] sm:$0xff] %v266
                %v268 = vld [vmem:[%s180 + $0x518] sm:$0xff]
                %269 = vst [vmem:[%s181 + $0x158] sm:$0xff] %v268
                %v270 = vld [vmem:[%s180 + $0x520] sm:$0xff]
                %271 = vst [vmem:[%s181 + $0x160] sm:$0xff] %v270
                %v272 = vld [vmem:[%s180 + $0x528] sm:$0xff]
                %273 = vst [vmem:[%s181 + $0x168] sm:$0xff] %v272
                %v274 = vld [vmem:[%s180 + $0x530] sm:$0xff]
                %275 = vst [vmem:[%s181 + $0x170] sm:$0xff] %v274
                %v276 = vld [vmem:[%s180 + $0x538] sm:$0xff]
                %277 = vst [vmem:[%s181 + $0x178] sm:$0xff] %v276
                %v278 = vld [vmem:[%s180 + $0x600] sm:$0xff]
                %279 = vst [vmem:[%s181 + $0x180] sm:$0xff] %v278
                %v280 = vld [vmem:[%s180 + $0x608] sm:$0xff]
                %281 = vst [vmem:[%s181 + $0x188] sm:$0xff] %v280
                %v282 = vld [vmem:[%s180 + $0x610] sm:$0xff]
                %283 = vst [vmem:[%s181 + $0x190] sm:$0xff] %v282
                %v284 = vld [vmem:[%s180 + $0x618] sm:$0xff]
                %285 = vst [vmem:[%s181 + $0x198] sm:$0xff] %v284
                %v286 = vld [vmem:[%s180 + $0x620] sm:$0xff]
                %287 = vst [vmem:[%s181 + $0x1a0] sm:$0xff] %v286
                %v288 = vld [vmem:[%s180 + $0x628] sm:$0xff]
                %289 = vst [vmem:[%s181 + $0x1a8] sm:$0xff] %v288
                %v290 = vld [vmem:[%s180 + $0x630] sm:$0xff]
                %291 = vst [vmem:[%s181 + $0x1b0] sm:$0xff] %v290
                %v292 = vld [vmem:[%s180 + $0x638] sm:$0xff]
                %293 = vst [vmem:[%s181 + $0x1b8] sm:$0xff] %v292
                %v294 = vld [vmem:[%s180 + $0x700] sm:$0xff]
                %295 = vst [vmem:[%s181 + $0x1c0] sm:$0xff] %v294
                %v296 = vld [vmem:[%s180 + $0x708] sm:$0xff]
                %297 = vst [vmem:[%s181 + $0x1c8] sm:$0xff] %v296
                %v298 = vld [vmem:[%s180 + $0x710] sm:$0xff]
                %299 = vst [vmem:[%s181 + $0x1d0] sm:$0xff] %v298
                %v300 = vld [vmem:[%s180 + $0x718] sm:$0xff]
                %301 = vst [vmem:[%s181 + $0x1d8] sm:$0xff] %v300
                %v302 = vld [vmem:[%s180 + $0x720] sm:$0xff]
                %303 = vst [vmem:[%s181 + $0x1e0] sm:$0xff] %v302
                %v304 = vld [vmem:[%s180 + $0x728] sm:$0xff]
                %305 = vst [vmem:[%s181 + $0x1e8] sm:$0xff] %v304
                %v306 = vld [vmem:[%s180 + $0x730] sm:$0xff]
                %307 = vst [vmem:[%s181 + $0x1f0] sm:$0xff] %v306
                %v308 = vld [vmem:[%s180 + $0x738] sm:$0xff]
                %309 = vst [vmem:[%s181 + $0x1f8] sm:$0xff] %v308
                %v310 = vld [vmem:[%s180 + $0x800] sm:$0xff]
                %311 = vst [vmem:[%s181 + $0x200] sm:$0xff] %v310
                %v312 = vld [vmem:[%s180 + $0x808] sm:$0xff]
                %313 = vst [vmem:[%s181 + $0x208] sm:$0xff] %v312
                %v314 = vld [vmem:[%s180 + $0x810] sm:$0xff]
                %315 = vst [vmem:[%s181 + $0x210] sm:$0xff] %v314
                %v316 = vld [vmem:[%s180 + $0x818] sm:$0xff]
                %317 = vst [vmem:[%s181 + $0x218] sm:$0xff] %v316
                %v318 = vld [vmem:[%s180 + $0x820] sm:$0xff]
                %319 = vst [vmem:[%s181 + $0x220] sm:$0xff] %v318
                %v320 = vld [vmem:[%s180 + $0x828] sm:$0xff]
                %321 = vst [vmem:[%s181 + $0x228] sm:$0xff] %v320
                %v322 = vld [vmem:[%s180 + $0x830] sm:$0xff]
                %323 = vst [vmem:[%s181 + $0x230] sm:$0xff] %v322
                %v324 = vld [vmem:[%s180 + $0x838] sm:$0xff]
                %325 = vst [vmem:[%s181 + $0x238] sm:$0xff] %v324
              $region41: #{sr_projection_forward.19} parent=35 // loop_footer
                %s179 = sadd.s32 1, %s175
              $region42: #{sr_projection_forward.19} parent=35 // loop_footer_branch
                %174 = sbr.rel target = $region38
              $region43: #{sr_projection_forward.19} parent=35 // loop_exit
                _
            $region36: #{sr_projection_forward.19} parent=31 // pred_fallthru
              _
            // Predicated region
            $region44: #{sr_projection_forward.19} parent=31 // pred_check
              _
            $region45: #{sr_projection_forward.19} parent=31 // pred_check_branch
              %327 = sbr.rel target = $region47
            $region46: #{sr_projection_forward.19} parent=31 // pred_region
              _
            $region47: #{sr_projection_forward.19} parent=31 // pred_fallthru
              _
          $region32: #{sr_projection_forward.19} parent=27 // pred_fallthru
            _
          %328 = vnop
        $region28: #{sr_projection_forward.19} parent=23 // pred_fallthru
          _
      $region24: #{sr_projection_forward.19} parent=5 // pred_fallthru
        _
      %p329 = scmp.le.s32.totalorder 1, %s9
      %p330 = scmp.lt.s32.totalorder %s9, 5
      %p331 = pnand %p329, %p330
      %p332 = pneg %p331
      // Predicated region
      $region48: #{sr_projection_forward.19} parent=5 // pred_check
        _
      $region49: #{sr_projection_forward.19} parent=5 // pred_check_branch
        %334 = sbr.rel (%p331) target = $region51
      $region50: #{sr_projection_forward.19} parent=5 // pred_region
        %s335 = ssub.s32 %s9, 1
        %s336 = sand.u32 %s60, 1
        %s337 = sand.u32 %s60, 1
        %s338 = smul.addr %s337, 576
        %s339 = scalar_lea.vmem [#allocation2], %s338
        // Predicated region
        $region52: #{sr_projection_forward.19} parent=50 // pred_check
          %p340 = pneg %p73
        $region53: #{sr_projection_forward.19} parent=50 // pred_check_branch
          %342 = sbr.rel (%p340) target = $region55
        $region54: #{sr_projection_forward.19} parent=50 // pred_region
          _
        $region55: #{sr_projection_forward.19} parent=50 // pred_fallthru
          _
        %p343 = scmp.lt.s32.totalorder %s18, 0
        %s344 = scalar_select %p343, %s18, 0
        %s345 = smul.addr %s344, 4
        %s346 = scalar_lea.vmem %s0, %s345
        %p347 = pneg %p47
        %p348 = pneg %p44
        %s349 = sand.u32 %s60, 1
        %s350 = sand.u32 %s60, 1
        %s351 = smul.addr %s350, 576
        %s352 = scalar_lea.vmem [#allocation2], %s351
        %p353 = pneg %p73
        %p354 = pneg %p70
        %p355 = scmp.lt.s32.totalorder %s18, 0
        %s356 = scalar_select %p355, %s18, 0
        %s357 = smul.addr %s356, 8
        %s358 = scalar_lea.vmem %s2, %s357
        %p359 = pneg %p99
        %p360 = pneg %p96
        %p361 = pneg %p127
        %p362 = pneg %p124
        %s363 = smul.u32 16, %s19
        %p364 = scmp.lt.s32.totalorder %s18, 0
        %s365 = scalar_select %p364, %s18, 0
        %p366 = scmp.lt.s32.totalorder %s363, 63
        %s367 = scalar_select %p366, %s363, 63
        %s368 = smul.addr %s365, 64
        %s369 = sadd.s32 %s367, %s368
        %s370 = smul.addr %s369, 8
        %s371 = scalar_lea.vmem %s3, %s370
        %p372 = scmp.lt.s32.totalorder %s18, 0
        %s373 = scalar_select %p372, %s18, 0
        %s374 = smul.addr %s373, 4
        %s375 = scalar_lea.vmem %s0, %s374
        %s376 = smul.u32 16, %s19
        %p377 = scmp.lt.s32.totalorder %s18, 0
        %s378 = scalar_select %p377, %s18, 0
        %s379 = smul.addr %s378, 8
        %s380 = scalar_lea.vmem %s2, %s379
        %s381 = smul.u32 16, %s19
        %p382 = scmp.lt.s32.totalorder %s18, 0
        %s383 = scalar_select %p382, %s18, 0
        %p384 = scmp.lt.s32.totalorder %s381, 63
        %s385 = scalar_select %p384, %s381, 63
        %s386 = smul.addr %s383, 64
        %s387 = sadd.s32 %s385, %s386
        %s388 = smul.addr %s387, 8
        %s389 = scalar_lea.vmem %s3, %s388
        %s390 = smul.u32 16, %s19
        %v392 = vld [vmem:[%s375] sm:$0xf]
        %v393 = vld [vmem:[%s339] sm:$0xff]
        %v394 = vld [vmem:[%s339 + $0x8] sm:$0xff]
        %v395 = vld [vmem:[%s339 + $0x10] sm:$0xff]
        %v396 = vld [vmem:[%s339 + $0x18] sm:$0xff]
        %v397 = vld [vmem:[%s339 + $0x20] sm:$0xff]
        %v398 = vld [vmem:[%s339 + $0x28] sm:$0xff]
        %v399 = vld [vmem:[%s339 + $0x30] sm:$0xff]
        %v400 = vld [vmem:[%s339 + $0x38] sm:$0xff]
        %v401 = vld [vmem:[%s339 + $0x40] sm:$0xff]
        %v402 = vld [vmem:[%s339 + $0x48] sm:$0xff]
        %v403 = vld [vmem:[%s339 + $0x50] sm:$0xff]
        %v404 = vld [vmem:[%s339 + $0x58] sm:$0xff]
        %v405 = vld [vmem:[%s339 + $0x60] sm:$0xff]
        %v406 = vld [vmem:[%s339 + $0x68] sm:$0xff]
        %v407 = vld [vmem:[%s339 + $0x70] sm:$0xff]
        %v408 = vld [vmem:[%s339 + $0x78] sm:$0xff]
        %v409 = vld [vmem:[%s339 + $0x80] sm:$0xff]
        %v410 = vld [vmem:[%s339 + $0x88] sm:$0xff]
        %v411 = vld [vmem:[%s339 + $0x90] sm:$0xff]
        %v412 = vld [vmem:[%s339 + $0x98] sm:$0xff]
        %v413 = vld [vmem:[%s339 + $0xa0] sm:$0xff]
        %v414 = vld [vmem:[%s339 + $0xa8] sm:$0xff]
        %v415 = vld [vmem:[%s339 + $0xb0] sm:$0xff]
        %v416 = vld [vmem:[%s339 + $0xb8] sm:$0xff]
        %v417 = vld [vmem:[%s339 + $0xc0] sm:$0xff]
        %v418 = vld [vmem:[%s339 + $0xc8] sm:$0xff]
        %v419 = vld [vmem:[%s339 + $0xd0] sm:$0xff]
        %v420 = vld [vmem:[%s339 + $0xd8] sm:$0xff]
        %v421 = vld [vmem:[%s339 + $0xe0] sm:$0xff]
        %v422 = vld [vmem:[%s339 + $0xe8] sm:$0xff]
        %v423 = vld [vmem:[%s339 + $0xf0] sm:$0xff]
        %v424 = vld [vmem:[%s339 + $0xf8] sm:$0xff]
        %v425 = vld [vmem:[%s339 + $0x100] sm:$0xff]
        %v426 = vld [vmem:[%s339 + $0x108] sm:$0xff]
        %v427 = vld [vmem:[%s339 + $0x110] sm:$0xff]
        %v428 = vld [vmem:[%s339 + $0x118] sm:$0xff]
        %v429 = vld [vmem:[%s339 + $0x120] sm:$0xff]
        %v430 = vld [vmem:[%s339 + $0x128] sm:$0xff]
        %v431 = vld [vmem:[%s339 + $0x130] sm:$0xff]
        %v432 = vld [vmem:[%s339 + $0x138] sm:$0xff]
        %v433 = vld [vmem:[%s339 + $0x140] sm:$0xff]
        %v434 = vld [vmem:[%s339 + $0x148] sm:$0xff]
        %v435 = vld [vmem:[%s339 + $0x150] sm:$0xff]
        %v436 = vld [vmem:[%s339 + $0x158] sm:$0xff]
        %v437 = vld [vmem:[%s339 + $0x160] sm:$0xff]
        %v438 = vld [vmem:[%s339 + $0x168] sm:$0xff]
        %v439 = vld [vmem:[%s339 + $0x170] sm:$0xff]
        %v440 = vld [vmem:[%s339 + $0x178] sm:$0xff]
        %v441 = vld [vmem:[%s339 + $0x180] sm:$0xff]
        %v442 = vld [vmem:[%s339 + $0x188] sm:$0xff]
        %v443 = vld [vmem:[%s339 + $0x190] sm:$0xff]
        %v444 = vld [vmem:[%s339 + $0x198] sm:$0xff]
        %v445 = vld [vmem:[%s339 + $0x1a0] sm:$0xff]
        %v446 = vld [vmem:[%s339 + $0x1a8] sm:$0xff]
        %v447 = vld [vmem:[%s339 + $0x1b0] sm:$0xff]
        %v448 = vld [vmem:[%s339 + $0x1b8] sm:$0xff]
        %v449 = vld [vmem:[%s339 + $0x1c0] sm:$0xff]
        %v450 = vld [vmem:[%s339 + $0x1c8] sm:$0xff]
        %v451 = vld [vmem:[%s339 + $0x1d0] sm:$0xff]
        %v452 = vld [vmem:[%s339 + $0x1d8] sm:$0xff]
        %v453 = vld [vmem:[%s339 + $0x1e0] sm:$0xff]
        %v454 = vld [vmem:[%s339 + $0x1e8] sm:$0xff]
        %v455 = vld [vmem:[%s339 + $0x1f0] sm:$0xff]
        %v456 = vld [vmem:[%s339 + $0x1f8] sm:$0xff]
        %v457 = vld [vmem:[%s339 + $0x200] sm:$0xff]
        %v458 = vld [vmem:[%s339 + $0x208] sm:$0xff]
        %v459 = vld [vmem:[%s339 + $0x210] sm:$0xff]
        %v460 = vld [vmem:[%s339 + $0x218] sm:$0xff]
        %v461 = vld [vmem:[%s339 + $0x220] sm:$0xff]
        %v462 = vld [vmem:[%s339 + $0x228] sm:$0xff]
        %v463 = vld [vmem:[%s339 + $0x230] sm:$0xff]
        %v464 = vld [vmem:[%s339 + $0x238] sm:$0xff]
        %v465 = vld [vmem:[%s380] sm:$0xff]
        %467 = vset.pattern.permute.xlu0 0
        %468 = vperm.xlu0 %467, %v465
        %v469 = vpop.permute.xlu0 %468
        %v543 = vunpack.c.l.b16 %v393
        %v544 = vunpack.c.h.b16 %v393
        %v545 = vunpack.c.l.b16 %v394
        %v546 = vunpack.c.h.b16 %v394
        %v547 = vunpack.c.l.b16 %v395
        %v548 = vunpack.c.h.b16 %v395
        %v549 = vunpack.c.l.b16 %v396
        %v550 = vunpack.c.h.b16 %v396
        %v551 = vunpack.c.l.b16 %v397
        %v552 = vunpack.c.h.b16 %v397
        %v553 = vunpack.c.l.b16 %v398
        %v554 = vunpack.c.h.b16 %v398
        %v555 = vunpack.c.l.b16 %v399
        %v556 = vunpack.c.h.b16 %v399
        %v557 = vunpack.c.l.b16 %v400
        %v558 = vunpack.c.h.b16 %v400
        %v559 = vunpack.c.l.b16 %v401
        %v560 = vunpack.c.h.b16 %v401
        %v561 = vunpack.c.l.b16 %v402
        %v562 = vunpack.c.h.b16 %v402
        %v563 = vunpack.c.l.b16 %v403
        %v564 = vunpack.c.h.b16 %v403
        %v565 = vunpack.c.l.b16 %v404
        %v566 = vunpack.c.h.b16 %v404
        %v567 = vunpack.c.l.b16 %v405
        %v568 = vunpack.c.h.b16 %v405
        %v569 = vunpack.c.l.b16 %v406
        %v570 = vunpack.c.h.b16 %v406
        %v571 = vunpack.c.l.b16 %v407
        %v572 = vunpack.c.h.b16 %v407
        %v573 = vunpack.c.l.b16 %v408
        %v574 = vunpack.c.h.b16 %v408
        %v575 = vunpack.c.l.b16 %v409
        %v576 = vunpack.c.h.b16 %v409
        %v577 = vunpack.c.l.b16 %v410
        %v578 = vunpack.c.h.b16 %v410
        %v579 = vunpack.c.l.b16 %v411
        %v580 = vunpack.c.h.b16 %v411
        %v581 = vunpack.c.l.b16 %v412
        %v582 = vunpack.c.h.b16 %v412
        %v583 = vunpack.c.l.b16 %v413
        %v584 = vunpack.c.h.b16 %v413
        %v585 = vunpack.c.l.b16 %v414
        %v586 = vunpack.c.h.b16 %v414
        %v587 = vunpack.c.l.b16 %v415
        %v588 = vunpack.c.h.b16 %v415
        %v589 = vunpack.c.l.b16 %v416
        %v590 = vunpack.c.h.b16 %v416
        %v591 = vunpack.c.l.b16 %v417
        %v592 = vunpack.c.h.b16 %v417
        %v593 = vunpack.c.l.b16 %v418
        %v594 = vunpack.c.h.b16 %v418
        %v595 = vunpack.c.l.b16 %v419
        %v596 = vunpack.c.h.b16 %v419
        %v597 = vunpack.c.l.b16 %v420
        %v598 = vunpack.c.h.b16 %v420
        %v599 = vunpack.c.l.b16 %v421
        %v600 = vunpack.c.h.b16 %v421
        %v601 = vunpack.c.l.b16 %v422
        %v602 = vunpack.c.h.b16 %v422
        %v603 = vunpack.c.l.b16 %v423
        %v604 = vunpack.c.h.b16 %v423
        %v605 = vunpack.c.l.b16 %v424
        %v606 = vunpack.c.h.b16 %v424
        %v607 = vunpack.c.l.b16 %v425
        %v608 = vunpack.c.h.b16 %v425
        %v609 = vunpack.c.l.b16 %v426
        %v610 = vunpack.c.h.b16 %v426
        %v611 = vunpack.c.l.b16 %v427
        %v612 = vunpack.c.h.b16 %v427
        %v613 = vunpack.c.l.b16 %v428
        %v614 = vunpack.c.h.b16 %v428
        %v615 = vunpack.c.l.b16 %v429
        %v616 = vunpack.c.h.b16 %v429
        %v617 = vunpack.c.l.b16 %v430
        %v618 = vunpack.c.h.b16 %v430
        %v619 = vunpack.c.l.b16 %v431
        %v620 = vunpack.c.h.b16 %v431
        %v621 = vunpack.c.l.b16 %v432
        %v622 = vunpack.c.h.b16 %v432
        %v623 = vunpack.c.l.b16 %v433
        %v624 = vunpack.c.h.b16 %v433
        %v625 = vunpack.c.l.b16 %v434
        %v626 = vunpack.c.h.b16 %v434
        %v627 = vunpack.c.l.b16 %v435
        %v628 = vunpack.c.h.b16 %v435
        %v629 = vunpack.c.l.b16 %v436
        %v630 = vunpack.c.h.b16 %v436
        %v631 = vunpack.c.l.b16 %v437
        %v632 = vunpack.c.h.b16 %v437
        %v633 = vunpack.c.l.b16 %v438
        %v634 = vunpack.c.h.b16 %v438
        %v635 = vunpack.c.l.b16 %v439
        %v636 = vunpack.c.h.b16 %v439
        %v637 = vunpack.c.l.b16 %v440
        %v638 = vunpack.c.h.b16 %v440
        %v639 = vunpack.c.l.b16 %v441
        %v640 = vunpack.c.h.b16 %v441
        %v641 = vunpack.c.l.b16 %v442
        %v642 = vunpack.c.h.b16 %v442
        %v643 = vunpack.c.l.b16 %v443
        %v644 = vunpack.c.h.b16 %v443
        %v645 = vunpack.c.l.b16 %v444
        %v646 = vunpack.c.h.b16 %v444
        %v647 = vunpack.c.l.b16 %v445
        %v648 = vunpack.c.h.b16 %v445
        %v649 = vunpack.c.l.b16 %v446
        %v650 = vunpack.c.h.b16 %v446
        %v651 = vunpack.c.l.b16 %v447
        %v652 = vunpack.c.h.b16 %v447
        %v653 = vunpack.c.l.b16 %v448
        %v654 = vunpack.c.h.b16 %v448
        %v655 = vunpack.c.l.b16 %v449
        %v656 = vunpack.c.h.b16 %v449
        %v657 = vunpack.c.l.b16 %v450
        %v658 = vunpack.c.h.b16 %v450
        %v659 = vunpack.c.l.b16 %v451
        %v660 = vunpack.c.h.b16 %v451
        %v661 = vunpack.c.l.b16 %v452
        %v662 = vunpack.c.h.b16 %v452
        %v663 = vunpack.c.l.b16 %v453
        %v664 = vunpack.c.h.b16 %v453
        %v665 = vunpack.c.l.b16 %v454
        %v666 = vunpack.c.h.b16 %v454
        %v667 = vunpack.c.l.b16 %v455
        %v668 = vunpack.c.h.b16 %v455
        %v669 = vunpack.c.l.b16 %v456
        %v670 = vunpack.c.h.b16 %v456
        %v671 = vunpack.c.l.b16 %v457
        %v672 = vunpack.c.h.b16 %v457
        %v673 = vunpack.c.l.b16 %v458
        %v674 = vunpack.c.h.b16 %v458
        %v675 = vunpack.c.l.b16 %v459
        %v676 = vunpack.c.h.b16 %v459
        %v677 = vunpack.c.l.b16 %v460
        %v678 = vunpack.c.h.b16 %v460
        %v679 = vunpack.c.l.b16 %v461
        %v680 = vunpack.c.h.b16 %v461
        %v681 = vunpack.c.l.b16 %v462
        %v682 = vunpack.c.h.b16 %v462
        %v683 = vunpack.c.l.b16 %v463
        %v684 = vunpack.c.h.b16 %v463
        %v685 = vunpack.c.l.b16 %v464
        %v686 = vunpack.c.h.b16 %v464
        %v687 = vpack.c.b16 %v559, %v543
        %v688 = vpack.c.b16 %v560, %v544
        %v689 = vpack.c.b16 %v561, %v545
        %v690 = vpack.c.b16 %v562, %v546
        %v691 = vpack.c.b16 %v563, %v547
        %v692 = vpack.c.b16 %v564, %v548
        %v693 = vpack.c.b16 %v565, %v549
        %v694 = vpack.c.b16 %v566, %v550
        %v695 = vpack.c.b16 %v567, %v551
        %v696 = vpack.c.b16 %v568, %v552
        %v697 = vpack.c.b16 %v569, %v553
        %v698 = vpack.c.b16 %v570, %v554
        %v699 = vpack.c.b16 %v571, %v555
        %v700 = vpack.c.b16 %v572, %v556
        %v701 = vpack.c.b16 %v573, %v557
        %v702 = vpack.c.b16 %v574, %v558
        %v703 = vpack.c.b16 %v591, %v575
        %v704 = vpack.c.b16 %v592, %v576
        %v705 = vpack.c.b16 %v593, %v577
        %v706 = vpack.c.b16 %v594, %v578
        %v707 = vpack.c.b16 %v595, %v579
        %v708 = vpack.c.b16 %v596, %v580
        %v709 = vpack.c.b16 %v597, %v581
        %v710 = vpack.c.b16 %v598, %v582
        %v711 = vpack.c.b16 %v599, %v583
        %v712 = vpack.c.b16 %v600, %v584
        %v713 = vpack.c.b16 %v601, %v585
        %v714 = vpack.c.b16 %v602, %v586
        %v715 = vpack.c.b16 %v603, %v587
        %v716 = vpack.c.b16 %v604, %v588
        %v717 = vpack.c.b16 %v605, %v589
        %v718 = vpack.c.b16 %v606, %v590
        %v719 = vpack.c.b16 %v623, %v607
        %v720 = vpack.c.b16 %v624, %v608
        %v721 = vpack.c.b16 %v625, %v609
        %v722 = vpack.c.b16 %v626, %v610
        %v723 = vpack.c.b16 %v627, %v611
        %v724 = vpack.c.b16 %v628, %v612
        %v725 = vpack.c.b16 %v629, %v613
        %v726 = vpack.c.b16 %v630, %v614
        %v727 = vpack.c.b16 %v631, %v615
        %v728 = vpack.c.b16 %v632, %v616
        %v729 = vpack.c.b16 %v633, %v617
        %v730 = vpack.c.b16 %v634, %v618
        %v731 = vpack.c.b16 %v635, %v619
        %v732 = vpack.c.b16 %v636, %v620
        %v733 = vpack.c.b16 %v637, %v621
        %v734 = vpack.c.b16 %v638, %v622
        %v735 = vpack.c.b16 %v655, %v639
        %v736 = vpack.c.b16 %v656, %v640
        %v737 = vpack.c.b16 %v657, %v641
        %v738 = vpack.c.b16 %v658, %v642
        %v739 = vpack.c.b16 %v659, %v643
        %v740 = vpack.c.b16 %v660, %v644
        %v741 = vpack.c.b16 %v661, %v645
        %v742 = vpack.c.b16 %v662, %v646
        %v743 = vpack.c.b16 %v663, %v647
        %v744 = vpack.c.b16 %v664, %v648
        %v745 = vpack.c.b16 %v665, %v649
        %v746 = vpack.c.b16 %v666, %v650
        %v747 = vpack.c.b16 %v667, %v651
        %v748 = vpack.c.b16 %v668, %v652
        %v749 = vpack.c.b16 %v669, %v653
        %v750 = vpack.c.b16 %v670, %v654
        %v751 = vpack.c.b16 %v671, %v671
        %v752 = vpack.c.b16 %v672, %v672
        %v753 = vpack.c.b16 %v673, %v673
        %v754 = vpack.c.b16 %v674, %v674
        %v755 = vpack.c.b16 %v675, %v675
        %v756 = vpack.c.b16 %v676, %v676
        %v757 = vpack.c.b16 %v677, %v677
        %v758 = vpack.c.b16 %v678, %v678
        %v759 = vpack.c.b16 %v679, %v679
        %v760 = vpack.c.b16 %v680, %v680
        %v761 = vpack.c.b16 %v681, %v681
        %v762 = vpack.c.b16 %v682, %v682
        %v763 = vpack.c.b16 %v683, %v683
        %v764 = vpack.c.b16 %v684, %v684
        %v765 = vpack.c.b16 %v685, %v685
        %v766 = vpack.c.b16 %v686, %v686
        %vm831 = vcmask 588800
        %v833 = vsel %vm831, %v392, 0
        %vm835 = vcmask 1043456
        %v837 = vsel %vm835, %v751, 0
        %v840 = vsel %vm835, %v752, 0
        %v843 = vsel %vm835, %v753, 0
        %v846 = vsel %vm835, %v754, 0
        %v849 = vsel %vm835, %v755, 0
        %v852 = vsel %vm835, %v756, 0
        %v855 = vsel %vm835, %v757, 0
        %v858 = vsel %vm835, %v758, 0
        %v861 = vsel %vm835, %v759, 0
        %v864 = vsel %vm835, %v760, 0
        %v867 = vsel %vm835, %v761, 0
        %v870 = vsel %vm835, %v762, 0
        %v873 = vsel %vm835, %v763, 0
        %v876 = vsel %vm835, %v764, 0
        %v879 = vsel %vm835, %v765, 0
        %v882 = vsel %vm835, %v766, 0
        %884 = vmatprep.subr.bf16.mxu0 %v688
        %885 = vmatpush1.bf16.msra.mxu0 %v687
        %886 = vmatprep.subr.bf16.mxu0 %v704
        %887 = vmatpush1.bf16.msra.mxu0 %v703
        %888 = vmatprep.subr.bf16.mxu0 %v720
        %889 = vmatpush1.bf16.msra.mxu0 %v719
        %890 = vmatprep.subr.bf16.mxu0 %v736
        %891 = vmatpush1.bf16.msra.mxu0 %v735
        %892 = vmatprep.subr.bf16.mxu0 %v840
        %893 = vmatpush1.bf16.msra.mxu0 %v837
        %894 = vmatprep.subr.bf16.mxu0 0
        %895 = vmatpush1.bf16.msra.mxu0 0
        %896 = vmatprep.subr.bf16.mxu0 0
        %897 = vmatpush1.bf16.msra.mxu0 0
        %898 = vmatprep.subr.bf16.mxu0 0
        %899 = vmatpush1.bf16.msra.mxu0 0
        %900 = vmatprep.subr.bf16.mxu0 0
        %901 = vmatpush1.bf16.msra.mxu0 0
        %902 = vmatprep.subr.bf16.mxu0 0
        %903 = vmatpush1.bf16.msra.mxu0 0
        %904 = vmatprep.subr.bf16.mxu0 0
        %905 = vmatpush1.bf16.msra.mxu0 0
        %906 = vmatprep.subr.bf16.mxu0 0
        %907 = vmatpush1.bf16.msra.mxu0 0
        %908 = vmatprep.subr.bf16.mxu0 0
        %909 = vmatpush1.bf16.msra.mxu0 0
        %910 = vmatprep.subr.bf16.mxu0 0
        %911 = vmatpush1.bf16.msra.mxu0 0
        %912 = vmatprep.subr.bf16.mxu0 0
        %913 = vmatpush1.bf16.msra.mxu0 0
        %914 = vmatprep.subr.bf16.mxu0 0
        %915 = vmatpush1.bf16.msra.mxu0 0
        %916 = vmatprep.mubr.bf16.mxu0 0
        %917 = vmatmul.mubr.bf16.gmra.mrb[0].mxu0 %v833
        %v918 = vpop.f32.mrb[0].mxu0
        %v919 = vadd.f32 %v469, %v918
        %v920 = vpop.f32.mrb[0].mxu0
        %v921 = vadd.f32 %v469, %v920
        %v922 = vpop.f32.mrb[0].mxu0
        %v923 = vpop.f32.mrb[0].mxu0
        %924 = vdwg.mxu0
        %925 = vmatprep.subr.bf16.mxu0 %v690
        %926 = vmatpush1.bf16.msra.mxu0 %v689
        %927 = vmatprep.subr.bf16.mxu0 %v706
        %928 = vmatpush1.bf16.msra.mxu0 %v705
        %929 = vmatprep.subr.bf16.mxu0 %v722
        %930 = vmatpush1.bf16.msra.mxu0 %v721
        %931 = vmatprep.subr.bf16.mxu0 %v738
        %932 = vmatpush1.bf16.msra.mxu0 %v737
        %933 = vmatprep.subr.bf16.mxu0 %v846
        %934 = vmatpush1.bf16.msra.mxu0 %v843
        %935 = vmatprep.subr.bf16.mxu0 0
        %936 = vmatpush1.bf16.msra.mxu0 0
        %937 = vmatprep.subr.bf16.mxu0 0
        %938 = vmatpush1.bf16.msra.mxu0 0
        %939 = vmatprep.subr.bf16.mxu0 0
        %940 = vmatpush1.bf16.msra.mxu0 0
        %941 = vmatprep.subr.bf16.mxu0 0
        %942 = vmatpush1.bf16.msra.mxu0 0
        %943 = vmatprep.subr.bf16.mxu0 0
        %944 = vmatpush1.bf16.msra.mxu0 0
        %945 = vmatprep.subr.bf16.mxu0 0
        %946 = vmatpush1.bf16.msra.mxu0 0
        %947 = vmatprep.subr.bf16.mxu0 0
        %948 = vmatpush1.bf16.msra.mxu0 0
        %949 = vmatprep.subr.bf16.mxu0 0
        %950 = vmatpush1.bf16.msra.mxu0 0
        %951 = vmatprep.subr.bf16.mxu0 0
        %952 = vmatpush1.bf16.msra.mxu0 0
        %953 = vmatprep.subr.bf16.mxu0 0
        %954 = vmatpush1.bf16.msra.mxu0 0
        %955 = vmatprep.subr.bf16.mxu0 0
        %956 = vmatpush1.bf16.msra.mxu0 0
        %957 = vmatprep.mubr.bf16.mxu0 0
        %958 = vmatmul.mubr.bf16.gmra.mrb[0].mxu0 %v833
        %v959 = vpop.f32.mrb[0].mxu0
        %v960 = vadd.f32 %v469, %v959
        %v961 = vpop.f32.mrb[0].mxu0
        %v962 = vadd.f32 %v469, %v961
        %v963 = vpop.f32.mrb[0].mxu0
        %v964 = vpop.f32.mrb[0].mxu0
        %965 = vdwg.mxu0
        %966 = vmatprep.subr.bf16.mxu0 %v692
        %967 = vmatpush1.bf16.msra.mxu0 %v691
        %968 = vmatprep.subr.bf16.mxu0 %v708
        %969 = vmatpush1.bf16.msra.mxu0 %v707
        %970 = vmatprep.subr.bf16.mxu0 %v724
        %971 = vmatpush1.bf16.msra.mxu0 %v723
        %972 = vmatprep.subr.bf16.mxu0 %v740
        %973 = vmatpush1.bf16.msra.mxu0 %v739
        %974 = vmatprep.subr.bf16.mxu0 %v852
        %975 = vmatpush1.bf16.msra.mxu0 %v849
        %976 = vmatprep.subr.bf16.mxu0 0
        %977 = vmatpush1.bf16.msra.mxu0 0
        %978 = vmatprep.subr.bf16.mxu0 0
        %979 = vmatpush1.bf16.msra.mxu0 0
        %980 = vmatprep.subr.bf16.mxu0 0
        %981 = vmatpush1.bf16.msra.mxu0 0
        %982 = vmatprep.subr.bf16.mxu0 0
        %983 = vmatpush1.bf16.msra.mxu0 0
        %984 = vmatprep.subr.bf16.mxu0 0
        %985 = vmatpush1.bf16.msra.mxu0 0
        %986 = vmatprep.subr.bf16.mxu0 0
        %987 = vmatpush1.bf16.msra.mxu0 0
        %988 = vmatprep.subr.bf16.mxu0 0
        %989 = vmatpush1.bf16.msra.mxu0 0
        %990 = vmatprep.subr.bf16.mxu0 0
        %991 = vmatpush1.bf16.msra.mxu0 0
        %992 = vmatprep.subr.bf16.mxu0 0
        %993 = vmatpush1.bf16.msra.mxu0 0
        %994 = vmatprep.subr.bf16.mxu0 0
        %995 = vmatpush1.bf16.msra.mxu0 0
        %996 = vmatprep.subr.bf16.mxu0 0
        %997 = vmatpush1.bf16.msra.mxu0 0
        %998 = vmatprep.mubr.bf16.mxu0 0
        %999 = vmatmul.mubr.bf16.gmra.mrb[0].mxu0 %v833
        %v1000 = vpop.f32.mrb[0].mxu0
        %v1001 = vadd.f32 %v469, %v1000
        %v1002 = vpop.f32.mrb[0].mxu0
        %v1003 = vadd.f32 %v469, %v1002
        %v1004 = vpop.f32.mrb[0].mxu0
        %v1005 = vpop.f32.mrb[0].mxu0
        %1006 = vdwg.mxu0
        %1007 = vmatprep.subr.bf16.mxu0 %v694
        %1008 = vmatpush1.bf16.msra.mxu0 %v693
        %1009 = vmatprep.subr.bf16.mxu0 %v710
        %1010 = vmatpush1.bf16.msra.mxu0 %v709
        %1011 = vmatprep.subr.bf16.mxu0 %v726
        %1012 = vmatpush1.bf16.msra.mxu0 %v725
        %1013 = vmatprep.subr.bf16.mxu0 %v742
        %1014 = vmatpush1.bf16.msra.mxu0 %v741
        %1015 = vmatprep.subr.bf16.mxu0 %v858
        %1016 = vmatpush1.bf16.msra.mxu0 %v855
        %1017 = vmatprep.subr.bf16.mxu0 0
        %1018 = vmatpush1.bf16.msra.mxu0 0
        %1019 = vmatprep.subr.bf16.mxu0 0
        %1020 = vmatpush1.bf16.msra.mxu0 0
        %1021 = vmatprep.subr.bf16.mxu0 0
        %1022 = vmatpush1.bf16.msra.mxu0 0
        %1023 = vmatprep.subr.bf16.mxu0 0
        %1024 = vmatpush1.bf16.msra.mxu0 0
        %1025 = vmatprep.subr.bf16.mxu0 0
        %1026 = vmatpush1.bf16.msra.mxu0 0
        %1027 = vmatprep.subr.bf16.mxu0 0
        %1028 = vmatpush1.bf16.msra.mxu0 0
        %1029 = vmatprep.subr.bf16.mxu0 0
        %1030 = vmatpush1.bf16.msra.mxu0 0
        %1031 = vmatprep.subr.bf16.mxu0 0
        %1032 = vmatpush1.bf16.msra.mxu0 0
        %1033 = vmatprep.subr.bf16.mxu0 0
        %1034 = vmatpush1.bf16.msra.mxu0 0
        %1035 = vmatprep.subr.bf16.mxu0 0
        %1036 = vmatpush1.bf16.msra.mxu0 0
        %1037 = vmatprep.subr.bf16.mxu0 0
        %1038 = vmatpush1.bf16.msra.mxu0 0
        %1039 = vmatprep.mubr.bf16.mxu0 0
        %1040 = vmatmul.mubr.bf16.gmra.mrb[0].mxu0 %v833
        %v1041 = vpop.f32.mrb[0].mxu0
        %v1042 = vadd.f32 %v469, %v1041
        %v1043 = vpop.f32.mrb[0].mxu0
        %v1044 = vadd.f32 %v469, %v1043
        %v1045 = vpop.f32.mrb[0].mxu0
        %v1046 = vpop.f32.mrb[0].mxu0
        %1047 = vdwg.mxu0
        %1048 = vmatprep.subr.bf16.mxu0 %v696
        %1049 = vmatpush1.bf16.msra.mxu0 %v695
        %1050 = vmatprep.subr.bf16.mxu0 %v712
        %1051 = vmatpush1.bf16.msra.mxu0 %v711
        %1052 = vmatprep.subr.bf16.mxu0 %v728
        %1053 = vmatpush1.bf16.msra.mxu0 %v727
        %1054 = vmatprep.subr.bf16.mxu0 %v744
        %1055 = vmatpush1.bf16.msra.mxu0 %v743
        %1056 = vmatprep.subr.bf16.mxu0 %v864
        %1057 = vmatpush1.bf16.msra.mxu0 %v861
        %1058 = vmatprep.subr.bf16.mxu0 0
        %1059 = vmatpush1.bf16.msra.mxu0 0
        %1060 = vmatprep.subr.bf16.mxu0 0
        %1061 = vmatpush1.bf16.msra.mxu0 0
        %1062 = vmatprep.subr.bf16.mxu0 0
        %1063 = vmatpush1.bf16.msra.mxu0 0
        %1064 = vmatprep.subr.bf16.mxu0 0
        %1065 = vmatpush1.bf16.msra.mxu0 0
        %1066 = vmatprep.subr.bf16.mxu0 0
        %1067 = vmatpush1.bf16.msra.mxu0 0
        %1068 = vmatprep.subr.bf16.mxu0 0
        %1069 = vmatpush1.bf16.msra.mxu0 0
        %1070 = vmatprep.subr.bf16.mxu0 0
        %1071 = vmatpush1.bf16.msra.mxu0 0
        %1072 = vmatprep.subr.bf16.mxu0 0
        %1073 = vmatpush1.bf16.msra.mxu0 0
        %1074 = vmatprep.subr.bf16.mxu0 0
        %1075 = vmatpush1.bf16.msra.mxu0 0
        %1076 = vmatprep.subr.bf16.mxu0 0
        %1077 = vmatpush1.bf16.msra.mxu0 0
        %1078 = vmatprep.subr.bf16.mxu0 0
        %1079 = vmatpush1.bf16.msra.mxu0 0
        %1080 = vmatprep.mubr.bf16.mxu0 0
        %1081 = vmatmul.mubr.bf16.gmra.mrb[0].mxu0 %v833
        %v1082 = vpop.f32.mrb[0].mxu0
        %v1083 = vadd.f32 %v469, %v1082
        %v1084 = vpop.f32.mrb[0].mxu0
        %v1085 = vadd.f32 %v469, %v1084
        %v1086 = vpop.f32.mrb[0].mxu0
        %v1087 = vpop.f32.mrb[0].mxu0
        %1088 = vdwg.mxu0
        %1089 = vmatprep.subr.bf16.mxu0 %v698
        %1090 = vmatpush1.bf16.msra.mxu0 %v697
        %1091 = vmatprep.subr.bf16.mxu0 %v714
        %1092 = vmatpush1.bf16.msra.mxu0 %v713
        %1093 = vmatprep.subr.bf16.mxu0 %v730
        %1094 = vmatpush1.bf16.msra.mxu0 %v729
        %1095 = vmatprep.subr.bf16.mxu0 %v746
        %1096 = vmatpush1.bf16.msra.mxu0 %v745
        %1097 = vmatprep.subr.bf16.mxu0 %v870
        %1098 = vmatpush1.bf16.msra.mxu0 %v867
        %1099 = vmatprep.subr.bf16.mxu0 0
        %1100 = vmatpush1.bf16.msra.mxu0 0
        %1101 = vmatprep.subr.bf16.mxu0 0
        %1102 = vmatpush1.bf16.msra.mxu0 0
        %1103 = vmatprep.subr.bf16.mxu0 0
        %1104 = vmatpush1.bf16.msra.mxu0 0
        %1105 = vmatprep.subr.bf16.mxu0 0
        %1106 = vmatpush1.bf16.msra.mxu0 0
        %1107 = vmatprep.subr.bf16.mxu0 0
        %1108 = vmatpush1.bf16.msra.mxu0 0
        %1109 = vmatprep.subr.bf16.mxu0 0
        %1110 = vmatpush1.bf16.msra.mxu0 0
        %1111 = vmatprep.subr.bf16.mxu0 0
        %1112 = vmatpush1.bf16.msra.mxu0 0
        %1113 = vmatprep.subr.bf16.mxu0 0
        %1114 = vmatpush1.bf16.msra.mxu0 0
        %1115 = vmatprep.subr.bf16.mxu0 0
        %1116 = vmatpush1.bf16.msra.mxu0 0
        %1117 = vmatprep.subr.bf16.mxu0 0
        %1118 = vmatpush1.bf16.msra.mxu0 0
        %1119 = vmatprep.subr.bf16.mxu0 0
        %1120 = vmatpush1.bf16.msra.mxu0 0
        %1121 = vmatprep.mubr.bf16.mxu0 0
        %1122 = vmatmul.mubr.bf16.gmra.mrb[0].mxu0 %v833
        %v1123 = vpop.f32.mrb[0].mxu0
        %v1124 = vadd.f32 %v469, %v1123
        %v1125 = vpop.f32.mrb[0].mxu0
        %v1126 = vadd.f32 %v469, %v1125
        %v1127 = vpop.f32.mrb[0].mxu0
        %v1128 = vpop.f32.mrb[0].mxu0
        %1129 = vdwg.mxu0
        %1130 = vmatprep.subr.bf16.mxu0 %v700
        %1131 = vmatpush1.bf16.msra.mxu0 %v699
        %1132 = vmatprep.subr.bf16.mxu0 %v716
        %1133 = vmatpush1.bf16.msra.mxu0 %v715
        %1134 = vmatprep.subr.bf16.mxu0 %v732
        %1135 = vmatpush1.bf16.msra.mxu0 %v731
        %1136 = vmatprep.subr.bf16.mxu0 %v748
        %1137 = vmatpush1.bf16.msra.mxu0 %v747
        %1138 = vmatprep.subr.bf16.mxu0 %v876
        %1139 = vmatpush1.bf16.msra.mxu0 %v873
        %1140 = vmatprep.subr.bf16.mxu0 0
        %1141 = vmatpush1.bf16.msra.mxu0 0
        %1142 = vmatprep.subr.bf16.mxu0 0
        %1143 = vmatpush1.bf16.msra.mxu0 0
        %1144 = vmatprep.subr.bf16.mxu0 0
        %1145 = vmatpush1.bf16.msra.mxu0 0
        %1146 = vmatprep.subr.bf16.mxu0 0
        %1147 = vmatpush1.bf16.msra.mxu0 0
        %1148 = vmatprep.subr.bf16.mxu0 0
        %1149 = vmatpush1.bf16.msra.mxu0 0
        %1150 = vmatprep.subr.bf16.mxu0 0
        %1151 = vmatpush1.bf16.msra.mxu0 0
        %1152 = vmatprep.subr.bf16.mxu0 0
        %1153 = vmatpush1.bf16.msra.mxu0 0
        %1154 = vmatprep.subr.bf16.mxu0 0
        %1155 = vmatpush1.bf16.msra.mxu0 0
        %1156 = vmatprep.subr.bf16.mxu0 0
        %1157 = vmatpush1.bf16.msra.mxu0 0
        %1158 = vmatprep.subr.bf16.mxu0 0
        %1159 = vmatpush1.bf16.msra.mxu0 0
        %1160 = vmatprep.subr.bf16.mxu0 0
        %1161 = vmatpush1.bf16.msra.mxu0 0
        %1162 = vmatprep.mubr.bf16.mxu0 0
        %1163 = vmatmul.mubr.bf16.gmra.mrb[0].mxu0 %v833
        %v1164 = vpop.f32.mrb[0].mxu0
        %v1165 = vadd.f32 %v469, %v1164
        %v1166 = vpop.f32.mrb[0].mxu0
        %v1167 = vadd.f32 %v469, %v1166
        %v1168 = vpop.f32.mrb[0].mxu0
        %v1169 = vpop.f32.mrb[0].mxu0
        %1170 = vdwg.mxu0
        %1171 = vmatprep.subr.bf16.mxu0 %v702
        %1172 = vmatpush1.bf16.msra.mxu0 %v701
        %1173 = vmatprep.subr.bf16.mxu0 %v718
        %1174 = vmatpush1.bf16.msra.mxu0 %v717
        %1175 = vmatprep.subr.bf16.mxu0 %v734
        %1176 = vmatpush1.bf16.msra.mxu0 %v733
        %1177 = vmatprep.subr.bf16.mxu0 %v750
        %1178 = vmatpush1.bf16.msra.mxu0 %v749
        %1179 = vmatprep.subr.bf16.mxu0 %v882
        %1180 = vmatpush1.bf16.msra.mxu0 %v879
        %1181 = vmatprep.subr.bf16.mxu0 0
        %1182 = vmatpush1.bf16.msra.mxu0 0
        %1183 = vmatprep.subr.bf16.mxu0 0
        %1184 = vmatpush1.bf16.msra.mxu0 0
        %1185 = vmatprep.subr.bf16.mxu0 0
        %1186 = vmatpush1.bf16.msra.mxu0 0
        %1187 = vmatprep.subr.bf16.mxu0 0
        %1188 = vmatpush1.bf16.msra.mxu0 0
        %1189 = vmatprep.subr.bf16.mxu0 0
        %1190 = vmatpush1.bf16.msra.mxu0 0
        %1191 = vmatprep.subr.bf16.mxu0 0
        %1192 = vmatpush1.bf16.msra.mxu0 0
        %1193 = vmatprep.subr.bf16.mxu0 0
        %1194 = vmatpush1.bf16.msra.mxu0 0
        %1195 = vmatprep.subr.bf16.mxu0 0
        %1196 = vmatpush1.bf16.msra.mxu0 0
        %1197 = vmatprep.subr.bf16.mxu0 0
        %1198 = vmatpush1.bf16.msra.mxu0 0
        %1199 = vmatprep.subr.bf16.mxu0 0
        %1200 = vmatpush1.bf16.msra.mxu0 0
        %1201 = vmatprep.subr.bf16.mxu0 0
        %1202 = vmatpush1.bf16.msra.mxu0 0
        %1203 = vmatprep.mubr.bf16.mxu0 0
        %1204 = vmatmul.mubr.bf16.gmra.mrb[0].mxu0 %v833
        %v1205 = vpop.f32.mrb[0].mxu0
        %v1206 = vadd.f32 %v469, %v1205
        %v1207 = vpop.f32.mrb[0].mxu0
        %v1208 = vadd.f32 %v469, %v1207
        %v1209 = vpop.f32.mrb[0].mxu0
        %v1210 = vpop.f32.mrb[0].mxu0
        %1211 = vdwg.mxu0
        %1212 = vst [vmem:[%s389] sm:$0xff] %v919
        %1213 = vst [vmem:[%s389 + $0x8] sm:$0xff] %v921
        %1214 = vst [vmem:[%s389 + $0x10] sm:$0xff] %v960
        %1215 = vst [vmem:[%s389 + $0x18] sm:$0xff] %v962
        %1216 = vst [vmem:[%s389 + $0x20] sm:$0xff] %v1001
        %1217 = vst [vmem:[%s389 + $0x28] sm:$0xff] %v1003
        %1218 = vst [vmem:[%s389 + $0x30] sm:$0xff] %v1042
        %1219 = vst [vmem:[%s389 + $0x38] sm:$0xff] %v1044
        %1220 = vst [vmem:[%s389 + $0x40] sm:$0xff] %v1083
        %1221 = vst [vmem:[%s389 + $0x48] sm:$0xff] %v1085
        %1222 = vst [vmem:[%s389 + $0x50] sm:$0xff] %v1124
        %1223 = vst [vmem:[%s389 + $0x58] sm:$0xff] %v1126
        %1224 = vst [vmem:[%s389 + $0x60] sm:$0xff] %v1165
        %1225 = vst [vmem:[%s389 + $0x68] sm:$0xff] %v1167
        %1226 = vst [vmem:[%s389 + $0x70] sm:$0xff] %v1206
        %1227 = vst [vmem:[%s389 + $0x78] sm:$0xff] %v1208
        %s1228 = smul.u32 16, %s19
        %p1229 = scmp.lt.s32.totalorder %s18, 0
        %s1230 = scalar_select %p1229, %s18, 0
        %p1231 = scmp.lt.s32.totalorder %s1228, 63
        %s1232 = scalar_select %p1231, %s1228, 63
        %s1233 = smul.addr %s1230, 64
        %s1234 = sadd.s32 %s1232, %s1233
        %s1235 = smul.addr %s1234, 8
        %s1236 = scalar_lea.vmem %s3, %s1235
        // Predicated region
        $region56: #{sr_projection_forward.19} parent=50 // pred_check
          %p1237 = pneg %p124
        $region57: #{sr_projection_forward.19} parent=50 // pred_check_branch
          %1239 = sbr.rel (%p1237) target = $region59
        $region58: #{sr_projection_forward.19} parent=50 // pred_region
          %s1240 = smul.u32 16, %s19
        $region59: #{sr_projection_forward.19} parent=50 // pred_fallthru
          _
      $region51: #{sr_projection_forward.19} parent=5 // pred_fallthru
        _
      %p1241 = scmp.le.s32.totalorder 2, %s9
      // Predicated region
      $region60: #{sr_projection_forward.19} parent=5 // pred_check
        %p1242 = pneg %p1241
      $region61: #{sr_projection_forward.19} parent=5 // pred_check_branch
        %1244 = sbr.rel (%p1242) target = $region63
      $region62: #{sr_projection_forward.19} parent=5 // pred_region
        %s1245 = ssub.s32 %s9, 2
        // Predicated region
        $region64: #{sr_projection_forward.19} parent=62 // pred_check
          %p1246 = pneg %p130
        $region65: #{sr_projection_forward.19} parent=62 // pred_check_branch
          %1248 = sbr.rel (%p1246) target = $region67
        $region66: #{sr_projection_forward.19} parent=62 // pred_region
          %s1249 = smul.u32 16, %s21
          %p1250 = scmp.lt.s32.totalorder %s20, 0
          %s1251 = scalar_select %p1250, %s20, 0
          %p1252 = scmp.lt.s32.totalorder %s1249, 63
          %s1253 = scalar_select %p1252, %s1249, 63
          %s1254 = smul.addr %s1251, 64
          %s1255 = sadd.s32 %s1253, %s1254
          %s1256 = smul.addr %s1255, 8
          %s1257 = scalar_lea.vmem %s3, %s1256
        $region67: #{sr_projection_forward.19} parent=62 // pred_fallthru
          _
      $region63: #{sr_projection_forward.19} parent=5 // pred_fallthru
        _
    $region6: #{sr_projection_forward.19} parent=1 // loop_footer
      %s13 = sadd.s32 1, %s9
    $region7: #{sr_projection_forward.19} parent=1 // loop_footer_branch
      %8 = sbr.rel target = $region3
    $region8: #{sr_projection_forward.19} parent=1 // loop_exit
      _

// kernel: sr_projection_forward.11
$region0: #{sr_projection_forward.11}
  #allocation0 [shape = 'u32[]', space=smem, size = 0x4, offset = 0x4, fixed_abs, tag = 'smem constant byte address 0x4 - core index']
  #allocation1 [shape = 'u32[144,128]{1,0:T(1,128)}', space=vmem, size = 0x12000, scoped, tag = 'internal scratch']
  %s0 = inlined_call_operand.vmem [shape: bf16[192,8], index: 0, kind: input, shape index: {}]
  %s1 = inlined_call_operand.vmem [shape: bf16[8,32], index: 1, kind: input, shape index: {}]
  %s2 = inlined_call_operand.vmem [shape: f32[192,1], index: 2, kind: input, shape index: {}]
  %s3 = inlined_call_operand.vmem [shape: f32[192,32], index: 3, kind: output, shape index: {}]
  %s4 = sld [smem:[#allocation0]]
  $region22: #{sr_projection_forward.11} parent=0
    _
  %s6 = ssub.s32 1, %s4
  %s7 = scalar_select 0, %s6, %s4
  // Predicated region
  $region2: #{sr_projection_forward.11} parent=0 // pred_check
    _
  $region3: #{sr_projection_forward.11} parent=0 // pred_check_branch
    %9 = sbr.rel (0) target = $region5
  $region4: #{sr_projection_forward.11} parent=0 // pred_region
    _
  $region5: #{sr_projection_forward.11} parent=0 // pred_fallthru
    _
  // Predicated region
  $region6: #{sr_projection_forward.11} parent=0 // pred_check
    _
  $region7: #{sr_projection_forward.11} parent=0 // pred_check_branch
    %11 = sbr.rel (0) target = $region9
  $region8: #{sr_projection_forward.11} parent=0 // pred_region
    _
  $region9: #{sr_projection_forward.11} parent=0 // pred_fallthru
    _
  // Predicated region
  $region10: #{sr_projection_forward.11} parent=0 // pred_check
    _
  $region11: #{sr_projection_forward.11} parent=0 // pred_check_branch
    %13 = sbr.rel (0) target = $region13
  $region12: #{sr_projection_forward.11} parent=0 // pred_region
    _
  $region13: #{sr_projection_forward.11} parent=0 // pred_fallthru
    _
  %v15 = vld [vmem:[%s0] sm:$0xf]
  %v16 = vld [vmem:[%s0 + $0x4] sm:$0xf]
  %v17 = vld [vmem:[%s0 + $0x8] sm:$0xf]
  %v18 = vld [vmem:[%s0 + $0xc] sm:$0xf]
  %v19 = vld [vmem:[%s0 + $0x10] sm:$0xf]
  %v20 = vld [vmem:[%s0 + $0x14] sm:$0xf]
  %v21 = vld [vmem:[%s0 + $0x18] sm:$0xf]
  %v22 = vld [vmem:[%s0 + $0x1c] sm:$0xf]
  %v23 = vld [vmem:[%s0 + $0x20] sm:$0xf]
  %v24 = vld [vmem:[%s0 + $0x24] sm:$0xf]
  %v25 = vld [vmem:[%s0 + $0x28] sm:$0xf]
  %v26 = vld [vmem:[%s0 + $0x2c] sm:$0xf]
  %v27 = vld [vmem:[%s0 + $0x30] sm:$0xf]
  %v28 = vld [vmem:[%s0 + $0x34] sm:$0xf]
  %v29 = vld [vmem:[%s0 + $0x38] sm:$0xf]
  %v30 = vld [vmem:[%s0 + $0x3c] sm:$0xf]
  %v31 = vld [vmem:[%s0 + $0x40] sm:$0xf]
  %v32 = vld [vmem:[%s0 + $0x44] sm:$0xf]
  %v33 = vld [vmem:[%s0 + $0x48] sm:$0xf]
  %v34 = vld [vmem:[%s0 + $0x4c] sm:$0xf]
  %v35 = vld [vmem:[%s0 + $0x50] sm:$0xf]
  %v36 = vld [vmem:[%s0 + $0x54] sm:$0xf]
  %v37 = vld [vmem:[%s0 + $0x58] sm:$0xf]
  %v38 = vld [vmem:[%s0 + $0x5c] sm:$0xf]
  %v39 = vld [vmem:[%s1] sm:$0xf]
  %v40 = vld [vmem:[%s2] sm:$0xff]
  %v41 = vld [vmem:[%s2 + $0x8] sm:$0xff]
  %v42 = vld [vmem:[%s2 + $0x10] sm:$0xff]
  %v43 = vld [vmem:[%s2 + $0x18] sm:$0xff]
  %v44 = vld [vmem:[%s2 + $0x20] sm:$0xff]
  %v45 = vld [vmem:[%s2 + $0x28] sm:$0xff]
  %v46 = vld [vmem:[%s2 + $0x30] sm:$0xff]
  %v47 = vld [vmem:[%s2 + $0x38] sm:$0xff]
  %v48 = vld [vmem:[%s2 + $0x40] sm:$0xff]
  %v49 = vld [vmem:[%s2 + $0x48] sm:$0xff]
  %v50 = vld [vmem:[%s2 + $0x50] sm:$0xff]
  %v51 = vld [vmem:[%s2 + $0x58] sm:$0xff]
  %v52 = vld [vmem:[%s2 + $0x60] sm:$0xff]
  %v53 = vld [vmem:[%s2 + $0x68] sm:$0xff]
  %v54 = vld [vmem:[%s2 + $0x70] sm:$0xff]
  %v55 = vld [vmem:[%s2 + $0x78] sm:$0xff]
  %v56 = vld [vmem:[%s2 + $0x80] sm:$0xff]
  %v57 = vld [vmem:[%s2 + $0x88] sm:$0xff]
  %v58 = vld [vmem:[%s2 + $0x90] sm:$0xff]
  %v59 = vld [vmem:[%s2 + $0x98] sm:$0xff]
  %v60 = vld [vmem:[%s2 + $0xa0] sm:$0xff]
  %v61 = vld [vmem:[%s2 + $0xa8] sm:$0xff]
  %v62 = vld [vmem:[%s2 + $0xb0] sm:$0xff]
  %v63 = vld [vmem:[%s2 + $0xb8] sm:$0xff]
  %65 = vset.pattern.permute.xlu0 0
  %66 = vperm.xlu0 %65, %v40
  %v67 = vpop.permute.xlu0 %66
  %70 = vset.pattern.permute.xlu0 0
  %71 = vperm.xlu0 %70, %v41
  %v72 = vpop.permute.xlu0 %71
  %75 = vset.pattern.permute.xlu0 0
  %76 = vperm.xlu0 %75, %v42
  %v77 = vpop.permute.xlu0 %76
  %80 = vset.pattern.permute.xlu0 0
  %81 = vperm.xlu0 %80, %v43
  %v82 = vpop.permute.xlu0 %81
  %85 = vset.pattern.permute.xlu0 0
  %86 = vperm.xlu0 %85, %v44
  %v87 = vpop.permute.xlu0 %86
  %90 = vset.pattern.permute.xlu0 0
  %91 = vperm.xlu0 %90, %v45
  %v92 = vpop.permute.xlu0 %91
  %95 = vset.pattern.permute.xlu0 0
  %96 = vperm.xlu0 %95, %v46
  %v97 = vpop.permute.xlu0 %96
  %100 = vset.pattern.permute.xlu0 0
  %101 = vperm.xlu0 %100, %v47
  %v102 = vpop.permute.xlu0 %101
  %105 = vset.pattern.permute.xlu0 0
  %106 = vperm.xlu0 %105, %v48
  %v107 = vpop.permute.xlu0 %106
  %110 = vset.pattern.permute.xlu0 0
  %111 = vperm.xlu0 %110, %v49
  %v112 = vpop.permute.xlu0 %111
  %115 = vset.pattern.permute.xlu0 0
  %116 = vperm.xlu0 %115, %v50
  %v117 = vpop.permute.xlu0 %116
  %120 = vset.pattern.permute.xlu0 0
  %121 = vperm.xlu0 %120, %v51
  %v122 = vpop.permute.xlu0 %121
  %125 = vset.pattern.permute.xlu0 0
  %126 = vperm.xlu0 %125, %v52
  %v127 = vpop.permute.xlu0 %126
  %130 = vset.pattern.permute.xlu0 0
  %131 = vperm.xlu0 %130, %v53
  %v132 = vpop.permute.xlu0 %131
  %135 = vset.pattern.permute.xlu0 0
  %136 = vperm.xlu0 %135, %v54
  %v137 = vpop.permute.xlu0 %136
  %140 = vset.pattern.permute.xlu0 0
  %141 = vperm.xlu0 %140, %v55
  %v142 = vpop.permute.xlu0 %141
  %145 = vset.pattern.permute.xlu0 0
  %146 = vperm.xlu0 %145, %v56
  %v147 = vpop.permute.xlu0 %146
  %150 = vset.pattern.permute.xlu0 0
  %151 = vperm.xlu0 %150, %v57
  %v152 = vpop.permute.xlu0 %151
  %155 = vset.pattern.permute.xlu0 0
  %156 = vperm.xlu0 %155, %v58
  %v157 = vpop.permute.xlu0 %156
  %160 = vset.pattern.permute.xlu0 0
  %161 = vperm.xlu0 %160, %v59
  %v162 = vpop.permute.xlu0 %161
  %165 = vset.pattern.permute.xlu0 0
  %166 = vperm.xlu0 %165, %v60
  %v167 = vpop.permute.xlu0 %166
  %170 = vset.pattern.permute.xlu0 0
  %171 = vperm.xlu0 %170, %v61
  %v172 = vpop.permute.xlu0 %171
  %175 = vset.pattern.permute.xlu0 0
  %176 = vperm.xlu0 %175, %v62
  %v177 = vpop.permute.xlu0 %176
  %180 = vset.pattern.permute.xlu0 0
  %181 = vperm.xlu0 %180, %v63
  %v182 = vpop.permute.xlu0 %181
  %v208 = vunpack.c.l.b16 %v15
  %v209 = vunpack.c.l.b16 %v16
  %v210 = vunpack.c.l.b16 %v17
  %v211 = vunpack.c.l.b16 %v18
  %v212 = vunpack.c.l.b16 %v19
  %v213 = vunpack.c.l.b16 %v20
  %v214 = vunpack.c.l.b16 %v21
  %v215 = vunpack.c.l.b16 %v22
  %v216 = vunpack.c.l.b16 %v23
  %v217 = vunpack.c.l.b16 %v24
  %v218 = vunpack.c.l.b16 %v25
  %v219 = vunpack.c.l.b16 %v26
  %v220 = vunpack.c.l.b16 %v27
  %v221 = vunpack.c.l.b16 %v28
  %v222 = vunpack.c.l.b16 %v29
  %v223 = vunpack.c.l.b16 %v30
  %v224 = vunpack.c.l.b16 %v31
  %v225 = vunpack.c.l.b16 %v32
  %v226 = vunpack.c.l.b16 %v33
  %v227 = vunpack.c.l.b16 %v34
  %v228 = vunpack.c.l.b16 %v35
  %v229 = vunpack.c.l.b16 %v36
  %v230 = vunpack.c.l.b16 %v37
  %v231 = vunpack.c.l.b16 %v38
  %v232 = vpack.c.b16 %v209, %v208
  %v233 = vpack.c.b16 %v211, %v210
  %v234 = vpack.c.b16 %v213, %v212
  %v235 = vpack.c.b16 %v215, %v214
  %v236 = vpack.c.b16 %v217, %v216
  %v237 = vpack.c.b16 %v219, %v218
  %v238 = vpack.c.b16 %v221, %v220
  %v239 = vpack.c.b16 %v223, %v222
  %v240 = vpack.c.b16 %v225, %v224
  %v241 = vpack.c.b16 %v227, %v226
  %v242 = vpack.c.b16 %v229, %v228
  %v243 = vpack.c.b16 %v231, %v230
  %vm244 = vcmask 64512
  %v246 = vsel %vm244, %v232, 0
  %v249 = vsel %vm244, %v233, 0
  %v252 = vsel %vm244, %v234, 0
  %v255 = vsel %vm244, %v235, 0
  %v258 = vsel %vm244, %v236, 0
  %v261 = vsel %vm244, %v237, 0
  %v264 = vsel %vm244, %v238, 0
  %v267 = vsel %vm244, %v239, 0
  %v270 = vsel %vm244, %v240, 0
  %v273 = vsel %vm244, %v241, 0
  %v276 = vsel %vm244, %v242, 0
  %v279 = vsel %vm244, %v243, 0
  %vm281 = vcmask 1043456
  %v283 = vsel %vm281, %v39, 0
  %285 = vmatprep.subr.bf16.mxu0 0
  %286 = vmatpush1.bf16.msra.mxu0 %v283
  %287 = vmatprep.subr.bf16.mxu0 0
  %288 = vmatpush1.bf16.msra.mxu0 0
  %289 = vmatprep.subr.bf16.mxu0 0
  %290 = vmatpush1.bf16.msra.mxu0 0
  %291 = vmatprep.subr.bf16.mxu0 0
  %292 = vmatpush1.bf16.msra.mxu0 0
  %293 = vmatprep.subr.bf16.mxu0 0
  %294 = vmatpush1.bf16.msra.mxu0 0
  %295 = vmatprep.subr.bf16.mxu0 0
  %296 = vmatpush1.bf16.msra.mxu0 0
  %297 = vmatprep.subr.bf16.mxu0 0
  %298 = vmatpush1.bf16.msra.mxu0 0
  %299 = vmatprep.subr.bf16.mxu0 0
  %300 = vmatpush1.bf16.msra.mxu0 0
  %301 = vmatprep.subr.bf16.mxu0 0
  %302 = vmatpush1.bf16.msra.mxu0 0
  %303 = vmatprep.subr.bf16.mxu0 0
  %304 = vmatpush1.bf16.msra.mxu0 0
  %305 = vmatprep.subr.bf16.mxu0 0
  %306 = vmatpush1.bf16.msra.mxu0 0
  %307 = vmatprep.subr.bf16.mxu0 0
  %308 = vmatpush1.bf16.msra.mxu0 0
  %309 = vmatprep.subr.bf16.mxu0 0
  %310 = vmatpush1.bf16.msra.mxu0 0
  %311 = vmatprep.subr.bf16.mxu0 0
  %312 = vmatpush1.bf16.msra.mxu0 0
  %313 = vmatprep.subr.bf16.mxu0 0
  %314 = vmatpush1.bf16.msra.mxu0 0
  %315 = vmatprep.subr.bf16.mxu0 0
  %316 = vmatpush1.bf16.msra.mxu0 0
  %317 = vmatprep.mubr.bf16.mxu0 0
  %318 = vmatmul.mubr.bf16.gmra.mrb[0].mxu0 %v246
  %v319 = vpop.f32.mrb[0].mxu0
  %v320 = vadd.f32 %v67, %v319
  %v321 = vpop.f32.mrb[0].mxu0
  %v322 = vpop.f32.mrb[0].mxu0
  %v323 = vadd.f32 %v72, %v322
  %v324 = vpop.f32.mrb[0].mxu0
  %325 = vmatprep.mubr.bf16.mxu0 0
  %326 = vmatmul.mubr.bf16.gmra.mrb[0].mxu0 %v249
  %v327 = vpop.f32.mrb[0].mxu0
  %v328 = vadd.f32 %v77, %v327
  %v329 = vpop.f32.mrb[0].mxu0
  %v330 = vpop.f32.mrb[0].mxu0
  %v331 = vadd.f32 %v82, %v330
  %v332 = vpop.f32.mrb[0].mxu0
  %333 = vmatprep.mubr.bf16.mxu0 0
  %334 = vmatmul.mubr.bf16.gmra.mrb[0].mxu0 %v252
  %v335 = vpop.f32.mrb[0].mxu0
  %v336 = vadd.f32 %v87, %v335
  %v337 = vpop.f32.mrb[0].mxu0
  %v338 = vpop.f32.mrb[0].mxu0
  %v339 = vadd.f32 %v92, %v338
  %v340 = vpop.f32.mrb[0].mxu0
  %341 = vmatprep.mubr.bf16.mxu0 0
  %342 = vmatmul.mubr.bf16.gmra.mrb[0].mxu0 %v255
  %v343 = vpop.f32.mrb[0].mxu0
  %v344 = vadd.f32 %v97, %v343
  %v345 = vpop.f32.mrb[0].mxu0
  %v346 = vpop.f32.mrb[0].mxu0
  %v347 = vadd.f32 %v102, %v346
  %v348 = vpop.f32.mrb[0].mxu0
  %349 = vmatprep.mubr.bf16.mxu0 0
  %350 = vmatmul.mubr.bf16.gmra.mrb[0].mxu0 %v258
  %v351 = vpop.f32.mrb[0].mxu0
  %v352 = vadd.f32 %v107, %v351
  %v353 = vpop.f32.mrb[0].mxu0
  %v354 = vpop.f32.mrb[0].mxu0
  %v355 = vadd.f32 %v112, %v354
  %v356 = vpop.f32.mrb[0].mxu0
  %357 = vmatprep.mubr.bf16.mxu0 0
  %358 = vmatmul.mubr.bf16.gmra.mrb[0].mxu0 %v261
  %v359 = vpop.f32.mrb[0].mxu0
  %v360 = vadd.f32 %v117, %v359
  %v361 = vpop.f32.mrb[0].mxu0
  %v362 = vpop.f32.mrb[0].mxu0
  %v363 = vadd.f32 %v122, %v362
  %v364 = vpop.f32.mrb[0].mxu0
  %365 = vmatprep.mubr.bf16.mxu0 0
  %366 = vmatmul.mubr.bf16.gmra.mrb[0].mxu0 %v264
  %v367 = vpop.f32.mrb[0].mxu0
  %v368 = vadd.f32 %v127, %v367
  %v369 = vpop.f32.mrb[0].mxu0
  %v370 = vpop.f32.mrb[0].mxu0
  %v371 = vadd.f32 %v132, %v370
  %v372 = vpop.f32.mrb[0].mxu0
  %373 = vmatprep.mubr.bf16.mxu0 0
  %374 = vmatmul.mubr.bf16.gmra.mrb[0].mxu0 %v267
  %v375 = vpop.f32.mrb[0].mxu0
  %v376 = vadd.f32 %v137, %v375
  %v377 = vpop.f32.mrb[0].mxu0
  %v378 = vpop.f32.mrb[0].mxu0
  %v379 = vadd.f32 %v142, %v378
  %v380 = vpop.f32.mrb[0].mxu0
  %381 = vmatprep.mubr.bf16.mxu0 0
  %382 = vmatmul.mubr.bf16.gmra.mrb[0].mxu0 %v270
  %v383 = vpop.f32.mrb[0].mxu0
  %v384 = vadd.f32 %v147, %v383
  %v385 = vpop.f32.mrb[0].mxu0
  %v386 = vpop.f32.mrb[0].mxu0
  %v387 = vadd.f32 %v152, %v386
  %v388 = vpop.f32.mrb[0].mxu0
  %389 = vmatprep.mubr.bf16.mxu0 0
  %390 = vmatmul.mubr.bf16.gmra.mrb[0].mxu0 %v273
  %v391 = vpop.f32.mrb[0].mxu0
  %v392 = vadd.f32 %v157, %v391
  %v393 = vpop.f32.mrb[0].mxu0
  %v394 = vpop.f32.mrb[0].mxu0
  %v395 = vadd.f32 %v162, %v394
  %v396 = vpop.f32.mrb[0].mxu0
  %397 = vmatprep.mubr.bf16.mxu0 0
  %398 = vmatmul.mubr.bf16.gmra.mrb[0].mxu0 %v276
  %v399 = vpop.f32.mrb[0].mxu0
  %v400 = vadd.f32 %v167, %v399
  %v401 = vpop.f32.mrb[0].mxu0
  %v402 = vpop.f32.mrb[0].mxu0
  %v403 = vadd.f32 %v172, %v402
  %v404 = vpop.f32.mrb[0].mxu0
  %405 = vmatprep.mubr.bf16.mxu0 0
  %406 = vmatmul.mubr.bf16.gmra.mrb[0].mxu0 %v279
  %v407 = vpop.f32.mrb[0].mxu0
  %v408 = vadd.f32 %v177, %v407
  %v409 = vpop.f32.mrb[0].mxu0
  %v410 = vpop.f32.mrb[0].mxu0
  %v411 = vadd.f32 %v182, %v410
  %v412 = vpop.f32.mrb[0].mxu0
  %413 = vdwg.mxu0
  %vm414 = vcmask 261120
  %415 = vst.msk [vmem:[%s3] sm:$0xff] %vm414, %v320
  %416 = vst.msk [vmem:[%s3 + $0x8] sm:$0xff] %vm414, %v323
  %417 = vst.msk [vmem:[%s3 + $0x10] sm:$0xff] %vm414, %v328
  %418 = vst.msk [vmem:[%s3 + $0x18] sm:$0xff] %vm414, %v331
  %419 = vst.msk [vmem:[%s3 + $0x20] sm:$0xff] %vm414, %v336
  %420 = vst.msk [vmem:[%s3 + $0x28] sm:$0xff] %vm414, %v339
  %421 = vst.msk [vmem:[%s3 + $0x30] sm:$0xff] %vm414, %v344
  %422 = vst.msk [vmem:[%s3 + $0x38] sm:$0xff] %vm414, %v347
  %423 = vst.msk [vmem:[%s3 + $0x40] sm:$0xff] %vm414, %v352
  %424 = vst.msk [vmem:[%s3 + $0x48] sm:$0xff] %vm414, %v355
  %425 = vst.msk [vmem:[%s3 + $0x50] sm:$0xff] %vm414, %v360
  %426 = vst.msk [vmem:[%s3 + $0x58] sm:$0xff] %vm414, %v363
  %427 = vst.msk [vmem:[%s3 + $0x60] sm:$0xff] %vm414, %v368
  %428 = vst.msk [vmem:[%s3 + $0x68] sm:$0xff] %vm414, %v371
  %429 = vst.msk [vmem:[%s3 + $0x70] sm:$0xff] %vm414, %v376
  %430 = vst.msk [vmem:[%s3 + $0x78] sm:$0xff] %vm414, %v379
  %431 = vst.msk [vmem:[%s3 + $0x80] sm:$0xff] %vm414, %v384
  %432 = vst.msk [vmem:[%s3 + $0x88] sm:$0xff] %vm414, %v387
  %433 = vst.msk [vmem:[%s3 + $0x90] sm:$0xff] %vm414, %v392
  %434 = vst.msk [vmem:[%s3 + $0x98] sm:$0xff] %vm414, %v395
  %435 = vst.msk [vmem:[%s3 + $0xa0] sm:$0xff] %vm414, %v400
  %436 = vst.msk [vmem:[%s3 + $0xa8] sm:$0xff] %vm414, %v403
  %437 = vst.msk [vmem:[%s3 + $0xb0] sm:$0xff] %vm414, %v408
  %438 = vst.msk [vmem:[%s3 + $0xb8] sm:$0xff] %vm414, %v411
  // Predicated region
  $region14: #{sr_projection_forward.11} parent=0 // pred_check
    _
  $region15: #{sr_projection_forward.11} parent=0 // pred_check_branch
    %440 = sbr.rel (0) target = $region17
  $region16: #{sr_projection_forward.11} parent=0 // pred_region
    _
  $region17: #{sr_projection_forward.11} parent=0 // pred_fallthru
    _
  // Predicated region
  $region18: #{sr_projection_forward.11} parent=0 // pred_check
    _
  $region19: #{sr_projection_forward.11} parent=0 // pred_check_branch
    %442 = sbr.rel (0) target = $region21
  $region20: #{sr_projection_forward.11} parent=0 // pred_region
    _
  $region21: #{sr_projection_forward.11} parent=0 // pred_fallthru
    _

// kernel: sr_projection_forward.12
$region0: #{sr_projection_forward.12}
  #allocation0 [shape = 'u32[]', space=smem, size = 0x4, offset = 0x4, fixed_abs, tag = 'smem constant byte address 0x4 - core index']
  #allocation1 [shape = 'u32[144,128]{1,0:T(1,128)}', space=vmem, size = 0x12000, scoped, tag = 'internal scratch']
  %s0 = inlined_call_operand.vmem [shape: bf16[768,8], index: 0, kind: input, shape index: {}]
  %s1 = inlined_call_operand.vmem [shape: bf16[8,32], index: 1, kind: input, shape index: {}]
  %s2 = inlined_call_operand.vmem [shape: f32[768,1], index: 2, kind: input, shape index: {}]
  %s3 = inlined_call_operand.vmem [shape: f32[768,32], index: 3, kind: output, shape index: {}]
  %s4 = sld [smem:[#allocation0]]
  $region45: #{sr_projection_forward.12} parent=0
    _
  %s6 = ssub.s32 1, %s4
  %s7 = scalar_select 0, %s6, %s4
  loop: start=0, step=1, limit=4
  $region2: #{sr_projection_forward.12} parent=0 // loop_pre_header
    _
  $region3: #{sr_projection_forward.12} parent=0 // loop_header
    %s9 = sphi 0, %s13
    %p10 = scmp.ge.s32.totalorder %s9, 4
    %s16 = sphi 0, %s28
    %s17 = sphi 0, %s24
    %s18 = sphi 0, %s16
    %s19 = sphi 0, %s17
    %s20 = sphi 0, %s18
    %s21 = sphi 0, %s19
    %s31 = sphi 0, %s33
    %s34 = sphi 0, %s31
    %s35 = sphi 0, %s34
    %s51 = sphi 0, %s35
    %s57 = sphi 0, %s59
    %s60 = sphi 0, %s57
    %s61 = sphi 0, %s60
    %s77 = sphi 0, %s61
    %s83 = sphi 0, %s85
    %s86 = sphi 0, %s83
    %s87 = sphi 0, %s86
    %s103 = sphi 0, %s87
    %s111 = sphi 0, %s113
    %s114 = sphi 0, %s111
    %s115 = sphi 0, %s114
    %s131 = sphi 0, %s115
  $region4: #{sr_projection_forward.12} parent=0 // loop_header_branch
    %12 = sbr.rel (%p10) target = $region8
  $region5: #{sr_projection_forward.12} parent=0 // loop_body
    %s14 = ssub.s32 %s9, 1
    %s15 = ssub.s32 %s9, 2
    %s22 = sadd.s32 1, %s17
    %p23 = scmp.ge.s32.totalorder %s22, 1
    %s24 = scalar_select %p23, 0, %s22
    %s25 = sadd.s32 1, %s16
    %s26 = scalar_select %p23, %s25, %s16
    %p27 = scmp.ge.s32.totalorder %s26, 2
    %s28 = scalar_select %p27, 0, %s26
    %s29 = ssub.s32 %s16, %s28
    %p30 = scmp.eq.s32.totalorder %s29, 0
    %s32 = sadd.s32 %s31, 1
    %s33 = scalar_select %p30, %s31, %s32
    %p36 = pneg %p30
    %p37 = scmp.eq.s32.totalorder %s9, 1
    %p38 = por %p36, %p37
    %p39 = scmp.ne.s32.totalorder %s31, %s34
    %p40 = scmp.eq.s32.totalorder %s9, 0
    %p41 = por %p39, %p40
    %p42 = scmp.ne.s32.totalorder %s31, %s34
    %p43 = scmp.eq.s32.totalorder %s14, 1
    %p44 = por %p42, %p43
    %p45 = scmp.ne.s32.totalorder %s34, %s35
    %p46 = scmp.eq.s32.totalorder %s14, 0
    %p47 = por %p45, %p46
    %p48 = scmp.ne.s32.totalorder %s34, %s35
    %p49 = scmp.eq.s32.totalorder %s15, 1
    %p50 = por %p48, %p49
    %p52 = scmp.ne.s32.totalorder %s35, %s51
    %p53 = scmp.eq.s32.totalorder %s15, 0
    %p54 = por %p52, %p53
    %s55 = ssub.s32 %s17, %s24
    %p56 = scmp.eq.s32.totalorder %s55, 0
    %s58 = sadd.s32 %s57, 1
    %s59 = scalar_select %p56, %s57, %s58
    %p62 = pneg %p56
    %p63 = scmp.eq.s32.totalorder %s9, 1
    %p64 = por %p62, %p63
    %p65 = scmp.ne.s32.totalorder %s57, %s60
    %p66 = scmp.eq.s32.totalorder %s9, 0
    %p67 = por %p65, %p66
    %p68 = scmp.ne.s32.totalorder %s57, %s60
    %p69 = scmp.eq.s32.totalorder %s14, 1
    %p70 = por %p68, %p69
    %p71 = scmp.ne.s32.totalorder %s60, %s61
    %p72 = scmp.eq.s32.totalorder %s14, 0
    %p73 = por %p71, %p72
    %p74 = scmp.ne.s32.totalorder %s60, %s61
    %p75 = scmp.eq.s32.totalorder %s15, 1
    %p76 = por %p74, %p75
    %p78 = scmp.ne.s32.totalorder %s61, %s77
    %p79 = scmp.eq.s32.totalorder %s15, 0
    %p80 = por %p78, %p79
    %s81 = ssub.s32 %s16, %s28
    %p82 = scmp.eq.s32.totalorder %s81, 0
    %s84 = sadd.s32 %s83, 1
    %s85 = scalar_select %p82, %s83, %s84
    %p88 = pneg %p82
    %p89 = scmp.eq.s32.totalorder %s9, 1
    %p90 = por %p88, %p89
    %p91 = scmp.ne.s32.totalorder %s83, %s86
    %p92 = scmp.eq.s32.totalorder %s9, 0
    %p93 = por %p91, %p92
    %p94 = scmp.ne.s32.totalorder %s83, %s86
    %p95 = scmp.eq.s32.totalorder %s14, 1
    %p96 = por %p94, %p95
    %p97 = scmp.ne.s32.totalorder %s86, %s87
    %p98 = scmp.eq.s32.totalorder %s14, 0
    %p99 = por %p97, %p98
    %p100 = scmp.ne.s32.totalorder %s86, %s87
    %p101 = scmp.eq.s32.totalorder %s15, 1
    %p102 = por %p100, %p101
    %p104 = scmp.ne.s32.totalorder %s87, %s103
    %p105 = scmp.eq.s32.totalorder %s15, 0
    %p106 = por %p104, %p105
    %s107 = ssub.s32 %s16, %s28
    %s108 = ssub.s32 %s17, %s24
    %s109 = sor.u32 %s107, %s108
    %p110 = scmp.eq.s32.totalorder %s109, 0
    %s112 = sadd.s32 %s111, 1
    %s113 = scalar_select %p110, %s111, %s112
    %p116 = pneg %p110
    %p117 = scmp.eq.s32.totalorder %s9, 1
    %p118 = por %p116, %p117
    %p119 = scmp.ne.s32.totalorder %s111, %s114
    %p120 = scmp.eq.s32.totalorder %s9, 0
    %p121 = por %p119, %p120
    %p122 = scmp.ne.s32.totalorder %s111, %s114
    %p123 = scmp.eq.s32.totalorder %s14, 1
    %p124 = por %p122, %p123
    %p125 = scmp.ne.s32.totalorder %s114, %s115
    %p126 = scmp.eq.s32.totalorder %s14, 0
    %p127 = por %p125, %p126
    %p128 = scmp.ne.s32.totalorder %s114, %s115
    %p129 = scmp.eq.s32.totalorder %s15, 1
    %p130 = por %p128, %p129
    %p132 = scmp.ne.s32.totalorder %s115, %s131
    %p133 = scmp.eq.s32.totalorder %s15, 0
    %p134 = por %p132, %p133
    %p135 = scmp.le.s32.totalorder 1, %s9
    %p136 = scmp.lt.s32.totalorder %s9, 3
    %p137 = pnand %p135, %p136
    %p138 = pneg %p137
    // Predicated region
    $region9: #{sr_projection_forward.12} parent=5 // pred_check
      _
    $region10: #{sr_projection_forward.12} parent=5 // pred_check_branch
      %140 = sbr.rel (%p137) target = $region12
    $region11: #{sr_projection_forward.12} parent=5 // pred_region
      %s141 = ssub.s32 %s9, 1
      // Predicated region
      $region13: #{sr_projection_forward.12} parent=11 // pred_check
        %p142 = pneg %p73
      $region14: #{sr_projection_forward.12} parent=11 // pred_check_branch
        %144 = sbr.rel (%p142) target = $region16
      $region15: #{sr_projection_forward.12} parent=11 // pred_region
        %p145 = scmp.lt.s32.totalorder %s19, 0
        %s146 = scalar_select %p145, %s19, 0
        %s147 = smul.addr %s146, 4
        %s148 = scalar_lea.vmem %s1, %s147
      $region16: #{sr_projection_forward.12} parent=11 // pred_fallthru
        _
    $region12: #{sr_projection_forward.12} parent=5 // pred_fallthru
      _
    %p149 = scmp.lt.s32.totalorder %s9, 2
    // Predicated region
    $region17: #{sr_projection_forward.12} parent=5 // pred_check
      %p150 = pneg %p149
    $region18: #{sr_projection_forward.12} parent=5 // pred_check_branch
      %152 = sbr.rel (%p150) target = $region20
    $region19: #{sr_projection_forward.12} parent=5 // pred_region
      // Predicated region
      $region21: #{sr_projection_forward.12} parent=19 // pred_check
        %p153 = pneg %p41
      $region22: #{sr_projection_forward.12} parent=19 // pred_check_branch
        %155 = sbr.rel (%p153) target = $region24
      $region23: #{sr_projection_forward.12} parent=19 // pred_region
        %s156 = smul.u32 48, %s16
        %p157 = scmp.lt.s32.totalorder %s156, 95
        %s158 = scalar_select %p157, %s156, 95
        %s159 = smul.addr %s158, 4
        %s160 = scalar_lea.vmem %s0, %s159
        %s161 = smul.u32 48, %s16
      $region24: #{sr_projection_forward.12} parent=19 // pred_fallthru
        _
      // Predicated region
      $region25: #{sr_projection_forward.12} parent=19 // pred_check
        %p162 = pneg %p93
      $region26: #{sr_projection_forward.12} parent=19 // pred_check_branch
        %164 = sbr.rel (%p162) target = $region28
      $region27: #{sr_projection_forward.12} parent=19 // pred_region
        %s165 = smul.u32 48, %s16
        %p166 = scmp.lt.s32.totalorder %s165, 95
        %s167 = scalar_select %p166, %s165, 95
        %s168 = smul.addr %s167, 8
        %s169 = scalar_lea.vmem %s2, %s168
        %s170 = smul.u32 48, %s16
      $region28: #{sr_projection_forward.12} parent=19 // pred_fallthru
        _
    $region20: #{sr_projection_forward.12} parent=5 // pred_fallthru
      _
    %p171 = scmp.le.s32.totalorder 1, %s9
    %p172 = scmp.lt.s32.totalorder %s9, 3
    %p173 = pnand %p171, %p172
    %p174 = pneg %p173
    // Predicated region
    $region29: #{sr_projection_forward.12} parent=5 // pred_check
      _
    $region30: #{sr_projection_forward.12} parent=5 // pred_check_branch
      %176 = sbr.rel (%p173) target = $region32
    $region31: #{sr_projection_forward.12} parent=5 // pred_region
      %s177 = ssub.s32 %s9, 1
      %s178 = smul.u32 48, %s18
      %p179 = scmp.lt.s32.totalorder %s178, 95
      %s180 = scalar_select %p179, %s178, 95
      %s181 = smul.addr %s180, 4
      %s182 = scalar_lea.vmem %s0, %s181
      %p183 = pneg %p47
      %p184 = pneg %p44
      %p185 = scmp.lt.s32.totalorder %s19, 0
      %s186 = scalar_select %p185, %s19, 0
      %s187 = smul.addr %s186, 4
      %s188 = scalar_lea.vmem %s1, %s187
      %p189 = pneg %p73
      %p190 = pneg %p70
      %s191 = smul.u32 48, %s18
      %p192 = scmp.lt.s32.totalorder %s191, 95
      %s193 = scalar_select %p192, %s191, 95
      %s194 = smul.addr %s193, 8
      %s195 = scalar_lea.vmem %s2, %s194
      %p196 = pneg %p99
      %p197 = pneg %p96
      %p198 = pneg %p127
      %p199 = pneg %p124
      %s200 = smul.u32 48, %s18
      %p201 = scmp.lt.s32.totalorder %s200, 95
      %s202 = scalar_select %p201, %s200, 95
      %p203 = scmp.lt.s32.totalorder %s19, 0
      %s204 = scalar_select %p203, %s19, 0
      %s205 = sadd.s32 %s204, %s202
      %s206 = smul.addr %s205, 8
      %s207 = scalar_lea.vmem %s3, %s206
      %s208 = smul.u32 48, %s18
      %p209 = scmp.lt.s32.totalorder %s208, 95
      %s210 = scalar_select %p209, %s208, 95
      %s211 = smul.addr %s210, 4
      %s212 = scalar_lea.vmem %s0, %s211
      %s213 = smul.u32 48, %s18
      %p214 = scmp.lt.s32.totalorder %s19, 0
      %s215 = scalar_select %p214, %s19, 0
      %s216 = smul.addr %s215, 4
      %s217 = scalar_lea.vmem %s1, %s216
      %s218 = smul.u32 48, %s18
      %p219 = scmp.lt.s32.totalorder %s218, 95
      %s220 = scalar_select %p219, %s218, 95
      %s221 = smul.addr %s220, 8
      %s222 = scalar_lea.vmem %s2, %s221
      %s223 = smul.u32 48, %s18
      %s224 = smul.u32 48, %s18
      %p225 = scmp.lt.s32.totalorder %s224, 95
      %s226 = scalar_select %p225, %s224, 95
      %p227 = scmp.lt.s32.totalorder %s19, 0
      %s228 = scalar_select %p227, %s19, 0
      %s229 = sadd.s32 %s228, %s226
      %s230 = smul.addr %s229, 8
      %s231 = scalar_lea.vmem %s3, %s230
      %s232 = smul.u32 48, %s18
      %v234 = vld [vmem:[%s212] sm:$0xf]
      %v235 = vld [vmem:[%s212 + $0x4] sm:$0xf]
      %v236 = vld [vmem:[%s212 + $0x8] sm:$0xf]
      %v237 = vld [vmem:[%s212 + $0xc] sm:$0xf]
      %v238 = vld [vmem:[%s212 + $0x10] sm:$0xf]
      %v239 = vld [vmem:[%s212 + $0x14] sm:$0xf]
      %v240 = vld [vmem:[%s212 + $0x18] sm:$0xf]
      %v241 = vld [vmem:[%s212 + $0x1c] sm:$0xf]
      %v242 = vld [vmem:[%s212 + $0x20] sm:$0xf]
      %v243 = vld [vmem:[%s212 + $0x24] sm:$0xf]
      %v244 = vld [vmem:[%s212 + $0x28] sm:$0xf]
      %v245 = vld [vmem:[%s212 + $0x2c] sm:$0xf]
      %v246 = vld [vmem:[%s212 + $0x30] sm:$0xf]
      %v247 = vld [vmem:[%s212 + $0x34] sm:$0xf]
      %v248 = vld [vmem:[%s212 + $0x38] sm:$0xf]
      %v249 = vld [vmem:[%s212 + $0x3c] sm:$0xf]
      %v250 = vld [vmem:[%s212 + $0x40] sm:$0xf]
      %v251 = vld [vmem:[%s212 + $0x44] sm:$0xf]
      %v252 = vld [vmem:[%s212 + $0x48] sm:$0xf]
      %v253 = vld [vmem:[%s212 + $0x4c] sm:$0xf]
      %v254 = vld [vmem:[%s212 + $0x50] sm:$0xf]
      %v255 = vld [vmem:[%s212 + $0x54] sm:$0xf]
      %v256 = vld [vmem:[%s212 + $0x58] sm:$0xf]
      %v257 = vld [vmem:[%s212 + $0x5c] sm:$0xf]
      %v258 = vld [vmem:[%s212 + $0x60] sm:$0xf]
      %v259 = vld [vmem:[%s212 + $0x64] sm:$0xf]
      %v260 = vld [vmem:[%s212 + $0x68] sm:$0xf]
      %v261 = vld [vmem:[%s212 + $0x6c] sm:$0xf]
      %v262 = vld [vmem:[%s212 + $0x70] sm:$0xf]
      %v263 = vld [vmem:[%s212 + $0x74] sm:$0xf]
      %v264 = vld [vmem:[%s212 + $0x78] sm:$0xf]
      %v265 = vld [vmem:[%s212 + $0x7c] sm:$0xf]
      %v266 = vld [vmem:[%s212 + $0x80] sm:$0xf]
      %v267 = vld [vmem:[%s212 + $0x84] sm:$0xf]
      %v268 = vld [vmem:[%s212 + $0x88] sm:$0xf]
      %v269 = vld [vmem:[%s212 + $0x8c] sm:$0xf]
      %v270 = vld [vmem:[%s212 + $0x90] sm:$0xf]
      %v271 = vld [vmem:[%s212 + $0x94] sm:$0xf]
      %v272 = vld [vmem:[%s212 + $0x98] sm:$0xf]
      %v273 = vld [vmem:[%s212 + $0x9c] sm:$0xf]
      %v274 = vld [vmem:[%s212 + $0xa0] sm:$0xf]
      %v275 = vld [vmem:[%s212 + $0xa4] sm:$0xf]
      %v276 = vld [vmem:[%s212 + $0xa8] sm:$0xf]
      %v277 = vld [vmem:[%s212 + $0xac] sm:$0xf]
      %v278 = vld [vmem:[%s212 + $0xb0] sm:$0xf]
      %v279 = vld [vmem:[%s212 + $0xb4] sm:$0xf]
      %v280 = vld [vmem:[%s212 + $0xb8] sm:$0xf]
      %v281 = vld [vmem:[%s212 + $0xbc] sm:$0xf]
      %v282 = vld [vmem:[%s217] sm:$0xf]
      %v283 = vld [vmem:[%s222] sm:$0xff]
      %v284 = vld [vmem:[%s222 + $0x8] sm:$0xff]
      %v285 = vld [vmem:[%s222 + $0x10] sm:$0xff]
      %v286 = vld [vmem:[%s222 + $0x18] sm:$0xff]
      %v287 = vld [vmem:[%s222 + $0x20] sm:$0xff]
      %v288 = vld [vmem:[%s222 + $0x28] sm:$0xff]
      %v289 = vld [vmem:[%s222 + $0x30] sm:$0xff]
      %v290 = vld [vmem:[%s222 + $0x38] sm:$0xff]
      %v291 = vld [vmem:[%s222 + $0x40] sm:$0xff]
      %v292 = vld [vmem:[%s222 + $0x48] sm:$0xff]
      %v293 = vld [vmem:[%s222 + $0x50] sm:$0xff]
      %v294 = vld [vmem:[%s222 + $0x58] sm:$0xff]
      %v295 = vld [vmem:[%s222 + $0x60] sm:$0xff]
      %v296 = vld [vmem:[%s222 + $0x68] sm:$0xff]
      %v297 = vld [vmem:[%s222 + $0x70] sm:$0xff]
      %v298 = vld [vmem:[%s222 + $0x78] sm:$0xff]
      %v299 = vld [vmem:[%s222 + $0x80] sm:$0xff]
      %v300 = vld [vmem:[%s222 + $0x88] sm:$0xff]
      %v301 = vld [vmem:[%s222 + $0x90] sm:$0xff]
      %v302 = vld [vmem:[%s222 + $0x98] sm:$0xff]
      %v303 = vld [vmem:[%s222 + $0xa0] sm:$0xff]
      %v304 = vld [vmem:[%s222 + $0xa8] sm:$0xff]
      %v305 = vld [vmem:[%s222 + $0xb0] sm:$0xff]
      %v306 = vld [vmem:[%s222 + $0xb8] sm:$0xff]
      %v307 = vld [vmem:[%s222 + $0xc0] sm:$0xff]
      %v308 = vld [vmem:[%s222 + $0xc8] sm:$0xff]
      %v309 = vld [vmem:[%s222 + $0xd0] sm:$0xff]
      %v310 = vld [vmem:[%s222 + $0xd8] sm:$0xff]
      %v311 = vld [vmem:[%s222 + $0xe0] sm:$0xff]
      %v312 = vld [vmem:[%s222 + $0xe8] sm:$0xff]
      %v313 = vld [vmem:[%s222 + $0xf0] sm:$0xff]
      %v314 = vld [vmem:[%s222 + $0xf8] sm:$0xff]
      %v315 = vld [vmem:[%s222 + $0x100] sm:$0xff]
      %v316 = vld [vmem:[%s222 + $0x108] sm:$0xff]
      %v317 = vld [vmem:[%s222 + $0x110] sm:$0xff]
      %v318 = vld [vmem:[%s222 + $0x118] sm:$0xff]
      %v319 = vld [vmem:[%s222 + $0x120] sm:$0xff]
      %v320 = vld [vmem:[%s222 + $0x128] sm:$0xff]
      %v321 = vld [vmem:[%s222 + $0x130] sm:$0xff]
      %v322 = vld [vmem:[%s222 + $0x138] sm:$0xff]
      %v323 = vld [vmem:[%s222 + $0x140] sm:$0xff]
      %v324 = vld [vmem:[%s222 + $0x148] sm:$0xff]
      %v325 = vld [vmem:[%s222 + $0x150] sm:$0xff]
      %v326 = vld [vmem:[%s222 + $0x158] sm:$0xff]
      %v327 = vld [vmem:[%s222 + $0x160] sm:$0xff]
      %v328 = vld [vmem:[%s222 + $0x168] sm:$0xff]
      %v329 = vld [vmem:[%s222 + $0x170] sm:$0xff]
      %v330 = vld [vmem:[%s222 + $0x178] sm:$0xff]
      %332 = vset.pattern.permute.xlu0 0
      %333 = vperm.xlu0 %332, %v283
      %v334 = vpop.permute.xlu0 %333
      %337 = vset.pattern.permute.xlu0 0
      %338 = vperm.xlu0 %337, %v284
      %v339 = vpop.permute.xlu0 %338
      %342 = vset.pattern.permute.xlu0 0
      %343 = vperm.xlu0 %342, %v285
      %v344 = vpop.permute.xlu0 %343
      %347 = vset.pattern.permute.xlu0 0
      %348 = vperm.xlu0 %347, %v286
      %v349 = vpop.permute.xlu0 %348
      %352 = vset.pattern.permute.xlu0 0
      %353 = vperm.xlu0 %352, %v287
      %v354 = vpop.permute.xlu0 %353
      %357 = vset.pattern.permute.xlu0 0
      %358 = vperm.xlu0 %357, %v288
      %v359 = vpop.permute.xlu0 %358
      %362 = vset.pattern.permute.xlu0 0
      %363 = vperm.xlu0 %362, %v289
      %v364 = vpop.permute.xlu0 %363
      %367 = vset.pattern.permute.xlu0 0
      %368 = vperm.xlu0 %367, %v290
      %v369 = vpop.permute.xlu0 %368
      %372 = vset.pattern.permute.xlu0 0
      %373 = vperm.xlu0 %372, %v291
      %v374 = vpop.permute.xlu0 %373
      %377 = vset.pattern.permute.xlu0 0
      %378 = vperm.xlu0 %377, %v292
      %v379 = vpop.permute.xlu0 %378
      %382 = vset.pattern.permute.xlu0 0
      %383 = vperm.xlu0 %382, %v293
      %v384 = vpop.permute.xlu0 %383
      %387 = vset.pattern.permute.xlu0 0
      %388 = vperm.xlu0 %387, %v294
      %v389 = vpop.permute.xlu0 %388
      %392 = vset.pattern.permute.xlu0 0
      %393 = vperm.xlu0 %392, %v295
      %v394 = vpop.permute.xlu0 %393
      %397 = vset.pattern.permute.xlu0 0
      %398 = vperm.xlu0 %397, %v296
      %v399 = vpop.permute.xlu0 %398
      %402 = vset.pattern.permute.xlu0 0
      %403 = vperm.xlu0 %402, %v297
      %v404 = vpop.permute.xlu0 %403
      %407 = vset.pattern.permute.xlu0 0
      %408 = vperm.xlu0 %407, %v298
      %v409 = vpop.permute.xlu0 %408
      %412 = vset.pattern.permute.xlu0 0
      %413 = vperm.xlu0 %412, %v299
      %v414 = vpop.permute.xlu0 %413
      %417 = vset.pattern.permute.xlu0 0
      %418 = vperm.xlu0 %417, %v300
      %v419 = vpop.permute.xlu0 %418
      %422 = vset.pattern.permute.xlu0 0
      %423 = vperm.xlu0 %422, %v301
      %v424 = vpop.permute.xlu0 %423
      %427 = vset.pattern.permute.xlu0 0
      %428 = vperm.xlu0 %427, %v302
      %v429 = vpop.permute.xlu0 %428
      %432 = vset.pattern.permute.xlu0 0
      %433 = vperm.xlu0 %432, %v303
      %v434 = vpop.permute.xlu0 %433
      %437 = vset.pattern.permute.xlu0 0
      %438 = vperm.xlu0 %437, %v304
      %v439 = vpop.permute.xlu0 %438
      %442 = vset.pattern.permute.xlu0 0
      %443 = vperm.xlu0 %442, %v305
      %v444 = vpop.permute.xlu0 %443
      %447 = vset.pattern.permute.xlu0 0
      %448 = vperm.xlu0 %447, %v306
      %v449 = vpop.permute.xlu0 %448
      %452 = vset.pattern.permute.xlu0 0
      %453 = vperm.xlu0 %452, %v307
      %v454 = vpop.permute.xlu0 %453
      %457 = vset.pattern.permute.xlu0 0
      %458 = vperm.xlu0 %457, %v308
      %v459 = vpop.permute.xlu0 %458
      %462 = vset.pattern.permute.xlu0 0
      %463 = vperm.xlu0 %462, %v309
      %v464 = vpop.permute.xlu0 %463
      %467 = vset.pattern.permute.xlu0 0
      %468 = vperm.xlu0 %467, %v310
      %v469 = vpop.permute.xlu0 %468
      %472 = vset.pattern.permute.xlu0 0
      %473 = vperm.xlu0 %472, %v311
      %v474 = vpop.permute.xlu0 %473
      %477 = vset.pattern.permute.xlu0 0
      %478 = vperm.xlu0 %477, %v312
      %v479 = vpop.permute.xlu0 %478
      %482 = vset.pattern.permute.xlu0 0
      %483 = vperm.xlu0 %482, %v313
      %v484 = vpop.permute.xlu0 %483
      %487 = vset.pattern.permute.xlu0 0
      %488 = vperm.xlu0 %487, %v314
      %v489 = vpop.permute.xlu0 %488
      %492 = vset.pattern.permute.xlu0 0
      %493 = vperm.xlu0 %492, %v315
      %v494 = vpop.permute.xlu0 %493
      %497 = vset.pattern.permute.xlu0 0
      %498 = vperm.xlu0 %497, %v316
      %v499 = vpop.permute.xlu0 %498
      %502 = vset.pattern.permute.xlu0 0
      %503 = vperm.xlu0 %502, %v317
      %v504 = vpop.permute.xlu0 %503
      %507 = vset.pattern.permute.xlu0 0
      %508 = vperm.xlu0 %507, %v318
      %v509 = vpop.permute.xlu0 %508
      %512 = vset.pattern.permute.xlu0 0
      %513 = vperm.xlu0 %512, %v319
      %v514 = vpop.permute.xlu0 %513
      %517 = vset.pattern.permute.xlu0 0
      %518 = vperm.xlu0 %517, %v320
      %v519 = vpop.permute.xlu0 %518
      %522 = vset.pattern.permute.xlu0 0
      %523 = vperm.xlu0 %522, %v321
      %v524 = vpop.permute.xlu0 %523
      %527 = vset.pattern.permute.xlu0 0
      %528 = vperm.xlu0 %527, %v322
      %v529 = vpop.permute.xlu0 %528
      %532 = vset.pattern.permute.xlu0 0
      %533 = vperm.xlu0 %532, %v323
      %v534 = vpop.permute.xlu0 %533
      %537 = vset.pattern.permute.xlu0 0
      %538 = vperm.xlu0 %537, %v324
      %v539 = vpop.permute.xlu0 %538
      %542 = vset.pattern.permute.xlu0 0
      %543 = vperm.xlu0 %542, %v325
      %v544 = vpop.permute.xlu0 %543
      %547 = vset.pattern.permute.xlu0 0
      %548 = vperm.xlu0 %547, %v326
      %v549 = vpop.permute.xlu0 %548
      %552 = vset.pattern.permute.xlu0 0
      %553 = vperm.xlu0 %552, %v327
      %v554 = vpop.permute.xlu0 %553
      %557 = vset.pattern.permute.xlu0 0
      %558 = vperm.xlu0 %557, %v328
      %v559 = vpop.permute.xlu0 %558
      %562 = vset.pattern.permute.xlu0 0
      %563 = vperm.xlu0 %562, %v329
      %v564 = vpop.permute.xlu0 %563
      %567 = vset.pattern.permute.xlu0 0
      %568 = vperm.xlu0 %567, %v330
      %v569 = vpop.permute.xlu0 %568
      %v619 = vunpack.c.l.b16 %v234
      %v620 = vunpack.c.l.b16 %v235
      %v621 = vunpack.c.l.b16 %v236
      %v622 = vunpack.c.l.b16 %v237
      %v623 = vunpack.c.l.b16 %v238
      %v624 = vunpack.c.l.b16 %v239
      %v625 = vunpack.c.l.b16 %v240
      %v626 = vunpack.c.l.b16 %v241
      %v627 = vunpack.c.l.b16 %v242
      %v628 = vunpack.c.l.b16 %v243
      %v629 = vunpack.c.l.b16 %v244
      %v630 = vunpack.c.l.b16 %v245
      %v631 = vunpack.c.l.b16 %v246
      %v632 = vunpack.c.l.b16 %v247
      %v633 = vunpack.c.l.b16 %v248
      %v634 = vunpack.c.l.b16 %v249
      %v635 = vunpack.c.l.b16 %v250
      %v636 = vunpack.c.l.b16 %v251
      %v637 = vunpack.c.l.b16 %v252
      %v638 = vunpack.c.l.b16 %v253
      %v639 = vunpack.c.l.b16 %v254
      %v640 = vunpack.c.l.b16 %v255
      %v641 = vunpack.c.l.b16 %v256
      %v642 = vunpack.c.l.b16 %v257
      %v643 = vunpack.c.l.b16 %v258
      %v644 = vunpack.c.l.b16 %v259
      %v645 = vunpack.c.l.b16 %v260
      %v646 = vunpack.c.l.b16 %v261
      %v647 = vunpack.c.l.b16 %v262
      %v648 = vunpack.c.l.b16 %v263
      %v649 = vunpack.c.l.b16 %v264
      %v650 = vunpack.c.l.b16 %v265
      %v651 = vunpack.c.l.b16 %v266
      %v652 = vunpack.c.l.b16 %v267
      %v653 = vunpack.c.l.b16 %v268
      %v654 = vunpack.c.l.b16 %v269
      %v655 = vunpack.c.l.b16 %v270
      %v656 = vunpack.c.l.b16 %v271
      %v657 = vunpack.c.l.b16 %v272
      %v658 = vunpack.c.l.b16 %v273
      %v659 = vunpack.c.l.b16 %v274
      %v660 = vunpack.c.l.b16 %v275
      %v661 = vunpack.c.l.b16 %v276
      %v662 = vunpack.c.l.b16 %v277
      %v663 = vunpack.c.l.b16 %v278
      %v664 = vunpack.c.l.b16 %v279
      %v665 = vunpack.c.l.b16 %v280
      %v666 = vunpack.c.l.b16 %v281
      %v667 = vpack.c.b16 %v620, %v619
      %v668 = vpack.c.b16 %v622, %v621
      %v669 = vpack.c.b16 %v624, %v623
      %v670 = vpack.c.b16 %v626, %v625
      %v671 = vpack.c.b16 %v628, %v627
      %v672 = vpack.c.b16 %v630, %v629
      %v673 = vpack.c.b16 %v632, %v631
      %v674 = vpack.c.b16 %v634, %v633
      %v675 = vpack.c.b16 %v636, %v635
      %v676 = vpack.c.b16 %v638, %v637
      %v677 = vpack.c.b16 %v640, %v639
      %v678 = vpack.c.b16 %v642, %v641
      %v679 = vpack.c.b16 %v644, %v643
      %v680 = vpack.c.b16 %v646, %v645
      %v681 = vpack.c.b16 %v648, %v647
      %v682 = vpack.c.b16 %v650, %v649
      %v683 = vpack.c.b16 %v652, %v651
      %v684 = vpack.c.b16 %v654, %v653
      %v685 = vpack.c.b16 %v656, %v655
      %v686 = vpack.c.b16 %v658, %v657
      %v687 = vpack.c.b16 %v660, %v659
      %v688 = vpack.c.b16 %v662, %v661
      %v689 = vpack.c.b16 %v664, %v663
      %v690 = vpack.c.b16 %v666, %v665
      %vm691 = vcmask 64512
      %v693 = vsel %vm691, %v667, 0
      %v696 = vsel %vm691, %v668, 0
      %v699 = vsel %vm691, %v669, 0
      %v702 = vsel %vm691, %v670, 0
      %v705 = vsel %vm691, %v671, 0
      %v708 = vsel %vm691, %v672, 0
      %v711 = vsel %vm691, %v673, 0
      %v714 = vsel %vm691, %v674, 0
      %v717 = vsel %vm691, %v675, 0
      %v720 = vsel %vm691, %v676, 0
      %v723 = vsel %vm691, %v677, 0
      %v726 = vsel %vm691, %v678, 0
      %v729 = vsel %vm691, %v679, 0
      %v732 = vsel %vm691, %v680, 0
      %v735 = vsel %vm691, %v681, 0
      %v738 = vsel %vm691, %v682, 0
      %v741 = vsel %vm691, %v683, 0
      %v744 = vsel %vm691, %v684, 0
      %v747 = vsel %vm691, %v685, 0
      %v750 = vsel %vm691, %v686, 0
      %v753 = vsel %vm691, %v687, 0
      %v756 = vsel %vm691, %v688, 0
      %v759 = vsel %vm691, %v689, 0
      %v762 = vsel %vm691, %v690, 0
      %vm764 = vcmask 1043456
      %v766 = vsel %vm764, %v282, 0
      %768 = vmatprep.subr.bf16.mxu0 0
      %769 = vmatpush1.bf16.msra.mxu0 %v766
      %770 = vmatprep.subr.bf16.mxu0 0
      %771 = vmatpush1.bf16.msra.mxu0 0
      %772 = vmatprep.subr.bf16.mxu0 0
      %773 = vmatpush1.bf16.msra.mxu0 0
      %774 = vmatprep.subr.bf16.mxu0 0
      %775 = vmatpush1.bf16.msra.mxu0 0
      %776 = vmatprep.subr.bf16.mxu0 0
      %777 = vmatpush1.bf16.msra.mxu0 0
      %778 = vmatprep.subr.bf16.mxu0 0
      %779 = vmatpush1.bf16.msra.mxu0 0
      %780 = vmatprep.subr.bf16.mxu0 0
      %781 = vmatpush1.bf16.msra.mxu0 0
      %782 = vmatprep.subr.bf16.mxu0 0
      %783 = vmatpush1.bf16.msra.mxu0 0
      %784 = vmatprep.subr.bf16.mxu0 0
      %785 = vmatpush1.bf16.msra.mxu0 0
      %786 = vmatprep.subr.bf16.mxu0 0
      %787 = vmatpush1.bf16.msra.mxu0 0
      %788 = vmatprep.subr.bf16.mxu0 0
      %789 = vmatpush1.bf16.msra.mxu0 0
      %790 = vmatprep.subr.bf16.mxu0 0
      %791 = vmatpush1.bf16.msra.mxu0 0
      %792 = vmatprep.subr.bf16.mxu0 0
      %793 = vmatpush1.bf16.msra.mxu0 0
      %794 = vmatprep.subr.bf16.mxu0 0
      %795 = vmatpush1.bf16.msra.mxu0 0
      %796 = vmatprep.subr.bf16.mxu0 0
      %797 = vmatpush1.bf16.msra.mxu0 0
      %798 = vmatprep.subr.bf16.mxu0 0
      %799 = vmatpush1.bf16.msra.mxu0 0
      %800 = vmatprep.mubr.bf16.mxu0 0
      %801 = vmatmul.mubr.bf16.gmra.mrb[0].mxu0 %v693
      %v802 = vpop.f32.mrb[0].mxu0
      %v803 = vadd.f32 %v334, %v802
      %v804 = vpop.f32.mrb[0].mxu0
      %v805 = vpop.f32.mrb[0].mxu0
      %v806 = vadd.f32 %v339, %v805
      %v807 = vpop.f32.mrb[0].mxu0
      %808 = vmatprep.mubr.bf16.mxu0 0
      %809 = vmatmul.mubr.bf16.gmra.mrb[0].mxu0 %v696
      %v810 = vpop.f32.mrb[0].mxu0
      %v811 = vadd.f32 %v344, %v810
      %v812 = vpop.f32.mrb[0].mxu0
      %v813 = vpop.f32.mrb[0].mxu0
      %v814 = vadd.f32 %v349, %v813
      %v815 = vpop.f32.mrb[0].mxu0
      %816 = vmatprep.mubr.bf16.mxu0 0
      %817 = vmatmul.mubr.bf16.gmra.mrb[0].mxu0 %v699
      %v818 = vpop.f32.mrb[0].mxu0
      %v819 = vadd.f32 %v354, %v818
      %v820 = vpop.f32.mrb[0].mxu0
      %v821 = vpop.f32.mrb[0].mxu0
      %v822 = vadd.f32 %v359, %v821
      %v823 = vpop.f32.mrb[0].mxu0
      %824 = vmatprep.mubr.bf16.mxu0 0
      %825 = vmatmul.mubr.bf16.gmra.mrb[0].mxu0 %v702
      %v826 = vpop.f32.mrb[0].mxu0
      %v827 = vadd.f32 %v364, %v826
      %v828 = vpop.f32.mrb[0].mxu0
      %v829 = vpop.f32.mrb[0].mxu0
      %v830 = vadd.f32 %v369, %v829
      %v831 = vpop.f32.mrb[0].mxu0
      %832 = vmatprep.mubr.bf16.mxu0 0
      %833 = vmatmul.mubr.bf16.gmra.mrb[0].mxu0 %v705
      %v834 = vpop.f32.mrb[0].mxu0
      %v835 = vadd.f32 %v374, %v834
      %v836 = vpop.f32.mrb[0].mxu0
      %v837 = vpop.f32.mrb[0].mxu0
      %v838 = vadd.f32 %v379, %v837
      %v839 = vpop.f32.mrb[0].mxu0
      %840 = vmatprep.mubr.bf16.mxu0 0
      %841 = vmatmul.mubr.bf16.gmra.mrb[0].mxu0 %v708
      %v842 = vpop.f32.mrb[0].mxu0
      %v843 = vadd.f32 %v384, %v842
      %v844 = vpop.f32.mrb[0].mxu0
      %v845 = vpop.f32.mrb[0].mxu0
      %v846 = vadd.f32 %v389, %v845
      %v847 = vpop.f32.mrb[0].mxu0
      %848 = vmatprep.mubr.bf16.mxu0 0
      %849 = vmatmul.mubr.bf16.gmra.mrb[0].mxu0 %v711
      %v850 = vpop.f32.mrb[0].mxu0
      %v851 = vadd.f32 %v394, %v850
      %v852 = vpop.f32.mrb[0].mxu0
      %v853 = vpop.f32.mrb[0].mxu0
      %v854 = vadd.f32 %v399, %v853
      %v855 = vpop.f32.mrb[0].mxu0
      %856 = vmatprep.mubr.bf16.mxu0 0
      %857 = vmatmul.mubr.bf16.gmra.mrb[0].mxu0 %v714
      %v858 = vpop.f32.mrb[0].mxu0
      %v859 = vadd.f32 %v404, %v858
      %v860 = vpop.f32.mrb[0].mxu0
      %v861 = vpop.f32.mrb[0].mxu0
      %v862 = vadd.f32 %v409, %v861
      %v863 = vpop.f32.mrb[0].mxu0
      %864 = vmatprep.mubr.bf16.mxu0 0
      %865 = vmatmul.mubr.bf16.gmra.mrb[0].mxu0 %v717
      %v866 = vpop.f32.mrb[0].mxu0
      %v867 = vadd.f32 %v414, %v866
      %v868 = vpop.f32.mrb[0].mxu0
      %v869 = vpop.f32.mrb[0].mxu0
      %v870 = vadd.f32 %v419, %v869
      %v871 = vpop.f32.mrb[0].mxu0
      %872 = vmatprep.mubr.bf16.mxu0 0
      %873 = vmatmul.mubr.bf16.gmra.mrb[0].mxu0 %v720
      %v874 = vpop.f32.mrb[0].mxu0
      %v875 = vadd.f32 %v424, %v874
      %v876 = vpop.f32.mrb[0].mxu0
      %v877 = vpop.f32.mrb[0].mxu0
      %v878 = vadd.f32 %v429, %v877
      %v879 = vpop.f32.mrb[0].mxu0
      %880 = vmatprep.mubr.bf16.mxu0 0
      %881 = vmatmul.mubr.bf16.gmra.mrb[0].mxu0 %v723
      %v882 = vpop.f32.mrb[0].mxu0
      %v883 = vadd.f32 %v434, %v882
      %v884 = vpop.f32.mrb[0].mxu0
      %v885 = vpop.f32.mrb[0].mxu0
      %v886 = vadd.f32 %v439, %v885
      %v887 = vpop.f32.mrb[0].mxu0
      %888 = vmatprep.mubr.bf16.mxu0 0
      %889 = vmatmul.mubr.bf16.gmra.mrb[0].mxu0 %v726
      %v890 = vpop.f32.mrb[0].mxu0
      %v891 = vadd.f32 %v444, %v890
      %v892 = vpop.f32.mrb[0].mxu0
      %v893 = vpop.f32.mrb[0].mxu0
      %v894 = vadd.f32 %v449, %v893
      %v895 = vpop.f32.mrb[0].mxu0
      %896 = vmatprep.mubr.bf16.mxu0 0
      %897 = vmatmul.mubr.bf16.gmra.mrb[0].mxu0 %v729
      %v898 = vpop.f32.mrb[0].mxu0
      %v899 = vadd.f32 %v454, %v898
      %v900 = vpop.f32.mrb[0].mxu0
      %v901 = vpop.f32.mrb[0].mxu0
      %v902 = vadd.f32 %v459, %v901
      %v903 = vpop.f32.mrb[0].mxu0
      %904 = vmatprep.mubr.bf16.mxu0 0
      %905 = vmatmul.mubr.bf16.gmra.mrb[0].mxu0 %v732
      %v906 = vpop.f32.mrb[0].mxu0
      %v907 = vadd.f32 %v464, %v906
      %v908 = vpop.f32.mrb[0].mxu0
      %v909 = vpop.f32.mrb[0].mxu0
      %v910 = vadd.f32 %v469, %v909
      %v911 = vpop.f32.mrb[0].mxu0
      %912 = vmatprep.mubr.bf16.mxu0 0
      %913 = vmatmul.mubr.bf16.gmra.mrb[0].mxu0 %v735
      %v914 = vpop.f32.mrb[0].mxu0
      %v915 = vadd.f32 %v474, %v914
      %v916 = vpop.f32.mrb[0].mxu0
      %v917 = vpop.f32.mrb[0].mxu0
      %v918 = vadd.f32 %v479, %v917
      %v919 = vpop.f32.mrb[0].mxu0
      %920 = vmatprep.mubr.bf16.mxu0 0
      %921 = vmatmul.mubr.bf16.gmra.mrb[0].mxu0 %v738
      %v922 = vpop.f32.mrb[0].mxu0
      %v923 = vadd.f32 %v484, %v922
      %v924 = vpop.f32.mrb[0].mxu0
      %v925 = vpop.f32.mrb[0].mxu0
      %v926 = vadd.f32 %v489, %v925
      %v927 = vpop.f32.mrb[0].mxu0
      %928 = vmatprep.mubr.bf16.mxu0 0
      %929 = vmatmul.mubr.bf16.gmra.mrb[0].mxu0 %v741
      %v930 = vpop.f32.mrb[0].mxu0
      %v931 = vadd.f32 %v494, %v930
      %v932 = vpop.f32.mrb[0].mxu0
      %v933 = vpop.f32.mrb[0].mxu0
      %v934 = vadd.f32 %v499, %v933
      %v935 = vpop.f32.mrb[0].mxu0
      %936 = vmatprep.mubr.bf16.mxu0 0
      %937 = vmatmul.mubr.bf16.gmra.mrb[0].mxu0 %v744
      %v938 = vpop.f32.mrb[0].mxu0
      %v939 = vadd.f32 %v504, %v938
      %v940 = vpop.f32.mrb[0].mxu0
      %v941 = vpop.f32.mrb[0].mxu0
      %v942 = vadd.f32 %v509, %v941
      %v943 = vpop.f32.mrb[0].mxu0
      %944 = vmatprep.mubr.bf16.mxu0 0
      %945 = vmatmul.mubr.bf16.gmra.mrb[0].mxu0 %v747
      %v946 = vpop.f32.mrb[0].mxu0
      %v947 = vadd.f32 %v514, %v946
      %v948 = vpop.f32.mrb[0].mxu0
      %v949 = vpop.f32.mrb[0].mxu0
      %v950 = vadd.f32 %v519, %v949
      %v951 = vpop.f32.mrb[0].mxu0
      %952 = vmatprep.mubr.bf16.mxu0 0
      %953 = vmatmul.mubr.bf16.gmra.mrb[0].mxu0 %v750
      %v954 = vpop.f32.mrb[0].mxu0
      %v955 = vadd.f32 %v524, %v954
      %v956 = vpop.f32.mrb[0].mxu0
      %v957 = vpop.f32.mrb[0].mxu0
      %v958 = vadd.f32 %v529, %v957
      %v959 = vpop.f32.mrb[0].mxu0
      %960 = vmatprep.mubr.bf16.mxu0 0
      %961 = vmatmul.mubr.bf16.gmra.mrb[0].mxu0 %v753
      %v962 = vpop.f32.mrb[0].mxu0
      %v963 = vadd.f32 %v534, %v962
      %v964 = vpop.f32.mrb[0].mxu0
      %v965 = vpop.f32.mrb[0].mxu0
      %v966 = vadd.f32 %v539, %v965
      %v967 = vpop.f32.mrb[0].mxu0
      %968 = vmatprep.mubr.bf16.mxu0 0
      %969 = vmatmul.mubr.bf16.gmra.mrb[0].mxu0 %v756
      %v970 = vpop.f32.mrb[0].mxu0
      %v971 = vadd.f32 %v544, %v970
      %v972 = vpop.f32.mrb[0].mxu0
      %v973 = vpop.f32.mrb[0].mxu0
      %v974 = vadd.f32 %v549, %v973
      %v975 = vpop.f32.mrb[0].mxu0
      %976 = vmatprep.mubr.bf16.mxu0 0
      %977 = vmatmul.mubr.bf16.gmra.mrb[0].mxu0 %v759
      %v978 = vpop.f32.mrb[0].mxu0
      %v979 = vadd.f32 %v554, %v978
      %v980 = vpop.f32.mrb[0].mxu0
      %v981 = vpop.f32.mrb[0].mxu0
      %v982 = vadd.f32 %v559, %v981
      %v983 = vpop.f32.mrb[0].mxu0
      %984 = vmatprep.mubr.bf16.mxu0 0
      %985 = vmatmul.mubr.bf16.gmra.mrb[0].mxu0 %v762
      %v986 = vpop.f32.mrb[0].mxu0
      %v987 = vadd.f32 %v564, %v986
      %v988 = vpop.f32.mrb[0].mxu0
      %v989 = vpop.f32.mrb[0].mxu0
      %v990 = vadd.f32 %v569, %v989
      %v991 = vpop.f32.mrb[0].mxu0
      %992 = vdwg.mxu0
      %vm993 = vcmask 261120
      %994 = vst.msk [vmem:[%s231] sm:$0xff] %vm993, %v803
      %995 = vst.msk [vmem:[%s231 + $0x8] sm:$0xff] %vm993, %v806
      %996 = vst.msk [vmem:[%s231 + $0x10] sm:$0xff] %vm993, %v811
      %997 = vst.msk [vmem:[%s231 + $0x18] sm:$0xff] %vm993, %v814
      %998 = vst.msk [vmem:[%s231 + $0x20] sm:$0xff] %vm993, %v819
      %999 = vst.msk [vmem:[%s231 + $0x28] sm:$0xff] %vm993, %v822
      %1000 = vst.msk [vmem:[%s231 + $0x30] sm:$0xff] %vm993, %v827
      %1001 = vst.msk [vmem:[%s231 + $0x38] sm:$0xff] %vm993, %v830
      %1002 = vst.msk [vmem:[%s231 + $0x40] sm:$0xff] %vm993, %v835
      %1003 = vst.msk [vmem:[%s231 + $0x48] sm:$0xff] %vm993, %v838
      %1004 = vst.msk [vmem:[%s231 + $0x50] sm:$0xff] %vm993, %v843
      %1005 = vst.msk [vmem:[%s231 + $0x58] sm:$0xff] %vm993, %v846
      %1006 = vst.msk [vmem:[%s231 + $0x60] sm:$0xff] %vm993, %v851
      %1007 = vst.msk [vmem:[%s231 + $0x68] sm:$0xff] %vm993, %v854
      %1008 = vst.msk [vmem:[%s231 + $0x70] sm:$0xff] %vm993, %v859
      %1009 = vst.msk [vmem:[%s231 + $0x78] sm:$0xff] %vm993, %v862
      %1010 = vst.msk [vmem:[%s231 + $0x80] sm:$0xff] %vm993, %v867
      %1011 = vst.msk [vmem:[%s231 + $0x88] sm:$0xff] %vm993, %v870
      %1012 = vst.msk [vmem:[%s231 + $0x90] sm:$0xff] %vm993, %v875
      %1013 = vst.msk [vmem:[%s231 + $0x98] sm:$0xff] %vm993, %v878
      %1014 = vst.msk [vmem:[%s231 + $0xa0] sm:$0xff] %vm993, %v883
      %1015 = vst.msk [vmem:[%s231 + $0xa8] sm:$0xff] %vm993, %v886
      %1016 = vst.msk [vmem:[%s231 + $0xb0] sm:$0xff] %vm993, %v891
      %1017 = vst.msk [vmem:[%s231 + $0xb8] sm:$0xff] %vm993, %v894
      %1018 = vst.msk [vmem:[%s231 + $0xc0] sm:$0xff] %vm993, %v899
      %1019 = vst.msk [vmem:[%s231 + $0xc8] sm:$0xff] %vm993, %v902
      %1020 = vst.msk [vmem:[%s231 + $0xd0] sm:$0xff] %vm993, %v907
      %1021 = vst.msk [vmem:[%s231 + $0xd8] sm:$0xff] %vm993, %v910
      %1022 = vst.msk [vmem:[%s231 + $0xe0] sm:$0xff] %vm993, %v915
      %1023 = vst.msk [vmem:[%s231 + $0xe8] sm:$0xff] %vm993, %v918
      %1024 = vst.msk [vmem:[%s231 + $0xf0] sm:$0xff] %vm993, %v923
      %1025 = vst.msk [vmem:[%s231 + $0xf8] sm:$0xff] %vm993, %v926
      %1026 = vst.msk [vmem:[%s231 + $0x100] sm:$0xff] %vm993, %v931
      %1027 = vst.msk [vmem:[%s231 + $0x108] sm:$0xff] %vm993, %v934
      %1028 = vst.msk [vmem:[%s231 + $0x110] sm:$0xff] %vm993, %v939
      %1029 = vst.msk [vmem:[%s231 + $0x118] sm:$0xff] %vm993, %v942
      %1030 = vst.msk [vmem:[%s231 + $0x120] sm:$0xff] %vm993, %v947
      %1031 = vst.msk [vmem:[%s231 + $0x128] sm:$0xff] %vm993, %v950
      %1032 = vst.msk [vmem:[%s231 + $0x130] sm:$0xff] %vm993, %v955
      %1033 = vst.msk [vmem:[%s231 + $0x138] sm:$0xff] %vm993, %v958
      %1034 = vst.msk [vmem:[%s231 + $0x140] sm:$0xff] %vm993, %v963
      %1035 = vst.msk [vmem:[%s231 + $0x148] sm:$0xff] %vm993, %v966
      %1036 = vst.msk [vmem:[%s231 + $0x150] sm:$0xff] %vm993, %v971
      %1037 = vst.msk [vmem:[%s231 + $0x158] sm:$0xff] %vm993, %v974
      %1038 = vst.msk [vmem:[%s231 + $0x160] sm:$0xff] %vm993, %v979
      %1039 = vst.msk [vmem:[%s231 + $0x168] sm:$0xff] %vm993, %v982
      %1040 = vst.msk [vmem:[%s231 + $0x170] sm:$0xff] %vm993, %v987
      %1041 = vst.msk [vmem:[%s231 + $0x178] sm:$0xff] %vm993, %v990
      %s1042 = smul.u32 48, %s18
      %p1043 = scmp.lt.s32.totalorder %s1042, 95
      %s1044 = scalar_select %p1043, %s1042, 95
      %p1045 = scmp.lt.s32.totalorder %s19, 0
      %s1046 = scalar_select %p1045, %s19, 0
      %s1047 = sadd.s32 %s1046, %s1044
      %s1048 = smul.addr %s1047, 8
      %s1049 = scalar_lea.vmem %s3, %s1048
      // Predicated region
      $region33: #{sr_projection_forward.12} parent=31 // pred_check
        %p1050 = pneg %p124
      $region34: #{sr_projection_forward.12} parent=31 // pred_check_branch
        %1052 = sbr.rel (%p1050) target = $region36
      $region35: #{sr_projection_forward.12} parent=31 // pred_region
        %s1053 = smul.u32 48, %s18
      $region36: #{sr_projection_forward.12} parent=31 // pred_fallthru
        _
    $region32: #{sr_projection_forward.12} parent=5 // pred_fallthru
      _
    %p1054 = scmp.le.s32.totalorder 2, %s9
    // Predicated region
    $region37: #{sr_projection_forward.12} parent=5 // pred_check
      %p1055 = pneg %p1054
    $region38: #{sr_projection_forward.12} parent=5 // pred_check_branch
      %1057 = sbr.rel (%p1055) target = $region40
    $region39: #{sr_projection_forward.12} parent=5 // pred_region
      %s1058 = ssub.s32 %s9, 2
      // Predicated region
      $region41: #{sr_projection_forward.12} parent=39 // pred_check
        %p1059 = pneg %p130
      $region42: #{sr_projection_forward.12} parent=39 // pred_check_branch
        %1061 = sbr.rel (%p1059) target = $region44
      $region43: #{sr_projection_forward.12} parent=39 // pred_region
        %s1062 = smul.u32 48, %s20
        %p1063 = scmp.lt.s32.totalorder %s1062, 95
        %s1064 = scalar_select %p1063, %s1062, 95
        %p1065 = scmp.lt.s32.totalorder %s21, 0
        %s1066 = scalar_select %p1065, %s21, 0
        %s1067 = sadd.s32 %s1066, %s1064
        %s1068 = smul.addr %s1067, 8
        %s1069 = scalar_lea.vmem %s3, %s1068
      $region44: #{sr_projection_forward.12} parent=39 // pred_fallthru
        _
    $region40: #{sr_projection_forward.12} parent=5 // pred_fallthru
      _
  $region6: #{sr_projection_forward.12} parent=0 // loop_footer
    %s13 = sadd.s32 1, %s9
  $region7: #{sr_projection_forward.12} parent=0 // loop_footer_branch
    %8 = sbr.rel target = $region3
  $region8: #{sr_projection_forward.12} parent=0 // loop_exit
    _

// kernel: sr_projection_forward.20
$region0: #{sr_projection_forward.20}
  #allocation0 [shape = 'u32[]', space=smem, size = 0x4, offset = 0x4, fixed_abs, tag = 'smem constant byte address 0x4 - core index']
  #allocation1 [shape = 'u32[144,128]{1,0:T(1,128)}', space=vmem, size = 0x12000, scoped, tag = 'internal scratch']
  %s0 = inlined_call_operand.vmem [shape: bf16[32,8], index: 0, kind: input, shape index: {}]
  %s1 = inlined_call_operand.vmem [shape: bf16[8,3072], index: 1, kind: input, shape index: {}]
  %s2 = inlined_call_operand.vmem [shape: f32[32,1], index: 2, kind: input, shape index: {}]
  %s3 = inlined_call_operand.vmem [shape: f32[32,3072], index: 3, kind: output, shape index: {}]
  %s4 = sld [smem:[#allocation0]]
  $region64: #{sr_projection_forward.20} parent=0
    _
  %s6 = ssub.s32 1, %s4
  %s7 = scalar_select 0, %s6, %s4
  $region1: #{sr_projection_forward.20} parent=0
    #allocation2 [shape = 'u8[393216]{0}', space=vmem, size = 0x60000, scoped, tag = 'output window, operand 0']
    loop: start=0, step=1, limit=4
    $region2: #{sr_projection_forward.20} parent=1 // loop_pre_header
      _
    $region3: #{sr_projection_forward.20} parent=1 // loop_header
      %s9 = sphi 0, %s13
      %p10 = scmp.ge.s32.totalorder %s9, 4
      %s16 = sphi 0, %s28
      %s17 = sphi 0, %s24
      %s18 = sphi 0, %s16
      %s19 = sphi 0, %s17
      %s20 = sphi 0, %s18
      %s21 = sphi 0, %s19
      %s31 = sphi 0, %s33
      %s34 = sphi 0, %s31
      %s35 = sphi 0, %s34
      %s51 = sphi 0, %s35
      %s57 = sphi 0, %s59
      %s60 = sphi 0, %s57
      %s61 = sphi 0, %s60
      %s77 = sphi 0, %s61
      %s83 = sphi 0, %s85
      %s86 = sphi 0, %s83
      %s87 = sphi 0, %s86
      %s103 = sphi 0, %s87
      %s111 = sphi 0, %s113
      %s114 = sphi 0, %s111
      %s115 = sphi 0, %s114
      %s131 = sphi 0, %s115
    $region4: #{sr_projection_forward.20} parent=1 // loop_header_branch
      %12 = sbr.rel (%p10) target = $region8
    $region5: #{sr_projection_forward.20} parent=1 // loop_body
      %s14 = ssub.s32 %s9, 1
      %s15 = ssub.s32 %s9, 2
      %s22 = sadd.s32 1, %s17
      %p23 = scmp.ge.s32.totalorder %s22, 2
      %s24 = scalar_select %p23, 0, %s22
      %s25 = sadd.s32 1, %s16
      %s26 = scalar_select %p23, %s25, %s16
      %p27 = scmp.ge.s32.totalorder %s26, 1
      %s28 = scalar_select %p27, 0, %s26
      %s29 = ssub.s32 %s16, %s28
      %p30 = scmp.eq.s32.totalorder %s29, 0
      %s32 = sadd.s32 %s31, 1
      %s33 = scalar_select %p30, %s31, %s32
      %p36 = pneg %p30
      %p37 = scmp.eq.s32.totalorder %s9, 1
      %p38 = por %p36, %p37
      %p39 = scmp.ne.s32.totalorder %s31, %s34
      %p40 = scmp.eq.s32.totalorder %s9, 0
      %p41 = por %p39, %p40
      %p42 = scmp.ne.s32.totalorder %s31, %s34
      %p43 = scmp.eq.s32.totalorder %s14, 1
      %p44 = por %p42, %p43
      %p45 = scmp.ne.s32.totalorder %s34, %s35
      %p46 = scmp.eq.s32.totalorder %s14, 0
      %p47 = por %p45, %p46
      %p48 = scmp.ne.s32.totalorder %s34, %s35
      %p49 = scmp.eq.s32.totalorder %s15, 1
      %p50 = por %p48, %p49
      %p52 = scmp.ne.s32.totalorder %s35, %s51
      %p53 = scmp.eq.s32.totalorder %s15, 0
      %p54 = por %p52, %p53
      %s55 = ssub.s32 %s17, %s24
      %p56 = scmp.eq.s32.totalorder %s55, 0
      %s58 = sadd.s32 %s57, 1
      %s59 = scalar_select %p56, %s57, %s58
      %p62 = pneg %p56
      %p63 = scmp.eq.s32.totalorder %s9, 1
      %p64 = por %p62, %p63
      %p65 = scmp.ne.s32.totalorder %s57, %s60
      %p66 = scmp.eq.s32.totalorder %s9, 0
      %p67 = por %p65, %p66
      %p68 = scmp.ne.s32.totalorder %s57, %s60
      %p69 = scmp.eq.s32.totalorder %s14, 1
      %p70 = por %p68, %p69
      %p71 = scmp.ne.s32.totalorder %s60, %s61
      %p72 = scmp.eq.s32.totalorder %s14, 0
      %p73 = por %p71, %p72
      %p74 = scmp.ne.s32.totalorder %s60, %s61
      %p75 = scmp.eq.s32.totalorder %s15, 1
      %p76 = por %p74, %p75
      %p78 = scmp.ne.s32.totalorder %s61, %s77
      %p79 = scmp.eq.s32.totalorder %s15, 0
      %p80 = por %p78, %p79
      %s81 = ssub.s32 %s16, %s28
      %p82 = scmp.eq.s32.totalorder %s81, 0
      %s84 = sadd.s32 %s83, 1
      %s85 = scalar_select %p82, %s83, %s84
      %p88 = pneg %p82
      %p89 = scmp.eq.s32.totalorder %s9, 1
      %p90 = por %p88, %p89
      %p91 = scmp.ne.s32.totalorder %s83, %s86
      %p92 = scmp.eq.s32.totalorder %s9, 0
      %p93 = por %p91, %p92
      %p94 = scmp.ne.s32.totalorder %s83, %s86
      %p95 = scmp.eq.s32.totalorder %s14, 1
      %p96 = por %p94, %p95
      %p97 = scmp.ne.s32.totalorder %s86, %s87
      %p98 = scmp.eq.s32.totalorder %s14, 0
      %p99 = por %p97, %p98
      %p100 = scmp.ne.s32.totalorder %s86, %s87
      %p101 = scmp.eq.s32.totalorder %s15, 1
      %p102 = por %p100, %p101
      %p104 = scmp.ne.s32.totalorder %s87, %s103
      %p105 = scmp.eq.s32.totalorder %s15, 0
      %p106 = por %p104, %p105
      %s107 = ssub.s32 %s16, %s28
      %s108 = ssub.s32 %s17, %s24
      %s109 = sor.u32 %s107, %s108
      %p110 = scmp.eq.s32.totalorder %s109, 0
      %s112 = sadd.s32 %s111, 1
      %s113 = scalar_select %p110, %s111, %s112
      %p116 = pneg %p110
      %p117 = scmp.eq.s32.totalorder %s9, 1
      %p118 = por %p116, %p117
      %p119 = scmp.ne.s32.totalorder %s111, %s114
      %p120 = scmp.eq.s32.totalorder %s9, 0
      %p121 = por %p119, %p120
      %p122 = scmp.ne.s32.totalorder %s111, %s114
      %p123 = scmp.eq.s32.totalorder %s14, 1
      %p124 = por %p122, %p123
      %p125 = scmp.ne.s32.totalorder %s114, %s115
      %p126 = scmp.eq.s32.totalorder %s14, 0
      %p127 = por %p125, %p126
      %p128 = scmp.ne.s32.totalorder %s114, %s115
      %p129 = scmp.eq.s32.totalorder %s15, 1
      %p130 = por %p128, %p129
      %p132 = scmp.ne.s32.totalorder %s115, %s131
      %p133 = scmp.eq.s32.totalorder %s15, 0
      %p134 = por %p132, %p133
      %p135 = scmp.le.s32.totalorder 1, %s9
      %p136 = scmp.lt.s32.totalorder %s9, 3
      %p137 = pnand %p135, %p136
      %p138 = pneg %p137
      // Predicated region
      $region9: #{sr_projection_forward.20} parent=5 // pred_check
        _
      $region10: #{sr_projection_forward.20} parent=5 // pred_check_branch
        %140 = sbr.rel (%p137) target = $region12
      $region11: #{sr_projection_forward.20} parent=5 // pred_region
        %s141 = ssub.s32 %s9, 1
        // Predicated region
        $region13: #{sr_projection_forward.20} parent=11 // pred_check
          %p142 = pneg %p47
        $region14: #{sr_projection_forward.20} parent=11 // pred_check_branch
          %144 = sbr.rel (%p142) target = $region16
        $region15: #{sr_projection_forward.20} parent=11 // pred_region
          %s145 = smul.u32 4, %s18
          %p146 = scmp.lt.s32.totalorder %s145, 3
          %s147 = scalar_select %p146, %s145, 3
          %s148 = smul.addr %s147, 4
          %s149 = scalar_lea.vmem %s0, %s148
          %s150 = smul.u32 4, %s18
        $region16: #{sr_projection_forward.20} parent=11 // pred_fallthru
          _
        // Predicated region
        $region17: #{sr_projection_forward.20} parent=11 // pred_check
          %p151 = pneg %p99
        $region18: #{sr_projection_forward.20} parent=11 // pred_check_branch
          %153 = sbr.rel (%p151) target = $region20
        $region19: #{sr_projection_forward.20} parent=11 // pred_region
          %s154 = smul.u32 4, %s18
          %p155 = scmp.lt.s32.totalorder %s154, 3
          %s156 = scalar_select %p155, %s154, 3
          %s157 = smul.addr %s156, 8
          %s158 = scalar_lea.vmem %s2, %s157
          %s159 = smul.u32 4, %s18
        $region20: #{sr_projection_forward.20} parent=11 // pred_fallthru
          _
      $region12: #{sr_projection_forward.20} parent=5 // pred_fallthru
        _
      %p160 = scmp.lt.s32.totalorder %s9, 2
      // Predicated region
      $region21: #{sr_projection_forward.20} parent=5 // pred_check
        %p161 = pneg %p160
      $region22: #{sr_projection_forward.20} parent=5 // pred_check_branch
        %163 = sbr.rel (%p161) target = $region24
      $region23: #{sr_projection_forward.20} parent=5 // pred_region
        // Predicated region
        $region25: #{sr_projection_forward.20} parent=23 // pred_check
          %p164 = pneg %p67
        $region26: #{sr_projection_forward.20} parent=23 // pred_check_branch
          %166 = sbr.rel (%p164) target = $region28
        $region27: #{sr_projection_forward.20} parent=23 // pred_region
          %s167 = smul.u32 12, %s17
          %p168 = scmp.lt.s32.totalorder %s167, 23
          %s169 = scalar_select %p168, %s167, 23
          %s170 = smul.addr %s169, 4
          %s171 = scalar_lea.vmem %s1, %s170
          %s172 = smul.u32 12, %s17
        $region28: #{sr_projection_forward.20} parent=23 // pred_fallthru
          _
      $region24: #{sr_projection_forward.20} parent=5 // pred_fallthru
        _
      %p173 = scmp.le.s32.totalorder 1, %s9
      %p174 = scmp.lt.s32.totalorder %s9, 3
      %p175 = pnand %p173, %p174
      %p176 = pneg %p175
      // Predicated region
      $region29: #{sr_projection_forward.20} parent=5 // pred_check
        _
      $region30: #{sr_projection_forward.20} parent=5 // pred_check_branch
        %178 = sbr.rel (%p175) target = $region32
      $region31: #{sr_projection_forward.20} parent=5 // pred_region
        %s179 = ssub.s32 %s9, 1
        %s180 = smul.u32 4, %s18
        %p181 = scmp.lt.s32.totalorder %s180, 3
        %s182 = scalar_select %p181, %s180, 3
        %s183 = smul.addr %s182, 4
        %s184 = scalar_lea.vmem %s0, %s183
        %p185 = pneg %p47
        %p186 = pneg %p44
        %s187 = smul.u32 12, %s19
        %p188 = scmp.lt.s32.totalorder %s187, 23
        %s189 = scalar_select %p188, %s187, 23
        %s190 = smul.addr %s189, 4
        %s191 = scalar_lea.vmem %s1, %s190
        %p192 = pneg %p73
        %p193 = pneg %p70
        %s194 = smul.u32 4, %s18
        %p195 = scmp.lt.s32.totalorder %s194, 3
        %s196 = scalar_select %p195, %s194, 3
        %s197 = smul.addr %s196, 8
        %s198 = scalar_lea.vmem %s2, %s197
        %p199 = pneg %p99
        %p200 = pneg %p96
        %p201 = pneg %p127
        %p202 = pneg %p124
        %s203 = sand.u32 %s114, 1
        %s204 = sand.u32 %s114, 1
        %s205 = smul.addr %s204, 384
        %s206 = scalar_lea.vmem [#allocation2], %s205
        %s207 = smul.u32 4, %s18
        %p208 = scmp.lt.s32.totalorder %s207, 3
        %s209 = scalar_select %p208, %s207, 3
        %s210 = smul.addr %s209, 4
        %s211 = scalar_lea.vmem %s0, %s210
        %s212 = smul.u32 4, %s18
        %s213 = smul.u32 12, %s19
        %p214 = scmp.lt.s32.totalorder %s213, 23
        %s215 = scalar_select %p214, %s213, 23
        %s216 = smul.addr %s215, 4
        %s217 = scalar_lea.vmem %s1, %s216
        %s218 = smul.u32 12, %s19
        %s219 = smul.u32 4, %s18
        %p220 = scmp.lt.s32.totalorder %s219, 3
        %s221 = scalar_select %p220, %s219, 3
        %s222 = smul.addr %s221, 8
        %s223 = scalar_lea.vmem %s2, %s222
        %s224 = smul.u32 4, %s18
        %s225 = smul.u32 4, %s18
        %s226 = smul.u32 12, %s19
        %v228 = vld [vmem:[%s211] sm:$0xf]
        %v229 = vld [vmem:[%s211 + $0x4] sm:$0xf]
        %v230 = vld [vmem:[%s211 + $0x8] sm:$0xf]
        %v231 = vld [vmem:[%s211 + $0xc] sm:$0xf]
        %v232 = vld [vmem:[%s217] sm:$0xff]
        %v233 = vld [vmem:[%s217 + $0x8] sm:$0xff]
        %v234 = vld [vmem:[%s217 + $0x10] sm:$0xff]
        %v235 = vld [vmem:[%s217 + $0x18] sm:$0xff]
        %v236 = vld [vmem:[%s217 + $0x20] sm:$0xff]
        %v237 = vld [vmem:[%s217 + $0x28] sm:$0xff]
        %v238 = vld [vmem:[%s223] sm:$0xff]
        %v239 = vld [vmem:[%s223 + $0x8] sm:$0xff]
        %v240 = vld [vmem:[%s223 + $0x10] sm:$0xff]
        %v241 = vld [vmem:[%s223 + $0x18] sm:$0xff]
        %243 = vset.pattern.permute.xlu0 0
        %244 = vperm.xlu0 %243, %v238
        %v245 = vpop.permute.xlu0 %244
        %248 = vset.pattern.permute.xlu0 0
        %249 = vperm.xlu0 %248, %v239
        %v250 = vpop.permute.xlu0 %249
        %253 = vset.pattern.permute.xlu0 0
        %254 = vperm.xlu0 %253, %v240
        %v255 = vpop.permute.xlu0 %254
        %258 = vset.pattern.permute.xlu0 0
        %259 = vperm.xlu0 %258, %v241
        %v260 = vpop.permute.xlu0 %259
        %v266 = vunpack.c.l.b16 %v228
        %v267 = vunpack.c.l.b16 %v229
        %v268 = vunpack.c.l.b16 %v230
        %v269 = vunpack.c.l.b16 %v231
        %v270 = vpack.c.b16 %v267, %v266
        %v271 = vpack.c.b16 %v269, %v268
        %v278 = vunpack.c.l.b16 %v232
        %v279 = vunpack.c.h.b16 %v232
        %v280 = vunpack.c.l.b16 %v233
        %v281 = vunpack.c.h.b16 %v233
        %v282 = vunpack.c.l.b16 %v234
        %v283 = vunpack.c.h.b16 %v234
        %v284 = vunpack.c.l.b16 %v235
        %v285 = vunpack.c.h.b16 %v235
        %v286 = vunpack.c.l.b16 %v236
        %v287 = vunpack.c.h.b16 %v236
        %v288 = vunpack.c.l.b16 %v237
        %v289 = vunpack.c.h.b16 %v237
        %v290 = vpack.c.b16 %v278, %v278
        %v291 = vpack.c.b16 %v279, %v279
        %v292 = vpack.c.b16 %v280, %v280
        %v293 = vpack.c.b16 %v281, %v281
        %v294 = vpack.c.b16 %v282, %v282
        %v295 = vpack.c.b16 %v283, %v283
        %v296 = vpack.c.b16 %v284, %v284
        %v297 = vpack.c.b16 %v285, %v285
        %v298 = vpack.c.b16 %v286, %v286
        %v299 = vpack.c.b16 %v287, %v287
        %v300 = vpack.c.b16 %v288, %v288
        %v301 = vpack.c.b16 %v289, %v289
        %vm302 = vcmask 64512
        %v304 = vsel %vm302, %v270, 0
        %v307 = vsel %vm302, %v271, 0
        %vm309 = vcmask 1043456
        %v311 = vsel %vm309, %v290, 0
        %v314 = vsel %vm309, %v291, 0
        %v317 = vsel %vm309, %v292, 0
        %v320 = vsel %vm309, %v293, 0
        %v323 = vsel %vm309, %v294, 0
        %v326 = vsel %vm309, %v295, 0
        %v329 = vsel %vm309, %v296, 0
        %v332 = vsel %vm309, %v297, 0
        %v335 = vsel %vm309, %v298, 0
        %v338 = vsel %vm309, %v299, 0
        %v341 = vsel %vm309, %v300, 0
        %v344 = vsel %vm309, %v301, 0
        %346 = vmatprep.subr.bf16.mxu0 %v314
        %347 = vmatpush1.bf16.msra.mxu0 %v311
        %348 = vmatprep.subr.bf16.mxu0 0
        %349 = vmatpush1.bf16.msra.mxu0 0
        %350 = vmatprep.subr.bf16.mxu0 0
        %351 = vmatpush1.bf16.msra.mxu0 0
        %352 = vmatprep.subr.bf16.mxu0 0
        %353 = vmatpush1.bf16.msra.mxu0 0
        %354 = vmatprep.subr.bf16.mxu0 0
        %355 = vmatpush1.bf16.msra.mxu0 0
        %356 = vmatprep.subr.bf16.mxu0 0
        %357 = vmatpush1.bf16.msra.mxu0 0
        %358 = vmatprep.subr.bf16.mxu0 0
        %359 = vmatpush1.bf16.msra.mxu0 0
        %360 = vmatprep.subr.bf16.mxu0 0
        %361 = vmatpush1.bf16.msra.mxu0 0
        %362 = vmatprep.subr.bf16.mxu0 0
        %363 = vmatpush1.bf16.msra.mxu0 0
        %364 = vmatprep.subr.bf16.mxu0 0
        %365 = vmatpush1.bf16.msra.mxu0 0
        %366 = vmatprep.subr.bf16.mxu0 0
        %367 = vmatpush1.bf16.msra.mxu0 0
        %368 = vmatprep.subr.bf16.mxu0 0
        %369 = vmatpush1.bf16.msra.mxu0 0
        %370 = vmatprep.subr.bf16.mxu0 0
        %371 = vmatpush1.bf16.msra.mxu0 0
        %372 = vmatprep.subr.bf16.mxu0 0
        %373 = vmatpush1.bf16.msra.mxu0 0
        %374 = vmatprep.subr.bf16.mxu0 0
        %375 = vmatpush1.bf16.msra.mxu0 0
        %376 = vmatprep.subr.bf16.mxu0 0
        %377 = vmatpush1.bf16.msra.mxu0 0
        %378 = vmatprep.mubr.bf16.mxu0 0
        %379 = vmatmul.mubr.bf16.gmra.mrb[0].mxu0 %v304
        %v380 = vpop.f32.mrb[0].mxu0
        %v381 = vadd.f32 %v245, %v380
        %v382 = vpop.f32.mrb[0].mxu0
        %v383 = vadd.f32 %v245, %v382
        %v384 = vpop.f32.mrb[0].mxu0
        %v385 = vadd.f32 %v250, %v384
        %v386 = vpop.f32.mrb[0].mxu0
        %v387 = vadd.f32 %v250, %v386
        %388 = vmatprep.mubr.bf16.mxu0 0
        %389 = vmatmul.mubr.bf16.gmra.mrb[0].mxu0 %v307
        %v390 = vpop.f32.mrb[0].mxu0
        %v391 = vadd.f32 %v255, %v390
        %v392 = vpop.f32.mrb[0].mxu0
        %v393 = vadd.f32 %v255, %v392
        %v394 = vpop.f32.mrb[0].mxu0
        %v395 = vadd.f32 %v260, %v394
        %v396 = vpop.f32.mrb[0].mxu0
        %v397 = vadd.f32 %v260, %v396
        %398 = vdwg.mxu0
        %399 = vmatprep.subr.bf16.mxu0 %v320
        %400 = vmatpush1.bf16.msra.mxu0 %v317
        %401 = vmatprep.subr.bf16.mxu0 0
        %402 = vmatpush1.bf16.msra.mxu0 0
        %403 = vmatprep.subr.bf16.mxu0 0
        %404 = vmatpush1.bf16.msra.mxu0 0
        %405 = vmatprep.subr.bf16.mxu0 0
        %406 = vmatpush1.bf16.msra.mxu0 0
        %407 = vmatprep.subr.bf16.mxu0 0
        %408 = vmatpush1.bf16.msra.mxu0 0
        %409 = vmatprep.subr.bf16.mxu0 0
        %410 = vmatpush1.bf16.msra.mxu0 0
        %411 = vmatprep.subr.bf16.mxu0 0
        %412 = vmatpush1.bf16.msra.mxu0 0
        %413 = vmatprep.subr.bf16.mxu0 0
        %414 = vmatpush1.bf16.msra.mxu0 0
        %415 = vmatprep.subr.bf16.mxu0 0
        %416 = vmatpush1.bf16.msra.mxu0 0
        %417 = vmatprep.subr.bf16.mxu0 0
        %418 = vmatpush1.bf16.msra.mxu0 0
        %419 = vmatprep.subr.bf16.mxu0 0
        %420 = vmatpush1.bf16.msra.mxu0 0
        %421 = vmatprep.subr.bf16.mxu0 0
        %422 = vmatpush1.bf16.msra.mxu0 0
        %423 = vmatprep.subr.bf16.mxu0 0
        %424 = vmatpush1.bf16.msra.mxu0 0
        %425 = vmatprep.subr.bf16.mxu0 0
        %426 = vmatpush1.bf16.msra.mxu0 0
        %427 = vmatprep.subr.bf16.mxu0 0
        %428 = vmatpush1.bf16.msra.mxu0 0
        %429 = vmatprep.subr.bf16.mxu0 0
        %430 = vmatpush1.bf16.msra.mxu0 0
        %431 = vmatprep.mubr.bf16.mxu0 0
        %432 = vmatmul.mubr.bf16.gmra.mrb[0].mxu0 %v304
        %v433 = vpop.f32.mrb[0].mxu0
        %v434 = vadd.f32 %v245, %v433
        %v435 = vpop.f32.mrb[0].mxu0
        %v436 = vadd.f32 %v245, %v435
        %v437 = vpop.f32.mrb[0].mxu0
        %v438 = vadd.f32 %v250, %v437
        %v439 = vpop.f32.mrb[0].mxu0
        %v440 = vadd.f32 %v250, %v439
        %441 = vmatprep.mubr.bf16.mxu0 0
        %442 = vmatmul.mubr.bf16.gmra.mrb[0].mxu0 %v307
        %v443 = vpop.f32.mrb[0].mxu0
        %v444 = vadd.f32 %v255, %v443
        %v445 = vpop.f32.mrb[0].mxu0
        %v446 = vadd.f32 %v255, %v445
        %v447 = vpop.f32.mrb[0].mxu0
        %v448 = vadd.f32 %v260, %v447
        %v449 = vpop.f32.mrb[0].mxu0
        %v450 = vadd.f32 %v260, %v449
        %451 = vdwg.mxu0
        %452 = vmatprep.subr.bf16.mxu0 %v326
        %453 = vmatpush1.bf16.msra.mxu0 %v323
        %454 = vmatprep.subr.bf16.mxu0 0
        %455 = vmatpush1.bf16.msra.mxu0 0
        %456 = vmatprep.subr.bf16.mxu0 0
        %457 = vmatpush1.bf16.msra.mxu0 0
        %458 = vmatprep.subr.bf16.mxu0 0
        %459 = vmatpush1.bf16.msra.mxu0 0
        %460 = vmatprep.subr.bf16.mxu0 0
        %461 = vmatpush1.bf16.msra.mxu0 0
        %462 = vmatprep.subr.bf16.mxu0 0
        %463 = vmatpush1.bf16.msra.mxu0 0
        %464 = vmatprep.subr.bf16.mxu0 0
        %465 = vmatpush1.bf16.msra.mxu0 0
        %466 = vmatprep.subr.bf16.mxu0 0
        %467 = vmatpush1.bf16.msra.mxu0 0
        %468 = vmatprep.subr.bf16.mxu0 0
        %469 = vmatpush1.bf16.msra.mxu0 0
        %470 = vmatprep.subr.bf16.mxu0 0
        %471 = vmatpush1.bf16.msra.mxu0 0
        %472 = vmatprep.subr.bf16.mxu0 0
        %473 = vmatpush1.bf16.msra.mxu0 0
        %474 = vmatprep.subr.bf16.mxu0 0
        %475 = vmatpush1.bf16.msra.mxu0 0
        %476 = vmatprep.subr.bf16.mxu0 0
        %477 = vmatpush1.bf16.msra.mxu0 0
        %478 = vmatprep.subr.bf16.mxu0 0
        %479 = vmatpush1.bf16.msra.mxu0 0
        %480 = vmatprep.subr.bf16.mxu0 0
        %481 = vmatpush1.bf16.msra.mxu0 0
        %482 = vmatprep.subr.bf16.mxu0 0
        %483 = vmatpush1.bf16.msra.mxu0 0
        %484 = vmatprep.mubr.bf16.mxu0 0
        %485 = vmatmul.mubr.bf16.gmra.mrb[0].mxu0 %v304
        %v486 = vpop.f32.mrb[0].mxu0
        %v487 = vadd.f32 %v245, %v486
        %v488 = vpop.f32.mrb[0].mxu0
        %v489 = vadd.f32 %v245, %v488
        %v490 = vpop.f32.mrb[0].mxu0
        %v491 = vadd.f32 %v250, %v490
        %v492 = vpop.f32.mrb[0].mxu0
        %v493 = vadd.f32 %v250, %v492
        %494 = vmatprep.mubr.bf16.mxu0 0
        %495 = vmatmul.mubr.bf16.gmra.mrb[0].mxu0 %v307
        %v496 = vpop.f32.mrb[0].mxu0
        %v497 = vadd.f32 %v255, %v496
        %v498 = vpop.f32.mrb[0].mxu0
        %v499 = vadd.f32 %v255, %v498
        %v500 = vpop.f32.mrb[0].mxu0
        %v501 = vadd.f32 %v260, %v500
        %v502 = vpop.f32.mrb[0].mxu0
        %v503 = vadd.f32 %v260, %v502
        %504 = vdwg.mxu0
        %505 = vmatprep.subr.bf16.mxu0 %v332
        %506 = vmatpush1.bf16.msra.mxu0 %v329
        %507 = vmatprep.subr.bf16.mxu0 0
        %508 = vmatpush1.bf16.msra.mxu0 0
        %509 = vmatprep.subr.bf16.mxu0 0
        %510 = vmatpush1.bf16.msra.mxu0 0
        %511 = vmatprep.subr.bf16.mxu0 0
        %512 = vmatpush1.bf16.msra.mxu0 0
        %513 = vmatprep.subr.bf16.mxu0 0
        %514 = vmatpush1.bf16.msra.mxu0 0
        %515 = vmatprep.subr.bf16.mxu0 0
        %516 = vmatpush1.bf16.msra.mxu0 0
        %517 = vmatprep.subr.bf16.mxu0 0
        %518 = vmatpush1.bf16.msra.mxu0 0
        %519 = vmatprep.subr.bf16.mxu0 0
        %520 = vmatpush1.bf16.msra.mxu0 0
        %521 = vmatprep.subr.bf16.mxu0 0
        %522 = vmatpush1.bf16.msra.mxu0 0
        %523 = vmatprep.subr.bf16.mxu0 0
        %524 = vmatpush1.bf16.msra.mxu0 0
        %525 = vmatprep.subr.bf16.mxu0 0
        %526 = vmatpush1.bf16.msra.mxu0 0
        %527 = vmatprep.subr.bf16.mxu0 0
        %528 = vmatpush1.bf16.msra.mxu0 0
        %529 = vmatprep.subr.bf16.mxu0 0
        %530 = vmatpush1.bf16.msra.mxu0 0
        %531 = vmatprep.subr.bf16.mxu0 0
        %532 = vmatpush1.bf16.msra.mxu0 0
        %533 = vmatprep.subr.bf16.mxu0 0
        %534 = vmatpush1.bf16.msra.mxu0 0
        %535 = vmatprep.subr.bf16.mxu0 0
        %536 = vmatpush1.bf16.msra.mxu0 0
        %537 = vmatprep.mubr.bf16.mxu0 0
        %538 = vmatmul.mubr.bf16.gmra.mrb[0].mxu0 %v304
        %v539 = vpop.f32.mrb[0].mxu0
        %v540 = vadd.f32 %v245, %v539
        %v541 = vpop.f32.mrb[0].mxu0
        %v542 = vadd.f32 %v245, %v541
        %v543 = vpop.f32.mrb[0].mxu0
        %v544 = vadd.f32 %v250, %v543
        %v545 = vpop.f32.mrb[0].mxu0
        %v546 = vadd.f32 %v250, %v545
        %547 = vmatprep.mubr.bf16.mxu0 0
        %548 = vmatmul.mubr.bf16.gmra.mrb[0].mxu0 %v307
        %v549 = vpop.f32.mrb[0].mxu0
        %v550 = vadd.f32 %v255, %v549
        %v551 = vpop.f32.mrb[0].mxu0
        %v552 = vadd.f32 %v255, %v551
        %v553 = vpop.f32.mrb[0].mxu0
        %v554 = vadd.f32 %v260, %v553
        %v555 = vpop.f32.mrb[0].mxu0
        %v556 = vadd.f32 %v260, %v555
        %557 = vdwg.mxu0
        %558 = vmatprep.subr.bf16.mxu0 %v338
        %559 = vmatpush1.bf16.msra.mxu0 %v335
        %560 = vmatprep.subr.bf16.mxu0 0
        %561 = vmatpush1.bf16.msra.mxu0 0
        %562 = vmatprep.subr.bf16.mxu0 0
        %563 = vmatpush1.bf16.msra.mxu0 0
        %564 = vmatprep.subr.bf16.mxu0 0
        %565 = vmatpush1.bf16.msra.mxu0 0
        %566 = vmatprep.subr.bf16.mxu0 0
        %567 = vmatpush1.bf16.msra.mxu0 0
        %568 = vmatprep.subr.bf16.mxu0 0
        %569 = vmatpush1.bf16.msra.mxu0 0
        %570 = vmatprep.subr.bf16.mxu0 0
        %571 = vmatpush1.bf16.msra.mxu0 0
        %572 = vmatprep.subr.bf16.mxu0 0
        %573 = vmatpush1.bf16.msra.mxu0 0
        %574 = vmatprep.subr.bf16.mxu0 0
        %575 = vmatpush1.bf16.msra.mxu0 0
        %576 = vmatprep.subr.bf16.mxu0 0
        %577 = vmatpush1.bf16.msra.mxu0 0
        %578 = vmatprep.subr.bf16.mxu0 0
        %579 = vmatpush1.bf16.msra.mxu0 0
        %580 = vmatprep.subr.bf16.mxu0 0
        %581 = vmatpush1.bf16.msra.mxu0 0
        %582 = vmatprep.subr.bf16.mxu0 0
        %583 = vmatpush1.bf16.msra.mxu0 0
        %584 = vmatprep.subr.bf16.mxu0 0
        %585 = vmatpush1.bf16.msra.mxu0 0
        %586 = vmatprep.subr.bf16.mxu0 0
        %587 = vmatpush1.bf16.msra.mxu0 0
        %588 = vmatprep.subr.bf16.mxu0 0
        %589 = vmatpush1.bf16.msra.mxu0 0
        %590 = vmatprep.mubr.bf16.mxu0 0
        %591 = vmatmul.mubr.bf16.gmra.mrb[0].mxu0 %v304
        %v592 = vpop.f32.mrb[0].mxu0
        %v593 = vadd.f32 %v245, %v592
        %v594 = vpop.f32.mrb[0].mxu0
        %v595 = vadd.f32 %v245, %v594
        %v596 = vpop.f32.mrb[0].mxu0
        %v597 = vadd.f32 %v250, %v596
        %v598 = vpop.f32.mrb[0].mxu0
        %v599 = vadd.f32 %v250, %v598
        %600 = vmatprep.mubr.bf16.mxu0 0
        %601 = vmatmul.mubr.bf16.gmra.mrb[0].mxu0 %v307
        %v602 = vpop.f32.mrb[0].mxu0
        %v603 = vadd.f32 %v255, %v602
        %v604 = vpop.f32.mrb[0].mxu0
        %v605 = vadd.f32 %v255, %v604
        %v606 = vpop.f32.mrb[0].mxu0
        %v607 = vadd.f32 %v260, %v606
        %v608 = vpop.f32.mrb[0].mxu0
        %v609 = vadd.f32 %v260, %v608
        %610 = vdwg.mxu0
        %611 = vmatprep.subr.bf16.mxu0 %v344
        %612 = vmatpush1.bf16.msra.mxu0 %v341
        %613 = vmatprep.subr.bf16.mxu0 0
        %614 = vmatpush1.bf16.msra.mxu0 0
        %615 = vmatprep.subr.bf16.mxu0 0
        %616 = vmatpush1.bf16.msra.mxu0 0
        %617 = vmatprep.subr.bf16.mxu0 0
        %618 = vmatpush1.bf16.msra.mxu0 0
        %619 = vmatprep.subr.bf16.mxu0 0
        %620 = vmatpush1.bf16.msra.mxu0 0
        %621 = vmatprep.subr.bf16.mxu0 0
        %622 = vmatpush1.bf16.msra.mxu0 0
        %623 = vmatprep.subr.bf16.mxu0 0
        %624 = vmatpush1.bf16.msra.mxu0 0
        %625 = vmatprep.subr.bf16.mxu0 0
        %626 = vmatpush1.bf16.msra.mxu0 0
        %627 = vmatprep.subr.bf16.mxu0 0
        %628 = vmatpush1.bf16.msra.mxu0 0
        %629 = vmatprep.subr.bf16.mxu0 0
        %630 = vmatpush1.bf16.msra.mxu0 0
        %631 = vmatprep.subr.bf16.mxu0 0
        %632 = vmatpush1.bf16.msra.mxu0 0
        %633 = vmatprep.subr.bf16.mxu0 0
        %634 = vmatpush1.bf16.msra.mxu0 0
        %635 = vmatprep.subr.bf16.mxu0 0
        %636 = vmatpush1.bf16.msra.mxu0 0
        %637 = vmatprep.subr.bf16.mxu0 0
        %638 = vmatpush1.bf16.msra.mxu0 0
        %639 = vmatprep.subr.bf16.mxu0 0
        %640 = vmatpush1.bf16.msra.mxu0 0
        %641 = vmatprep.subr.bf16.mxu0 0
        %642 = vmatpush1.bf16.msra.mxu0 0
        %643 = vmatprep.mubr.bf16.mxu0 0
        %644 = vmatmul.mubr.bf16.gmra.mrb[0].mxu0 %v304
        %v645 = vpop.f32.mrb[0].mxu0
        %v646 = vadd.f32 %v245, %v645
        %v647 = vpop.f32.mrb[0].mxu0
        %v648 = vadd.f32 %v245, %v647
        %v649 = vpop.f32.mrb[0].mxu0
        %v650 = vadd.f32 %v250, %v649
        %v651 = vpop.f32.mrb[0].mxu0
        %v652 = vadd.f32 %v250, %v651
        %653 = vmatprep.mubr.bf16.mxu0 0
        %654 = vmatmul.mubr.bf16.gmra.mrb[0].mxu0 %v307
        %v655 = vpop.f32.mrb[0].mxu0
        %v656 = vadd.f32 %v255, %v655
        %v657 = vpop.f32.mrb[0].mxu0
        %v658 = vadd.f32 %v255, %v657
        %v659 = vpop.f32.mrb[0].mxu0
        %v660 = vadd.f32 %v260, %v659
        %v661 = vpop.f32.mrb[0].mxu0
        %v662 = vadd.f32 %v260, %v661
        %663 = vdwg.mxu0
        %v664 = vmax.f32 %v381, 0.0
        %v665 = vmax.f32 %v383, 0.0
        %v666 = vmax.f32 %v434, 0.0
        %v667 = vmax.f32 %v436, 0.0
        %v668 = vmax.f32 %v487, 0.0
        %v669 = vmax.f32 %v489, 0.0
        %v670 = vmax.f32 %v540, 0.0
        %v671 = vmax.f32 %v542, 0.0
        %v672 = vmax.f32 %v593, 0.0
        %v673 = vmax.f32 %v595, 0.0
        %v674 = vmax.f32 %v646, 0.0
        %v675 = vmax.f32 %v648, 0.0
        %v676 = vmax.f32 %v385, 0.0
        %v677 = vmax.f32 %v387, 0.0
        %v678 = vmax.f32 %v438, 0.0
        %v679 = vmax.f32 %v440, 0.0
        %v680 = vmax.f32 %v491, 0.0
        %v681 = vmax.f32 %v493, 0.0
        %v682 = vmax.f32 %v544, 0.0
        %v683 = vmax.f32 %v546, 0.0
        %v684 = vmax.f32 %v597, 0.0
        %v685 = vmax.f32 %v599, 0.0
        %v686 = vmax.f32 %v650, 0.0
        %v687 = vmax.f32 %v652, 0.0
        %v688 = vmax.f32 %v391, 0.0
        %v689 = vmax.f32 %v393, 0.0
        %v690 = vmax.f32 %v444, 0.0
        %v691 = vmax.f32 %v446, 0.0
        %v692 = vmax.f32 %v497, 0.0
        %v693 = vmax.f32 %v499, 0.0
        %v694 = vmax.f32 %v550, 0.0
        %v695 = vmax.f32 %v552, 0.0
        %v696 = vmax.f32 %v603, 0.0
        %v697 = vmax.f32 %v605, 0.0
        %v698 = vmax.f32 %v656, 0.0
        %v699 = vmax.f32 %v658, 0.0
        %v700 = vmax.f32 %v395, 0.0
        %v701 = vmax.f32 %v397, 0.0
        %v702 = vmax.f32 %v448, 0.0
        %v703 = vmax.f32 %v450, 0.0
        %v704 = vmax.f32 %v501, 0.0
        %v705 = vmax.f32 %v503, 0.0
        %v706 = vmax.f32 %v554, 0.0
        %v707 = vmax.f32 %v556, 0.0
        %v708 = vmax.f32 %v607, 0.0
        %v709 = vmax.f32 %v609, 0.0
        %v710 = vmax.f32 %v660, 0.0
        %v711 = vmax.f32 %v662, 0.0
        %712 = vst [vmem:[%s206] sm:$0xff] %v664
        %713 = vst [vmem:[%s206 + $0x8] sm:$0xff] %v665
        %714 = vst [vmem:[%s206 + $0x10] sm:$0xff] %v666
        %715 = vst [vmem:[%s206 + $0x18] sm:$0xff] %v667
        %716 = vst [vmem:[%s206 + $0x20] sm:$0xff] %v668
        %717 = vst [vmem:[%s206 + $0x28] sm:$0xff] %v669
        %718 = vst [vmem:[%s206 + $0x30] sm:$0xff] %v670
        %719 = vst [vmem:[%s206 + $0x38] sm:$0xff] %v671
        %720 = vst [vmem:[%s206 + $0x40] sm:$0xff] %v672
        %721 = vst [vmem:[%s206 + $0x48] sm:$0xff] %v673
        %722 = vst [vmem:[%s206 + $0x50] sm:$0xff] %v674
        %723 = vst [vmem:[%s206 + $0x58] sm:$0xff] %v675
        %724 = vst [vmem:[%s206 + $0x60] sm:$0xff] %v676
        %725 = vst [vmem:[%s206 + $0x68] sm:$0xff] %v677
        %726 = vst [vmem:[%s206 + $0x70] sm:$0xff] %v678
        %727 = vst [vmem:[%s206 + $0x78] sm:$0xff] %v679
        %728 = vst [vmem:[%s206 + $0x80] sm:$0xff] %v680
        %729 = vst [vmem:[%s206 + $0x88] sm:$0xff] %v681
        %730 = vst [vmem:[%s206 + $0x90] sm:$0xff] %v682
        %731 = vst [vmem:[%s206 + $0x98] sm:$0xff] %v683
        %732 = vst [vmem:[%s206 + $0xa0] sm:$0xff] %v684
        %733 = vst [vmem:[%s206 + $0xa8] sm:$0xff] %v685
        %734 = vst [vmem:[%s206 + $0xb0] sm:$0xff] %v686
        %735 = vst [vmem:[%s206 + $0xb8] sm:$0xff] %v687
        %736 = vst [vmem:[%s206 + $0xc0] sm:$0xff] %v688
        %737 = vst [vmem:[%s206 + $0xc8] sm:$0xff] %v689
        %738 = vst [vmem:[%s206 + $0xd0] sm:$0xff] %v690
        %739 = vst [vmem:[%s206 + $0xd8] sm:$0xff] %v691
        %740 = vst [vmem:[%s206 + $0xe0] sm:$0xff] %v692
        %741 = vst [vmem:[%s206 + $0xe8] sm:$0xff] %v693
        %742 = vst [vmem:[%s206 + $0xf0] sm:$0xff] %v694
        %743 = vst [vmem:[%s206 + $0xf8] sm:$0xff] %v695
        %744 = vst [vmem:[%s206 + $0x100] sm:$0xff] %v696
        %745 = vst [vmem:[%s206 + $0x108] sm:$0xff] %v697
        %746 = vst [vmem:[%s206 + $0x110] sm:$0xff] %v698
        %747 = vst [vmem:[%s206 + $0x118] sm:$0xff] %v699
        %748 = vst [vmem:[%s206 + $0x120] sm:$0xff] %v700
        %749 = vst [vmem:[%s206 + $0x128] sm:$0xff] %v701
        %750 = vst [vmem:[%s206 + $0x130] sm:$0xff] %v702
        %751 = vst [vmem:[%s206 + $0x138] sm:$0xff] %v703
        %752 = vst [vmem:[%s206 + $0x140] sm:$0xff] %v704
        %753 = vst [vmem:[%s206 + $0x148] sm:$0xff] %v705
        %754 = vst [vmem:[%s206 + $0x150] sm:$0xff] %v706
        %755 = vst [vmem:[%s206 + $0x158] sm:$0xff] %v707
        %756 = vst [vmem:[%s206 + $0x160] sm:$0xff] %v708
        %757 = vst [vmem:[%s206 + $0x168] sm:$0xff] %v709
        %758 = vst [vmem:[%s206 + $0x170] sm:$0xff] %v710
        %759 = vst [vmem:[%s206 + $0x178] sm:$0xff] %v711
        %s760 = sand.u32 %s114, 1
        %s761 = sand.u32 %s114, 1
        %s762 = smul.addr %s761, 384
        %s763 = scalar_lea.vmem [#allocation2], %s762
        // Predicated region
        $region33: #{sr_projection_forward.20} parent=31 // pred_check
          %p764 = pneg %p124
        $region34: #{sr_projection_forward.20} parent=31 // pred_check_branch
          %766 = sbr.rel (%p764) target = $region36
        $region35: #{sr_projection_forward.20} parent=31 // pred_region
          %s767 = smul.u32 4, %s18
          %s768 = smul.u32 12, %s19
          %s769 = smul.addr %s767, 24
          %s770 = sadd.s32 %s768, %s769
          %s771 = smul.addr %s770, 8
          %s772 = scalar_lea.vmem %s3, %s771
          // Predicated region
          $region37: #{sr_projection_forward.20} parent=35 // pred_check
            _
          $region38: #{sr_projection_forward.20} parent=35 // pred_check_branch
            %774 = sbr.rel (0) target = $region40
          $region39: #{sr_projection_forward.20} parent=35 // pred_region
            // Predicated region
            $region41: #{sr_projection_forward.20} parent=39 // pred_check
              _
            $region42: #{sr_projection_forward.20} parent=39 // pred_check_branch
              %776 = sbr.rel (0) target = $region44
            $region43: #{sr_projection_forward.20} parent=39 // pred_region
              loop: start=0, step=1, limit=1
              $region45: #{sr_projection_forward.20} parent=43 // loop_pre_header
                _
              $region46: #{sr_projection_forward.20} parent=43 // loop_header
                %s778 = sphi 0, %s782
                %p779 = scmp.ge.s32.totalorder %s778, 1
                %s783 = sphi %s763, %s763
                %s784 = sphi %s772, %s772
              $region47: #{sr_projection_forward.20} parent=43 // loop_header_branch
                %781 = sbr.rel (%p779) target = $region51
              $region48: #{sr_projection_forward.20} parent=43 // loop_body
                %v785 = vld [vmem:[%s783] sm:$0xff]
                %786 = vst [vmem:[%s784] sm:$0xff] %v785
                %v787 = vld [vmem:[%s783 + $0x8] sm:$0xff]
                %788 = vst [vmem:[%s784 + $0x8] sm:$0xff] %v787
                %v789 = vld [vmem:[%s783 + $0x10] sm:$0xff]
                %790 = vst [vmem:[%s784 + $0x10] sm:$0xff] %v789
                %v791 = vld [vmem:[%s783 + $0x18] sm:$0xff]
                %792 = vst [vmem:[%s784 + $0x18] sm:$0xff] %v791
                %v793 = vld [vmem:[%s783 + $0x20] sm:$0xff]
                %794 = vst [vmem:[%s784 + $0x20] sm:$0xff] %v793
                %v795 = vld [vmem:[%s783 + $0x28] sm:$0xff]
                %796 = vst [vmem:[%s784 + $0x28] sm:$0xff] %v795
                %v797 = vld [vmem:[%s783 + $0x30] sm:$0xff]
                %798 = vst [vmem:[%s784 + $0x30] sm:$0xff] %v797
                %v799 = vld [vmem:[%s783 + $0x38] sm:$0xff]
                %800 = vst [vmem:[%s784 + $0x38] sm:$0xff] %v799
                %v801 = vld [vmem:[%s783 + $0x40] sm:$0xff]
                %802 = vst [vmem:[%s784 + $0x40] sm:$0xff] %v801
                %v803 = vld [vmem:[%s783 + $0x48] sm:$0xff]
                %804 = vst [vmem:[%s784 + $0x48] sm:$0xff] %v803
                %v805 = vld [vmem:[%s783 + $0x50] sm:$0xff]
                %806 = vst [vmem:[%s784 + $0x50] sm:$0xff] %v805
                %v807 = vld [vmem:[%s783 + $0x58] sm:$0xff]
                %808 = vst [vmem:[%s784 + $0x58] sm:$0xff] %v807
                %v809 = vld [vmem:[%s783 + $0x60] sm:$0xff]
                %810 = vst [vmem:[%s784 + $0xc0] sm:$0xff] %v809
                %v811 = vld [vmem:[%s783 + $0x68] sm:$0xff]
                %812 = vst [vmem:[%s784 + $0xc8] sm:$0xff] %v811
                %v813 = vld [vmem:[%s783 + $0x70] sm:$0xff]
                %814 = vst [vmem:[%s784 + $0xd0] sm:$0xff] %v813
                %v815 = vld [vmem:[%s783 + $0x78] sm:$0xff]
                %816 = vst [vmem:[%s784 + $0xd8] sm:$0xff] %v815
                %v817 = vld [vmem:[%s783 + $0x80] sm:$0xff]
                %818 = vst [vmem:[%s784 + $0xe0] sm:$0xff] %v817
                %v819 = vld [vmem:[%s783 + $0x88] sm:$0xff]
                %820 = vst [vmem:[%s784 + $0xe8] sm:$0xff] %v819
                %v821 = vld [vmem:[%s783 + $0x90] sm:$0xff]
                %822 = vst [vmem:[%s784 + $0xf0] sm:$0xff] %v821
                %v823 = vld [vmem:[%s783 + $0x98] sm:$0xff]
                %824 = vst [vmem:[%s784 + $0xf8] sm:$0xff] %v823
                %v825 = vld [vmem:[%s783 + $0xa0] sm:$0xff]
                %826 = vst [vmem:[%s784 + $0x100] sm:$0xff] %v825
                %v827 = vld [vmem:[%s783 + $0xa8] sm:$0xff]
                %828 = vst [vmem:[%s784 + $0x108] sm:$0xff] %v827
                %v829 = vld [vmem:[%s783 + $0xb0] sm:$0xff]
                %830 = vst [vmem:[%s784 + $0x110] sm:$0xff] %v829
                %v831 = vld [vmem:[%s783 + $0xb8] sm:$0xff]
                %832 = vst [vmem:[%s784 + $0x118] sm:$0xff] %v831
                %v833 = vld [vmem:[%s783 + $0xc0] sm:$0xff]
                %834 = vst [vmem:[%s784 + $0x180] sm:$0xff] %v833
                %v835 = vld [vmem:[%s783 + $0xc8] sm:$0xff]
                %836 = vst [vmem:[%s784 + $0x188] sm:$0xff] %v835
                %v837 = vld [vmem:[%s783 + $0xd0] sm:$0xff]
                %838 = vst [vmem:[%s784 + $0x190] sm:$0xff] %v837
                %v839 = vld [vmem:[%s783 + $0xd8] sm:$0xff]
                %840 = vst [vmem:[%s784 + $0x198] sm:$0xff] %v839
                %v841 = vld [vmem:[%s783 + $0xe0] sm:$0xff]
                %842 = vst [vmem:[%s784 + $0x1a0] sm:$0xff] %v841
                %v843 = vld [vmem:[%s783 + $0xe8] sm:$0xff]
                %844 = vst [vmem:[%s784 + $0x1a8] sm:$0xff] %v843
                %v845 = vld [vmem:[%s783 + $0xf0] sm:$0xff]
                %846 = vst [vmem:[%s784 + $0x1b0] sm:$0xff] %v845
                %v847 = vld [vmem:[%s783 + $0xf8] sm:$0xff]
                %848 = vst [vmem:[%s784 + $0x1b8] sm:$0xff] %v847
                %v849 = vld [vmem:[%s783 + $0x100] sm:$0xff]
                %850 = vst [vmem:[%s784 + $0x1c0] sm:$0xff] %v849
                %v851 = vld [vmem:[%s783 + $0x108] sm:$0xff]
                %852 = vst [vmem:[%s784 + $0x1c8] sm:$0xff] %v851
                %v853 = vld [vmem:[%s783 + $0x110] sm:$0xff]
                %854 = vst [vmem:[%s784 + $0x1d0] sm:$0xff] %v853
                %v855 = vld [vmem:[%s783 + $0x118] sm:$0xff]
                %856 = vst [vmem:[%s784 + $0x1d8] sm:$0xff] %v855
                %v857 = vld [vmem:[%s783 + $0x120] sm:$0xff]
                %858 = vst [vmem:[%s784 + $0x240] sm:$0xff] %v857
                %v859 = vld [vmem:[%s783 + $0x128] sm:$0xff]
                %860 = vst [vmem:[%s784 + $0x248] sm:$0xff] %v859
                %v861 = vld [vmem:[%s783 + $0x130] sm:$0xff]
                %862 = vst [vmem:[%s784 + $0x250] sm:$0xff] %v861
                %v863 = vld [vmem:[%s783 + $0x138] sm:$0xff]
                %864 = vst [vmem:[%s784 + $0x258] sm:$0xff] %v863
                %v865 = vld [vmem:[%s783 + $0x140] sm:$0xff]
                %866 = vst [vmem:[%s784 + $0x260] sm:$0xff] %v865
                %v867 = vld [vmem:[%s783 + $0x148] sm:$0xff]
                %868 = vst [vmem:[%s784 + $0x268] sm:$0xff] %v867
                %v869 = vld [vmem:[%s783 + $0x150] sm:$0xff]
                %870 = vst [vmem:[%s784 + $0x270] sm:$0xff] %v869
                %v871 = vld [vmem:[%s783 + $0x158] sm:$0xff]
                %872 = vst [vmem:[%s784 + $0x278] sm:$0xff] %v871
                %v873 = vld [vmem:[%s783 + $0x160] sm:$0xff]
                %874 = vst [vmem:[%s784 + $0x280] sm:$0xff] %v873
                %v875 = vld [vmem:[%s783 + $0x168] sm:$0xff]
                %876 = vst [vmem:[%s784 + $0x288] sm:$0xff] %v875
                %v877 = vld [vmem:[%s783 + $0x170] sm:$0xff]
                %878 = vst [vmem:[%s784 + $0x290] sm:$0xff] %v877
                %v879 = vld [vmem:[%s783 + $0x178] sm:$0xff]
                %880 = vst [vmem:[%s784 + $0x298] sm:$0xff] %v879
              $region49: #{sr_projection_forward.20} parent=43 // loop_footer
                %s782 = sadd.s32 1, %s778
              $region50: #{sr_projection_forward.20} parent=43 // loop_footer_branch
                %777 = sbr.rel target = $region46
              $region51: #{sr_projection_forward.20} parent=43 // loop_exit
                _
            $region44: #{sr_projection_forward.20} parent=39 // pred_fallthru
              _
            // Predicated region
            $region52: #{sr_projection_forward.20} parent=39 // pred_check
              _
            $region53: #{sr_projection_forward.20} parent=39 // pred_check_branch
              %882 = sbr.rel target = $region55
            $region54: #{sr_projection_forward.20} parent=39 // pred_region
              _
            $region55: #{sr_projection_forward.20} parent=39 // pred_fallthru
              _
          $region40: #{sr_projection_forward.20} parent=35 // pred_fallthru
            _
          %883 = vnop
        $region36: #{sr_projection_forward.20} parent=31 // pred_fallthru
          _
      $region32: #{sr_projection_forward.20} parent=5 // pred_fallthru
        _
      %p884 = scmp.le.s32.totalorder 2, %s9
      // Predicated region
      $region56: #{sr_projection_forward.20} parent=5 // pred_check
        %p885 = pneg %p884
      $region57: #{sr_projection_forward.20} parent=5 // pred_check_branch
        %887 = sbr.rel (%p885) target = $region59
      $region58: #{sr_projection_forward.20} parent=5 // pred_region
        %s888 = ssub.s32 %s9, 2
        // Predicated region
        $region60: #{sr_projection_forward.20} parent=58 // pred_check
          %p889 = pneg %p130
        $region61: #{sr_projection_forward.20} parent=58 // pred_check_branch
          %891 = sbr.rel (%p889) target = $region63
        $region62: #{sr_projection_forward.20} parent=58 // pred_region
          %s892 = sand.u32 %s115, 1
          %s893 = sand.u32 %s115, 1
          %s894 = smul.addr %s893, 384
          %s895 = scalar_lea.vmem [#allocation2], %s894
        $region63: #{sr_projection_forward.20} parent=58 // pred_fallthru
          _
      $region59: #{sr_projection_forward.20} parent=5 // pred_fallthru
        _
    $region6: #{sr_projection_forward.20} parent=1 // loop_footer
      %s13 = sadd.s32 1, %s9
    $region7: #{sr_projection_forward.20} parent=1 // loop_footer_branch
      %8 = sbr.rel target = $region3
    $region8: #{sr_projection_forward.20} parent=1 // loop_exit
      _

// kernel: sr_projection_forward.21
$region0: #{sr_projection_forward.21}
  #allocation0 [shape = 'u32[]', space=smem, size = 0x4, offset = 0x4, fixed_abs, tag = 'smem constant byte address 0x4 - core index']
  #allocation1 [shape = 'u32[144,128]{1,0:T(1,128)}', space=vmem, size = 0x12000, scoped, tag = 'internal scratch']
  %s0 = inlined_call_operand.vmem [shape: bf16[8,32], index: 0, kind: input, shape index: {}]
  %s1 = inlined_call_operand.vmem [shape: bf16[32,3072], index: 1, kind: input, shape index: {}]
  %s2 = inlined_call_operand.vmem [shape: f32[8,1], index: 2, kind: input, shape index: {}]
  %s3 = inlined_call_operand.vmem [shape: f32[8,3072], index: 3, kind: output, shape index: {}]
  %s4 = sld [smem:[#allocation0]]
  $region68: #{sr_projection_forward.21} parent=0
    _
  %s6 = ssub.s32 1, %s4
  %s7 = scalar_select 0, %s6, %s4
  $region1: #{sr_projection_forward.21} parent=0
    #allocation2 [shape = 'u8[196608]{0}', space=vmem, size = 0x30000, scoped, tag = 'input window, operand 1']
    loop: start=0, step=1, limit=4
    $region2: #{sr_projection_forward.21} parent=1 // loop_pre_header
      _
    $region3: #{sr_projection_forward.21} parent=1 // loop_header
      %s9 = sphi 0, %s13
      %p10 = scmp.ge.s32.totalorder %s9, 4
      %s16 = sphi 0, %s28
      %s17 = sphi 0, %s24
      %s18 = sphi 0, %s16
      %s19 = sphi 0, %s17
      %s20 = sphi 0, %s18
      %s21 = sphi 0, %s19
      %s31 = sphi 0, %s33
      %s34 = sphi 0, %s31
      %s35 = sphi 0, %s34
      %s51 = sphi 0, %s35
      %s57 = sphi 0, %s59
      %s60 = sphi 0, %s57
      %s61 = sphi 0, %s60
      %s77 = sphi 0, %s61
      %s83 = sphi 0, %s85
      %s86 = sphi 0, %s83
      %s87 = sphi 0, %s86
      %s103 = sphi 0, %s87
      %s111 = sphi 0, %s113
      %s114 = sphi 0, %s111
      %s115 = sphi 0, %s114
      %s131 = sphi 0, %s115
    $region4: #{sr_projection_forward.21} parent=1 // loop_header_branch
      %12 = sbr.rel (%p10) target = $region8
    $region5: #{sr_projection_forward.21} parent=1 // loop_body
      %s14 = ssub.s32 %s9, 1
      %s15 = ssub.s32 %s9, 2
      %s22 = sadd.s32 1, %s17
      %p23 = scmp.ge.s32.totalorder %s22, 2
      %s24 = scalar_select %p23, 0, %s22
      %s25 = sadd.s32 1, %s16
      %s26 = scalar_select %p23, %s25, %s16
      %p27 = scmp.ge.s32.totalorder %s26, 1
      %s28 = scalar_select %p27, 0, %s26
      %s29 = ssub.s32 %s16, %s28
      %p30 = scmp.eq.s32.totalorder %s29, 0
      %s32 = sadd.s32 %s31, 1
      %s33 = scalar_select %p30, %s31, %s32
      %p36 = pneg %p30
      %p37 = scmp.eq.s32.totalorder %s9, 1
      %p38 = por %p36, %p37
      %p39 = scmp.ne.s32.totalorder %s31, %s34
      %p40 = scmp.eq.s32.totalorder %s9, 0
      %p41 = por %p39, %p40
      %p42 = scmp.ne.s32.totalorder %s31, %s34
      %p43 = scmp.eq.s32.totalorder %s14, 1
      %p44 = por %p42, %p43
      %p45 = scmp.ne.s32.totalorder %s34, %s35
      %p46 = scmp.eq.s32.totalorder %s14, 0
      %p47 = por %p45, %p46
      %p48 = scmp.ne.s32.totalorder %s34, %s35
      %p49 = scmp.eq.s32.totalorder %s15, 1
      %p50 = por %p48, %p49
      %p52 = scmp.ne.s32.totalorder %s35, %s51
      %p53 = scmp.eq.s32.totalorder %s15, 0
      %p54 = por %p52, %p53
      %s55 = ssub.s32 %s17, %s24
      %p56 = scmp.eq.s32.totalorder %s55, 0
      %s58 = sadd.s32 %s57, 1
      %s59 = scalar_select %p56, %s57, %s58
      %p62 = pneg %p56
      %p63 = scmp.eq.s32.totalorder %s9, 1
      %p64 = por %p62, %p63
      %p65 = scmp.ne.s32.totalorder %s57, %s60
      %p66 = scmp.eq.s32.totalorder %s9, 0
      %p67 = por %p65, %p66
      %p68 = scmp.ne.s32.totalorder %s57, %s60
      %p69 = scmp.eq.s32.totalorder %s14, 1
      %p70 = por %p68, %p69
      %p71 = scmp.ne.s32.totalorder %s60, %s61
      %p72 = scmp.eq.s32.totalorder %s14, 0
      %p73 = por %p71, %p72
      %p74 = scmp.ne.s32.totalorder %s60, %s61
      %p75 = scmp.eq.s32.totalorder %s15, 1
      %p76 = por %p74, %p75
      %p78 = scmp.ne.s32.totalorder %s61, %s77
      %p79 = scmp.eq.s32.totalorder %s15, 0
      %p80 = por %p78, %p79
      %s81 = ssub.s32 %s16, %s28
      %p82 = scmp.eq.s32.totalorder %s81, 0
      %s84 = sadd.s32 %s83, 1
      %s85 = scalar_select %p82, %s83, %s84
      %p88 = pneg %p82
      %p89 = scmp.eq.s32.totalorder %s9, 1
      %p90 = por %p88, %p89
      %p91 = scmp.ne.s32.totalorder %s83, %s86
      %p92 = scmp.eq.s32.totalorder %s9, 0
      %p93 = por %p91, %p92
      %p94 = scmp.ne.s32.totalorder %s83, %s86
      %p95 = scmp.eq.s32.totalorder %s14, 1
      %p96 = por %p94, %p95
      %p97 = scmp.ne.s32.totalorder %s86, %s87
      %p98 = scmp.eq.s32.totalorder %s14, 0
      %p99 = por %p97, %p98
      %p100 = scmp.ne.s32.totalorder %s86, %s87
      %p101 = scmp.eq.s32.totalorder %s15, 1
      %p102 = por %p100, %p101
      %p104 = scmp.ne.s32.totalorder %s87, %s103
      %p105 = scmp.eq.s32.totalorder %s15, 0
      %p106 = por %p104, %p105
      %s107 = ssub.s32 %s16, %s28
      %s108 = ssub.s32 %s17, %s24
      %s109 = sor.u32 %s107, %s108
      %p110 = scmp.eq.s32.totalorder %s109, 0
      %s112 = sadd.s32 %s111, 1
      %s113 = scalar_select %p110, %s111, %s112
      %p116 = pneg %p110
      %p117 = scmp.eq.s32.totalorder %s9, 1
      %p118 = por %p116, %p117
      %p119 = scmp.ne.s32.totalorder %s111, %s114
      %p120 = scmp.eq.s32.totalorder %s9, 0
      %p121 = por %p119, %p120
      %p122 = scmp.ne.s32.totalorder %s111, %s114
      %p123 = scmp.eq.s32.totalorder %s14, 1
      %p124 = por %p122, %p123
      %p125 = scmp.ne.s32.totalorder %s114, %s115
      %p126 = scmp.eq.s32.totalorder %s14, 0
      %p127 = por %p125, %p126
      %p128 = scmp.ne.s32.totalorder %s114, %s115
      %p129 = scmp.eq.s32.totalorder %s15, 1
      %p130 = por %p128, %p129
      %p132 = scmp.ne.s32.totalorder %s115, %s131
      %p133 = scmp.eq.s32.totalorder %s15, 0
      %p134 = por %p132, %p133
      %p135 = scmp.le.s32.totalorder 1, %s9
      %p136 = scmp.lt.s32.totalorder %s9, 3
      %p137 = pnand %p135, %p136
      %p138 = pneg %p137
      // Predicated region
      $region9: #{sr_projection_forward.21} parent=5 // pred_check
        _
      $region10: #{sr_projection_forward.21} parent=5 // pred_check_branch
        %140 = sbr.rel (%p137) target = $region12
      $region11: #{sr_projection_forward.21} parent=5 // pred_region
        %s141 = ssub.s32 %s9, 1
        // Predicated region
        $region13: #{sr_projection_forward.21} parent=11 // pred_check
          %p142 = pneg %p47
        $region14: #{sr_projection_forward.21} parent=11 // pred_check_branch
          %144 = sbr.rel (%p142) target = $region16
        $region15: #{sr_projection_forward.21} parent=11 // pred_region
          %p145 = scmp.lt.s32.totalorder %s18, 0
          %s146 = scalar_select %p145, %s18, 0
          %s147 = smul.addr %s146, 4
          %s148 = scalar_lea.vmem %s0, %s147
        $region16: #{sr_projection_forward.21} parent=11 // pred_fallthru
          _
        // Predicated region
        $region17: #{sr_projection_forward.21} parent=11 // pred_check
          %p149 = pneg %p99
        $region18: #{sr_projection_forward.21} parent=11 // pred_check_branch
          %151 = sbr.rel (%p149) target = $region20
        $region19: #{sr_projection_forward.21} parent=11 // pred_region
          %p152 = scmp.lt.s32.totalorder %s18, 0
          %s153 = scalar_select %p152, %s18, 0
          %s154 = smul.addr %s153, 8
          %s155 = scalar_lea.vmem %s2, %s154
        $region20: #{sr_projection_forward.21} parent=11 // pred_fallthru
          _
      $region12: #{sr_projection_forward.21} parent=5 // pred_fallthru
        _
      %p156 = scmp.lt.s32.totalorder %s9, 2
      // Predicated region
      $region21: #{sr_projection_forward.21} parent=5 // pred_check
        %p157 = pneg %p156
      $region22: #{sr_projection_forward.21} parent=5 // pred_check_branch
        %159 = sbr.rel (%p157) target = $region24
      $region23: #{sr_projection_forward.21} parent=5 // pred_region
        // Predicated region
        $region25: #{sr_projection_forward.21} parent=23 // pred_check
          %p160 = pneg %p67
        $region26: #{sr_projection_forward.21} parent=23 // pred_check_branch
          %162 = sbr.rel (%p160) target = $region28
        $region27: #{sr_projection_forward.21} parent=23 // pred_region
          %s163 = sand.u32 %s57, 1
          %s164 = sand.u32 %s57, 1
          %s165 = smul.addr %s164, 192
          %s166 = scalar_lea.vmem [#allocation2], %s165
          %s167 = smul.u32 12, %s17
          %s168 = smul.addr %s167, 4
          %s169 = scalar_lea.vmem %s1, %s168
          // Predicated region
          $region29: #{sr_projection_forward.21} parent=27 // pred_check
            _
          $region30: #{sr_projection_forward.21} parent=27 // pred_check_branch
            %171 = sbr.rel (0) target = $region32
          $region31: #{sr_projection_forward.21} parent=27 // pred_region
            // Predicated region
            $region33: #{sr_projection_forward.21} parent=31 // pred_check
              _
            $region34: #{sr_projection_forward.21} parent=31 // pred_check_branch
              %173 = sbr.rel (0) target = $region36
            $region35: #{sr_projection_forward.21} parent=31 // pred_region
              loop: start=0, step=1, limit=1
              $region37: #{sr_projection_forward.21} parent=35 // loop_pre_header
                _
              $region38: #{sr_projection_forward.21} parent=35 // loop_header
                %s175 = sphi 0, %s179
                %p176 = scmp.ge.s32.totalorder %s175, 1
                %s180 = sphi %s169, %s169
                %s181 = sphi %s166, %s166
              $region39: #{sr_projection_forward.21} parent=35 // loop_header_branch
                %178 = sbr.rel (%p176) target = $region43
              $region40: #{sr_projection_forward.21} parent=35 // loop_body
                %v182 = vld [vmem:[%s180] sm:$0xff]
                %183 = vst [vmem:[%s181] sm:$0xff] %v182
                %v184 = vld [vmem:[%s180 + $0x8] sm:$0xff]
                %185 = vst [vmem:[%s181 + $0x8] sm:$0xff] %v184
                %v186 = vld [vmem:[%s180 + $0x10] sm:$0xff]
                %187 = vst [vmem:[%s181 + $0x10] sm:$0xff] %v186
                %v188 = vld [vmem:[%s180 + $0x18] sm:$0xff]
                %189 = vst [vmem:[%s181 + $0x18] sm:$0xff] %v188
                %v190 = vld [vmem:[%s180 + $0x20] sm:$0xff]
                %191 = vst [vmem:[%s181 + $0x20] sm:$0xff] %v190
                %v192 = vld [vmem:[%s180 + $0x28] sm:$0xff]
                %193 = vst [vmem:[%s181 + $0x28] sm:$0xff] %v192
                %v194 = vld [vmem:[%s180 + $0x60] sm:$0xff]
                %195 = vst [vmem:[%s181 + $0x30] sm:$0xff] %v194
                %v196 = vld [vmem:[%s180 + $0x68] sm:$0xff]
                %197 = vst [vmem:[%s181 + $0x38] sm:$0xff] %v196
                %v198 = vld [vmem:[%s180 + $0x70] sm:$0xff]
                %199 = vst [vmem:[%s181 + $0x40] sm:$0xff] %v198
                %v200 = vld [vmem:[%s180 + $0x78] sm:$0xff]
                %201 = vst [vmem:[%s181 + $0x48] sm:$0xff] %v200
                %v202 = vld [vmem:[%s180 + $0x80] sm:$0xff]
                %203 = vst [vmem:[%s181 + $0x50] sm:$0xff] %v202
                %v204 = vld [vmem:[%s180 + $0x88] sm:$0xff]
                %205 = vst [vmem:[%s181 + $0x58] sm:$0xff] %v204
                %v206 = vld [vmem:[%s180 + $0xc0] sm:$0xff]
                %207 = vst [vmem:[%s181 + $0x60] sm:$0xff] %v206
                %v208 = vld [vmem:[%s180 + $0xc8] sm:$0xff]
                %209 = vst [vmem:[%s181 + $0x68] sm:$0xff] %v208
                %v210 = vld [vmem:[%s180 + $0xd0] sm:$0xff]
                %211 = vst [vmem:[%s181 + $0x70] sm:$0xff] %v210
                %v212 = vld [vmem:[%s180 + $0xd8] sm:$0xff]
                %213 = vst [vmem:[%s181 + $0x78] sm:$0xff] %v212
                %v214 = vld [vmem:[%s180 + $0xe0] sm:$0xff]
                %215 = vst [vmem:[%s181 + $0x80] sm:$0xff] %v214
                %v216 = vld [vmem:[%s180 + $0xe8] sm:$0xff]
                %217 = vst [vmem:[%s181 + $0x88] sm:$0xff] %v216
                %v218 = vld [vmem:[%s180 + $0x120] sm:$0xff]
                %219 = vst [vmem:[%s181 + $0x90] sm:$0xff] %v218
                %v220 = vld [vmem:[%s180 + $0x128] sm:$0xff]
                %221 = vst [vmem:[%s181 + $0x98] sm:$0xff] %v220
                %v222 = vld [vmem:[%s180 + $0x130] sm:$0xff]
                %223 = vst [vmem:[%s181 + $0xa0] sm:$0xff] %v222
                %v224 = vld [vmem:[%s180 + $0x138] sm:$0xff]
                %225 = vst [vmem:[%s181 + $0xa8] sm:$0xff] %v224
                %v226 = vld [vmem:[%s180 + $0x140] sm:$0xff]
                %227 = vst [vmem:[%s181 + $0xb0] sm:$0xff] %v226
                %v228 = vld [vmem:[%s180 + $0x148] sm:$0xff]
                %229 = vst [vmem:[%s181 + $0xb8] sm:$0xff] %v228
              $region41: #{sr_projection_forward.21} parent=35 // loop_footer
                %s179 = sadd.s32 1, %s175
              $region42: #{sr_projection_forward.21} parent=35 // loop_footer_branch
                %174 = sbr.rel target = $region38
              $region43: #{sr_projection_forward.21} parent=35 // loop_exit
                _
            $region36: #{sr_projection_forward.21} parent=31 // pred_fallthru
              _
            // Predicated region
            $region44: #{sr_projection_forward.21} parent=31 // pred_check
              _
            $region45: #{sr_projection_forward.21} parent=31 // pred_check_branch
              %231 = sbr.rel target = $region47
            $region46: #{sr_projection_forward.21} parent=31 // pred_region
              _
            $region47: #{sr_projection_forward.21} parent=31 // pred_fallthru
              _
          $region32: #{sr_projection_forward.21} parent=27 // pred_fallthru
            _
          %232 = vnop
        $region28: #{sr_projection_forward.21} parent=23 // pred_fallthru
          _
      $region24: #{sr_projection_forward.21} parent=5 // pred_fallthru
        _
      %p233 = scmp.le.s32.totalorder 1, %s9
      %p234 = scmp.lt.s32.totalorder %s9, 3
      %p235 = pnand %p233, %p234
      %p236 = pneg %p235
      // Predicated region
      $region48: #{sr_projection_forward.21} parent=5 // pred_check
        _
      $region49: #{sr_projection_forward.21} parent=5 // pred_check_branch
        %238 = sbr.rel (%p235) target = $region51
      $region50: #{sr_projection_forward.21} parent=5 // pred_region
        %s239 = ssub.s32 %s9, 1
        %s240 = sand.u32 %s60, 1
        %s241 = sand.u32 %s60, 1
        %s242 = smul.addr %s241, 192
        %s243 = scalar_lea.vmem [#allocation2], %s242
        // Predicated region
        $region52: #{sr_projection_forward.21} parent=50 // pred_check
          %p244 = pneg %p73
        $region53: #{sr_projection_forward.21} parent=50 // pred_check_branch
          %246 = sbr.rel (%p244) target = $region55
        $region54: #{sr_projection_forward.21} parent=50 // pred_region
          _
        $region55: #{sr_projection_forward.21} parent=50 // pred_fallthru
          _
        %p247 = scmp.lt.s32.totalorder %s18, 0
        %s248 = scalar_select %p247, %s18, 0
        %s249 = smul.addr %s248, 4
        %s250 = scalar_lea.vmem %s0, %s249
        %p251 = pneg %p47
        %p252 = pneg %p44
        %s253 = sand.u32 %s60, 1
        %s254 = sand.u32 %s60, 1
        %s255 = smul.addr %s254, 192
        %s256 = scalar_lea.vmem [#allocation2], %s255
        %p257 = pneg %p73
        %p258 = pneg %p70
        %p259 = scmp.lt.s32.totalorder %s18, 0
        %s260 = scalar_select %p259, %s18, 0
        %s261 = smul.addr %s260, 8
        %s262 = scalar_lea.vmem %s2, %s261
        %p263 = pneg %p99
        %p264 = pneg %p96
        %p265 = pneg %p127
        %p266 = pneg %p124
        %s267 = smul.u32 12, %s19
        %p268 = scmp.lt.s32.totalorder %s18, 0
        %s269 = scalar_select %p268, %s18, 0
        %p270 = scmp.lt.s32.totalorder %s267, 23
        %s271 = scalar_select %p270, %s267, 23
        %s272 = smul.addr %s269, 24
        %s273 = sadd.s32 %s271, %s272
        %s274 = smul.addr %s273, 8
        %s275 = scalar_lea.vmem %s3, %s274
        %p276 = scmp.lt.s32.totalorder %s18, 0
        %s277 = scalar_select %p276, %s18, 0
        %s278 = smul.addr %s277, 4
        %s279 = scalar_lea.vmem %s0, %s278
        %s280 = smul.u32 12, %s19
        %p281 = scmp.lt.s32.totalorder %s18, 0
        %s282 = scalar_select %p281, %s18, 0
        %s283 = smul.addr %s282, 8
        %s284 = scalar_lea.vmem %s2, %s283
        %s285 = smul.u32 12, %s19
        %p286 = scmp.lt.s32.totalorder %s18, 0
        %s287 = scalar_select %p286, %s18, 0
        %p288 = scmp.lt.s32.totalorder %s285, 23
        %s289 = scalar_select %p288, %s285, 23
        %s290 = smul.addr %s287, 24
        %s291 = sadd.s32 %s289, %s290
        %s292 = smul.addr %s291, 8
        %s293 = scalar_lea.vmem %s3, %s292
        %s294 = smul.u32 12, %s19
        %v296 = vld [vmem:[%s279] sm:$0xf]
        %v297 = vld [vmem:[%s243] sm:$0xff]
        %v298 = vld [vmem:[%s243 + $0x8] sm:$0xff]
        %v299 = vld [vmem:[%s243 + $0x10] sm:$0xff]
        %v300 = vld [vmem:[%s243 + $0x18] sm:$0xff]
        %v301 = vld [vmem:[%s243 + $0x20] sm:$0xff]
        %v302 = vld [vmem:[%s243 + $0x28] sm:$0xff]
        %v303 = vld [vmem:[%s243 + $0x30] sm:$0xff]
        %v304 = vld [vmem:[%s243 + $0x38] sm:$0xff]
        %v305 = vld [vmem:[%s243 + $0x40] sm:$0xff]
        %v306 = vld [vmem:[%s243 + $0x48] sm:$0xff]
        %v307 = vld [vmem:[%s243 + $0x50] sm:$0xff]
        %v308 = vld [vmem:[%s243 + $0x58] sm:$0xff]
        %v309 = vld [vmem:[%s243 + $0x60] sm:$0xff]
        %v310 = vld [vmem:[%s243 + $0x68] sm:$0xff]
        %v311 = vld [vmem:[%s243 + $0x70] sm:$0xff]
        %v312 = vld [vmem:[%s243 + $0x78] sm:$0xff]
        %v313 = vld [vmem:[%s243 + $0x80] sm:$0xff]
        %v314 = vld [vmem:[%s243 + $0x88] sm:$0xff]
        %v315 = vld [vmem:[%s243 + $0x90] sm:$0xff]
        %v316 = vld [vmem:[%s243 + $0x98] sm:$0xff]
        %v317 = vld [vmem:[%s243 + $0xa0] sm:$0xff]
        %v318 = vld [vmem:[%s243 + $0xa8] sm:$0xff]
        %v319 = vld [vmem:[%s243 + $0xb0] sm:$0xff]
        %v320 = vld [vmem:[%s243 + $0xb8] sm:$0xff]
        %v321 = vld [vmem:[%s284] sm:$0xff]
        %323 = vset.pattern.permute.xlu0 0
        %324 = vperm.xlu0 %323, %v321
        %v325 = vpop.permute.xlu0 %324
        %v351 = vunpack.c.l.b16 %v297
        %v352 = vunpack.c.h.b16 %v297
        %v353 = vunpack.c.l.b16 %v298
        %v354 = vunpack.c.h.b16 %v298
        %v355 = vunpack.c.l.b16 %v299
        %v356 = vunpack.c.h.b16 %v299
        %v357 = vunpack.c.l.b16 %v300
        %v358 = vunpack.c.h.b16 %v300
        %v359 = vunpack.c.l.b16 %v301
        %v360 = vunpack.c.h.b16 %v301
        %v361 = vunpack.c.l.b16 %v302
        %v362 = vunpack.c.h.b16 %v302
        %v363 = vunpack.c.l.b16 %v303
        %v364 = vunpack.c.h.b16 %v303
        %v365 = vunpack.c.l.b16 %v304
        %v366 = vunpack.c.h.b16 %v304
        %v367 = vunpack.c.l.b16 %v305
        %v368 = vunpack.c.h.b16 %v305
        %v369 = vunpack.c.l.b16 %v306
        %v370 = vunpack.c.h.b16 %v306
        %v371 = vunpack.c.l.b16 %v307
        %v372 = vunpack.c.h.b16 %v307
        %v373 = vunpack.c.l.b16 %v308
        %v374 = vunpack.c.h.b16 %v308
        %v375 = vunpack.c.l.b16 %v309
        %v376 = vunpack.c.h.b16 %v309
        %v377 = vunpack.c.l.b16 %v310
        %v378 = vunpack.c.h.b16 %v310
        %v379 = vunpack.c.l.b16 %v311
        %v380 = vunpack.c.h.b16 %v311
        %v381 = vunpack.c.l.b16 %v312
        %v382 = vunpack.c.h.b16 %v312
        %v383 = vunpack.c.l.b16 %v313
        %v384 = vunpack.c.h.b16 %v313
        %v385 = vunpack.c.l.b16 %v314
        %v386 = vunpack.c.h.b16 %v314
        %v387 = vunpack.c.l.b16 %v315
        %v388 = vunpack.c.h.b16 %v315
        %v389 = vunpack.c.l.b16 %v316
        %v390 = vunpack.c.h.b16 %v316
        %v391 = vunpack.c.l.b16 %v317
        %v392 = vunpack.c.h.b16 %v317
        %v393 = vunpack.c.l.b16 %v318
        %v394 = vunpack.c.h.b16 %v318
        %v395 = vunpack.c.l.b16 %v319
        %v396 = vunpack.c.h.b16 %v319
        %v397 = vunpack.c.l.b16 %v320
        %v398 = vunpack.c.h.b16 %v320
        %v399 = vpack.c.b16 %v363, %v351
        %v400 = vpack.c.b16 %v364, %v352
        %v401 = vpack.c.b16 %v365, %v353
        %v402 = vpack.c.b16 %v366, %v354
        %v403 = vpack.c.b16 %v367, %v355
        %v404 = vpack.c.b16 %v368, %v356
        %v405 = vpack.c.b16 %v369, %v357
        %v406 = vpack.c.b16 %v370, %v358
        %v407 = vpack.c.b16 %v371, %v359
        %v408 = vpack.c.b16 %v372, %v360
        %v409 = vpack.c.b16 %v373, %v361
        %v410 = vpack.c.b16 %v374, %v362
        %v411 = vpack.c.b16 %v387, %v375
        %v412 = vpack.c.b16 %v388, %v376
        %v413 = vpack.c.b16 %v389, %v377
        %v414 = vpack.c.b16 %v390, %v378
        %v415 = vpack.c.b16 %v391, %v379
        %v416 = vpack.c.b16 %v392, %v380
        %v417 = vpack.c.b16 %v393, %v381
        %v418 = vpack.c.b16 %v394, %v382
        %v419 = vpack.c.b16 %v395, %v383
        %v420 = vpack.c.b16 %v396, %v384
        %v421 = vpack.c.b16 %v397, %v385
        %v422 = vpack.c.b16 %v398, %v386
        %vm447 = vcmask 261120
        %v449 = vsel %vm447, %v296, 0
        %451 = vmatprep.subr.bf16.mxu0 %v400
        %452 = vmatpush1.bf16.msra.mxu0 %v399
        %453 = vmatprep.subr.bf16.mxu0 %v412
        %454 = vmatpush1.bf16.msra.mxu0 %v411
        %455 = vmatprep.subr.bf16.mxu0 0
        %456 = vmatpush1.bf16.msra.mxu0 0
        %457 = vmatprep.subr.bf16.mxu0 0
        %458 = vmatpush1.bf16.msra.mxu0 0
        %459 = vmatprep.subr.bf16.mxu0 0
        %460 = vmatpush1.bf16.msra.mxu0 0
        %461 = vmatprep.subr.bf16.mxu0 0
        %462 = vmatpush1.bf16.msra.mxu0 0
        %463 = vmatprep.subr.bf16.mxu0 0
        %464 = vmatpush1.bf16.msra.mxu0 0
        %465 = vmatprep.subr.bf16.mxu0 0
        %466 = vmatpush1.bf16.msra.mxu0 0
        %467 = vmatprep.subr.bf16.mxu0 0
        %468 = vmatpush1.bf16.msra.mxu0 0
        %469 = vmatprep.subr.bf16.mxu0 0
        %470 = vmatpush1.bf16.msra.mxu0 0
        %471 = vmatprep.subr.bf16.mxu0 0
        %472 = vmatpush1.bf16.msra.mxu0 0
        %473 = vmatprep.subr.bf16.mxu0 0
        %474 = vmatpush1.bf16.msra.mxu0 0
        %475 = vmatprep.subr.bf16.mxu0 0
        %476 = vmatpush1.bf16.msra.mxu0 0
        %477 = vmatprep.subr.bf16.mxu0 0
        %478 = vmatpush1.bf16.msra.mxu0 0
        %479 = vmatprep.subr.bf16.mxu0 0
        %480 = vmatpush1.bf16.msra.mxu0 0
        %481 = vmatprep.subr.bf16.mxu0 0
        %482 = vmatpush1.bf16.msra.mxu0 0
        %483 = vmatprep.mubr.bf16.mxu0 0
        %484 = vmatmul.mubr.bf16.gmra.mrb[0].mxu0 %v449
        %v485 = vpop.f32.mrb[0].mxu0
        %v486 = vadd.f32 %v325, %v485
        %v487 = vpop.f32.mrb[0].mxu0
        %v488 = vadd.f32 %v325, %v487
        %v489 = vpop.f32.mrb[0].mxu0
        %v490 = vpop.f32.mrb[0].mxu0
        %491 = vdwg.mxu0
        %492 = vmatprep.subr.bf16.mxu0 %v402
        %493 = vmatpush1.bf16.msra.mxu0 %v401
        %494 = vmatprep.subr.bf16.mxu0 %v414
        %495 = vmatpush1.bf16.msra.mxu0 %v413
        %496 = vmatprep.subr.bf16.mxu0 0
        %497 = vmatpush1.bf16.msra.mxu0 0
        %498 = vmatprep.subr.bf16.mxu0 0
        %499 = vmatpush1.bf16.msra.mxu0 0
        %500 = vmatprep.subr.bf16.mxu0 0
        %501 = vmatpush1.bf16.msra.mxu0 0
        %502 = vmatprep.subr.bf16.mxu0 0
        %503 = vmatpush1.bf16.msra.mxu0 0
        %504 = vmatprep.subr.bf16.mxu0 0
        %505 = vmatpush1.bf16.msra.mxu0 0
        %506 = vmatprep.subr.bf16.mxu0 0
        %507 = vmatpush1.bf16.msra.mxu0 0
        %508 = vmatprep.subr.bf16.mxu0 0
        %509 = vmatpush1.bf16.msra.mxu0 0
        %510 = vmatprep.subr.bf16.mxu0 0
        %511 = vmatpush1.bf16.msra.mxu0 0
        %512 = vmatprep.subr.bf16.mxu0 0
        %513 = vmatpush1.bf16.msra.mxu0 0
        %514 = vmatprep.subr.bf16.mxu0 0
        %515 = vmatpush1.bf16.msra.mxu0 0
        %516 = vmatprep.subr.bf16.mxu0 0
        %517 = vmatpush1.bf16.msra.mxu0 0
        %518 = vmatprep.subr.bf16.mxu0 0
        %519 = vmatpush1.bf16.msra.mxu0 0
        %520 = vmatprep.subr.bf16.mxu0 0
        %521 = vmatpush1.bf16.msra.mxu0 0
        %522 = vmatprep.subr.bf16.mxu0 0
        %523 = vmatpush1.bf16.msra.mxu0 0
        %524 = vmatprep.mubr.bf16.mxu0 0
        %525 = vmatmul.mubr.bf16.gmra.mrb[0].mxu0 %v449
        %v526 = vpop.f32.mrb[0].mxu0
        %v527 = vadd.f32 %v325, %v526
        %v528 = vpop.f32.mrb[0].mxu0
        %v529 = vadd.f32 %v325, %v528
        %v530 = vpop.f32.mrb[0].mxu0
        %v531 = vpop.f32.mrb[0].mxu0
        %532 = vdwg.mxu0
        %533 = vmatprep.subr.bf16.mxu0 %v404
        %534 = vmatpush1.bf16.msra.mxu0 %v403
        %535 = vmatprep.subr.bf16.mxu0 %v416
        %536 = vmatpush1.bf16.msra.mxu0 %v415
        %537 = vmatprep.subr.bf16.mxu0 0
        %538 = vmatpush1.bf16.msra.mxu0 0
        %539 = vmatprep.subr.bf16.mxu0 0
        %540 = vmatpush1.bf16.msra.mxu0 0
        %541 = vmatprep.subr.bf16.mxu0 0
        %542 = vmatpush1.bf16.msra.mxu0 0
        %543 = vmatprep.subr.bf16.mxu0 0
        %544 = vmatpush1.bf16.msra.mxu0 0
        %545 = vmatprep.subr.bf16.mxu0 0
        %546 = vmatpush1.bf16.msra.mxu0 0
        %547 = vmatprep.subr.bf16.mxu0 0
        %548 = vmatpush1.bf16.msra.mxu0 0
        %549 = vmatprep.subr.bf16.mxu0 0
        %550 = vmatpush1.bf16.msra.mxu0 0
        %551 = vmatprep.subr.bf16.mxu0 0
        %552 = vmatpush1.bf16.msra.mxu0 0
        %553 = vmatprep.subr.bf16.mxu0 0
        %554 = vmatpush1.bf16.msra.mxu0 0
        %555 = vmatprep.subr.bf16.mxu0 0
        %556 = vmatpush1.bf16.msra.mxu0 0
        %557 = vmatprep.subr.bf16.mxu0 0
        %558 = vmatpush1.bf16.msra.mxu0 0
        %559 = vmatprep.subr.bf16.mxu0 0
        %560 = vmatpush1.bf16.msra.mxu0 0
        %561 = vmatprep.subr.bf16.mxu0 0
        %562 = vmatpush1.bf16.msra.mxu0 0
        %563 = vmatprep.subr.bf16.mxu0 0
        %564 = vmatpush1.bf16.msra.mxu0 0
        %565 = vmatprep.mubr.bf16.mxu0 0
        %566 = vmatmul.mubr.bf16.gmra.mrb[0].mxu0 %v449
        %v567 = vpop.f32.mrb[0].mxu0
        %v568 = vadd.f32 %v325, %v567
        %v569 = vpop.f32.mrb[0].mxu0
        %v570 = vadd.f32 %v325, %v569
        %v571 = vpop.f32.mrb[0].mxu0
        %v572 = vpop.f32.mrb[0].mxu0
        %573 = vdwg.mxu0
        %574 = vmatprep.subr.bf16.mxu0 %v406
        %575 = vmatpush1.bf16.msra.mxu0 %v405
        %576 = vmatprep.subr.bf16.mxu0 %v418
        %577 = vmatpush1.bf16.msra.mxu0 %v417
        %578 = vmatprep.subr.bf16.mxu0 0
        %579 = vmatpush1.bf16.msra.mxu0 0
        %580 = vmatprep.subr.bf16.mxu0 0
        %581 = vmatpush1.bf16.msra.mxu0 0
        %582 = vmatprep.subr.bf16.mxu0 0
        %583 = vmatpush1.bf16.msra.mxu0 0
        %584 = vmatprep.subr.bf16.mxu0 0
        %585 = vmatpush1.bf16.msra.mxu0 0
        %586 = vmatprep.subr.bf16.mxu0 0
        %587 = vmatpush1.bf16.msra.mxu0 0
        %588 = vmatprep.subr.bf16.mxu0 0
        %589 = vmatpush1.bf16.msra.mxu0 0
        %590 = vmatprep.subr.bf16.mxu0 0
        %591 = vmatpush1.bf16.msra.mxu0 0
        %592 = vmatprep.subr.bf16.mxu0 0
        %593 = vmatpush1.bf16.msra.mxu0 0
        %594 = vmatprep.subr.bf16.mxu0 0
        %595 = vmatpush1.bf16.msra.mxu0 0
        %596 = vmatprep.subr.bf16.mxu0 0
        %597 = vmatpush1.bf16.msra.mxu0 0
        %598 = vmatprep.subr.bf16.mxu0 0
        %599 = vmatpush1.bf16.msra.mxu0 0
        %600 = vmatprep.subr.bf16.mxu0 0
        %601 = vmatpush1.bf16.msra.mxu0 0
        %602 = vmatprep.subr.bf16.mxu0 0
        %603 = vmatpush1.bf16.msra.mxu0 0
        %604 = vmatprep.subr.bf16.mxu0 0
        %605 = vmatpush1.bf16.msra.mxu0 0
        %606 = vmatprep.mubr.bf16.mxu0 0
        %607 = vmatmul.mubr.bf16.gmra.mrb[0].mxu0 %v449
        %v608 = vpop.f32.mrb[0].mxu0
        %v609 = vadd.f32 %v325, %v608
        %v610 = vpop.f32.mrb[0].mxu0
        %v611 = vadd.f32 %v325, %v610
        %v612 = vpop.f32.mrb[0].mxu0
        %v613 = vpop.f32.mrb[0].mxu0
        %614 = vdwg.mxu0
        %615 = vmatprep.subr.bf16.mxu0 %v408
        %616 = vmatpush1.bf16.msra.mxu0 %v407
        %617 = vmatprep.subr.bf16.mxu0 %v420
        %618 = vmatpush1.bf16.msra.mxu0 %v419
        %619 = vmatprep.subr.bf16.mxu0 0
        %620 = vmatpush1.bf16.msra.mxu0 0
        %621 = vmatprep.subr.bf16.mxu0 0
        %622 = vmatpush1.bf16.msra.mxu0 0
        %623 = vmatprep.subr.bf16.mxu0 0
        %624 = vmatpush1.bf16.msra.mxu0 0
        %625 = vmatprep.subr.bf16.mxu0 0
        %626 = vmatpush1.bf16.msra.mxu0 0
        %627 = vmatprep.subr.bf16.mxu0 0
        %628 = vmatpush1.bf16.msra.mxu0 0
        %629 = vmatprep.subr.bf16.mxu0 0
        %630 = vmatpush1.bf16.msra.mxu0 0
        %631 = vmatprep.subr.bf16.mxu0 0
        %632 = vmatpush1.bf16.msra.mxu0 0
        %633 = vmatprep.subr.bf16.mxu0 0
        %634 = vmatpush1.bf16.msra.mxu0 0
        %635 = vmatprep.subr.bf16.mxu0 0
        %636 = vmatpush1.bf16.msra.mxu0 0
        %637 = vmatprep.subr.bf16.mxu0 0
        %638 = vmatpush1.bf16.msra.mxu0 0
        %639 = vmatprep.subr.bf16.mxu0 0
        %640 = vmatpush1.bf16.msra.mxu0 0
        %641 = vmatprep.subr.bf16.mxu0 0
        %642 = vmatpush1.bf16.msra.mxu0 0
        %643 = vmatprep.subr.bf16.mxu0 0
        %644 = vmatpush1.bf16.msra.mxu0 0
        %645 = vmatprep.subr.bf16.mxu0 0
        %646 = vmatpush1.bf16.msra.mxu0 0
        %647 = vmatprep.mubr.bf16.mxu0 0
        %648 = vmatmul.mubr.bf16.gmra.mrb[0].mxu0 %v449
        %v649 = vpop.f32.mrb[0].mxu0
        %v650 = vadd.f32 %v325, %v649
        %v651 = vpop.f32.mrb[0].mxu0
        %v652 = vadd.f32 %v325, %v651
        %v653 = vpop.f32.mrb[0].mxu0
        %v654 = vpop.f32.mrb[0].mxu0
        %655 = vdwg.mxu0
        %656 = vmatprep.subr.bf16.mxu0 %v410
        %657 = vmatpush1.bf16.msra.mxu0 %v409
        %658 = vmatprep.subr.bf16.mxu0 %v422
        %659 = vmatpush1.bf16.msra.mxu0 %v421
        %660 = vmatprep.subr.bf16.mxu0 0
        %661 = vmatpush1.bf16.msra.mxu0 0
        %662 = vmatprep.subr.bf16.mxu0 0
        %663 = vmatpush1.bf16.msra.mxu0 0
        %664 = vmatprep.subr.bf16.mxu0 0
        %665 = vmatpush1.bf16.msra.mxu0 0
        %666 = vmatprep.subr.bf16.mxu0 0
        %667 = vmatpush1.bf16.msra.mxu0 0
        %668 = vmatprep.subr.bf16.mxu0 0
        %669 = vmatpush1.bf16.msra.mxu0 0
        %670 = vmatprep.subr.bf16.mxu0 0
        %671 = vmatpush1.bf16.msra.mxu0 0
        %672 = vmatprep.subr.bf16.mxu0 0
        %673 = vmatpush1.bf16.msra.mxu0 0
        %674 = vmatprep.subr.bf16.mxu0 0
        %675 = vmatpush1.bf16.msra.mxu0 0
        %676 = vmatprep.subr.bf16.mxu0 0
        %677 = vmatpush1.bf16.msra.mxu0 0
        %678 = vmatprep.subr.bf16.mxu0 0
        %679 = vmatpush1.bf16.msra.mxu0 0
        %680 = vmatprep.subr.bf16.mxu0 0
        %681 = vmatpush1.bf16.msra.mxu0 0
        %682 = vmatprep.subr.bf16.mxu0 0
        %683 = vmatpush1.bf16.msra.mxu0 0
        %684 = vmatprep.subr.bf16.mxu0 0
        %685 = vmatpush1.bf16.msra.mxu0 0
        %686 = vmatprep.subr.bf16.mxu0 0
        %687 = vmatpush1.bf16.msra.mxu0 0
        %688 = vmatprep.mubr.bf16.mxu0 0
        %689 = vmatmul.mubr.bf16.gmra.mrb[0].mxu0 %v449
        %v690 = vpop.f32.mrb[0].mxu0
        %v691 = vadd.f32 %v325, %v690
        %v692 = vpop.f32.mrb[0].mxu0
        %v693 = vadd.f32 %v325, %v692
        %v694 = vpop.f32.mrb[0].mxu0
        %v695 = vpop.f32.mrb[0].mxu0
        %696 = vdwg.mxu0
        %v697 = vmax.f32 %v486, 0.0
        %v698 = vmax.f32 %v488, 0.0
        %v699 = vmax.f32 %v527, 0.0
        %v700 = vmax.f32 %v529, 0.0
        %v701 = vmax.f32 %v568, 0.0
        %v702 = vmax.f32 %v570, 0.0
        %v703 = vmax.f32 %v609, 0.0
        %v704 = vmax.f32 %v611, 0.0
        %v705 = vmax.f32 %v650, 0.0
        %v706 = vmax.f32 %v652, 0.0
        %v707 = vmax.f32 %v691, 0.0
        %v708 = vmax.f32 %v693, 0.0
        %709 = vst [vmem:[%s293] sm:$0xff] %v697
        %710 = vst [vmem:[%s293 + $0x8] sm:$0xff] %v698
        %711 = vst [vmem:[%s293 + $0x10] sm:$0xff] %v699
        %712 = vst [vmem:[%s293 + $0x18] sm:$0xff] %v700
        %713 = vst [vmem:[%s293 + $0x20] sm:$0xff] %v701
        %714 = vst [vmem:[%s293 + $0x28] sm:$0xff] %v702
        %715 = vst [vmem:[%s293 + $0x30] sm:$0xff] %v703
        %716 = vst [vmem:[%s293 + $0x38] sm:$0xff] %v704
        %717 = vst [vmem:[%s293 + $0x40] sm:$0xff] %v705
        %718 = vst [vmem:[%s293 + $0x48] sm:$0xff] %v706
        %719 = vst [vmem:[%s293 + $0x50] sm:$0xff] %v707
        %720 = vst [vmem:[%s293 + $0x58] sm:$0xff] %v708
        %s721 = smul.u32 12, %s19
        %p722 = scmp.lt.s32.totalorder %s18, 0
        %s723 = scalar_select %p722, %s18, 0
        %p724 = scmp.lt.s32.totalorder %s721, 23
        %s725 = scalar_select %p724, %s721, 23
        %s726 = smul.addr %s723, 24
        %s727 = sadd.s32 %s725, %s726
        %s728 = smul.addr %s727, 8
        %s729 = scalar_lea.vmem %s3, %s728
        // Predicated region
        $region56: #{sr_projection_forward.21} parent=50 // pred_check
          %p730 = pneg %p124
        $region57: #{sr_projection_forward.21} parent=50 // pred_check_branch
          %732 = sbr.rel (%p730) target = $region59
        $region58: #{sr_projection_forward.21} parent=50 // pred_region
          %s733 = smul.u32 12, %s19
        $region59: #{sr_projection_forward.21} parent=50 // pred_fallthru
          _
      $region51: #{sr_projection_forward.21} parent=5 // pred_fallthru
        _
      %p734 = scmp.le.s32.totalorder 2, %s9
      // Predicated region
      $region60: #{sr_projection_forward.21} parent=5 // pred_check
        %p735 = pneg %p734
      $region61: #{sr_projection_forward.21} parent=5 // pred_check_branch
        %737 = sbr.rel (%p735) target = $region63
      $region62: #{sr_projection_forward.21} parent=5 // pred_region
        %s738 = ssub.s32 %s9, 2
        // Predicated region
        $region64: #{sr_projection_forward.21} parent=62 // pred_check
          %p739 = pneg %p130
        $region65: #{sr_projection_forward.21} parent=62 // pred_check_branch
          %741 = sbr.rel (%p739) target = $region67
        $region66: #{sr_projection_forward.21} parent=62 // pred_region
          %s742 = smul.u32 12, %s21
          %p743 = scmp.lt.s32.totalorder %s20, 0
          %s744 = scalar_select %p743, %s20, 0
          %p745 = scmp.lt.s32.totalorder %s742, 23
          %s746 = scalar_select %p745, %s742, 23
          %s747 = smul.addr %s744, 24
          %s748 = sadd.s32 %s746, %s747
          %s749 = smul.addr %s748, 8
          %s750 = scalar_lea.vmem %s3, %s749
        $region67: #{sr_projection_forward.21} parent=62 // pred_fallthru
          _
      $region63: #{sr_projection_forward.21} parent=5 // pred_fallthru
        _
    $region6: #{sr_projection_forward.21} parent=1 // loop_footer
      %s13 = sadd.s32 1, %s9
    $region7: #{sr_projection_forward.21} parent=1 // loop_footer_branch
      %8 = sbr.rel target = $region3
    $region8: #{sr_projection_forward.21} parent=1 // loop_exit
      _

</llo_original>
